<compile_context>
chip_gen: v6e
topology: v6e:2x2x1
jax: 0.10.0
libtpu: 0.0.40
codegen_flags: <defaults>
</compile_context>

<pallas_src>
import jax
import jax.numpy as jnp
from jax import lax
from jax.experimental import pallas as pl
from jax.experimental.pallas import tpu as pltpu


# (cin, cout, ksize, stride, pad) for each Conv2d + BatchNorm2d + ReLU block.
CFGS = [(4, 16, 3, 1, 1), (16, 32, 3, 2, 1), (32, 32, 3, 1, 1)]


# --------------------------------------------------------------------------------------
# Static planning helpers (all Python ints, resolved at trace time).
# --------------------------------------------------------------------------------------
def _make_plan(h, w, cfgs):
    plan = []
    for (cin, cout, k, s, p) in cfgs:
        hof, wof = h + 2 * p - k + 1, w + 2 * p - k + 1            # stride-1 output extent
        ho, wo = (h + 2 * p - k) // s + 1, (w + 2 * p - k) // s + 1  # real (strided) output
        plan.append(dict(cin=cin, cout=cout, k=k, stride=s, pad=p,
                         hin=h, win=w, hof=hof, wof=wof, hout=ho, wout=wo))
        h, w = ho, wo
    return plan


def _stage_structure(cfgs):
    """GBackbone rule: a layer with stride>1 closes the running stage, starts a new one."""
    stage_of, cur = [], 0
    for c in cfgs:
        if c[3] > 1:
            cur += 1
        stage_of.append(cur)
    n_stages = cur + 1
    # TODO(synk): a stride>1 FIRST layer would create an empty (identity) stage 0 in the
    # torch module; the fused kernel assumes stage 0 is non-empty.
    assert stage_of[0] == 0
    last_of_stage = [max(i for i, s in enumerate(stage_of) if s == st) for st in range(n_stages)]
    return stage_of, last_of_stage


# --------------------------------------------------------------------------------------
# The fused kernel (built from the static plan; all loops unrolled at trace time).
# --------------------------------------------------------------------------------------
def _make_backbone_kernel(plan, last_of_stage):
    n_layers = len(plan)
    n_stages = len(last_of_stage)
    stage_of_last = {li: si for si, li in enumerate(last_of_stage)}

    def kernel(*refs):
        it = iter(refs)
        x_ref = next(it)                               # (Hp, Wp, Cin) f32, pre-padded NHWC
        layer_refs = []
        for lp in plan:
            w_ref = next(it)                           # (K*K*Cin, Cout) bf16, BN folded
            b_ref = next(it)                           # (1, Cout) f32
            s_ref = next(it) if lp["stride"] > 1 else None  # (Ho*Wo, Hof*Wof) f32 selector
            layer_refs.append((w_ref, b_ref, s_ref))
        out_refs = [next(it) for _ in range(n_stages)]
        pad_refs = [next(it) for _ in range(n_layers - 1)]   # padded VMEM activations

        cur = None                                     # previous layer output, (M, C) f32
        for i, lp in enumerate(plan):
            cin, cout, k, p = lp["cin"], lp["cout"], lp["k"], lp["pad"]
            hin, win, hof, wof = lp["hin"], lp["win"], lp["hof"], lp["wof"]
            w_ref, b_ref, s_ref = layer_refs[i]

            if i == 0:
                src = x_ref                            # padding already baked in
            else:
                src = pad_refs[i - 1]
                src[...] = jnp.zeros_like(src)         # zero halo
                src[p:p + hin, p:p + win, :] = cur.reshape(hin, win, cin)

            # In-kernel im2col: one shifted window + one small bf16 matmul per tap,
            # accumulated in f32 at stride-1 resolution.
            acc = jnp.zeros((hof * wof, cout), jnp.float32)
            for kh in range(k):
                for kw in range(k):
                    patch = src[kh:kh + hof, kw:kw + wof, :]
                    patch = patch.reshape(hof * wof, cin).astype(jnp.bfloat16)
                    t = kh * k + kw
                    w_tap = w_ref[t * cin:(t + 1) * cin, :]
                    acc = acc + jnp.dot(patch, w_tap,
                                        preferred_element_type=jnp.float32)

            if lp["stride"] > 1:
                # stride-s output == stride-1 output sampled at multiples of s:
                # exact 0/1 row selection done on the MXU (f32, bit-exact).
                acc = jnp.dot(s_ref[...], acc, preferred_element_type=jnp.float32)

            y = jnp.maximum(acc + b_ref[...], 0.0)     # folded-BN bias + ReLU, f32

            if i in stage_of_last:                     # this layer ends a stage -> emit c{i}
                o_ref = out_refs[stage_of_last[i]]
                o_ref[...] = y.astype(o_ref.dtype)
            cur = y

    return kernel


# --------------------------------------------------------------------------------------
# Wrapper: builds specs once, jit-compiles the whole forward (1 pallas_call inside).
# --------------------------------------------------------------------------------------
def make_gbackbone_forward(plan, last_of_stage):
    kernel = _make_backbone_kernel(plan, last_of_stage)
    p0 = plan[0]

    @jax.jit
    def forward(x_nchw, wmats, biases, smats):
        N, C, H, W = x_nchw.shape
        assert (C, H, W) == (p0["cin"], p0["hin"], p0["win"])
        pad = p0["pad"]

        # NCHW -> padded NHWC, once at the module boundary (f32; cast to bf16 in-kernel).
        x = jnp.transpose(x_nchw, (0, 2, 3, 1))
        x = jnp.pad(x, ((0, 0), (pad, pad), (pad, pad), (0, 0)))

        in_specs = [pl.BlockSpec((None, H + 2 * pad, W + 2 * pad, C),
                                 lambda n: (n, 0, 0, 0))]
        inputs = [x]
        si = 0
        for i, lp in enumerate(plan):
            kk = lp["k"] * lp["k"] * lp["cin"]
            in_specs.append(pl.BlockSpec((kk, lp["cout"]), lambda n: (0, 0)))
            inputs.append(wmats[i])
            in_specs.append(pl.BlockSpec((1, lp["cout"]), lambda n: (0, 0)))
            inputs.append(biases[i])
            if lp["stride"] > 1:
                s = smats[si]
                si += 1
                in_specs.append(pl.BlockSpec(s.shape, lambda n: (0, 0)))
                inputs.append(s)

        out_shapes, out_specs = [], []
        for li in last_of_stage:
            lp = plan[li]
            m, c = lp["hout"] * lp["wout"], lp["cout"]
            out_shapes.append(jax.ShapeDtypeStruct((N, m, c), jnp.float32))
            out_specs.append(pl.BlockSpec((None, m, c), lambda n: (n, 0, 0)))

        scratch = [pltpu.VMEM((lp["hin"] + 2 * lp["pad"],
                               lp["win"] + 2 * lp["pad"],
                               lp["cin"]), jnp.float32) for lp in plan[1:]]

        outs = pl.pallas_call(
            kernel,
            out_shape=tuple(out_shapes),
            grid_spec=pltpu.PrefetchScalarGridSpec(
                num_scalar_prefetch=0,
                grid=(N,),
                in_specs=in_specs,
                out_specs=tuple(out_specs),
                scratch_shapes=scratch,
            ),
            compiler_params=pltpu.CompilerParams(dimension_semantics=("parallel",)),
        )(*inputs)

        feats = {}
        for st, (li, o) in enumerate(zip(last_of_stage, outs)):
            lp = plan[li]
            o = o.reshape(N, lp["hout"], lp["wout"], lp["cout"])
            feats["c{}".format(st)] = jnp.transpose(o, (0, 3, 1, 2))   # NHWC -> NCHW
        return feats

    return forward


# --------------------------------------------------------------------------------------
# Parameters: init (kaiming, like init_weights()), eval-mode BN fold, selection matrices.
# --------------------------------------------------------------------------------------
def init_conv_bn_relu(key, cin, cout, ksize, stride, pad):
    k1, k2 = jax.random.split(key)
    fan_in = cin * ksize * ksize
    std = (2.0 / fan_in) ** 0.5
    w = std * jax.random.normal(k1, (cout, cin, ksize, ksize), jnp.float32)
    b = 0.01 * jax.random.normal(k2, (cout,), jnp.float32)
    return dict(w=w, b=b,
                gamma=jnp.ones((cout,), jnp.float32),
                beta=jnp.zeros((cout,), jnp.float32),
                mean=jnp.zeros((cout,), jnp.float32),
                var=jnp.ones((cout,), jnp.float32),
                eps=1e-5, stride=stride, pad=pad)
    # TODO(synk): training-mode BatchNorm (batch statistics) is not reproduced; BN runs in
    # eval mode and is folded into the conv weights/bias.


def fold_params(blocks, plan):
    """Fold eval BN into the conv; emit (K*K*Cin, Cout) bf16 kernel weights + f32 bias."""
    wmats, biases = [], []
    for blk, lp in zip(blocks, plan):
        scale = blk["gamma"] / jnp.sqrt(blk["var"] + blk["eps"])
        w_f = (blk["w"] * scale[:, None, None, None]).astype(jnp.bfloat16)   # OIHW, folded
        bias = (scale * (blk["b"] - blk["mean"]) + blk["beta"]).astype(jnp.float32)
        wmat = jnp.transpose(w_f, (2, 3, 1, 0)).reshape(
            lp["k"] * lp["k"] * lp["cin"], lp["cout"])                       # (kh,kw,cin) rows
        wmats.append(wmat)
        biases.append(bias.reshape(1, lp["cout"]))
    return tuple(wmats), tuple(biases)


def make_subsample_mats(plan):
    """0/1 selection matrices mapping stride-1 raster rows -> strided output rows."""
    smats = []
    for lp in plan:
        if lp["stride"] > 1:
            rows = jnp.arange(lp["hout"] * lp["wout"])
            src = (rows // lp["wout"]) * lp["stride"] * lp["wof"] \
                + (rows % lp["wout"]) * lp["stride"]
            s = jnp.zeros((lp["hout"] * lp["wout"], lp["hof"] * lp["wof"]),
                          jnp.float32).at[rows, src].set(1.0)
            smats.append(s)
    return tuple(smats)


# --------------------------------------------------------------------------------------
# Pure-JAX references (for correctness checking only).
# --------------------------------------------------------------------------------------
def reference_feats(x, blocks, plan, stage_of, bf16_matmul):
    feats, cur = {}, x
    for i, (blk, lp) in enumerate(zip(blocks, plan)):
        scale = blk["gamma"] / jnp.sqrt(blk["var"] + blk["eps"])
        w_f = blk["w"] * scale[:, None, None, None]
        bias = scale * (blk["b"] - blk["mean"]) + blk["beta"]
        xin = cur
        if bf16_matmul:                       # mirror the kernel's bf16 MXU inputs exactly
            w_f = w_f.astype(jnp.bfloat16)
            xin = cur.astype(jnp.bfloat16)
        y = lax.conv_general_dilated(
            xin, w_f, window_strides=(lp["stride"],) * 2,
            padding=[(lp["pad"], lp["pad"])] * 2,
            dimension_numbers=("NCHW", "OIHW", "NCHW"),
            preferred_element_type=jnp.float32)
        cur = jnp.maximum(y + bias.reshape(1, -1, 1, 1), 0.0)
        if i == len(plan) - 1 or stage_of[i + 1] != stage_of[i]:
            feats["c{}".format(stage_of[i])] = cur
    return feats


# --------------------------------------------------------------------------------------
if __name__ == "__main__":
    key = jax.random.PRNGKey(0)
    kx, kp = jax.random.split(key)
    x = jax.random.normal(kx, (2, 4, 16, 16), jnp.float32)   # NCHW, like PyTorch

    plan = _make_plan(16, 16, CFGS)
    stage_of, last_of_stage = _stage_structure(CFGS)

    keys = jax.random.split(kp, len(CFGS))
    blocks = [init_conv_bn_relu(k, *c) for k, c in zip(keys, CFGS)]
    wmats, biases = fold_params(blocks, plan)
    smats = make_subsample_mats(plan)

    forward = make_gbackbone_forward(plan, last_of_stage)
    feats = forward(x, wmats, biases, smats)
    jax.block_until_ready(feats)

    # 1) Tight elementwise check vs a bf16-matched JAX reference (same folded weights,
    #    same bf16 roundings, f32 accumulation) -- expected agreement ~1e-5.
    ref_bf16 = reference_feats(x, blocks, plan, stage_of, bf16_matmul=True)
    for name in sorted(feats):
        assert feats[name].shape == ref_bf16[name].shape, (name, feats[name].shape)
        assert jnp.allclose(feats[name], ref_bf16[name], atol=1e-2, rtol=1e-2), name

    # 2) Loose aggregate check vs the pure-f32 reference (bounds total bf16 matmul error).
    ref_f32 = reference_feats(x, blocks, plan, stage_of, bf16_matmul=False)
    for name in sorted(feats):
        num = jnp.linalg.norm(feats[name] - ref_f32[name])
        den = jnp.linalg.norm(ref_f32[name]) + 1e-6
        assert float(num / den) < 0.1, (name, float(num / den))

    assert feats["c0"].shape == (2, 16, 16, 16)
    assert feats["c1"].shape == (2, 32, 8, 8)
    print("KERNEL_OK")
</pallas_src>

<mosaic_0001>
module attributes {stable_mosaic.version = 11 : i64} {
  func.func @kernel(%arg0: i32, %arg1: memref<1x18x18x4xf32, #tpu.memory_space<vmem>>, %arg2: memref<36x16xbf16, #tpu.memory_space<vmem>>, %arg3: memref<1x16xf32, #tpu.memory_space<vmem>>, %arg4: memref<144x32xbf16, #tpu.memory_space<vmem>>, %arg5: memref<1x32xf32, #tpu.memory_space<vmem>>, %arg6: memref<64x256xf32, #tpu.memory_space<vmem>>, %arg7: memref<288x32xbf16, #tpu.memory_space<vmem>>, %arg8: memref<1x32xf32, #tpu.memory_space<vmem>>, %arg9: memref<1x256x16xf32, #tpu.memory_space<vmem>>, %arg10: memref<1x64x32xf32, #tpu.memory_space<vmem>>, %arg11: memref<18x18x16xf32, #tpu.memory_space<vmem>>, %arg12: memref<10x10x32xf32, #tpu.memory_space<vmem>>) attributes {dimension_semantics = [#tpu.dimension_semantics<parallel>], iteration_bounds = array<i64: 2>, scalar_prefetch = 0 : i64, scratch_operands = 2 : i64, tpu.core_type = #tpu.core_type<tc>, window_params = [{transform_indices = @transform_0, window_bounds = array<i64: 1, 18, 18, 4>}, {pipeline_mode = #tpu.pipeline_mode<synchronous>, transform_indices = @transform_1, window_bounds = array<i64: 36, 16>}, {pipeline_mode = #tpu.pipeline_mode<synchronous>, transform_indices = @transform_2, window_bounds = array<i64: 1, 16>}, {pipeline_mode = #tpu.pipeline_mode<synchronous>, transform_indices = @transform_3, window_bounds = array<i64: 144, 32>}, {pipeline_mode = #tpu.pipeline_mode<synchronous>, transform_indices = @transform_4, window_bounds = array<i64: 1, 32>}, {pipeline_mode = #tpu.pipeline_mode<synchronous>, transform_indices = @transform_5, window_bounds = array<i64: 64, 256>}, {pipeline_mode = #tpu.pipeline_mode<synchronous>, transform_indices = @transform_6, window_bounds = array<i64: 288, 32>}, {pipeline_mode = #tpu.pipeline_mode<synchronous>, transform_indices = @transform_7, window_bounds = array<i64: 1, 32>}, {transform_indices = @transform_8, window_bounds = array<i64: 1, 256, 16>}, {transform_indices = @transform_9, window_bounds = array<i64: 1, 64, 32>}]} {
    %cst = arith.constant 0.000000e+00 : f32
    %0 = vector.broadcast %cst : f32 to vector<256x16xf32>
    %c0 = arith.constant 0 : index
    %c0_0 = arith.constant 0 : index
    %c0_1 = arith.constant 0 : index
    %c0_2 = arith.constant 0 : index
    %1 = vector.load %arg1[%c0, %c0_0, %c0_1, %c0_2] : memref<1x18x18x4xf32, #tpu.memory_space<vmem>>, vector<1x16x16x4xf32>
    %2 = vector.shape_cast %1 : vector<1x16x16x4xf32> to vector<16x16x4xf32>
    %3 = vector.shape_cast %2 : vector<16x16x4xf32> to vector<256x4xf32>
    %4 = arith.truncf %3 : vector<256x4xf32> to vector<256x4xbf16>
    %c0_3 = arith.constant 0 : index
    %c0_4 = arith.constant 0 : index
    %5 = vector.load %arg2[%c0_3, %c0_4] : memref<36x16xbf16, #tpu.memory_space<vmem>>, vector<4x16xbf16>
    %cst_5 = arith.constant dense<0.000000e+00> : vector<256x16xf32>
    %6 = tpu.matmul %4, %5, %cst_5 {dimension_numbers = #tpu.dot_dimension_numbers<[1], [0], [0], [1], [0, 0, 1, 1], [], []>} : vector<256x4xbf16>, vector<4x16xbf16>, vector<256x16xf32> -> vector<256x16xf32>
    %7 = arith.addf %0, %6 : vector<256x16xf32>
    %c0_6 = arith.constant 0 : index
    %c0_7 = arith.constant 0 : index
    %c1 = arith.constant 1 : index
    %c0_8 = arith.constant 0 : index
    %8 = vector.load %arg1[%c0_6, %c0_7, %c1, %c0_8] : memref<1x18x18x4xf32, #tpu.memory_space<vmem>>, vector<1x16x16x4xf32>
    %9 = vector.shape_cast %8 : vector<1x16x16x4xf32> to vector<16x16x4xf32>
    %10 = vector.shape_cast %9 : vector<16x16x4xf32> to vector<256x4xf32>
    %11 = arith.truncf %10 : vector<256x4xf32> to vector<256x4xbf16>
    %c4 = arith.constant 4 : index
    %c0_9 = arith.constant 0 : index
    %12 = vector.load %arg2[%c4, %c0_9] : memref<36x16xbf16, #tpu.memory_space<vmem>>, vector<4x16xbf16>
    %cst_10 = arith.constant dense<0.000000e+00> : vector<256x16xf32>
    %13 = tpu.matmul %11, %12, %cst_10 {dimension_numbers = #tpu.dot_dimension_numbers<[1], [0], [0], [1], [0, 0, 1, 1], [], []>} : vector<256x4xbf16>, vector<4x16xbf16>, vector<256x16xf32> -> vector<256x16xf32>
    %14 = arith.addf %7, %13 : vector<256x16xf32>
    %c0_11 = arith.constant 0 : index
    %c0_12 = arith.constant 0 : index
    %c2 = arith.constant 2 : index
    %c0_13 = arith.constant 0 : index
    %15 = vector.load %arg1[%c0_11, %c0_12, %c2, %c0_13] : memref<1x18x18x4xf32, #tpu.memory_space<vmem>>, vector<1x16x16x4xf32>
    %16 = vector.shape_cast %15 : vector<1x16x16x4xf32> to vector<16x16x4xf32>
    %17 = vector.shape_cast %16 : vector<16x16x4xf32> to vector<256x4xf32>
    %18 = arith.truncf %17 : vector<256x4xf32> to vector<256x4xbf16>
    %c8 = arith.constant 8 : index
    %c0_14 = arith.constant 0 : index
    %19 = vector.load %arg2[%c8, %c0_14] : memref<36x16xbf16, #tpu.memory_space<vmem>>, vector<4x16xbf16>
    %cst_15 = arith.constant dense<0.000000e+00> : vector<256x16xf32>
    %20 = tpu.matmul %18, %19, %cst_15 {dimension_numbers = #tpu.dot_dimension_numbers<[1], [0], [0], [1], [0, 0, 1, 1], [], []>} : vector<256x4xbf16>, vector<4x16xbf16>, vector<256x16xf32> -> vector<256x16xf32>
    %21 = arith.addf %14, %20 : vector<256x16xf32>
    %c0_16 = arith.constant 0 : index
    %c1_17 = arith.constant 1 : index
    %c0_18 = arith.constant 0 : index
    %c0_19 = arith.constant 0 : index
    %22 = vector.load %arg1[%c0_16, %c1_17, %c0_18, %c0_19] : memref<1x18x18x4xf32, #tpu.memory_space<vmem>>, vector<1x16x16x4xf32>
    %23 = vector.shape_cast %22 : vector<1x16x16x4xf32> to vector<16x16x4xf32>
    %24 = vector.shape_cast %23 : vector<16x16x4xf32> to vector<256x4xf32>
    %25 = arith.truncf %24 : vector<256x4xf32> to vector<256x4xbf16>
    %c12 = arith.constant 12 : index
    %c0_20 = arith.constant 0 : index
    %26 = vector.load %arg2[%c12, %c0_20] : memref<36x16xbf16, #tpu.memory_space<vmem>>, vector<4x16xbf16>
    %cst_21 = arith.constant dense<0.000000e+00> : vector<256x16xf32>
    %27 = tpu.matmul %25, %26, %cst_21 {dimension_numbers = #tpu.dot_dimension_numbers<[1], [0], [0], [1], [0, 0, 1, 1], [], []>} : vector<256x4xbf16>, vector<4x16xbf16>, vector<256x16xf32> -> vector<256x16xf32>
    %28 = arith.addf %21, %27 : vector<256x16xf32>
    %c0_22 = arith.constant 0 : index
    %c1_23 = arith.constant 1 : index
    %c1_24 = arith.constant 1 : index
    %c0_25 = arith.constant 0 : index
    %29 = vector.load %arg1[%c0_22, %c1_23, %c1_24, %c0_25] : memref<1x18x18x4xf32, #tpu.memory_space<vmem>>, vector<1x16x16x4xf32>
    %30 = vector.shape_cast %29 : vector<1x16x16x4xf32> to vector<16x16x4xf32>
    %31 = vector.shape_cast %30 : vector<16x16x4xf32> to vector<256x4xf32>
    %32 = arith.truncf %31 : vector<256x4xf32> to vector<256x4xbf16>
    %c16 = arith.constant 16 : index
    %c0_26 = arith.constant 0 : index
    %33 = vector.load %arg2[%c16, %c0_26] : memref<36x16xbf16, #tpu.memory_space<vmem>>, vector<4x16xbf16>
    %cst_27 = arith.constant dense<0.000000e+00> : vector<256x16xf32>
    %34 = tpu.matmul %32, %33, %cst_27 {dimension_numbers = #tpu.dot_dimension_numbers<[1], [0], [0], [1], [0, 0, 1, 1], [], []>} : vector<256x4xbf16>, vector<4x16xbf16>, vector<256x16xf32> -> vector<256x16xf32>
    %35 = arith.addf %28, %34 : vector<256x16xf32>
    %c0_28 = arith.constant 0 : index
    %c1_29 = arith.constant 1 : index
    %c2_30 = arith.constant 2 : index
    %c0_31 = arith.constant 0 : index
    %36 = vector.load %arg1[%c0_28, %c1_29, %c2_30, %c0_31] : memref<1x18x18x4xf32, #tpu.memory_space<vmem>>, vector<1x16x16x4xf32>
    %37 = vector.shape_cast %36 : vector<1x16x16x4xf32> to vector<16x16x4xf32>
    %38 = vector.shape_cast %37 : vector<16x16x4xf32> to vector<256x4xf32>
    %39 = arith.truncf %38 : vector<256x4xf32> to vector<256x4xbf16>
    %c20 = arith.constant 20 : index
    %c0_32 = arith.constant 0 : index
    %40 = vector.load %arg2[%c20, %c0_32] : memref<36x16xbf16, #tpu.memory_space<vmem>>, vector<4x16xbf16>
    %cst_33 = arith.constant dense<0.000000e+00> : vector<256x16xf32>
    %41 = tpu.matmul %39, %40, %cst_33 {dimension_numbers = #tpu.dot_dimension_numbers<[1], [0], [0], [1], [0, 0, 1, 1], [], []>} : vector<256x4xbf16>, vector<4x16xbf16>, vector<256x16xf32> -> vector<256x16xf32>
    %42 = arith.addf %35, %41 : vector<256x16xf32>
    %c0_34 = arith.constant 0 : index
    %c2_35 = arith.constant 2 : index
    %c0_36 = arith.constant 0 : index
    %c0_37 = arith.constant 0 : index
    %43 = vector.load %arg1[%c0_34, %c2_35, %c0_36, %c0_37] : memref<1x18x18x4xf32, #tpu.memory_space<vmem>>, vector<1x16x16x4xf32>
    %44 = vector.shape_cast %43 : vector<1x16x16x4xf32> to vector<16x16x4xf32>
    %45 = vector.shape_cast %44 : vector<16x16x4xf32> to vector<256x4xf32>
    %46 = arith.truncf %45 : vector<256x4xf32> to vector<256x4xbf16>
    %c24 = arith.constant 24 : index
    %c0_38 = arith.constant 0 : index
    %47 = vector.load %arg2[%c24, %c0_38] : memref<36x16xbf16, #tpu.memory_space<vmem>>, vector<4x16xbf16>
    %cst_39 = arith.constant dense<0.000000e+00> : vector<256x16xf32>
    %48 = tpu.matmul %46, %47, %cst_39 {dimension_numbers = #tpu.dot_dimension_numbers<[1], [0], [0], [1], [0, 0, 1, 1], [], []>} : vector<256x4xbf16>, vector<4x16xbf16>, vector<256x16xf32> -> vector<256x16xf32>
    %49 = arith.addf %42, %48 : vector<256x16xf32>
    %c0_40 = arith.constant 0 : index
    %c2_41 = arith.constant 2 : index
    %c1_42 = arith.constant 1 : index
    %c0_43 = arith.constant 0 : index
    %50 = vector.load %arg1[%c0_40, %c2_41, %c1_42, %c0_43] : memref<1x18x18x4xf32, #tpu.memory_space<vmem>>, vector<1x16x16x4xf32>
    %51 = vector.shape_cast %50 : vector<1x16x16x4xf32> to vector<16x16x4xf32>
    %52 = vector.shape_cast %51 : vector<16x16x4xf32> to vector<256x4xf32>
    %53 = arith.truncf %52 : vector<256x4xf32> to vector<256x4xbf16>
    %c28 = arith.constant 28 : index
    %c0_44 = arith.constant 0 : index
    %54 = vector.load %arg2[%c28, %c0_44] : memref<36x16xbf16, #tpu.memory_space<vmem>>, vector<4x16xbf16>
    %cst_45 = arith.constant dense<0.000000e+00> : vector<256x16xf32>
    %55 = tpu.matmul %53, %54, %cst_45 {dimension_numbers = #tpu.dot_dimension_numbers<[1], [0], [0], [1], [0, 0, 1, 1], [], []>} : vector<256x4xbf16>, vector<4x16xbf16>, vector<256x16xf32> -> vector<256x16xf32>
    %56 = arith.addf %49, %55 : vector<256x16xf32>
    %c0_46 = arith.constant 0 : index
    %c2_47 = arith.constant 2 : index
    %c2_48 = arith.constant 2 : index
    %c0_49 = arith.constant 0 : index
    %57 = vector.load %arg1[%c0_46, %c2_47, %c2_48, %c0_49] : memref<1x18x18x4xf32, #tpu.memory_space<vmem>>, vector<1x16x16x4xf32>
    %58 = vector.shape_cast %57 : vector<1x16x16x4xf32> to vector<16x16x4xf32>
    %59 = vector.shape_cast %58 : vector<16x16x4xf32> to vector<256x4xf32>
    %60 = arith.truncf %59 : vector<256x4xf32> to vector<256x4xbf16>
    %c32 = arith.constant 32 : index
    %c0_50 = arith.constant 0 : index
    %61 = vector.load %arg2[%c32, %c0_50] : memref<36x16xbf16, #tpu.memory_space<vmem>>, vector<4x16xbf16>
    %cst_51 = arith.constant dense<0.000000e+00> : vector<256x16xf32>
    %62 = tpu.matmul %60, %61, %cst_51 {dimension_numbers = #tpu.dot_dimension_numbers<[1], [0], [0], [1], [0, 0, 1, 1], [], []>} : vector<256x4xbf16>, vector<4x16xbf16>, vector<256x16xf32> -> vector<256x16xf32>
    %63 = arith.addf %56, %62 : vector<256x16xf32>
    %c0_52 = arith.constant 0 : index
    %c0_53 = arith.constant 0 : index
    %64 = vector.load %arg3[%c0_52, %c0_53] : memref<1x16xf32, #tpu.memory_space<vmem>>, vector<1x16xf32>
    %65 = vector.broadcast %64 : vector<1x16xf32> to vector<256x16xf32>
    %66 = arith.addf %63, %65 : vector<256x16xf32>
    %cst_54 = arith.constant 0.000000e+00 : f32
    %67 = vector.broadcast %cst_54 : f32 to vector<256x16xf32>
    %68 = arith.maximumf %66, %67 : vector<256x16xf32>
    %c0_55 = arith.constant 0 : index
    %c0_56 = arith.constant 0 : index
    %c0_57 = arith.constant 0 : index
    %69 = vector.load %arg9[%c0_55, %c0_56, %c0_57] : memref<1x256x16xf32, #tpu.memory_space<vmem>>, vector<1x256x16xf32>
    %70 = vector.shape_cast %69 : vector<1x256x16xf32> to vector<256x16xf32>
    %71 = vector.shape_cast %68 : vector<256x16xf32> to vector<1x256x16xf32>
    tpu.vector_store %arg9[%c0_55, %c0_56, %c0_57], %71 {strides = array<i32>} : memref<1x256x16xf32, #tpu.memory_space<vmem>>, vector<1x256x16xf32>,
    %cst_58 = arith.constant 0.000000e+00 : f32
    %72 = vector.broadcast %cst_58 : f32 to vector<18x18x16xf32>
    %c0_59 = arith.constant 0 : index
    %c0_60 = arith.constant 0 : index
    %c0_61 = arith.constant 0 : index
    %73 = vector.load %arg11[%c0_59, %c0_60, %c0_61] : memref<18x18x16xf32, #tpu.memory_space<vmem>>, vector<18x18x16xf32>
    tpu.vector_store %arg11[%c0_59, %c0_60, %c0_61], %72 {strides = array<i32>} : memref<18x18x16xf32, #tpu.memory_space<vmem>>, vector<18x18x16xf32>,
    %74 = vector.shape_cast %68 : vector<256x16xf32> to vector<16x16x16xf32>
    %c1_62 = arith.constant 1 : index
    %c1_63 = arith.constant 1 : index
    %c0_64 = arith.constant 0 : index
    %75 = vector.load %arg11[%c1_62, %c1_63, %c0_64] : memref<18x18x16xf32, #tpu.memory_space<vmem>>, vector<16x16x16xf32>
    tpu.vector_store %arg11[%c1_62, %c1_63, %c0_64], %74 {strides = array<i32>} : memref<18x18x16xf32, #tpu.memory_space<vmem>>, vector<16x16x16xf32>,
    %cst_65 = arith.constant 0.000000e+00 : f32
    %76 = vector.broadcast %cst_65 : f32 to vector<256x32xf32>
    %c0_66 = arith.constant 0 : index
    %c0_67 = arith.constant 0 : index
    %c0_68 = arith.constant 0 : index
    %77 = vector.load %arg11[%c0_66, %c0_67, %c0_68] : memref<18x18x16xf32, #tpu.memory_space<vmem>>, vector<16x16x16xf32>
    %78 = vector.shape_cast %77 : vector<16x16x16xf32> to vector<256x16xf32>
    %79 = arith.truncf %78 : vector<256x16xf32> to vector<256x16xbf16>
    %c0_69 = arith.constant 0 : index
    %c0_70 = arith.constant 0 : index
    %80 = vector.load %arg4[%c0_69, %c0_70] : memref<144x32xbf16, #tpu.memory_space<vmem>>, vector<16x32xbf16>
    %cst_71 = arith.constant dense<0.000000e+00> : vector<256x32xf32>
    %81 = tpu.matmul %79, %80, %cst_71 {dimension_numbers = #tpu.dot_dimension_numbers<[1], [0], [0], [1], [0, 0, 1, 1], [], []>} : vector<256x16xbf16>, vector<16x32xbf16>, vector<256x32xf32> -> vector<256x32xf32>
    %82 = arith.addf %76, %81 : vector<256x32xf32>
    %c0_72 = arith.constant 0 : index
    %c1_73 = arith.constant 1 : index
    %c0_74 = arith.constant 0 : index
    %83 = vector.load %arg11[%c0_72, %c1_73, %c0_74] : memref<18x18x16xf32, #tpu.memory_space<vmem>>, vector<16x16x16xf32>
    %84 = vector.shape_cast %83 : vector<16x16x16xf32> to vector<256x16xf32>
    %85 = arith.truncf %84 : vector<256x16xf32> to vector<256x16xbf16>
    %c16_75 = arith.constant 16 : index
    %c0_76 = arith.constant 0 : index
    %86 = vector.load %arg4[%c16_75, %c0_76] : memref<144x32xbf16, #tpu.memory_space<vmem>>, vector<16x32xbf16>
    %cst_77 = arith.constant dense<0.000000e+00> : vector<256x32xf32>
    %87 = tpu.matmul %85, %86, %cst_77 {dimension_numbers = #tpu.dot_dimension_numbers<[1], [0], [0], [1], [0, 0, 1, 1], [], []>} : vector<256x16xbf16>, vector<16x32xbf16>, vector<256x32xf32> -> vector<256x32xf32>
    %88 = arith.addf %82, %87 : vector<256x32xf32>
    %c0_78 = arith.constant 0 : index
    %c2_79 = arith.constant 2 : index
    %c0_80 = arith.constant 0 : index
    %89 = vector.load %arg11[%c0_78, %c2_79, %c0_80] : memref<18x18x16xf32, #tpu.memory_space<vmem>>, vector<16x16x16xf32>
    %90 = vector.shape_cast %89 : vector<16x16x16xf32> to vector<256x16xf32>
    %91 = arith.truncf %90 : vector<256x16xf32> to vector<256x16xbf16>
    %c32_81 = arith.constant 32 : index
    %c0_82 = arith.constant 0 : index
    %92 = vector.load %arg4[%c32_81, %c0_82] : memref<144x32xbf16, #tpu.memory_space<vmem>>, vector<16x32xbf16>
    %cst_83 = arith.constant dense<0.000000e+00> : vector<256x32xf32>
    %93 = tpu.matmul %91, %92, %cst_83 {dimension_numbers = #tpu.dot_dimension_numbers<[1], [0], [0], [1], [0, 0, 1, 1], [], []>} : vector<256x16xbf16>, vector<16x32xbf16>, vector<256x32xf32> -> vector<256x32xf32>
    %94 = arith.addf %88, %93 : vector<256x32xf32>
    %c1_84 = arith.constant 1 : index
    %c0_85 = arith.constant 0 : index
    %c0_86 = arith.constant 0 : index
    %95 = vector.load %arg11[%c1_84, %c0_85, %c0_86] : memref<18x18x16xf32, #tpu.memory_space<vmem>>, vector<16x16x16xf32>
    %96 = vector.shape_cast %95 : vector<16x16x16xf32> to vector<256x16xf32>
    %97 = arith.truncf %96 : vector<256x16xf32> to vector<256x16xbf16>
    %c48 = arith.constant 48 : index
    %c0_87 = arith.constant 0 : index
    %98 = vector.load %arg4[%c48, %c0_87] : memref<144x32xbf16, #tpu.memory_space<vmem>>, vector<16x32xbf16>
    %cst_88 = arith.constant dense<0.000000e+00> : vector<256x32xf32>
    %99 = tpu.matmul %97, %98, %cst_88 {dimension_numbers = #tpu.dot_dimension_numbers<[1], [0], [0], [1], [0, 0, 1, 1], [], []>} : vector<256x16xbf16>, vector<16x32xbf16>, vector<256x32xf32> -> vector<256x32xf32>
    %100 = arith.addf %94, %99 : vector<256x32xf32>
    %c1_89 = arith.constant 1 : index
    %c1_90 = arith.constant 1 : index
    %c0_91 = arith.constant 0 : index
    %101 = vector.load %arg11[%c1_89, %c1_90, %c0_91] : memref<18x18x16xf32, #tpu.memory_space<vmem>>, vector<16x16x16xf32>
    %102 = vector.shape_cast %101 : vector<16x16x16xf32> to vector<256x16xf32>
    %103 = arith.truncf %102 : vector<256x16xf32> to vector<256x16xbf16>
    %c64 = arith.constant 64 : index
    %c0_92 = arith.constant 0 : index
    %104 = vector.load %arg4[%c64, %c0_92] : memref<144x32xbf16, #tpu.memory_space<vmem>>, vector<16x32xbf16>
    %cst_93 = arith.constant dense<0.000000e+00> : vector<256x32xf32>
    %105 = tpu.matmul %103, %104, %cst_93 {dimension_numbers = #tpu.dot_dimension_numbers<[1], [0], [0], [1], [0, 0, 1, 1], [], []>} : vector<256x16xbf16>, vector<16x32xbf16>, vector<256x32xf32> -> vector<256x32xf32>
    %106 = arith.addf %100, %105 : vector<256x32xf32>
    %c1_94 = arith.constant 1 : index
    %c2_95 = arith.constant 2 : index
    %c0_96 = arith.constant 0 : index
    %107 = vector.load %arg11[%c1_94, %c2_95, %c0_96] : memref<18x18x16xf32, #tpu.memory_space<vmem>>, vector<16x16x16xf32>
    %108 = vector.shape_cast %107 : vector<16x16x16xf32> to vector<256x16xf32>
    %109 = arith.truncf %108 : vector<256x16xf32> to vector<256x16xbf16>
    %c80 = arith.constant 80 : index
    %c0_97 = arith.constant 0 : index
    %110 = vector.load %arg4[%c80, %c0_97] : memref<144x32xbf16, #tpu.memory_space<vmem>>, vector<16x32xbf16>
    %cst_98 = arith.constant dense<0.000000e+00> : vector<256x32xf32>
    %111 = tpu.matmul %109, %110, %cst_98 {dimension_numbers = #tpu.dot_dimension_numbers<[1], [0], [0], [1], [0, 0, 1, 1], [], []>} : vector<256x16xbf16>, vector<16x32xbf16>, vector<256x32xf32> -> vector<256x32xf32>
    %112 = arith.addf %106, %111 : vector<256x32xf32>
    %c2_99 = arith.constant 2 : index
    %c0_100 = arith.constant 0 : index
    %c0_101 = arith.constant 0 : index
    %113 = vector.load %arg11[%c2_99, %c0_100, %c0_101] : memref<18x18x16xf32, #tpu.memory_space<vmem>>, vector<16x16x16xf32>
    %114 = vector.shape_cast %113 : vector<16x16x16xf32> to vector<256x16xf32>
    %115 = arith.truncf %114 : vector<256x16xf32> to vector<256x16xbf16>
    %c96 = arith.constant 96 : index
    %c0_102 = arith.constant 0 : index
    %116 = vector.load %arg4[%c96, %c0_102] : memref<144x32xbf16, #tpu.memory_space<vmem>>, vector<16x32xbf16>
    %cst_103 = arith.constant dense<0.000000e+00> : vector<256x32xf32>
    %117 = tpu.matmul %115, %116, %cst_103 {dimension_numbers = #tpu.dot_dimension_numbers<[1], [0], [0], [1], [0, 0, 1, 1], [], []>} : vector<256x16xbf16>, vector<16x32xbf16>, vector<256x32xf32> -> vector<256x32xf32>
    %118 = arith.addf %112, %117 : vector<256x32xf32>
    %c2_104 = arith.constant 2 : index
    %c1_105 = arith.constant 1 : index
    %c0_106 = arith.constant 0 : index
    %119 = vector.load %arg11[%c2_104, %c1_105, %c0_106] : memref<18x18x16xf32, #tpu.memory_space<vmem>>, vector<16x16x16xf32>
    %120 = vector.shape_cast %119 : vector<16x16x16xf32> to vector<256x16xf32>
    %121 = arith.truncf %120 : vector<256x16xf32> to vector<256x16xbf16>
    %c112 = arith.constant 112 : index
    %c0_107 = arith.constant 0 : index
    %122 = vector.load %arg4[%c112, %c0_107] : memref<144x32xbf16, #tpu.memory_space<vmem>>, vector<16x32xbf16>
    %cst_108 = arith.constant dense<0.000000e+00> : vector<256x32xf32>
    %123 = tpu.matmul %121, %122, %cst_108 {dimension_numbers = #tpu.dot_dimension_numbers<[1], [0], [0], [1], [0, 0, 1, 1], [], []>} : vector<256x16xbf16>, vector<16x32xbf16>, vector<256x32xf32> -> vector<256x32xf32>
    %124 = arith.addf %118, %123 : vector<256x32xf32>
    %c2_109 = arith.constant 2 : index
    %c2_110 = arith.constant 2 : index
    %c0_111 = arith.constant 0 : index
    %125 = vector.load %arg11[%c2_109, %c2_110, %c0_111] : memref<18x18x16xf32, #tpu.memory_space<vmem>>, vector<16x16x16xf32>
    %126 = vector.shape_cast %125 : vector<16x16x16xf32> to vector<256x16xf32>
    %127 = arith.truncf %126 : vector<256x16xf32> to vector<256x16xbf16>
    %c128 = arith.constant 128 : index
    %c0_112 = arith.constant 0 : index
    %128 = vector.load %arg4[%c128, %c0_112] : memref<144x32xbf16, #tpu.memory_space<vmem>>, vector<16x32xbf16>
    %cst_113 = arith.constant dense<0.000000e+00> : vector<256x32xf32>
    %129 = tpu.matmul %127, %128, %cst_113 {dimension_numbers = #tpu.dot_dimension_numbers<[1], [0], [0], [1], [0, 0, 1, 1], [], []>} : vector<256x16xbf16>, vector<16x32xbf16>, vector<256x32xf32> -> vector<256x32xf32>
    %130 = arith.addf %124, %129 : vector<256x32xf32>
    %c0_114 = arith.constant 0 : index
    %c0_115 = arith.constant 0 : index
    %131 = vector.load %arg6[%c0_114, %c0_115] : memref<64x256xf32, #tpu.memory_space<vmem>>, vector<64x256xf32>
    %cst_116 = arith.constant dense<0.000000e+00> : vector<64x32xf32>
    %132 = tpu.matmul %131, %130, %cst_116 {dimension_numbers = #tpu.dot_dimension_numbers<[1], [0], [0], [1], [0, 0, 1, 1], [], []>} : vector<64x256xf32>, vector<256x32xf32>, vector<64x32xf32> -> vector<64x32xf32>
    %c0_117 = arith.constant 0 : index
    %c0_118 = arith.constant 0 : index
    %133 = vector.load %arg5[%c0_117, %c0_118] : memref<1x32xf32, #tpu.memory_space<vmem>>, vector<1x32xf32>
    %134 = vector.broadcast %133 : vector<1x32xf32> to vector<64x32xf32>
    %135 = arith.addf %132, %134 : vector<64x32xf32>
    %cst_119 = arith.constant 0.000000e+00 : f32
    %136 = vector.broadcast %cst_119 : f32 to vector<64x32xf32>
    %137 = arith.maximumf %135, %136 : vector<64x32xf32>
    %cst_120 = arith.constant 0.000000e+00 : f32
    %138 = vector.broadcast %cst_120 : f32 to vector<10x10x32xf32>
    %c0_121 = arith.constant 0 : index
    %c0_122 = arith.constant 0 : index
    %c0_123 = arith.constant 0 : index
    %139 = vector.load %arg12[%c0_121, %c0_122, %c0_123] : memref<10x10x32xf32, #tpu.memory_space<vmem>>, vector<10x10x32xf32>
    tpu.vector_store %arg12[%c0_121, %c0_122, %c0_123], %138 {strides = array<i32>} : memref<10x10x32xf32, #tpu.memory_space<vmem>>, vector<10x10x32xf32>,
    %140 = vector.shape_cast %137 : vector<64x32xf32> to vector<8x8x32xf32>
    %c1_124 = arith.constant 1 : index
    %c1_125 = arith.constant 1 : index
    %c0_126 = arith.constant 0 : index
    %141 = vector.load %arg12[%c1_124, %c1_125, %c0_126] : memref<10x10x32xf32, #tpu.memory_space<vmem>>, vector<8x8x32xf32>
    tpu.vector_store %arg12[%c1_124, %c1_125, %c0_126], %140 {strides = array<i32>} : memref<10x10x32xf32, #tpu.memory_space<vmem>>, vector<8x8x32xf32>,
    %cst_127 = arith.constant 0.000000e+00 : f32
    %142 = vector.broadcast %cst_127 : f32 to vector<64x32xf32>
    %c0_128 = arith.constant 0 : index
    %c0_129 = arith.constant 0 : index
    %c0_130 = arith.constant 0 : index
    %143 = vector.load %arg12[%c0_128, %c0_129, %c0_130] : memref<10x10x32xf32, #tpu.memory_space<vmem>>, vector<8x8x32xf32>
    %144 = vector.shape_cast %143 : vector<8x8x32xf32> to vector<64x32xf32>
    %145 = arith.truncf %144 : vector<64x32xf32> to vector<64x32xbf16>
    %c0_131 = arith.constant 0 : index
    %c0_132 = arith.constant 0 : index
    %146 = vector.load %arg7[%c0_131, %c0_132] : memref<288x32xbf16, #tpu.memory_space<vmem>>, vector<32x32xbf16>
    %cst_133 = arith.constant dense<0.000000e+00> : vector<64x32xf32>
    %147 = tpu.matmul %145, %146, %cst_133 {dimension_numbers = #tpu.dot_dimension_numbers<[1], [0], [0], [1], [0, 0, 1, 1], [], []>} : vector<64x32xbf16>, vector<32x32xbf16>, vector<64x32xf32> -> vector<64x32xf32>
    %148 = arith.addf %142, %147 : vector<64x32xf32>
    %c0_134 = arith.constant 0 : index
    %c1_135 = arith.constant 1 : index
    %c0_136 = arith.constant 0 : index
    %149 = vector.load %arg12[%c0_134, %c1_135, %c0_136] : memref<10x10x32xf32, #tpu.memory_space<vmem>>, vector<8x8x32xf32>
    %150 = vector.shape_cast %149 : vector<8x8x32xf32> to vector<64x32xf32>
    %151 = arith.truncf %150 : vector<64x32xf32> to vector<64x32xbf16>
    %c32_137 = arith.constant 32 : index
    %c0_138 = arith.constant 0 : index
    %152 = vector.load %arg7[%c32_137, %c0_138] : memref<288x32xbf16, #tpu.memory_space<vmem>>, vector<32x32xbf16>
    %cst_139 = arith.constant dense<0.000000e+00> : vector<64x32xf32>
    %153 = tpu.matmul %151, %152, %cst_139 {dimension_numbers = #tpu.dot_dimension_numbers<[1], [0], [0], [1], [0, 0, 1, 1], [], []>} : vector<64x32xbf16>, vector<32x32xbf16>, vector<64x32xf32> -> vector<64x32xf32>
    %154 = arith.addf %148, %153 : vector<64x32xf32>
    %c0_140 = arith.constant 0 : index
    %c2_141 = arith.constant 2 : index
    %c0_142 = arith.constant 0 : index
    %155 = vector.load %arg12[%c0_140, %c2_141, %c0_142] : memref<10x10x32xf32, #tpu.memory_space<vmem>>, vector<8x8x32xf32>
    %156 = vector.shape_cast %155 : vector<8x8x32xf32> to vector<64x32xf32>
    %157 = arith.truncf %156 : vector<64x32xf32> to vector<64x32xbf16>
    %c64_143 = arith.constant 64 : index
    %c0_144 = arith.constant 0 : index
    %158 = vector.load %arg7[%c64_143, %c0_144] : memref<288x32xbf16, #tpu.memory_space<vmem>>, vector<32x32xbf16>
    %cst_145 = arith.constant dense<0.000000e+00> : vector<64x32xf32>
    %159 = tpu.matmul %157, %158, %cst_145 {dimension_numbers = #tpu.dot_dimension_numbers<[1], [0], [0], [1], [0, 0, 1, 1], [], []>} : vector<64x32xbf16>, vector<32x32xbf16>, vector<64x32xf32> -> vector<64x32xf32>
    %160 = arith.addf %154, %159 : vector<64x32xf32>
    %c1_146 = arith.constant 1 : index
    %c0_147 = arith.constant 0 : index
    %c0_148 = arith.constant 0 : index
    %161 = vector.load %arg12[%c1_146, %c0_147, %c0_148] : memref<10x10x32xf32, #tpu.memory_space<vmem>>, vector<8x8x32xf32>
    %162 = vector.shape_cast %161 : vector<8x8x32xf32> to vector<64x32xf32>
    %163 = arith.truncf %162 : vector<64x32xf32> to vector<64x32xbf16>
    %c96_149 = arith.constant 96 : index
    %c0_150 = arith.constant 0 : index
    %164 = vector.load %arg7[%c96_149, %c0_150] : memref<288x32xbf16, #tpu.memory_space<vmem>>, vector<32x32xbf16>
    %cst_151 = arith.constant dense<0.000000e+00> : vector<64x32xf32>
    %165 = tpu.matmul %163, %164, %cst_151 {dimension_numbers = #tpu.dot_dimension_numbers<[1], [0], [0], [1], [0, 0, 1, 1], [], []>} : vector<64x32xbf16>, vector<32x32xbf16>, vector<64x32xf32> -> vector<64x32xf32>
    %166 = arith.addf %160, %165 : vector<64x32xf32>
    %c1_152 = arith.constant 1 : index
    %c1_153 = arith.constant 1 : index
    %c0_154 = arith.constant 0 : index
    %167 = vector.load %arg12[%c1_152, %c1_153, %c0_154] : memref<10x10x32xf32, #tpu.memory_space<vmem>>, vector<8x8x32xf32>
    %168 = vector.shape_cast %167 : vector<8x8x32xf32> to vector<64x32xf32>
    %169 = arith.truncf %168 : vector<64x32xf32> to vector<64x32xbf16>
    %c128_155 = arith.constant 128 : index
    %c0_156 = arith.constant 0 : index
    %170 = vector.load %arg7[%c128_155, %c0_156] : memref<288x32xbf16, #tpu.memory_space<vmem>>, vector<32x32xbf16>
    %cst_157 = arith.constant dense<0.000000e+00> : vector<64x32xf32>
    %171 = tpu.matmul %169, %170, %cst_157 {dimension_numbers = #tpu.dot_dimension_numbers<[1], [0], [0], [1], [0, 0, 1, 1], [], []>} : vector<64x32xbf16>, vector<32x32xbf16>, vector<64x32xf32> -> vector<64x32xf32>
    %172 = arith.addf %166, %171 : vector<64x32xf32>
    %c1_158 = arith.constant 1 : index
    %c2_159 = arith.constant 2 : index
    %c0_160 = arith.constant 0 : index
    %173 = vector.load %arg12[%c1_158, %c2_159, %c0_160] : memref<10x10x32xf32, #tpu.memory_space<vmem>>, vector<8x8x32xf32>
    %174 = vector.shape_cast %173 : vector<8x8x32xf32> to vector<64x32xf32>
    %175 = arith.truncf %174 : vector<64x32xf32> to vector<64x32xbf16>
    %c160 = arith.constant 160 : index
    %c0_161 = arith.constant 0 : index
    %176 = vector.load %arg7[%c160, %c0_161] : memref<288x32xbf16, #tpu.memory_space<vmem>>, vector<32x32xbf16>
    %cst_162 = arith.constant dense<0.000000e+00> : vector<64x32xf32>
    %177 = tpu.matmul %175, %176, %cst_162 {dimension_numbers = #tpu.dot_dimension_numbers<[1], [0], [0], [1], [0, 0, 1, 1], [], []>} : vector<64x32xbf16>, vector<32x32xbf16>, vector<64x32xf32> -> vector<64x32xf32>
    %178 = arith.addf %172, %177 : vector<64x32xf32>
    %c2_163 = arith.constant 2 : index
    %c0_164 = arith.constant 0 : index
    %c0_165 = arith.constant 0 : index
    %179 = vector.load %arg12[%c2_163, %c0_164, %c0_165] : memref<10x10x32xf32, #tpu.memory_space<vmem>>, vector<8x8x32xf32>
    %180 = vector.shape_cast %179 : vector<8x8x32xf32> to vector<64x32xf32>
    %181 = arith.truncf %180 : vector<64x32xf32> to vector<64x32xbf16>
    %c192 = arith.constant 192 : index
    %c0_166 = arith.constant 0 : index
    %182 = vector.load %arg7[%c192, %c0_166] : memref<288x32xbf16, #tpu.memory_space<vmem>>, vector<32x32xbf16>
    %cst_167 = arith.constant dense<0.000000e+00> : vector<64x32xf32>
    %183 = tpu.matmul %181, %182, %cst_167 {dimension_numbers = #tpu.dot_dimension_numbers<[1], [0], [0], [1], [0, 0, 1, 1], [], []>} : vector<64x32xbf16>, vector<32x32xbf16>, vector<64x32xf32> -> vector<64x32xf32>
    %184 = arith.addf %178, %183 : vector<64x32xf32>
    %c2_168 = arith.constant 2 : index
    %c1_169 = arith.constant 1 : index
    %c0_170 = arith.constant 0 : index
    %185 = vector.load %arg12[%c2_168, %c1_169, %c0_170] : memref<10x10x32xf32, #tpu.memory_space<vmem>>, vector<8x8x32xf32>
    %186 = vector.shape_cast %185 : vector<8x8x32xf32> to vector<64x32xf32>
    %187 = arith.truncf %186 : vector<64x32xf32> to vector<64x32xbf16>
    %c224 = arith.constant 224 : index
    %c0_171 = arith.constant 0 : index
    %188 = vector.load %arg7[%c224, %c0_171] : memref<288x32xbf16, #tpu.memory_space<vmem>>, vector<32x32xbf16>
    %cst_172 = arith.constant dense<0.000000e+00> : vector<64x32xf32>
    %189 = tpu.matmul %187, %188, %cst_172 {dimension_numbers = #tpu.dot_dimension_numbers<[1], [0], [0], [1], [0, 0, 1, 1], [], []>} : vector<64x32xbf16>, vector<32x32xbf16>, vector<64x32xf32> -> vector<64x32xf32>
    %190 = arith.addf %184, %189 : vector<64x32xf32>
    %c2_173 = arith.constant 2 : index
    %c2_174 = arith.constant 2 : index
    %c0_175 = arith.constant 0 : index
    %191 = vector.load %arg12[%c2_173, %c2_174, %c0_175] : memref<10x10x32xf32, #tpu.memory_space<vmem>>, vector<8x8x32xf32>
    %192 = vector.shape_cast %191 : vector<8x8x32xf32> to vector<64x32xf32>
    %193 = arith.truncf %192 : vector<64x32xf32> to vector<64x32xbf16>
    %c256 = arith.constant 256 : index
    %c0_176 = arith.constant 0 : index
    %194 = vector.load %arg7[%c256, %c0_176] : memref<288x32xbf16, #tpu.memory_space<vmem>>, vector<32x32xbf16>
    %cst_177 = arith.constant dense<0.000000e+00> : vector<64x32xf32>
    %195 = tpu.matmul %193, %194, %cst_177 {dimension_numbers = #tpu.dot_dimension_numbers<[1], [0], [0], [1], [0, 0, 1, 1], [], []>} : vector<64x32xbf16>, vector<32x32xbf16>, vector<64x32xf32> -> vector<64x32xf32>
    %196 = arith.addf %190, %195 : vector<64x32xf32>
    %c0_178 = arith.constant 0 : index
    %c0_179 = arith.constant 0 : index
    %197 = vector.load %arg8[%c0_178, %c0_179] : memref<1x32xf32, #tpu.memory_space<vmem>>, vector<1x32xf32>
    %198 = vector.broadcast %197 : vector<1x32xf32> to vector<64x32xf32>
    %199 = arith.addf %196, %198 : vector<64x32xf32>
    %cst_180 = arith.constant 0.000000e+00 : f32
    %200 = vector.broadcast %cst_180 : f32 to vector<64x32xf32>
    %201 = arith.maximumf %199, %200 : vector<64x32xf32>
    %c0_181 = arith.constant 0 : index
    %c0_182 = arith.constant 0 : index
    %c0_183 = arith.constant 0 : index
    %202 = vector.load %arg10[%c0_181, %c0_182, %c0_183] : memref<1x64x32xf32, #tpu.memory_space<vmem>>, vector<1x64x32xf32>
    %203 = vector.shape_cast %202 : vector<1x64x32xf32> to vector<64x32xf32>
    %204 = vector.shape_cast %201 : vector<64x32xf32> to vector<1x64x32xf32>
    tpu.vector_store %arg10[%c0_181, %c0_182, %c0_183], %204 {strides = array<i32>} : memref<1x64x32xf32, #tpu.memory_space<vmem>>, vector<1x64x32xf32>,
    return
  }
  func.func @transform_0(%arg0: i32) -> (i32, i32, i32, i32) {
    %c0_i32 = arith.constant 0 : i32
    %c0_i32_0 = arith.constant 0 : i32
    %c0_i32_1 = arith.constant 0 : i32
    %c0_i32_2 = arith.constant 0 : i32
    return %arg0, %c0_i32, %c0_i32_0, %c0_i32_1 : i32, i32, i32, i32
  }
  func.func @transform_1(%arg0: i32) -> (i32, i32) {
    %c0_i32 = arith.constant 0 : i32
    %c0_i32_0 = arith.constant 0 : i32
    %c0_i32_1 = arith.constant 0 : i32
    return %c0_i32, %c0_i32_0 : i32, i32
  }
  func.func @transform_2(%arg0: i32) -> (i32, i32) {
    %c0_i32 = arith.constant 0 : i32
    %c0_i32_0 = arith.constant 0 : i32
    %c0_i32_1 = arith.constant 0 : i32
    return %c0_i32, %c0_i32_0 : i32, i32
  }
  func.func @transform_3(%arg0: i32) -> (i32, i32) {
    %c0_i32 = arith.constant 0 : i32
    %c0_i32_0 = arith.constant 0 : i32
    %c0_i32_1 = arith.constant 0 : i32
    return %c0_i32, %c0_i32_0 : i32, i32
  }
  func.func @transform_4(%arg0: i32) -> (i32, i32) {
    %c0_i32 = arith.constant 0 : i32
    %c0_i32_0 = arith.constant 0 : i32
    %c0_i32_1 = arith.constant 0 : i32
    return %c0_i32, %c0_i32_0 : i32, i32
  }
  func.func @transform_5(%arg0: i32) -> (i32, i32) {
    %c0_i32 = arith.constant 0 : i32
    %c0_i32_0 = arith.constant 0 : i32
    %c0_i32_1 = arith.constant 0 : i32
    return %c0_i32, %c0_i32_0 : i32, i32
  }
  func.func @transform_6(%arg0: i32) -> (i32, i32) {
    %c0_i32 = arith.constant 0 : i32
    %c0_i32_0 = arith.constant 0 : i32
    %c0_i32_1 = arith.constant 0 : i32
    return %c0_i32, %c0_i32_0 : i32, i32
  }
  func.func @transform_7(%arg0: i32) -> (i32, i32) {
    %c0_i32 = arith.constant 0 : i32
    %c0_i32_0 = arith.constant 0 : i32
    %c0_i32_1 = arith.constant 0 : i32
    return %c0_i32, %c0_i32_0 : i32, i32
  }
  func.func @transform_8(%arg0: i32) -> (i32, i32, i32) {
    %c0_i32 = arith.constant 0 : i32
    %c0_i32_0 = arith.constant 0 : i32
    %c0_i32_1 = arith.constant 0 : i32
    return %arg0, %c0_i32, %c0_i32_0 : i32, i32, i32
  }
  func.func @transform_9(%arg0: i32) -> (i32, i32, i32) {
    %c0_i32 = arith.constant 0 : i32
    %c0_i32_0 = arith.constant 0 : i32
    %c0_i32_1 = arith.constant 0 : i32
    return %arg0, %c0_i32, %c0_i32_0 : i32, i32, i32
  }
}

</mosaic_0001>

<llo_original>
// kernel: forward.1
$region0: #{forward.1}
  #allocation0 [shape = 'u32[]', space=smem, size = 0x4, offset = 0x4, fixed_abs, tag = 'smem constant byte address 0x4 - core index']
  #allocation1 [shape = 'u32[144,128]{1,0:T(1,128)}', space=vmem, size = 0x12000, scoped, tag = 'internal scratch']
  #allocation2 [shape = 'f32[18,18,16]{2,1,0:T(8,128)}', space=vmem, size = 0x36000, scoped, tag = 'scratch operand']
  #allocation3 [shape = 'f32[10,10,32]{2,1,0:T(8,128)}', space=vmem, size = 0x14000, scoped, tag = 'scratch operand']
  %s0 = inlined_call_operand.vmem [shape: f32[2,18,18,4], index: 0, kind: input, shape index: {}]
  %s1 = inlined_call_operand.vmem [shape: bf16[36,16], index: 1, kind: input, shape index: {}]
  %s2 = inlined_call_operand.vmem [shape: f32[1,16], index: 2, kind: input, shape index: {}]
  %s3 = inlined_call_operand.vmem [shape: bf16[144,32], index: 3, kind: input, shape index: {}]
  %s4 = inlined_call_operand.vmem [shape: f32[1,32], index: 4, kind: input, shape index: {}]
  %s5 = inlined_call_operand.vmem [shape: f32[64,256], index: 5, kind: input, shape index: {}]
  %s6 = inlined_call_operand.vmem [shape: bf16[288,32], index: 6, kind: input, shape index: {}]
  %s7 = inlined_call_operand.vmem [shape: f32[1,32], index: 7, kind: input, shape index: {}]
  %s8 = inlined_call_operand.vmem [shape: f32[2,256,16], index: 8, kind: output, shape index: {0}]
  %s9 = inlined_call_operand.hbm [shape: f32[2,64,32], index: 9, kind: output, shape index: {1}]
  %10 = xla_tuple %s8, %s9
  %s11 = sld [smem:[#allocation0]]
  $region73: #{forward.1} parent=0
    _
  %s13 = ssub.s32 1, %s11
  %s14 = scalar_select 0, %s13, %s11
  $region1: #{forward.1} parent=0
    #allocation4 [shape = 'u8[65536]{0}', space=vmem, size = 0x10000, scoped, tag = 'output window, operand 1']
    #allocation5 [shape = 's32[2]{0}', space=sflag, size = 0x8, scoped, tag = 'scoped memory for forward.1']
    %15 = vsyncpa [#allocation5], 0
    %s16 = scalar_lea.sflag [#allocation5], 1
    %17 = vsyncpa %s16, 0
    loop: start=0, step=1, limit=4
    $region2: #{forward.1} parent=1 // loop_pre_header
      _
    $region3: #{forward.1} parent=1 // loop_header
      %s19 = sphi 0, %s23
      %p20 = scmp.ge.s32.totalorder %s19, 4
      %s29 = sphi 0, %s31
      %s32 = sphi 0, %s29
      %s33 = sphi 0, %s32
      %s49 = sphi 0, %s33
      %s53 = sphi 0, %s53
      %s55 = sphi 0, %s53
      %s56 = sphi 0, %s55
      %s70 = sphi 0, %s56
      %s74 = sphi 0, %s74
      %s76 = sphi 0, %s74
      %s77 = sphi 0, %s76
      %s91 = sphi 0, %s77
      %s95 = sphi 0, %s95
      %s97 = sphi 0, %s95
      %s98 = sphi 0, %s97
      %s112 = sphi 0, %s98
      %s116 = sphi 0, %s116
      %s118 = sphi 0, %s116
      %s119 = sphi 0, %s118
      %s133 = sphi 0, %s119
      %s137 = sphi 0, %s137
      %s139 = sphi 0, %s137
      %s140 = sphi 0, %s139
      %s154 = sphi 0, %s140
      %s158 = sphi 0, %s158
      %s160 = sphi 0, %s158
      %s161 = sphi 0, %s160
      %s175 = sphi 0, %s161
      %s179 = sphi 0, %s179
      %s181 = sphi 0, %s179
      %s182 = sphi 0, %s181
      %s196 = sphi 0, %s182
      %s202 = sphi 0, %s204
      %s205 = sphi 0, %s202
      %s206 = sphi 0, %s205
      %s222 = sphi 0, %s206
      %s228 = sphi 0, %s230
      %s231 = sphi 0, %s228
      %s232 = sphi 0, %s231
      %s248 = sphi 0, %s232
    $region4: #{forward.1} parent=1 // loop_header_branch
      %22 = sbr.rel (%p20) target = $region8
    $region5: #{forward.1} parent=1 // loop_body
      %s24 = ssub.s32 %s19, 1
      %s25 = ssub.s32 %s19, 2
      %s26 = sadd.s32 %s19, 1
      %s27 = ssub.s32 %s19, %s26
      %p28 = scmp.eq.s32.totalorder %s27, 0
      %s30 = sadd.s32 %s29, 1
      %s31 = scalar_select %p28, %s29, %s30
      %p34 = pneg %p28
      %p35 = scmp.eq.s32.totalorder %s19, 1
      %p36 = por %p34, %p35
      %p37 = scmp.ne.s32.totalorder %s29, %s32
      %p38 = scmp.eq.s32.totalorder %s19, 0
      %p39 = por %p37, %p38
      %p40 = scmp.ne.s32.totalorder %s29, %s32
      %p41 = scmp.eq.s32.totalorder %s24, 1
      %p42 = por %p40, %p41
      %p43 = scmp.ne.s32.totalorder %s32, %s33
      %p44 = scmp.eq.s32.totalorder %s24, 0
      %p45 = por %p43, %p44
      %p46 = scmp.ne.s32.totalorder %s32, %s33
      %p47 = scmp.eq.s32.totalorder %s25, 1
      %p48 = por %p46, %p47
      %p50 = scmp.ne.s32.totalorder %s33, %s49
      %p51 = scmp.eq.s32.totalorder %s25, 0
      %p52 = por %p50, %p51
      %s54 = sadd.s32 %s53, 1
      %p57 = scmp.eq.s32.totalorder %s19, 1
      %p58 = scmp.ne.s32.totalorder %s53, %s55
      %p59 = scmp.eq.s32.totalorder %s19, 0
      %p60 = por %p58, %p59
      %p61 = scmp.ne.s32.totalorder %s53, %s55
      %p62 = scmp.eq.s32.totalorder %s24, 1
      %p63 = por %p61, %p62
      %p64 = scmp.ne.s32.totalorder %s55, %s56
      %p65 = scmp.eq.s32.totalorder %s24, 0
      %p66 = por %p64, %p65
      %p67 = scmp.ne.s32.totalorder %s55, %s56
      %p68 = scmp.eq.s32.totalorder %s25, 1
      %p69 = por %p67, %p68
      %p71 = scmp.ne.s32.totalorder %s56, %s70
      %p72 = scmp.eq.s32.totalorder %s25, 0
      %p73 = por %p71, %p72
      %s75 = sadd.s32 %s74, 1
      %p78 = scmp.eq.s32.totalorder %s19, 1
      %p79 = scmp.ne.s32.totalorder %s74, %s76
      %p80 = scmp.eq.s32.totalorder %s19, 0
      %p81 = por %p79, %p80
      %p82 = scmp.ne.s32.totalorder %s74, %s76
      %p83 = scmp.eq.s32.totalorder %s24, 1
      %p84 = por %p82, %p83
      %p85 = scmp.ne.s32.totalorder %s76, %s77
      %p86 = scmp.eq.s32.totalorder %s24, 0
      %p87 = por %p85, %p86
      %p88 = scmp.ne.s32.totalorder %s76, %s77
      %p89 = scmp.eq.s32.totalorder %s25, 1
      %p90 = por %p88, %p89
      %p92 = scmp.ne.s32.totalorder %s77, %s91
      %p93 = scmp.eq.s32.totalorder %s25, 0
      %p94 = por %p92, %p93
      %s96 = sadd.s32 %s95, 1
      %p99 = scmp.eq.s32.totalorder %s19, 1
      %p100 = scmp.ne.s32.totalorder %s95, %s97
      %p101 = scmp.eq.s32.totalorder %s19, 0
      %p102 = por %p100, %p101
      %p103 = scmp.ne.s32.totalorder %s95, %s97
      %p104 = scmp.eq.s32.totalorder %s24, 1
      %p105 = por %p103, %p104
      %p106 = scmp.ne.s32.totalorder %s97, %s98
      %p107 = scmp.eq.s32.totalorder %s24, 0
      %p108 = por %p106, %p107
      %p109 = scmp.ne.s32.totalorder %s97, %s98
      %p110 = scmp.eq.s32.totalorder %s25, 1
      %p111 = por %p109, %p110
      %p113 = scmp.ne.s32.totalorder %s98, %s112
      %p114 = scmp.eq.s32.totalorder %s25, 0
      %p115 = por %p113, %p114
      %s117 = sadd.s32 %s116, 1
      %p120 = scmp.eq.s32.totalorder %s19, 1
      %p121 = scmp.ne.s32.totalorder %s116, %s118
      %p122 = scmp.eq.s32.totalorder %s19, 0
      %p123 = por %p121, %p122
      %p124 = scmp.ne.s32.totalorder %s116, %s118
      %p125 = scmp.eq.s32.totalorder %s24, 1
      %p126 = por %p124, %p125
      %p127 = scmp.ne.s32.totalorder %s118, %s119
      %p128 = scmp.eq.s32.totalorder %s24, 0
      %p129 = por %p127, %p128
      %p130 = scmp.ne.s32.totalorder %s118, %s119
      %p131 = scmp.eq.s32.totalorder %s25, 1
      %p132 = por %p130, %p131
      %p134 = scmp.ne.s32.totalorder %s119, %s133
      %p135 = scmp.eq.s32.totalorder %s25, 0
      %p136 = por %p134, %p135
      %s138 = sadd.s32 %s137, 1
      %p141 = scmp.eq.s32.totalorder %s19, 1
      %p142 = scmp.ne.s32.totalorder %s137, %s139
      %p143 = scmp.eq.s32.totalorder %s19, 0
      %p144 = por %p142, %p143
      %p145 = scmp.ne.s32.totalorder %s137, %s139
      %p146 = scmp.eq.s32.totalorder %s24, 1
      %p147 = por %p145, %p146
      %p148 = scmp.ne.s32.totalorder %s139, %s140
      %p149 = scmp.eq.s32.totalorder %s24, 0
      %p150 = por %p148, %p149
      %p151 = scmp.ne.s32.totalorder %s139, %s140
      %p152 = scmp.eq.s32.totalorder %s25, 1
      %p153 = por %p151, %p152
      %p155 = scmp.ne.s32.totalorder %s140, %s154
      %p156 = scmp.eq.s32.totalorder %s25, 0
      %p157 = por %p155, %p156
      %s159 = sadd.s32 %s158, 1
      %p162 = scmp.eq.s32.totalorder %s19, 1
      %p163 = scmp.ne.s32.totalorder %s158, %s160
      %p164 = scmp.eq.s32.totalorder %s19, 0
      %p165 = por %p163, %p164
      %p166 = scmp.ne.s32.totalorder %s158, %s160
      %p167 = scmp.eq.s32.totalorder %s24, 1
      %p168 = por %p166, %p167
      %p169 = scmp.ne.s32.totalorder %s160, %s161
      %p170 = scmp.eq.s32.totalorder %s24, 0
      %p171 = por %p169, %p170
      %p172 = scmp.ne.s32.totalorder %s160, %s161
      %p173 = scmp.eq.s32.totalorder %s25, 1
      %p174 = por %p172, %p173
      %p176 = scmp.ne.s32.totalorder %s161, %s175
      %p177 = scmp.eq.s32.totalorder %s25, 0
      %p178 = por %p176, %p177
      %s180 = sadd.s32 %s179, 1
      %p183 = scmp.eq.s32.totalorder %s19, 1
      %p184 = scmp.ne.s32.totalorder %s179, %s181
      %p185 = scmp.eq.s32.totalorder %s19, 0
      %p186 = por %p184, %p185
      %p187 = scmp.ne.s32.totalorder %s179, %s181
      %p188 = scmp.eq.s32.totalorder %s24, 1
      %p189 = por %p187, %p188
      %p190 = scmp.ne.s32.totalorder %s181, %s182
      %p191 = scmp.eq.s32.totalorder %s24, 0
      %p192 = por %p190, %p191
      %p193 = scmp.ne.s32.totalorder %s181, %s182
      %p194 = scmp.eq.s32.totalorder %s25, 1
      %p195 = por %p193, %p194
      %p197 = scmp.ne.s32.totalorder %s182, %s196
      %p198 = scmp.eq.s32.totalorder %s25, 0
      %p199 = por %p197, %p198
      %s200 = ssub.s32 %s19, %s26
      %p201 = scmp.eq.s32.totalorder %s200, 0
      %s203 = sadd.s32 %s202, 1
      %s204 = scalar_select %p201, %s202, %s203
      %p207 = pneg %p201
      %p208 = scmp.eq.s32.totalorder %s19, 1
      %p209 = por %p207, %p208
      %p210 = scmp.ne.s32.totalorder %s202, %s205
      %p211 = scmp.eq.s32.totalorder %s19, 0
      %p212 = por %p210, %p211
      %p213 = scmp.ne.s32.totalorder %s202, %s205
      %p214 = scmp.eq.s32.totalorder %s24, 1
      %p215 = por %p213, %p214
      %p216 = scmp.ne.s32.totalorder %s205, %s206
      %p217 = scmp.eq.s32.totalorder %s24, 0
      %p218 = por %p216, %p217
      %p219 = scmp.ne.s32.totalorder %s205, %s206
      %p220 = scmp.eq.s32.totalorder %s25, 1
      %p221 = por %p219, %p220
      %p223 = scmp.ne.s32.totalorder %s206, %s222
      %p224 = scmp.eq.s32.totalorder %s25, 0
      %p225 = por %p223, %p224
      %s226 = ssub.s32 %s19, %s26
      %p227 = scmp.eq.s32.totalorder %s226, 0
      %s229 = sadd.s32 %s228, 1
      %s230 = scalar_select %p227, %s228, %s229
      %p233 = pneg %p227
      %p234 = scmp.eq.s32.totalorder %s19, 1
      %p235 = por %p233, %p234
      %p236 = scmp.ne.s32.totalorder %s228, %s231
      %p237 = scmp.eq.s32.totalorder %s19, 0
      %p238 = por %p236, %p237
      %p239 = scmp.ne.s32.totalorder %s228, %s231
      %p240 = scmp.eq.s32.totalorder %s24, 1
      %p241 = por %p239, %p240
      %p242 = scmp.ne.s32.totalorder %s231, %s232
      %p243 = scmp.eq.s32.totalorder %s24, 0
      %p244 = por %p242, %p243
      %p245 = scmp.ne.s32.totalorder %s231, %s232
      %p246 = scmp.eq.s32.totalorder %s25, 1
      %p247 = por %p245, %p246
      %p249 = scmp.ne.s32.totalorder %s232, %s248
      %p250 = scmp.eq.s32.totalorder %s25, 0
      %p251 = por %p249, %p250
      %p252 = scmp.le.s32.totalorder 1, %s19
      %p253 = scmp.lt.s32.totalorder %s19, 3
      %p254 = pnand %p252, %p253
      %p255 = pneg %p254
      // Predicated region
      $region9: #{forward.1} parent=5 // pred_check
        _
      $region10: #{forward.1} parent=5 // pred_check_branch
        %257 = sbr.rel (%p254) target = $region12
      $region11: #{forward.1} parent=5 // pred_region
        %s258 = ssub.s32 %s19, 1
        // Predicated region
        $region13: #{forward.1} parent=11 // pred_check
          %p259 = pneg %p66
        $region14: #{forward.1} parent=11 // pred_check_branch
          %261 = sbr.rel (%p259) target = $region16
        $region15: #{forward.1} parent=11 // pred_region
          _
        $region16: #{forward.1} parent=11 // pred_fallthru
          _
        // Predicated region
        $region17: #{forward.1} parent=11 // pred_check
          %p262 = pneg %p87
        $region18: #{forward.1} parent=11 // pred_check_branch
          %264 = sbr.rel (%p262) target = $region20
        $region19: #{forward.1} parent=11 // pred_region
          _
        $region20: #{forward.1} parent=11 // pred_fallthru
          _
        // Predicated region
        $region21: #{forward.1} parent=11 // pred_check
          %p265 = pneg %p108
        $region22: #{forward.1} parent=11 // pred_check_branch
          %267 = sbr.rel (%p265) target = $region24
        $region23: #{forward.1} parent=11 // pred_region
          _
        $region24: #{forward.1} parent=11 // pred_fallthru
          _
        // Predicated region
        $region25: #{forward.1} parent=11 // pred_check
          %p268 = pneg %p129
        $region26: #{forward.1} parent=11 // pred_check_branch
          %270 = sbr.rel (%p268) target = $region28
        $region27: #{forward.1} parent=11 // pred_region
          _
        $region28: #{forward.1} parent=11 // pred_fallthru
          _
        // Predicated region
        $region29: #{forward.1} parent=11 // pred_check
          %p271 = pneg %p150
        $region30: #{forward.1} parent=11 // pred_check_branch
          %273 = sbr.rel (%p271) target = $region32
        $region31: #{forward.1} parent=11 // pred_region
          _
        $region32: #{forward.1} parent=11 // pred_fallthru
          _
        // Predicated region
        $region33: #{forward.1} parent=11 // pred_check
          %p274 = pneg %p171
        $region34: #{forward.1} parent=11 // pred_check_branch
          %276 = sbr.rel (%p274) target = $region36
        $region35: #{forward.1} parent=11 // pred_region
          _
        $region36: #{forward.1} parent=11 // pred_fallthru
          _
        // Predicated region
        $region37: #{forward.1} parent=11 // pred_check
          %p277 = pneg %p192
        $region38: #{forward.1} parent=11 // pred_check_branch
          %279 = sbr.rel (%p277) target = $region40
        $region39: #{forward.1} parent=11 // pred_region
          _
        $region40: #{forward.1} parent=11 // pred_fallthru
          _
      $region12: #{forward.1} parent=5 // pred_fallthru
        _
      %p280 = scmp.lt.s32.totalorder %s19, 2
      // Predicated region
      $region41: #{forward.1} parent=5 // pred_check
        %p281 = pneg %p280
      $region42: #{forward.1} parent=5 // pred_check_branch
        %283 = sbr.rel (%p281) target = $region44
      $region43: #{forward.1} parent=5 // pred_region
        // Predicated region
        $region45: #{forward.1} parent=43 // pred_check
          %p284 = pneg %p39
        $region46: #{forward.1} parent=43 // pred_check_branch
          %286 = sbr.rel (%p284) target = $region48
        $region47: #{forward.1} parent=43 // pred_region
          %p287 = scmp.lt.s32.totalorder %s19, 1
          %s288 = scalar_select %p287, %s19, 1
          %s289 = smul.addr %s288, 54
          %s290 = smul.addr %s289, 8
          %s291 = scalar_lea.vmem %s0, %s290
        $region48: #{forward.1} parent=43 // pred_fallthru
          _
      $region44: #{forward.1} parent=5 // pred_fallthru
        _
      %p292 = scmp.le.s32.totalorder 1, %s19
      %p293 = scmp.lt.s32.totalorder %s19, 3
      %p294 = pnand %p292, %p293
      %p295 = pneg %p294
      // Predicated region
      $region49: #{forward.1} parent=5 // pred_check
        _
      $region50: #{forward.1} parent=5 // pred_check_branch
        %297 = sbr.rel (%p294) target = $region52
      $region51: #{forward.1} parent=5 // pred_region
        %s298 = ssub.s32 %s19, 1
        %p299 = scmp.lt.s32.totalorder %s24, 1
        %s300 = scalar_select %p299, %s24, 1
        %s301 = smul.addr %s300, 54
        %s302 = smul.addr %s301, 8
        %s303 = scalar_lea.vmem %s0, %s302
        %p304 = pneg %p45
        %p305 = pneg %p42
        %p306 = pneg %p66
        %p307 = pneg %p63
        %p308 = pneg %p87
        %p309 = pneg %p84
        %p310 = pneg %p108
        %p311 = pneg %p105
        %p312 = pneg %p129
        %p313 = pneg %p126
        %p314 = pneg %p150
        %p315 = pneg %p147
        %p316 = pneg %p171
        %p317 = pneg %p168
        %p318 = pneg %p192
        %p319 = pneg %p189
        %p320 = pneg %p218
        %p321 = pneg %p215
        %p322 = scmp.lt.s32.totalorder %s24, 1
        %s323 = scalar_select %p322, %s24, 1
        %s324 = smul.addr %s323, 32
        %s325 = smul.addr %s324, 8
        %s326 = scalar_lea.vmem %s8, %s325
        %p327 = pneg %p244
        %p328 = pneg %p241
        %s329 = sand.u32 %s231, 1
        %s330 = scalar_lea.sflag [#allocation5], %s329
        %s331 = sand.u32 %s231, 1
        %s332 = smul.addr %s331, 64
        %s333 = scalar_lea.vmem [#allocation4], %s332
        %p334 = scmp.lt.s32.totalorder %s24, 1
        %s335 = scalar_select %p334, %s24, 1
        %s336 = smul.addr %s335, 54
        %s337 = smul.addr %s336, 8
        %s338 = scalar_lea.vmem %s0, %s337
        %p339 = scmp.lt.s32.totalorder %s24, 1
        %s340 = scalar_select %p339, %s24, 1
        %s341 = smul.addr %s340, 32
        %s342 = smul.addr %s341, 8
        %s343 = scalar_lea.vmem %s8, %s342
        %v345 = vld [vmem:[%s338] sm:$0xff]
        %v346 = vld [vmem:[%s338 + $0x8] sm:$0xff]
        %v347 = vld [vmem:[%s338 + $0x18] sm:$0xff]
        %v348 = vld [vmem:[%s338 + $0x20] sm:$0xff]
        %v349 = vld [vmem:[%s338 + $0x30] sm:$0xff]
        %v350 = vld [vmem:[%s338 + $0x38] sm:$0xff]
        %v351 = vld [vmem:[%s338 + $0x48] sm:$0xff]
        %v352 = vld [vmem:[%s338 + $0x50] sm:$0xff]
        %v353 = vld [vmem:[%s338 + $0x60] sm:$0xff]
        %v354 = vld [vmem:[%s338 + $0x68] sm:$0xff]
        %v355 = vld [vmem:[%s338 + $0x78] sm:$0xff]
        %v356 = vld [vmem:[%s338 + $0x80] sm:$0xff]
        %v357 = vld [vmem:[%s338 + $0x90] sm:$0xff]
        %v358 = vld [vmem:[%s338 + $0x98] sm:$0xff]
        %v359 = vld [vmem:[%s338 + $0xa8] sm:$0xff]
        %v360 = vld [vmem:[%s338 + $0xb0] sm:$0xff]
        %v361 = vld [vmem:[%s338 + $0xc0] sm:$0xff]
        %v362 = vld [vmem:[%s338 + $0xc8] sm:$0xff]
        %v363 = vld [vmem:[%s338 + $0xd8] sm:$0xff]
        %v364 = vld [vmem:[%s338 + $0xe0] sm:$0xff]
        %v365 = vld [vmem:[%s338 + $0xf0] sm:$0xff]
        %v366 = vld [vmem:[%s338 + $0xf8] sm:$0xff]
        %v367 = vld [vmem:[%s338 + $0x108] sm:$0xff]
        %v368 = vld [vmem:[%s338 + $0x110] sm:$0xff]
        %v369 = vld [vmem:[%s338 + $0x120] sm:$0xff]
        %v370 = vld [vmem:[%s338 + $0x128] sm:$0xff]
        %v371 = vld [vmem:[%s338 + $0x138] sm:$0xff]
        %v372 = vld [vmem:[%s338 + $0x140] sm:$0xff]
        %v373 = vld [vmem:[%s338 + $0x150] sm:$0xff]
        %v374 = vld [vmem:[%s338 + $0x158] sm:$0xff]
        %v375 = vld [vmem:[%s338 + $0x168] sm:$0xff]
        %v376 = vld [vmem:[%s338 + $0x170] sm:$0xff]
        %v377 = vpack.c.bf16 %v346, %v345
        %v378 = vpack.c.bf16 %v348, %v347
        %v379 = vpack.c.bf16 %v350, %v349
        %v380 = vpack.c.bf16 %v352, %v351
        %v381 = vpack.c.bf16 %v354, %v353
        %v382 = vpack.c.bf16 %v356, %v355
        %v383 = vpack.c.bf16 %v358, %v357
        %v384 = vpack.c.bf16 %v360, %v359
        %v385 = vpack.c.bf16 %v362, %v361
        %v386 = vpack.c.bf16 %v364, %v363
        %v387 = vpack.c.bf16 %v366, %v365
        %v388 = vpack.c.bf16 %v368, %v367
        %v389 = vpack.c.bf16 %v370, %v369
        %v390 = vpack.c.bf16 %v372, %v371
        %v391 = vpack.c.bf16 %v374, %v373
        %v392 = vpack.c.bf16 %v376, %v375
        %v393 = vld [vmem:[%s1] sm:$0x3]
        %v394 = vld [vmem:[%s338 + $0x1] sm:$0xff]
        %v395 = vld [vmem:[%s338 + $0x9] sm:$0xff]
        %v396 = vld [vmem:[%s338 + $0x19] sm:$0xff]
        %v397 = vld [vmem:[%s338 + $0x21] sm:$0xff]
        %v398 = vld [vmem:[%s338 + $0x31] sm:$0xff]
        %v399 = vld [vmem:[%s338 + $0x39] sm:$0xff]
        %v400 = vld [vmem:[%s338 + $0x49] sm:$0xff]
        %v401 = vld [vmem:[%s338 + $0x51] sm:$0xff]
        %v402 = vld [vmem:[%s338 + $0x61] sm:$0xff]
        %v403 = vld [vmem:[%s338 + $0x69] sm:$0xff]
        %v404 = vld [vmem:[%s338 + $0x79] sm:$0xff]
        %v405 = vld [vmem:[%s338 + $0x81] sm:$0xff]
        %v406 = vld [vmem:[%s338 + $0x91] sm:$0xff]
        %v407 = vld [vmem:[%s338 + $0x99] sm:$0xff]
        %v408 = vld [vmem:[%s338 + $0xa9] sm:$0xff]
        %v409 = vld [vmem:[%s338 + $0xb1] sm:$0xff]
        %v410 = vld [vmem:[%s338 + $0xc1] sm:$0xff]
        %v411 = vld [vmem:[%s338 + $0xc9] sm:$0xff]
        %v412 = vld [vmem:[%s338 + $0xd9] sm:$0xff]
        %v413 = vld [vmem:[%s338 + $0xe1] sm:$0xff]
        %v414 = vld [vmem:[%s338 + $0xf1] sm:$0xff]
        %v415 = vld [vmem:[%s338 + $0xf9] sm:$0xff]
        %v416 = vld [vmem:[%s338 + $0x109] sm:$0xff]
        %v417 = vld [vmem:[%s338 + $0x111] sm:$0xff]
        %v418 = vld [vmem:[%s338 + $0x121] sm:$0xff]
        %v419 = vld [vmem:[%s338 + $0x129] sm:$0xff]
        %v420 = vld [vmem:[%s338 + $0x139] sm:$0xff]
        %v421 = vld [vmem:[%s338 + $0x141] sm:$0xff]
        %v422 = vld [vmem:[%s338 + $0x151] sm:$0xff]
        %v423 = vld [vmem:[%s338 + $0x159] sm:$0xff]
        %v424 = vld [vmem:[%s338 + $0x169] sm:$0xff]
        %v425 = vld [vmem:[%s338 + $0x171] sm:$0xff]
        %v426 = vpack.c.bf16 %v395, %v394
        %v427 = vpack.c.bf16 %v397, %v396
        %v428 = vpack.c.bf16 %v399, %v398
        %v429 = vpack.c.bf16 %v401, %v400
        %v430 = vpack.c.bf16 %v403, %v402
        %v431 = vpack.c.bf16 %v405, %v404
        %v432 = vpack.c.bf16 %v407, %v406
        %v433 = vpack.c.bf16 %v409, %v408
        %v434 = vpack.c.bf16 %v411, %v410
        %v435 = vpack.c.bf16 %v413, %v412
        %v436 = vpack.c.bf16 %v415, %v414
        %v437 = vpack.c.bf16 %v417, %v416
        %v438 = vpack.c.bf16 %v419, %v418
        %v439 = vpack.c.bf16 %v421, %v420
        %v440 = vpack.c.bf16 %v423, %v422
        %v441 = vpack.c.bf16 %v425, %v424
        %v442 = vld [vmem:[%s1] sm:$0xc]
        %v444 = vunpack.c.l.b16 %v442
        %v445 = vpack.c.b16 %v444, %v444
        %v446 = vrot.slane %v445, 2
        %vm447 = vcmask 31744
        %v449 = vsel %vm447, %v426, 0
        %v452 = vsel %vm447, %v427, 0
        %v455 = vsel %vm447, %v428, 0
        %v458 = vsel %vm447, %v429, 0
        %v461 = vsel %vm447, %v430, 0
        %v464 = vsel %vm447, %v431, 0
        %v467 = vsel %vm447, %v432, 0
        %v470 = vsel %vm447, %v433, 0
        %v473 = vsel %vm447, %v434, 0
        %v476 = vsel %vm447, %v435, 0
        %v479 = vsel %vm447, %v436, 0
        %v482 = vsel %vm447, %v437, 0
        %v485 = vsel %vm447, %v438, 0
        %v488 = vsel %vm447, %v439, 0
        %v491 = vsel %vm447, %v440, 0
        %v494 = vsel %vm447, %v441, 0
        %vm496 = vcmask 1041408
        %v498 = vsel %vm496, %v446, 0
        %500 = vmatprep.subr.bf16.mxu0 0
        %501 = vmatpush1.bf16.msra.mxu0 0
        %502 = vmatprep.subr.bf16.mxu0 0
        %503 = vmatpush1.bf16.msra.mxu0 0
        %504 = vmatprep.subr.bf16.mxu0 0
        %505 = vmatpush1.bf16.msra.mxu0 0
        %506 = vmatprep.subr.bf16.mxu0 0
        %507 = vmatpush1.bf16.msra.mxu0 0
        %508 = vmatprep.subr.bf16.mxu0 0
        %509 = vmatpush1.bf16.msra.mxu0 0
        %510 = vmatprep.subr.bf16.mxu0 0
        %511 = vmatpush1.bf16.msra.mxu0 0
        %512 = vmatprep.subr.bf16.mxu0 0
        %513 = vmatpush1.bf16.msra.mxu0 0
        %514 = vmatprep.subr.bf16.mxu0 0
        %515 = vmatpush1.bf16.msra.mxu0 %v498
        %516 = vmatprep.subr.bf16.mxu0 0
        %517 = vmatpush2.bf16.msra.mxu0 0
        %518 = vmatprep.subr.bf16.mxu0 0
        %519 = vmatpush2.bf16.msra.mxu0 0
        %520 = vmatprep.subr.bf16.mxu0 0
        %521 = vmatpush2.bf16.msra.mxu0 0
        %522 = vmatprep.subr.bf16.mxu0 0
        %523 = vmatpush2.bf16.msra.mxu0 0
        %524 = vmatprep.subr.bf16.mxu0 0
        %525 = vmatpush2.bf16.msra.mxu0 0
        %526 = vmatprep.subr.bf16.mxu0 0
        %527 = vmatpush2.bf16.msra.mxu0 0
        %528 = vmatprep.subr.bf16.mxu0 0
        %529 = vmatpush2.bf16.msra.mxu0 0
        %530 = vmatprep.subr.bf16.mxu0 0
        %531 = vmatpush2.bf16.msra.mxu0 0
        %532 = vmatprep.mubr.bf16.mxu0 0
        %533 = vmatmul.mubr.bf16.gmra.mxu0 %v449
        %v534 = vpop.f32.mrf.mxu0
        %v535 = vadd.f32 0.0, %v534
        %v536 = vpop.f32.mrf.mxu0
        %v537 = vpop.f32.mrf.mxu0
        %v538 = vadd.f32 0.0, %v537
        %v539 = vpop.f32.mrf.mxu0
        %540 = vmatprep.mubr.bf16.mxu0 0
        %541 = vmatmul.mubr.bf16.gmra.mxu0 %v452
        %v542 = vpop.f32.mrf.mxu0
        %v543 = vadd.f32 0.0, %v542
        %v544 = vpop.f32.mrf.mxu0
        %v545 = vpop.f32.mrf.mxu0
        %v546 = vadd.f32 0.0, %v545
        %v547 = vpop.f32.mrf.mxu0
        %548 = vmatprep.mubr.bf16.mxu0 0
        %549 = vmatmul.mubr.bf16.gmra.mxu0 %v455
        %v550 = vpop.f32.mrf.mxu0
        %v551 = vadd.f32 0.0, %v550
        %v552 = vpop.f32.mrf.mxu0
        %v553 = vpop.f32.mrf.mxu0
        %v554 = vadd.f32 0.0, %v553
        %v555 = vpop.f32.mrf.mxu0
        %556 = vmatprep.mubr.bf16.mxu0 0
        %557 = vmatmul.mubr.bf16.gmra.mxu0 %v458
        %v558 = vpop.f32.mrf.mxu0
        %v559 = vadd.f32 0.0, %v558
        %v560 = vpop.f32.mrf.mxu0
        %v561 = vpop.f32.mrf.mxu0
        %v562 = vadd.f32 0.0, %v561
        %v563 = vpop.f32.mrf.mxu0
        %564 = vmatprep.mubr.bf16.mxu0 0
        %565 = vmatmul.mubr.bf16.gmra.mxu0 %v461
        %v566 = vpop.f32.mrf.mxu0
        %v567 = vadd.f32 0.0, %v566
        %v568 = vpop.f32.mrf.mxu0
        %v569 = vpop.f32.mrf.mxu0
        %v570 = vadd.f32 0.0, %v569
        %v571 = vpop.f32.mrf.mxu0
        %572 = vmatprep.mubr.bf16.mxu0 0
        %573 = vmatmul.mubr.bf16.gmra.mxu0 %v464
        %v574 = vpop.f32.mrf.mxu0
        %v575 = vadd.f32 0.0, %v574
        %v576 = vpop.f32.mrf.mxu0
        %v577 = vpop.f32.mrf.mxu0
        %v578 = vadd.f32 0.0, %v577
        %v579 = vpop.f32.mrf.mxu0
        %580 = vmatprep.mubr.bf16.mxu0 0
        %581 = vmatmul.mubr.bf16.gmra.mxu0 %v467
        %v582 = vpop.f32.mrf.mxu0
        %v583 = vadd.f32 0.0, %v582
        %v584 = vpop.f32.mrf.mxu0
        %v585 = vpop.f32.mrf.mxu0
        %v586 = vadd.f32 0.0, %v585
        %v587 = vpop.f32.mrf.mxu0
        %588 = vmatprep.mubr.bf16.mxu0 0
        %589 = vmatmul.mubr.bf16.gmra.mxu0 %v470
        %v590 = vpop.f32.mrf.mxu0
        %v591 = vadd.f32 0.0, %v590
        %v592 = vpop.f32.mrf.mxu0
        %v593 = vpop.f32.mrf.mxu0
        %v594 = vadd.f32 0.0, %v593
        %v595 = vpop.f32.mrf.mxu0
        %596 = vmatprep.mubr.bf16.mxu0 0
        %597 = vmatmul.mubr.bf16.gmra.mxu0 %v473
        %v598 = vpop.f32.mrf.mxu0
        %v599 = vadd.f32 0.0, %v598
        %v600 = vpop.f32.mrf.mxu0
        %v601 = vpop.f32.mrf.mxu0
        %v602 = vadd.f32 0.0, %v601
        %v603 = vpop.f32.mrf.mxu0
        %604 = vmatprep.mubr.bf16.mxu0 0
        %605 = vmatmul.mubr.bf16.gmra.mxu0 %v476
        %v606 = vpop.f32.mrf.mxu0
        %v607 = vadd.f32 0.0, %v606
        %v608 = vpop.f32.mrf.mxu0
        %v609 = vpop.f32.mrf.mxu0
        %v610 = vadd.f32 0.0, %v609
        %v611 = vpop.f32.mrf.mxu0
        %612 = vmatprep.mubr.bf16.mxu0 0
        %613 = vmatmul.mubr.bf16.gmra.mxu0 %v479
        %v614 = vpop.f32.mrf.mxu0
        %v615 = vadd.f32 0.0, %v614
        %v616 = vpop.f32.mrf.mxu0
        %v617 = vpop.f32.mrf.mxu0
        %v618 = vadd.f32 0.0, %v617
        %v619 = vpop.f32.mrf.mxu0
        %620 = vmatprep.mubr.bf16.mxu0 0
        %621 = vmatmul.mubr.bf16.gmra.mxu0 %v482
        %v622 = vpop.f32.mrf.mxu0
        %v623 = vadd.f32 0.0, %v622
        %v624 = vpop.f32.mrf.mxu0
        %v625 = vpop.f32.mrf.mxu0
        %v626 = vadd.f32 0.0, %v625
        %v627 = vpop.f32.mrf.mxu0
        %628 = vmatprep.mubr.bf16.mxu0 0
        %629 = vmatmul.mubr.bf16.gmra.mxu0 %v485
        %v630 = vpop.f32.mrf.mxu0
        %v631 = vadd.f32 0.0, %v630
        %v632 = vpop.f32.mrf.mxu0
        %v633 = vpop.f32.mrf.mxu0
        %v634 = vadd.f32 0.0, %v633
        %v635 = vpop.f32.mrf.mxu0
        %636 = vmatprep.mubr.bf16.mxu0 0
        %637 = vmatmul.mubr.bf16.gmra.mxu0 %v488
        %v638 = vpop.f32.mrf.mxu0
        %v639 = vadd.f32 0.0, %v638
        %v640 = vpop.f32.mrf.mxu0
        %v641 = vpop.f32.mrf.mxu0
        %v642 = vadd.f32 0.0, %v641
        %v643 = vpop.f32.mrf.mxu0
        %644 = vmatprep.mubr.bf16.mxu0 0
        %645 = vmatmul.mubr.bf16.gmra.mxu0 %v491
        %v646 = vpop.f32.mrf.mxu0
        %v647 = vadd.f32 0.0, %v646
        %v648 = vpop.f32.mrf.mxu0
        %v649 = vpop.f32.mrf.mxu0
        %v650 = vadd.f32 0.0, %v649
        %v651 = vpop.f32.mrf.mxu0
        %652 = vmatprep.mubr.bf16.mxu0 0
        %653 = vmatmul.mubr.bf16.gmra.mxu0 %v494
        %v654 = vpop.f32.mrf.mxu0
        %v655 = vadd.f32 0.0, %v654
        %v656 = vpop.f32.mrf.mxu0
        %v657 = vpop.f32.mrf.mxu0
        %v658 = vadd.f32 0.0, %v657
        %v659 = vpop.f32.mrf.mxu0
        %660 = vdwg.mxu0
        %v662 = vsel %vm447, %v377, 0
        %v665 = vsel %vm447, %v378, 0
        %v668 = vsel %vm447, %v379, 0
        %v671 = vsel %vm447, %v380, 0
        %v674 = vsel %vm447, %v381, 0
        %v677 = vsel %vm447, %v382, 0
        %v680 = vsel %vm447, %v383, 0
        %v683 = vsel %vm447, %v384, 0
        %v686 = vsel %vm447, %v385, 0
        %v689 = vsel %vm447, %v386, 0
        %v692 = vsel %vm447, %v387, 0
        %v695 = vsel %vm447, %v388, 0
        %v698 = vsel %vm447, %v389, 0
        %v701 = vsel %vm447, %v390, 0
        %v704 = vsel %vm447, %v391, 0
        %v707 = vsel %vm447, %v392, 0
        %v710 = vsel %vm496, %v393, 0
        %712 = vmatprep.subr.bf16.mxu0 0
        %713 = vmatpush1.bf16.msra.mxu0 0
        %714 = vmatprep.subr.bf16.mxu0 0
        %715 = vmatpush1.bf16.msra.mxu0 0
        %716 = vmatprep.subr.bf16.mxu0 0
        %717 = vmatpush1.bf16.msra.mxu0 0
        %718 = vmatprep.subr.bf16.mxu0 0
        %719 = vmatpush1.bf16.msra.mxu0 0
        %720 = vmatprep.subr.bf16.mxu0 0
        %721 = vmatpush1.bf16.msra.mxu0 0
        %722 = vmatprep.subr.bf16.mxu0 0
        %723 = vmatpush1.bf16.msra.mxu0 0
        %724 = vmatprep.subr.bf16.mxu0 0
        %725 = vmatpush1.bf16.msra.mxu0 0
        %726 = vmatprep.subr.bf16.mxu0 0
        %727 = vmatpush1.bf16.msra.mxu0 %v710
        %728 = vmatprep.subr.bf16.mxu0 0
        %729 = vmatpush2.bf16.msra.mxu0 0
        %730 = vmatprep.subr.bf16.mxu0 0
        %731 = vmatpush2.bf16.msra.mxu0 0
        %732 = vmatprep.subr.bf16.mxu0 0
        %733 = vmatpush2.bf16.msra.mxu0 0
        %734 = vmatprep.subr.bf16.mxu0 0
        %735 = vmatpush2.bf16.msra.mxu0 0
        %736 = vmatprep.subr.bf16.mxu0 0
        %737 = vmatpush2.bf16.msra.mxu0 0
        %738 = vmatprep.subr.bf16.mxu0 0
        %739 = vmatpush2.bf16.msra.mxu0 0
        %740 = vmatprep.subr.bf16.mxu0 0
        %741 = vmatpush2.bf16.msra.mxu0 0
        %742 = vmatprep.subr.bf16.mxu0 0
        %743 = vmatpush2.bf16.msra.mxu0 0
        %744 = vmatprep.mubr.bf16.mxu0 0
        %745 = vmatmul.mubr.bf16.gmra.mxu0 %v662
        %v746 = vpop.f32.mrf.mxu0
        %v747 = vadd.f32 %v535, %v746
        %v748 = vpop.f32.mrf.mxu0
        %v749 = vpop.f32.mrf.mxu0
        %v750 = vadd.f32 %v538, %v749
        %v751 = vpop.f32.mrf.mxu0
        %752 = vmatprep.mubr.bf16.mxu0 0
        %753 = vmatmul.mubr.bf16.gmra.mxu0 %v665
        %v754 = vpop.f32.mrf.mxu0
        %v755 = vadd.f32 %v543, %v754
        %v756 = vpop.f32.mrf.mxu0
        %v757 = vpop.f32.mrf.mxu0
        %v758 = vadd.f32 %v546, %v757
        %v759 = vpop.f32.mrf.mxu0
        %760 = vmatprep.mubr.bf16.mxu0 0
        %761 = vmatmul.mubr.bf16.gmra.mxu0 %v668
        %v762 = vpop.f32.mrf.mxu0
        %v763 = vadd.f32 %v551, %v762
        %v764 = vpop.f32.mrf.mxu0
        %v765 = vpop.f32.mrf.mxu0
        %v766 = vadd.f32 %v554, %v765
        %v767 = vpop.f32.mrf.mxu0
        %768 = vmatprep.mubr.bf16.mxu0 0
        %769 = vmatmul.mubr.bf16.gmra.mxu0 %v671
        %v770 = vpop.f32.mrf.mxu0
        %v771 = vadd.f32 %v559, %v770
        %v772 = vpop.f32.mrf.mxu0
        %v773 = vpop.f32.mrf.mxu0
        %v774 = vadd.f32 %v562, %v773
        %v775 = vpop.f32.mrf.mxu0
        %776 = vmatprep.mubr.bf16.mxu0 0
        %777 = vmatmul.mubr.bf16.gmra.mxu0 %v674
        %v778 = vpop.f32.mrf.mxu0
        %v779 = vadd.f32 %v567, %v778
        %v780 = vpop.f32.mrf.mxu0
        %v781 = vpop.f32.mrf.mxu0
        %v782 = vadd.f32 %v570, %v781
        %v783 = vpop.f32.mrf.mxu0
        %784 = vmatprep.mubr.bf16.mxu0 0
        %785 = vmatmul.mubr.bf16.gmra.mxu0 %v677
        %v786 = vpop.f32.mrf.mxu0
        %v787 = vadd.f32 %v575, %v786
        %v788 = vpop.f32.mrf.mxu0
        %v789 = vpop.f32.mrf.mxu0
        %v790 = vadd.f32 %v578, %v789
        %v791 = vpop.f32.mrf.mxu0
        %792 = vmatprep.mubr.bf16.mxu0 0
        %793 = vmatmul.mubr.bf16.gmra.mxu0 %v680
        %v794 = vpop.f32.mrf.mxu0
        %v795 = vadd.f32 %v583, %v794
        %v796 = vpop.f32.mrf.mxu0
        %v797 = vpop.f32.mrf.mxu0
        %v798 = vadd.f32 %v586, %v797
        %v799 = vpop.f32.mrf.mxu0
        %800 = vmatprep.mubr.bf16.mxu0 0
        %801 = vmatmul.mubr.bf16.gmra.mxu0 %v683
        %v802 = vpop.f32.mrf.mxu0
        %v803 = vadd.f32 %v591, %v802
        %v804 = vpop.f32.mrf.mxu0
        %v805 = vpop.f32.mrf.mxu0
        %v806 = vadd.f32 %v594, %v805
        %v807 = vpop.f32.mrf.mxu0
        %808 = vmatprep.mubr.bf16.mxu0 0
        %809 = vmatmul.mubr.bf16.gmra.mxu0 %v686
        %v810 = vpop.f32.mrf.mxu0
        %v811 = vadd.f32 %v599, %v810
        %v812 = vpop.f32.mrf.mxu0
        %v813 = vpop.f32.mrf.mxu0
        %v814 = vadd.f32 %v602, %v813
        %v815 = vpop.f32.mrf.mxu0
        %816 = vmatprep.mubr.bf16.mxu0 0
        %817 = vmatmul.mubr.bf16.gmra.mxu0 %v689
        %v818 = vpop.f32.mrf.mxu0
        %v819 = vadd.f32 %v607, %v818
        %v820 = vpop.f32.mrf.mxu0
        %v821 = vpop.f32.mrf.mxu0
        %v822 = vadd.f32 %v610, %v821
        %v823 = vpop.f32.mrf.mxu0
        %824 = vmatprep.mubr.bf16.mxu0 0
        %825 = vmatmul.mubr.bf16.gmra.mxu0 %v692
        %v826 = vpop.f32.mrf.mxu0
        %v827 = vadd.f32 %v615, %v826
        %v828 = vpop.f32.mrf.mxu0
        %v829 = vpop.f32.mrf.mxu0
        %v830 = vadd.f32 %v618, %v829
        %v831 = vpop.f32.mrf.mxu0
        %832 = vmatprep.mubr.bf16.mxu0 0
        %833 = vmatmul.mubr.bf16.gmra.mxu0 %v695
        %v834 = vpop.f32.mrf.mxu0
        %v835 = vadd.f32 %v623, %v834
        %v836 = vpop.f32.mrf.mxu0
        %v837 = vpop.f32.mrf.mxu0
        %v838 = vadd.f32 %v626, %v837
        %v839 = vpop.f32.mrf.mxu0
        %840 = vmatprep.mubr.bf16.mxu0 0
        %841 = vmatmul.mubr.bf16.gmra.mxu0 %v698
        %v842 = vpop.f32.mrf.mxu0
        %v843 = vadd.f32 %v631, %v842
        %v844 = vpop.f32.mrf.mxu0
        %v845 = vpop.f32.mrf.mxu0
        %v846 = vadd.f32 %v634, %v845
        %v847 = vpop.f32.mrf.mxu0
        %848 = vmatprep.mubr.bf16.mxu0 0
        %849 = vmatmul.mubr.bf16.gmra.mxu0 %v701
        %v850 = vpop.f32.mrf.mxu0
        %v851 = vadd.f32 %v639, %v850
        %v852 = vpop.f32.mrf.mxu0
        %v853 = vpop.f32.mrf.mxu0
        %v854 = vadd.f32 %v642, %v853
        %v855 = vpop.f32.mrf.mxu0
        %856 = vmatprep.mubr.bf16.mxu0 0
        %857 = vmatmul.mubr.bf16.gmra.mxu0 %v704
        %v858 = vpop.f32.mrf.mxu0
        %v859 = vadd.f32 %v647, %v858
        %v860 = vpop.f32.mrf.mxu0
        %v861 = vpop.f32.mrf.mxu0
        %v862 = vadd.f32 %v650, %v861
        %v863 = vpop.f32.mrf.mxu0
        %864 = vmatprep.mubr.bf16.mxu0 0
        %865 = vmatmul.mubr.bf16.gmra.mxu0 %v707
        %v866 = vpop.f32.mrf.mxu0
        %v867 = vadd.f32 %v655, %v866
        %v868 = vpop.f32.mrf.mxu0
        %v869 = vpop.f32.mrf.mxu0
        %v870 = vadd.f32 %v658, %v869
        %v871 = vpop.f32.mrf.mxu0
        %872 = vdwg.mxu0
        %v873 = vld [vmem:[%s338 + $0x2] sm:$0xff]
        %v874 = vld [vmem:[%s338 + $0xa] sm:$0xff]
        %v875 = vld [vmem:[%s338 + $0x1a] sm:$0xff]
        %v876 = vld [vmem:[%s338 + $0x22] sm:$0xff]
        %v877 = vld [vmem:[%s338 + $0x32] sm:$0xff]
        %v878 = vld [vmem:[%s338 + $0x3a] sm:$0xff]
        %v879 = vld [vmem:[%s338 + $0x4a] sm:$0xff]
        %v880 = vld [vmem:[%s338 + $0x52] sm:$0xff]
        %v881 = vld [vmem:[%s338 + $0x62] sm:$0xff]
        %v882 = vld [vmem:[%s338 + $0x6a] sm:$0xff]
        %v883 = vld [vmem:[%s338 + $0x7a] sm:$0xff]
        %v884 = vld [vmem:[%s338 + $0x82] sm:$0xff]
        %v885 = vld [vmem:[%s338 + $0x92] sm:$0xff]
        %v886 = vld [vmem:[%s338 + $0x9a] sm:$0xff]
        %v887 = vld [vmem:[%s338 + $0xaa] sm:$0xff]
        %v888 = vld [vmem:[%s338 + $0xb2] sm:$0xff]
        %v889 = vld [vmem:[%s338 + $0xc2] sm:$0xff]
        %v890 = vld [vmem:[%s338 + $0xca] sm:$0xff]
        %v891 = vld [vmem:[%s338 + $0xda] sm:$0xff]
        %v892 = vld [vmem:[%s338 + $0xe2] sm:$0xff]
        %v893 = vld [vmem:[%s338 + $0xf2] sm:$0xff]
        %v894 = vld [vmem:[%s338 + $0xfa] sm:$0xff]
        %v895 = vld [vmem:[%s338 + $0x10a] sm:$0xff]
        %v896 = vld [vmem:[%s338 + $0x112] sm:$0xff]
        %v897 = vld [vmem:[%s338 + $0x122] sm:$0xff]
        %v898 = vld [vmem:[%s338 + $0x12a] sm:$0xff]
        %v899 = vld [vmem:[%s338 + $0x13a] sm:$0xff]
        %v900 = vld [vmem:[%s338 + $0x142] sm:$0xff]
        %v901 = vld [vmem:[%s338 + $0x152] sm:$0xff]
        %v902 = vld [vmem:[%s338 + $0x15a] sm:$0xff]
        %v903 = vld [vmem:[%s338 + $0x16a] sm:$0xff]
        %v904 = vld [vmem:[%s338 + $0x172] sm:$0xff]
        %v905 = vpack.c.bf16 %v874, %v873
        %v906 = vpack.c.bf16 %v876, %v875
        %v907 = vpack.c.bf16 %v878, %v877
        %v908 = vpack.c.bf16 %v880, %v879
        %v909 = vpack.c.bf16 %v882, %v881
        %v910 = vpack.c.bf16 %v884, %v883
        %v911 = vpack.c.bf16 %v886, %v885
        %v912 = vpack.c.bf16 %v888, %v887
        %v913 = vpack.c.bf16 %v890, %v889
        %v914 = vpack.c.bf16 %v892, %v891
        %v915 = vpack.c.bf16 %v894, %v893
        %v916 = vpack.c.bf16 %v896, %v895
        %v917 = vpack.c.bf16 %v898, %v897
        %v918 = vpack.c.bf16 %v900, %v899
        %v919 = vpack.c.bf16 %v902, %v901
        %v920 = vpack.c.bf16 %v904, %v903
        %v921 = vld [vmem:[%s1 + $0x4] sm:$0x3]
        %v923 = vsel %vm447, %v905, 0
        %v926 = vsel %vm447, %v906, 0
        %v929 = vsel %vm447, %v907, 0
        %v932 = vsel %vm447, %v908, 0
        %v935 = vsel %vm447, %v909, 0
        %v938 = vsel %vm447, %v910, 0
        %v941 = vsel %vm447, %v911, 0
        %v944 = vsel %vm447, %v912, 0
        %v947 = vsel %vm447, %v913, 0
        %v950 = vsel %vm447, %v914, 0
        %v953 = vsel %vm447, %v915, 0
        %v956 = vsel %vm447, %v916, 0
        %v959 = vsel %vm447, %v917, 0
        %v962 = vsel %vm447, %v918, 0
        %v965 = vsel %vm447, %v919, 0
        %v968 = vsel %vm447, %v920, 0
        %v971 = vsel %vm496, %v921, 0
        %973 = vmatprep.subr.bf16.mxu0 0
        %974 = vmatpush1.bf16.msra.mxu0 0
        %975 = vmatprep.subr.bf16.mxu0 0
        %976 = vmatpush1.bf16.msra.mxu0 0
        %977 = vmatprep.subr.bf16.mxu0 0
        %978 = vmatpush1.bf16.msra.mxu0 0
        %979 = vmatprep.subr.bf16.mxu0 0
        %980 = vmatpush1.bf16.msra.mxu0 0
        %981 = vmatprep.subr.bf16.mxu0 0
        %982 = vmatpush1.bf16.msra.mxu0 0
        %983 = vmatprep.subr.bf16.mxu0 0
        %984 = vmatpush1.bf16.msra.mxu0 0
        %985 = vmatprep.subr.bf16.mxu0 0
        %986 = vmatpush1.bf16.msra.mxu0 0
        %987 = vmatprep.subr.bf16.mxu0 0
        %988 = vmatpush1.bf16.msra.mxu0 %v971
        %989 = vmatprep.subr.bf16.mxu0 0
        %990 = vmatpush2.bf16.msra.mxu0 0
        %991 = vmatprep.subr.bf16.mxu0 0
        %992 = vmatpush2.bf16.msra.mxu0 0
        %993 = vmatprep.subr.bf16.mxu0 0
        %994 = vmatpush2.bf16.msra.mxu0 0
        %995 = vmatprep.subr.bf16.mxu0 0
        %996 = vmatpush2.bf16.msra.mxu0 0
        %997 = vmatprep.subr.bf16.mxu0 0
        %998 = vmatpush2.bf16.msra.mxu0 0
        %999 = vmatprep.subr.bf16.mxu0 0
        %1000 = vmatpush2.bf16.msra.mxu0 0
        %1001 = vmatprep.subr.bf16.mxu0 0
        %1002 = vmatpush2.bf16.msra.mxu0 0
        %1003 = vmatprep.subr.bf16.mxu0 0
        %1004 = vmatpush2.bf16.msra.mxu0 0
        %1005 = vmatprep.mubr.bf16.mxu0 0
        %1006 = vmatmul.mubr.bf16.gmra.mxu0 %v923
        %v1007 = vpop.f32.mrf.mxu0
        %v1008 = vadd.f32 0.0, %v1007
        %v1009 = vpop.f32.mrf.mxu0
        %v1010 = vpop.f32.mrf.mxu0
        %v1011 = vadd.f32 0.0, %v1010
        %v1012 = vpop.f32.mrf.mxu0
        %1013 = vmatprep.mubr.bf16.mxu0 0
        %1014 = vmatmul.mubr.bf16.gmra.mxu0 %v926
        %v1015 = vpop.f32.mrf.mxu0
        %v1016 = vadd.f32 0.0, %v1015
        %v1017 = vpop.f32.mrf.mxu0
        %v1018 = vpop.f32.mrf.mxu0
        %v1019 = vadd.f32 0.0, %v1018
        %v1020 = vpop.f32.mrf.mxu0
        %1021 = vmatprep.mubr.bf16.mxu0 0
        %1022 = vmatmul.mubr.bf16.gmra.mxu0 %v929
        %v1023 = vpop.f32.mrf.mxu0
        %v1024 = vadd.f32 0.0, %v1023
        %v1025 = vpop.f32.mrf.mxu0
        %v1026 = vpop.f32.mrf.mxu0
        %v1027 = vadd.f32 0.0, %v1026
        %v1028 = vpop.f32.mrf.mxu0
        %1029 = vmatprep.mubr.bf16.mxu0 0
        %1030 = vmatmul.mubr.bf16.gmra.mxu0 %v932
        %v1031 = vpop.f32.mrf.mxu0
        %v1032 = vadd.f32 0.0, %v1031
        %v1033 = vpop.f32.mrf.mxu0
        %v1034 = vpop.f32.mrf.mxu0
        %v1035 = vadd.f32 0.0, %v1034
        %v1036 = vpop.f32.mrf.mxu0
        %1037 = vmatprep.mubr.bf16.mxu0 0
        %1038 = vmatmul.mubr.bf16.gmra.mxu0 %v935
        %v1039 = vpop.f32.mrf.mxu0
        %v1040 = vadd.f32 0.0, %v1039
        %v1041 = vpop.f32.mrf.mxu0
        %v1042 = vpop.f32.mrf.mxu0
        %v1043 = vadd.f32 0.0, %v1042
        %v1044 = vpop.f32.mrf.mxu0
        %1045 = vmatprep.mubr.bf16.mxu0 0
        %1046 = vmatmul.mubr.bf16.gmra.mxu0 %v938
        %v1047 = vpop.f32.mrf.mxu0
        %v1048 = vadd.f32 0.0, %v1047
        %v1049 = vpop.f32.mrf.mxu0
        %v1050 = vpop.f32.mrf.mxu0
        %v1051 = vadd.f32 0.0, %v1050
        %v1052 = vpop.f32.mrf.mxu0
        %1053 = vmatprep.mubr.bf16.mxu0 0
        %1054 = vmatmul.mubr.bf16.gmra.mxu0 %v941
        %v1055 = vpop.f32.mrf.mxu0
        %v1056 = vadd.f32 0.0, %v1055
        %v1057 = vpop.f32.mrf.mxu0
        %v1058 = vpop.f32.mrf.mxu0
        %v1059 = vadd.f32 0.0, %v1058
        %v1060 = vpop.f32.mrf.mxu0
        %1061 = vmatprep.mubr.bf16.mxu0 0
        %1062 = vmatmul.mubr.bf16.gmra.mxu0 %v944
        %v1063 = vpop.f32.mrf.mxu0
        %v1064 = vadd.f32 0.0, %v1063
        %v1065 = vpop.f32.mrf.mxu0
        %v1066 = vpop.f32.mrf.mxu0
        %v1067 = vadd.f32 0.0, %v1066
        %v1068 = vpop.f32.mrf.mxu0
        %1069 = vmatprep.mubr.bf16.mxu0 0
        %1070 = vmatmul.mubr.bf16.gmra.mxu0 %v947
        %v1071 = vpop.f32.mrf.mxu0
        %v1072 = vadd.f32 0.0, %v1071
        %v1073 = vpop.f32.mrf.mxu0
        %v1074 = vpop.f32.mrf.mxu0
        %v1075 = vadd.f32 0.0, %v1074
        %v1076 = vpop.f32.mrf.mxu0
        %1077 = vmatprep.mubr.bf16.mxu0 0
        %1078 = vmatmul.mubr.bf16.gmra.mxu0 %v950
        %v1079 = vpop.f32.mrf.mxu0
        %v1080 = vadd.f32 0.0, %v1079
        %v1081 = vpop.f32.mrf.mxu0
        %v1082 = vpop.f32.mrf.mxu0
        %v1083 = vadd.f32 0.0, %v1082
        %v1084 = vpop.f32.mrf.mxu0
        %1085 = vmatprep.mubr.bf16.mxu0 0
        %1086 = vmatmul.mubr.bf16.gmra.mxu0 %v953
        %v1087 = vpop.f32.mrf.mxu0
        %v1088 = vadd.f32 0.0, %v1087
        %v1089 = vpop.f32.mrf.mxu0
        %v1090 = vpop.f32.mrf.mxu0
        %v1091 = vadd.f32 0.0, %v1090
        %v1092 = vpop.f32.mrf.mxu0
        %1093 = vmatprep.mubr.bf16.mxu0 0
        %1094 = vmatmul.mubr.bf16.gmra.mxu0 %v956
        %v1095 = vpop.f32.mrf.mxu0
        %v1096 = vadd.f32 0.0, %v1095
        %v1097 = vpop.f32.mrf.mxu0
        %v1098 = vpop.f32.mrf.mxu0
        %v1099 = vadd.f32 0.0, %v1098
        %v1100 = vpop.f32.mrf.mxu0
        %1101 = vmatprep.mubr.bf16.mxu0 0
        %1102 = vmatmul.mubr.bf16.gmra.mxu0 %v959
        %v1103 = vpop.f32.mrf.mxu0
        %v1104 = vadd.f32 0.0, %v1103
        %v1105 = vpop.f32.mrf.mxu0
        %v1106 = vpop.f32.mrf.mxu0
        %v1107 = vadd.f32 0.0, %v1106
        %v1108 = vpop.f32.mrf.mxu0
        %1109 = vmatprep.mubr.bf16.mxu0 0
        %1110 = vmatmul.mubr.bf16.gmra.mxu0 %v962
        %v1111 = vpop.f32.mrf.mxu0
        %v1112 = vadd.f32 0.0, %v1111
        %v1113 = vpop.f32.mrf.mxu0
        %v1114 = vpop.f32.mrf.mxu0
        %v1115 = vadd.f32 0.0, %v1114
        %v1116 = vpop.f32.mrf.mxu0
        %1117 = vmatprep.mubr.bf16.mxu0 0
        %1118 = vmatmul.mubr.bf16.gmra.mxu0 %v965
        %v1119 = vpop.f32.mrf.mxu0
        %v1120 = vadd.f32 0.0, %v1119
        %v1121 = vpop.f32.mrf.mxu0
        %v1122 = vpop.f32.mrf.mxu0
        %v1123 = vadd.f32 0.0, %v1122
        %v1124 = vpop.f32.mrf.mxu0
        %1125 = vmatprep.mubr.bf16.mxu0 0
        %1126 = vmatmul.mubr.bf16.gmra.mxu0 %v968
        %v1127 = vpop.f32.mrf.mxu0
        %v1128 = vadd.f32 0.0, %v1127
        %v1129 = vpop.f32.mrf.mxu0
        %v1130 = vpop.f32.mrf.mxu0
        %v1131 = vadd.f32 0.0, %v1130
        %v1132 = vpop.f32.mrf.mxu0
        %1133 = vdwg.mxu0
        %v1134 = vadd.f32 %v747, %v1008
        %v1135 = vadd.f32 %v750, %v1011
        %v1136 = vadd.f32 %v755, %v1016
        %v1137 = vadd.f32 %v758, %v1019
        %v1138 = vadd.f32 %v763, %v1024
        %v1139 = vadd.f32 %v766, %v1027
        %v1140 = vadd.f32 %v771, %v1032
        %v1141 = vadd.f32 %v774, %v1035
        %v1142 = vadd.f32 %v779, %v1040
        %v1143 = vadd.f32 %v782, %v1043
        %v1144 = vadd.f32 %v787, %v1048
        %v1145 = vadd.f32 %v790, %v1051
        %v1146 = vadd.f32 %v795, %v1056
        %v1147 = vadd.f32 %v798, %v1059
        %v1148 = vadd.f32 %v803, %v1064
        %v1149 = vadd.f32 %v806, %v1067
        %v1150 = vadd.f32 %v811, %v1072
        %v1151 = vadd.f32 %v814, %v1075
        %v1152 = vadd.f32 %v819, %v1080
        %v1153 = vadd.f32 %v822, %v1083
        %v1154 = vadd.f32 %v827, %v1088
        %v1155 = vadd.f32 %v830, %v1091
        %v1156 = vadd.f32 %v835, %v1096
        %v1157 = vadd.f32 %v838, %v1099
        %v1158 = vadd.f32 %v843, %v1104
        %v1159 = vadd.f32 %v846, %v1107
        %v1160 = vadd.f32 %v851, %v1112
        %v1161 = vadd.f32 %v854, %v1115
        %v1162 = vadd.f32 %v859, %v1120
        %v1163 = vadd.f32 %v862, %v1123
        %v1164 = vadd.f32 %v867, %v1128
        %v1165 = vadd.f32 %v870, %v1131
        %s1166 = scalar_lea.vmem %s338, 24
        %v1167 = vld [vmem:[%s1166] sm:$0xff]
        %v1168 = vld [vmem:[%s1166 + $0x8] sm:$0xff]
        %v1169 = vld [vmem:[%s1166 + $0x18] sm:$0xff]
        %v1170 = vld [vmem:[%s1166 + $0x20] sm:$0xff]
        %v1171 = vld [vmem:[%s1166 + $0x30] sm:$0xff]
        %v1172 = vld [vmem:[%s1166 + $0x38] sm:$0xff]
        %v1173 = vld [vmem:[%s1166 + $0x48] sm:$0xff]
        %v1174 = vld [vmem:[%s1166 + $0x50] sm:$0xff]
        %v1175 = vld [vmem:[%s1166 + $0x60] sm:$0xff]
        %v1176 = vld [vmem:[%s1166 + $0x68] sm:$0xff]
        %v1177 = vld [vmem:[%s1166 + $0x78] sm:$0xff]
        %v1178 = vld [vmem:[%s1166 + $0x80] sm:$0xff]
        %v1179 = vld [vmem:[%s1166 + $0x90] sm:$0xff]
        %v1180 = vld [vmem:[%s1166 + $0x98] sm:$0xff]
        %v1181 = vld [vmem:[%s1166 + $0xa8] sm:$0xff]
        %v1182 = vld [vmem:[%s1166 + $0xb0] sm:$0xff]
        %v1183 = vld [vmem:[%s1166 + $0xc0] sm:$0xff]
        %v1184 = vld [vmem:[%s1166 + $0xc8] sm:$0xff]
        %v1185 = vld [vmem:[%s1166 + $0xd8] sm:$0xff]
        %v1186 = vld [vmem:[%s1166 + $0xe0] sm:$0xff]
        %v1187 = vld [vmem:[%s1166 + $0xf0] sm:$0xff]
        %v1188 = vld [vmem:[%s1166 + $0xf8] sm:$0xff]
        %v1189 = vld [vmem:[%s1166 + $0x108] sm:$0xff]
        %v1190 = vld [vmem:[%s1166 + $0x110] sm:$0xff]
        %v1191 = vld [vmem:[%s1166 + $0x120] sm:$0xff]
        %v1192 = vld [vmem:[%s1166 + $0x128] sm:$0xff]
        %v1193 = vld [vmem:[%s1166 + $0x138] sm:$0xff]
        %v1194 = vld [vmem:[%s1166 + $0x140] sm:$0xff]
        %v1195 = vld [vmem:[%s1166 + $0x150] sm:$0xff]
        %v1196 = vld [vmem:[%s1166 + $0x158] sm:$0xff]
        %v1197 = vld [vmem:[%s1166 + $0x168] sm:$0xff]
        %v1198 = vld [vmem:[%s1166 + $0x170] sm:$0xff]
        %v1199 = vpack.c.bf16 %v1168, %v1167
        %v1200 = vpack.c.bf16 %v1170, %v1169
        %v1201 = vpack.c.bf16 %v1172, %v1171
        %v1202 = vpack.c.bf16 %v1174, %v1173
        %v1203 = vpack.c.bf16 %v1176, %v1175
        %v1204 = vpack.c.bf16 %v1178, %v1177
        %v1205 = vpack.c.bf16 %v1180, %v1179
        %v1206 = vpack.c.bf16 %v1182, %v1181
        %v1207 = vpack.c.bf16 %v1184, %v1183
        %v1208 = vpack.c.bf16 %v1186, %v1185
        %v1209 = vpack.c.bf16 %v1188, %v1187
        %v1210 = vpack.c.bf16 %v1190, %v1189
        %v1211 = vpack.c.bf16 %v1192, %v1191
        %v1212 = vpack.c.bf16 %v1194, %v1193
        %v1213 = vpack.c.bf16 %v1196, %v1195
        %v1214 = vpack.c.bf16 %v1198, %v1197
        %v1215 = vld [vmem:[%s1 + $0x4] sm:$0xc]
        %v1217 = vunpack.c.l.b16 %v1215
        %v1218 = vpack.c.b16 %v1217, %v1217
        %v1219 = vrot.slane %v1218, 2
        %v1221 = vsel %vm447, %v1199, 0
        %v1224 = vsel %vm447, %v1200, 0
        %v1227 = vsel %vm447, %v1201, 0
        %v1230 = vsel %vm447, %v1202, 0
        %v1233 = vsel %vm447, %v1203, 0
        %v1236 = vsel %vm447, %v1204, 0
        %v1239 = vsel %vm447, %v1205, 0
        %v1242 = vsel %vm447, %v1206, 0
        %v1245 = vsel %vm447, %v1207, 0
        %v1248 = vsel %vm447, %v1208, 0
        %v1251 = vsel %vm447, %v1209, 0
        %v1254 = vsel %vm447, %v1210, 0
        %v1257 = vsel %vm447, %v1211, 0
        %v1260 = vsel %vm447, %v1212, 0
        %v1263 = vsel %vm447, %v1213, 0
        %v1266 = vsel %vm447, %v1214, 0
        %v1269 = vsel %vm496, %v1219, 0
        %1271 = vmatprep.subr.bf16.mxu0 0
        %1272 = vmatpush1.bf16.msra.mxu0 0
        %1273 = vmatprep.subr.bf16.mxu0 0
        %1274 = vmatpush1.bf16.msra.mxu0 0
        %1275 = vmatprep.subr.bf16.mxu0 0
        %1276 = vmatpush1.bf16.msra.mxu0 0
        %1277 = vmatprep.subr.bf16.mxu0 0
        %1278 = vmatpush1.bf16.msra.mxu0 0
        %1279 = vmatprep.subr.bf16.mxu0 0
        %1280 = vmatpush1.bf16.msra.mxu0 0
        %1281 = vmatprep.subr.bf16.mxu0 0
        %1282 = vmatpush1.bf16.msra.mxu0 0
        %1283 = vmatprep.subr.bf16.mxu0 0
        %1284 = vmatpush1.bf16.msra.mxu0 0
        %1285 = vmatprep.subr.bf16.mxu0 0
        %1286 = vmatpush1.bf16.msra.mxu0 %v1269
        %1287 = vmatprep.subr.bf16.mxu0 0
        %1288 = vmatpush2.bf16.msra.mxu0 0
        %1289 = vmatprep.subr.bf16.mxu0 0
        %1290 = vmatpush2.bf16.msra.mxu0 0
        %1291 = vmatprep.subr.bf16.mxu0 0
        %1292 = vmatpush2.bf16.msra.mxu0 0
        %1293 = vmatprep.subr.bf16.mxu0 0
        %1294 = vmatpush2.bf16.msra.mxu0 0
        %1295 = vmatprep.subr.bf16.mxu0 0
        %1296 = vmatpush2.bf16.msra.mxu0 0
        %1297 = vmatprep.subr.bf16.mxu0 0
        %1298 = vmatpush2.bf16.msra.mxu0 0
        %1299 = vmatprep.subr.bf16.mxu0 0
        %1300 = vmatpush2.bf16.msra.mxu0 0
        %1301 = vmatprep.subr.bf16.mxu0 0
        %1302 = vmatpush2.bf16.msra.mxu0 0
        %1303 = vmatprep.mubr.bf16.mxu0 0
        %1304 = vmatmul.mubr.bf16.gmra.mxu0 %v1221
        %v1305 = vpop.f32.mrf.mxu0
        %v1306 = vadd.f32 0.0, %v1305
        %v1307 = vpop.f32.mrf.mxu0
        %v1308 = vpop.f32.mrf.mxu0
        %v1309 = vadd.f32 0.0, %v1308
        %v1310 = vpop.f32.mrf.mxu0
        %1311 = vmatprep.mubr.bf16.mxu0 0
        %1312 = vmatmul.mubr.bf16.gmra.mxu0 %v1224
        %v1313 = vpop.f32.mrf.mxu0
        %v1314 = vadd.f32 0.0, %v1313
        %v1315 = vpop.f32.mrf.mxu0
        %v1316 = vpop.f32.mrf.mxu0
        %v1317 = vadd.f32 0.0, %v1316
        %v1318 = vpop.f32.mrf.mxu0
        %1319 = vmatprep.mubr.bf16.mxu0 0
        %1320 = vmatmul.mubr.bf16.gmra.mxu0 %v1227
        %v1321 = vpop.f32.mrf.mxu0
        %v1322 = vadd.f32 0.0, %v1321
        %v1323 = vpop.f32.mrf.mxu0
        %v1324 = vpop.f32.mrf.mxu0
        %v1325 = vadd.f32 0.0, %v1324
        %v1326 = vpop.f32.mrf.mxu0
        %1327 = vmatprep.mubr.bf16.mxu0 0
        %1328 = vmatmul.mubr.bf16.gmra.mxu0 %v1230
        %v1329 = vpop.f32.mrf.mxu0
        %v1330 = vadd.f32 0.0, %v1329
        %v1331 = vpop.f32.mrf.mxu0
        %v1332 = vpop.f32.mrf.mxu0
        %v1333 = vadd.f32 0.0, %v1332
        %v1334 = vpop.f32.mrf.mxu0
        %1335 = vmatprep.mubr.bf16.mxu0 0
        %1336 = vmatmul.mubr.bf16.gmra.mxu0 %v1233
        %v1337 = vpop.f32.mrf.mxu0
        %v1338 = vadd.f32 0.0, %v1337
        %v1339 = vpop.f32.mrf.mxu0
        %v1340 = vpop.f32.mrf.mxu0
        %v1341 = vadd.f32 0.0, %v1340
        %v1342 = vpop.f32.mrf.mxu0
        %1343 = vmatprep.mubr.bf16.mxu0 0
        %1344 = vmatmul.mubr.bf16.gmra.mxu0 %v1236
        %v1345 = vpop.f32.mrf.mxu0
        %v1346 = vadd.f32 0.0, %v1345
        %v1347 = vpop.f32.mrf.mxu0
        %v1348 = vpop.f32.mrf.mxu0
        %v1349 = vadd.f32 0.0, %v1348
        %v1350 = vpop.f32.mrf.mxu0
        %1351 = vmatprep.mubr.bf16.mxu0 0
        %1352 = vmatmul.mubr.bf16.gmra.mxu0 %v1239
        %v1353 = vpop.f32.mrf.mxu0
        %v1354 = vadd.f32 0.0, %v1353
        %v1355 = vpop.f32.mrf.mxu0
        %v1356 = vpop.f32.mrf.mxu0
        %v1357 = vadd.f32 0.0, %v1356
        %v1358 = vpop.f32.mrf.mxu0
        %1359 = vmatprep.mubr.bf16.mxu0 0
        %1360 = vmatmul.mubr.bf16.gmra.mxu0 %v1242
        %v1361 = vpop.f32.mrf.mxu0
        %v1362 = vadd.f32 0.0, %v1361
        %v1363 = vpop.f32.mrf.mxu0
        %v1364 = vpop.f32.mrf.mxu0
        %v1365 = vadd.f32 0.0, %v1364
        %v1366 = vpop.f32.mrf.mxu0
        %1367 = vmatprep.mubr.bf16.mxu0 0
        %1368 = vmatmul.mubr.bf16.gmra.mxu0 %v1245
        %v1369 = vpop.f32.mrf.mxu0
        %v1370 = vadd.f32 0.0, %v1369
        %v1371 = vpop.f32.mrf.mxu0
        %v1372 = vpop.f32.mrf.mxu0
        %v1373 = vadd.f32 0.0, %v1372
        %v1374 = vpop.f32.mrf.mxu0
        %1375 = vmatprep.mubr.bf16.mxu0 0
        %1376 = vmatmul.mubr.bf16.gmra.mxu0 %v1248
        %v1377 = vpop.f32.mrf.mxu0
        %v1378 = vadd.f32 0.0, %v1377
        %v1379 = vpop.f32.mrf.mxu0
        %v1380 = vpop.f32.mrf.mxu0
        %v1381 = vadd.f32 0.0, %v1380
        %v1382 = vpop.f32.mrf.mxu0
        %1383 = vmatprep.mubr.bf16.mxu0 0
        %1384 = vmatmul.mubr.bf16.gmra.mxu0 %v1251
        %v1385 = vpop.f32.mrf.mxu0
        %v1386 = vadd.f32 0.0, %v1385
        %v1387 = vpop.f32.mrf.mxu0
        %v1388 = vpop.f32.mrf.mxu0
        %v1389 = vadd.f32 0.0, %v1388
        %v1390 = vpop.f32.mrf.mxu0
        %1391 = vmatprep.mubr.bf16.mxu0 0
        %1392 = vmatmul.mubr.bf16.gmra.mxu0 %v1254
        %v1393 = vpop.f32.mrf.mxu0
        %v1394 = vadd.f32 0.0, %v1393
        %v1395 = vpop.f32.mrf.mxu0
        %v1396 = vpop.f32.mrf.mxu0
        %v1397 = vadd.f32 0.0, %v1396
        %v1398 = vpop.f32.mrf.mxu0
        %1399 = vmatprep.mubr.bf16.mxu0 0
        %1400 = vmatmul.mubr.bf16.gmra.mxu0 %v1257
        %v1401 = vpop.f32.mrf.mxu0
        %v1402 = vadd.f32 0.0, %v1401
        %v1403 = vpop.f32.mrf.mxu0
        %v1404 = vpop.f32.mrf.mxu0
        %v1405 = vadd.f32 0.0, %v1404
        %v1406 = vpop.f32.mrf.mxu0
        %1407 = vmatprep.mubr.bf16.mxu0 0
        %1408 = vmatmul.mubr.bf16.gmra.mxu0 %v1260
        %v1409 = vpop.f32.mrf.mxu0
        %v1410 = vadd.f32 0.0, %v1409
        %v1411 = vpop.f32.mrf.mxu0
        %v1412 = vpop.f32.mrf.mxu0
        %v1413 = vadd.f32 0.0, %v1412
        %v1414 = vpop.f32.mrf.mxu0
        %1415 = vmatprep.mubr.bf16.mxu0 0
        %1416 = vmatmul.mubr.bf16.gmra.mxu0 %v1263
        %v1417 = vpop.f32.mrf.mxu0
        %v1418 = vadd.f32 0.0, %v1417
        %v1419 = vpop.f32.mrf.mxu0
        %v1420 = vpop.f32.mrf.mxu0
        %v1421 = vadd.f32 0.0, %v1420
        %v1422 = vpop.f32.mrf.mxu0
        %1423 = vmatprep.mubr.bf16.mxu0 0
        %1424 = vmatmul.mubr.bf16.gmra.mxu0 %v1266
        %v1425 = vpop.f32.mrf.mxu0
        %v1426 = vadd.f32 0.0, %v1425
        %v1427 = vpop.f32.mrf.mxu0
        %v1428 = vpop.f32.mrf.mxu0
        %v1429 = vadd.f32 0.0, %v1428
        %v1430 = vpop.f32.mrf.mxu0
        %1431 = vdwg.mxu0
        %v1432 = vadd.f32 %v1134, %v1306
        %v1433 = vadd.f32 %v1135, %v1309
        %v1434 = vadd.f32 %v1136, %v1314
        %v1435 = vadd.f32 %v1137, %v1317
        %v1436 = vadd.f32 %v1138, %v1322
        %v1437 = vadd.f32 %v1139, %v1325
        %v1438 = vadd.f32 %v1140, %v1330
        %v1439 = vadd.f32 %v1141, %v1333
        %v1440 = vadd.f32 %v1142, %v1338
        %v1441 = vadd.f32 %v1143, %v1341
        %v1442 = vadd.f32 %v1144, %v1346
        %v1443 = vadd.f32 %v1145, %v1349
        %v1444 = vadd.f32 %v1146, %v1354
        %v1445 = vadd.f32 %v1147, %v1357
        %v1446 = vadd.f32 %v1148, %v1362
        %v1447 = vadd.f32 %v1149, %v1365
        %v1448 = vadd.f32 %v1150, %v1370
        %v1449 = vadd.f32 %v1151, %v1373
        %v1450 = vadd.f32 %v1152, %v1378
        %v1451 = vadd.f32 %v1153, %v1381
        %v1452 = vadd.f32 %v1154, %v1386
        %v1453 = vadd.f32 %v1155, %v1389
        %v1454 = vadd.f32 %v1156, %v1394
        %v1455 = vadd.f32 %v1157, %v1397
        %v1456 = vadd.f32 %v1158, %v1402
        %v1457 = vadd.f32 %v1159, %v1405
        %v1458 = vadd.f32 %v1160, %v1410
        %v1459 = vadd.f32 %v1161, %v1413
        %v1460 = vadd.f32 %v1162, %v1418
        %v1461 = vadd.f32 %v1163, %v1421
        %v1462 = vadd.f32 %v1164, %v1426
        %v1463 = vadd.f32 %v1165, %v1429
        %v1464 = vld [vmem:[%s1166 + $0x1] sm:$0xff]
        %v1465 = vld [vmem:[%s1166 + $0x9] sm:$0xff]
        %v1466 = vld [vmem:[%s1166 + $0x19] sm:$0xff]
        %v1467 = vld [vmem:[%s1166 + $0x21] sm:$0xff]
        %v1468 = vld [vmem:[%s1166 + $0x31] sm:$0xff]
        %v1469 = vld [vmem:[%s1166 + $0x39] sm:$0xff]
        %v1470 = vld [vmem:[%s1166 + $0x49] sm:$0xff]
        %v1471 = vld [vmem:[%s1166 + $0x51] sm:$0xff]
        %v1472 = vld [vmem:[%s1166 + $0x61] sm:$0xff]
        %v1473 = vld [vmem:[%s1166 + $0x69] sm:$0xff]
        %v1474 = vld [vmem:[%s1166 + $0x79] sm:$0xff]
        %v1475 = vld [vmem:[%s1166 + $0x81] sm:$0xff]
        %v1476 = vld [vmem:[%s1166 + $0x91] sm:$0xff]
        %v1477 = vld [vmem:[%s1166 + $0x99] sm:$0xff]
        %v1478 = vld [vmem:[%s1166 + $0xa9] sm:$0xff]
        %v1479 = vld [vmem:[%s1166 + $0xb1] sm:$0xff]
        %v1480 = vld [vmem:[%s1166 + $0xc1] sm:$0xff]
        %v1481 = vld [vmem:[%s1166 + $0xc9] sm:$0xff]
        %v1482 = vld [vmem:[%s1166 + $0xd9] sm:$0xff]
        %v1483 = vld [vmem:[%s1166 + $0xe1] sm:$0xff]
        %v1484 = vld [vmem:[%s1166 + $0xf1] sm:$0xff]
        %v1485 = vld [vmem:[%s1166 + $0xf9] sm:$0xff]
        %v1486 = vld [vmem:[%s1166 + $0x109] sm:$0xff]
        %v1487 = vld [vmem:[%s1166 + $0x111] sm:$0xff]
        %v1488 = vld [vmem:[%s1166 + $0x121] sm:$0xff]
        %v1489 = vld [vmem:[%s1166 + $0x129] sm:$0xff]
        %v1490 = vld [vmem:[%s1166 + $0x139] sm:$0xff]
        %v1491 = vld [vmem:[%s1166 + $0x141] sm:$0xff]
        %v1492 = vld [vmem:[%s1166 + $0x151] sm:$0xff]
        %v1493 = vld [vmem:[%s1166 + $0x159] sm:$0xff]
        %v1494 = vld [vmem:[%s1166 + $0x169] sm:$0xff]
        %v1495 = vld [vmem:[%s1166 + $0x171] sm:$0xff]
        %v1496 = vpack.c.bf16 %v1465, %v1464
        %v1497 = vpack.c.bf16 %v1467, %v1466
        %v1498 = vpack.c.bf16 %v1469, %v1468
        %v1499 = vpack.c.bf16 %v1471, %v1470
        %v1500 = vpack.c.bf16 %v1473, %v1472
        %v1501 = vpack.c.bf16 %v1475, %v1474
        %v1502 = vpack.c.bf16 %v1477, %v1476
        %v1503 = vpack.c.bf16 %v1479, %v1478
        %v1504 = vpack.c.bf16 %v1481, %v1480
        %v1505 = vpack.c.bf16 %v1483, %v1482
        %v1506 = vpack.c.bf16 %v1485, %v1484
        %v1507 = vpack.c.bf16 %v1487, %v1486
        %v1508 = vpack.c.bf16 %v1489, %v1488
        %v1509 = vpack.c.bf16 %v1491, %v1490
        %v1510 = vpack.c.bf16 %v1493, %v1492
        %v1511 = vpack.c.bf16 %v1495, %v1494
        %v1512 = vld [vmem:[%s1 + $0x8] sm:$0x3]
        %v1514 = vsel %vm447, %v1496, 0
        %v1517 = vsel %vm447, %v1497, 0
        %v1520 = vsel %vm447, %v1498, 0
        %v1523 = vsel %vm447, %v1499, 0
        %v1526 = vsel %vm447, %v1500, 0
        %v1529 = vsel %vm447, %v1501, 0
        %v1532 = vsel %vm447, %v1502, 0
        %v1535 = vsel %vm447, %v1503, 0
        %v1538 = vsel %vm447, %v1504, 0
        %v1541 = vsel %vm447, %v1505, 0
        %v1544 = vsel %vm447, %v1506, 0
        %v1547 = vsel %vm447, %v1507, 0
        %v1550 = vsel %vm447, %v1508, 0
        %v1553 = vsel %vm447, %v1509, 0
        %v1556 = vsel %vm447, %v1510, 0
        %v1559 = vsel %vm447, %v1511, 0
        %v1562 = vsel %vm496, %v1512, 0
        %1564 = vmatprep.subr.bf16.mxu0 0
        %1565 = vmatpush1.bf16.msra.mxu0 0
        %1566 = vmatprep.subr.bf16.mxu0 0
        %1567 = vmatpush1.bf16.msra.mxu0 0
        %1568 = vmatprep.subr.bf16.mxu0 0
        %1569 = vmatpush1.bf16.msra.mxu0 0
        %1570 = vmatprep.subr.bf16.mxu0 0
        %1571 = vmatpush1.bf16.msra.mxu0 0
        %1572 = vmatprep.subr.bf16.mxu0 0
        %1573 = vmatpush1.bf16.msra.mxu0 0
        %1574 = vmatprep.subr.bf16.mxu0 0
        %1575 = vmatpush1.bf16.msra.mxu0 0
        %1576 = vmatprep.subr.bf16.mxu0 0
        %1577 = vmatpush1.bf16.msra.mxu0 0
        %1578 = vmatprep.subr.bf16.mxu0 0
        %1579 = vmatpush1.bf16.msra.mxu0 %v1562
        %1580 = vmatprep.subr.bf16.mxu0 0
        %1581 = vmatpush2.bf16.msra.mxu0 0
        %1582 = vmatprep.subr.bf16.mxu0 0
        %1583 = vmatpush2.bf16.msra.mxu0 0
        %1584 = vmatprep.subr.bf16.mxu0 0
        %1585 = vmatpush2.bf16.msra.mxu0 0
        %1586 = vmatprep.subr.bf16.mxu0 0
        %1587 = vmatpush2.bf16.msra.mxu0 0
        %1588 = vmatprep.subr.bf16.mxu0 0
        %1589 = vmatpush2.bf16.msra.mxu0 0
        %1590 = vmatprep.subr.bf16.mxu0 0
        %1591 = vmatpush2.bf16.msra.mxu0 0
        %1592 = vmatprep.subr.bf16.mxu0 0
        %1593 = vmatpush2.bf16.msra.mxu0 0
        %1594 = vmatprep.subr.bf16.mxu0 0
        %1595 = vmatpush2.bf16.msra.mxu0 0
        %1596 = vmatprep.mubr.bf16.mxu0 0
        %1597 = vmatmul.mubr.bf16.gmra.mxu0 %v1514
        %v1598 = vpop.f32.mrf.mxu0
        %v1599 = vadd.f32 0.0, %v1598
        %v1600 = vpop.f32.mrf.mxu0
        %v1601 = vpop.f32.mrf.mxu0
        %v1602 = vadd.f32 0.0, %v1601
        %v1603 = vpop.f32.mrf.mxu0
        %1604 = vmatprep.mubr.bf16.mxu0 0
        %1605 = vmatmul.mubr.bf16.gmra.mxu0 %v1517
        %v1606 = vpop.f32.mrf.mxu0
        %v1607 = vadd.f32 0.0, %v1606
        %v1608 = vpop.f32.mrf.mxu0
        %v1609 = vpop.f32.mrf.mxu0
        %v1610 = vadd.f32 0.0, %v1609
        %v1611 = vpop.f32.mrf.mxu0
        %1612 = vmatprep.mubr.bf16.mxu0 0
        %1613 = vmatmul.mubr.bf16.gmra.mxu0 %v1520
        %v1614 = vpop.f32.mrf.mxu0
        %v1615 = vadd.f32 0.0, %v1614
        %v1616 = vpop.f32.mrf.mxu0
        %v1617 = vpop.f32.mrf.mxu0
        %v1618 = vadd.f32 0.0, %v1617
        %v1619 = vpop.f32.mrf.mxu0
        %1620 = vmatprep.mubr.bf16.mxu0 0
        %1621 = vmatmul.mubr.bf16.gmra.mxu0 %v1523
        %v1622 = vpop.f32.mrf.mxu0
        %v1623 = vadd.f32 0.0, %v1622
        %v1624 = vpop.f32.mrf.mxu0
        %v1625 = vpop.f32.mrf.mxu0
        %v1626 = vadd.f32 0.0, %v1625
        %v1627 = vpop.f32.mrf.mxu0
        %1628 = vmatprep.mubr.bf16.mxu0 0
        %1629 = vmatmul.mubr.bf16.gmra.mxu0 %v1526
        %v1630 = vpop.f32.mrf.mxu0
        %v1631 = vadd.f32 0.0, %v1630
        %v1632 = vpop.f32.mrf.mxu0
        %v1633 = vpop.f32.mrf.mxu0
        %v1634 = vadd.f32 0.0, %v1633
        %v1635 = vpop.f32.mrf.mxu0
        %1636 = vmatprep.mubr.bf16.mxu0 0
        %1637 = vmatmul.mubr.bf16.gmra.mxu0 %v1529
        %v1638 = vpop.f32.mrf.mxu0
        %v1639 = vadd.f32 0.0, %v1638
        %v1640 = vpop.f32.mrf.mxu0
        %v1641 = vpop.f32.mrf.mxu0
        %v1642 = vadd.f32 0.0, %v1641
        %v1643 = vpop.f32.mrf.mxu0
        %1644 = vmatprep.mubr.bf16.mxu0 0
        %1645 = vmatmul.mubr.bf16.gmra.mxu0 %v1532
        %v1646 = vpop.f32.mrf.mxu0
        %v1647 = vadd.f32 0.0, %v1646
        %v1648 = vpop.f32.mrf.mxu0
        %v1649 = vpop.f32.mrf.mxu0
        %v1650 = vadd.f32 0.0, %v1649
        %v1651 = vpop.f32.mrf.mxu0
        %1652 = vmatprep.mubr.bf16.mxu0 0
        %1653 = vmatmul.mubr.bf16.gmra.mxu0 %v1535
        %v1654 = vpop.f32.mrf.mxu0
        %v1655 = vadd.f32 0.0, %v1654
        %v1656 = vpop.f32.mrf.mxu0
        %v1657 = vpop.f32.mrf.mxu0
        %v1658 = vadd.f32 0.0, %v1657
        %v1659 = vpop.f32.mrf.mxu0
        %1660 = vmatprep.mubr.bf16.mxu0 0
        %1661 = vmatmul.mubr.bf16.gmra.mxu0 %v1538
        %v1662 = vpop.f32.mrf.mxu0
        %v1663 = vadd.f32 0.0, %v1662
        %v1664 = vpop.f32.mrf.mxu0
        %v1665 = vpop.f32.mrf.mxu0
        %v1666 = vadd.f32 0.0, %v1665
        %v1667 = vpop.f32.mrf.mxu0
        %1668 = vmatprep.mubr.bf16.mxu0 0
        %1669 = vmatmul.mubr.bf16.gmra.mxu0 %v1541
        %v1670 = vpop.f32.mrf.mxu0
        %v1671 = vadd.f32 0.0, %v1670
        %v1672 = vpop.f32.mrf.mxu0
        %v1673 = vpop.f32.mrf.mxu0
        %v1674 = vadd.f32 0.0, %v1673
        %v1675 = vpop.f32.mrf.mxu0
        %1676 = vmatprep.mubr.bf16.mxu0 0
        %1677 = vmatmul.mubr.bf16.gmra.mxu0 %v1544
        %v1678 = vpop.f32.mrf.mxu0
        %v1679 = vadd.f32 0.0, %v1678
        %v1680 = vpop.f32.mrf.mxu0
        %v1681 = vpop.f32.mrf.mxu0
        %v1682 = vadd.f32 0.0, %v1681
        %v1683 = vpop.f32.mrf.mxu0
        %1684 = vmatprep.mubr.bf16.mxu0 0
        %1685 = vmatmul.mubr.bf16.gmra.mxu0 %v1547
        %v1686 = vpop.f32.mrf.mxu0
        %v1687 = vadd.f32 0.0, %v1686
        %v1688 = vpop.f32.mrf.mxu0
        %v1689 = vpop.f32.mrf.mxu0
        %v1690 = vadd.f32 0.0, %v1689
        %v1691 = vpop.f32.mrf.mxu0
        %1692 = vmatprep.mubr.bf16.mxu0 0
        %1693 = vmatmul.mubr.bf16.gmra.mxu0 %v1550
        %v1694 = vpop.f32.mrf.mxu0
        %v1695 = vadd.f32 0.0, %v1694
        %v1696 = vpop.f32.mrf.mxu0
        %v1697 = vpop.f32.mrf.mxu0
        %v1698 = vadd.f32 0.0, %v1697
        %v1699 = vpop.f32.mrf.mxu0
        %1700 = vmatprep.mubr.bf16.mxu0 0
        %1701 = vmatmul.mubr.bf16.gmra.mxu0 %v1553
        %v1702 = vpop.f32.mrf.mxu0
        %v1703 = vadd.f32 0.0, %v1702
        %v1704 = vpop.f32.mrf.mxu0
        %v1705 = vpop.f32.mrf.mxu0
        %v1706 = vadd.f32 0.0, %v1705
        %v1707 = vpop.f32.mrf.mxu0
        %1708 = vmatprep.mubr.bf16.mxu0 0
        %1709 = vmatmul.mubr.bf16.gmra.mxu0 %v1556
        %v1710 = vpop.f32.mrf.mxu0
        %v1711 = vadd.f32 0.0, %v1710
        %v1712 = vpop.f32.mrf.mxu0
        %v1713 = vpop.f32.mrf.mxu0
        %v1714 = vadd.f32 0.0, %v1713
        %v1715 = vpop.f32.mrf.mxu0
        %1716 = vmatprep.mubr.bf16.mxu0 0
        %1717 = vmatmul.mubr.bf16.gmra.mxu0 %v1559
        %v1718 = vpop.f32.mrf.mxu0
        %v1719 = vadd.f32 0.0, %v1718
        %v1720 = vpop.f32.mrf.mxu0
        %v1721 = vpop.f32.mrf.mxu0
        %v1722 = vadd.f32 0.0, %v1721
        %v1723 = vpop.f32.mrf.mxu0
        %1724 = vdwg.mxu0
        %v1725 = vadd.f32 %v1432, %v1599
        %v1726 = vadd.f32 %v1433, %v1602
        %v1727 = vadd.f32 %v1434, %v1607
        %v1728 = vadd.f32 %v1435, %v1610
        %v1729 = vadd.f32 %v1436, %v1615
        %v1730 = vadd.f32 %v1437, %v1618
        %v1731 = vadd.f32 %v1438, %v1623
        %v1732 = vadd.f32 %v1439, %v1626
        %v1733 = vadd.f32 %v1440, %v1631
        %v1734 = vadd.f32 %v1441, %v1634
        %v1735 = vadd.f32 %v1442, %v1639
        %v1736 = vadd.f32 %v1443, %v1642
        %v1737 = vadd.f32 %v1444, %v1647
        %v1738 = vadd.f32 %v1445, %v1650
        %v1739 = vadd.f32 %v1446, %v1655
        %v1740 = vadd.f32 %v1447, %v1658
        %v1741 = vadd.f32 %v1448, %v1663
        %v1742 = vadd.f32 %v1449, %v1666
        %v1743 = vadd.f32 %v1450, %v1671
        %v1744 = vadd.f32 %v1451, %v1674
        %v1745 = vadd.f32 %v1452, %v1679
        %v1746 = vadd.f32 %v1453, %v1682
        %v1747 = vadd.f32 %v1454, %v1687
        %v1748 = vadd.f32 %v1455, %v1690
        %v1749 = vadd.f32 %v1456, %v1695
        %v1750 = vadd.f32 %v1457, %v1698
        %v1751 = vadd.f32 %v1458, %v1703
        %v1752 = vadd.f32 %v1459, %v1706
        %v1753 = vadd.f32 %v1460, %v1711
        %v1754 = vadd.f32 %v1461, %v1714
        %v1755 = vadd.f32 %v1462, %v1719
        %v1756 = vadd.f32 %v1463, %v1722
        %v1757 = vld [vmem:[%s1166 + $0x2] sm:$0xff]
        %v1758 = vld [vmem:[%s1166 + $0xa] sm:$0xff]
        %v1759 = vld [vmem:[%s1166 + $0x1a] sm:$0xff]
        %v1760 = vld [vmem:[%s1166 + $0x22] sm:$0xff]
        %v1761 = vld [vmem:[%s1166 + $0x32] sm:$0xff]
        %v1762 = vld [vmem:[%s1166 + $0x3a] sm:$0xff]
        %v1763 = vld [vmem:[%s1166 + $0x4a] sm:$0xff]
        %v1764 = vld [vmem:[%s1166 + $0x52] sm:$0xff]
        %v1765 = vld [vmem:[%s1166 + $0x62] sm:$0xff]
        %v1766 = vld [vmem:[%s1166 + $0x6a] sm:$0xff]
        %v1767 = vld [vmem:[%s1166 + $0x7a] sm:$0xff]
        %v1768 = vld [vmem:[%s1166 + $0x82] sm:$0xff]
        %v1769 = vld [vmem:[%s1166 + $0x92] sm:$0xff]
        %v1770 = vld [vmem:[%s1166 + $0x9a] sm:$0xff]
        %v1771 = vld [vmem:[%s1166 + $0xaa] sm:$0xff]
        %v1772 = vld [vmem:[%s1166 + $0xb2] sm:$0xff]
        %v1773 = vld [vmem:[%s1166 + $0xc2] sm:$0xff]
        %v1774 = vld [vmem:[%s1166 + $0xca] sm:$0xff]
        %v1775 = vld [vmem:[%s1166 + $0xda] sm:$0xff]
        %v1776 = vld [vmem:[%s1166 + $0xe2] sm:$0xff]
        %v1777 = vld [vmem:[%s1166 + $0xf2] sm:$0xff]
        %v1778 = vld [vmem:[%s1166 + $0xfa] sm:$0xff]
        %v1779 = vld [vmem:[%s1166 + $0x10a] sm:$0xff]
        %v1780 = vld [vmem:[%s1166 + $0x112] sm:$0xff]
        %v1781 = vld [vmem:[%s1166 + $0x122] sm:$0xff]
        %v1782 = vld [vmem:[%s1166 + $0x12a] sm:$0xff]
        %v1783 = vld [vmem:[%s1166 + $0x13a] sm:$0xff]
        %v1784 = vld [vmem:[%s1166 + $0x142] sm:$0xff]
        %v1785 = vld [vmem:[%s1166 + $0x152] sm:$0xff]
        %v1786 = vld [vmem:[%s1166 + $0x15a] sm:$0xff]
        %v1787 = vld [vmem:[%s1166 + $0x16a] sm:$0xff]
        %v1788 = vld [vmem:[%s1166 + $0x172] sm:$0xff]
        %v1789 = vpack.c.bf16 %v1758, %v1757
        %v1790 = vpack.c.bf16 %v1760, %v1759
        %v1791 = vpack.c.bf16 %v1762, %v1761
        %v1792 = vpack.c.bf16 %v1764, %v1763
        %v1793 = vpack.c.bf16 %v1766, %v1765
        %v1794 = vpack.c.bf16 %v1768, %v1767
        %v1795 = vpack.c.bf16 %v1770, %v1769
        %v1796 = vpack.c.bf16 %v1772, %v1771
        %v1797 = vpack.c.bf16 %v1774, %v1773
        %v1798 = vpack.c.bf16 %v1776, %v1775
        %v1799 = vpack.c.bf16 %v1778, %v1777
        %v1800 = vpack.c.bf16 %v1780, %v1779
        %v1801 = vpack.c.bf16 %v1782, %v1781
        %v1802 = vpack.c.bf16 %v1784, %v1783
        %v1803 = vpack.c.bf16 %v1786, %v1785
        %v1804 = vpack.c.bf16 %v1788, %v1787
        %v1805 = vld [vmem:[%s1 + $0x8] sm:$0xc]
        %v1807 = vunpack.c.l.b16 %v1805
        %v1808 = vpack.c.b16 %v1807, %v1807
        %v1809 = vrot.slane %v1808, 2
        %v1811 = vsel %vm447, %v1789, 0
        %v1814 = vsel %vm447, %v1790, 0
        %v1817 = vsel %vm447, %v1791, 0
        %v1820 = vsel %vm447, %v1792, 0
        %v1823 = vsel %vm447, %v1793, 0
        %v1826 = vsel %vm447, %v1794, 0
        %v1829 = vsel %vm447, %v1795, 0
        %v1832 = vsel %vm447, %v1796, 0
        %v1835 = vsel %vm447, %v1797, 0
        %v1838 = vsel %vm447, %v1798, 0
        %v1841 = vsel %vm447, %v1799, 0
        %v1844 = vsel %vm447, %v1800, 0
        %v1847 = vsel %vm447, %v1801, 0
        %v1850 = vsel %vm447, %v1802, 0
        %v1853 = vsel %vm447, %v1803, 0
        %v1856 = vsel %vm447, %v1804, 0
        %v1859 = vsel %vm496, %v1809, 0
        %1861 = vmatprep.subr.bf16.mxu0 0
        %1862 = vmatpush1.bf16.msra.mxu0 0
        %1863 = vmatprep.subr.bf16.mxu0 0
        %1864 = vmatpush1.bf16.msra.mxu0 0
        %1865 = vmatprep.subr.bf16.mxu0 0
        %1866 = vmatpush1.bf16.msra.mxu0 0
        %1867 = vmatprep.subr.bf16.mxu0 0
        %1868 = vmatpush1.bf16.msra.mxu0 0
        %1869 = vmatprep.subr.bf16.mxu0 0
        %1870 = vmatpush1.bf16.msra.mxu0 0
        %1871 = vmatprep.subr.bf16.mxu0 0
        %1872 = vmatpush1.bf16.msra.mxu0 0
        %1873 = vmatprep.subr.bf16.mxu0 0
        %1874 = vmatpush1.bf16.msra.mxu0 0
        %1875 = vmatprep.subr.bf16.mxu0 0
        %1876 = vmatpush1.bf16.msra.mxu0 %v1859
        %1877 = vmatprep.subr.bf16.mxu0 0
        %1878 = vmatpush2.bf16.msra.mxu0 0
        %1879 = vmatprep.subr.bf16.mxu0 0
        %1880 = vmatpush2.bf16.msra.mxu0 0
        %1881 = vmatprep.subr.bf16.mxu0 0
        %1882 = vmatpush2.bf16.msra.mxu0 0
        %1883 = vmatprep.subr.bf16.mxu0 0
        %1884 = vmatpush2.bf16.msra.mxu0 0
        %1885 = vmatprep.subr.bf16.mxu0 0
        %1886 = vmatpush2.bf16.msra.mxu0 0
        %1887 = vmatprep.subr.bf16.mxu0 0
        %1888 = vmatpush2.bf16.msra.mxu0 0
        %1889 = vmatprep.subr.bf16.mxu0 0
        %1890 = vmatpush2.bf16.msra.mxu0 0
        %1891 = vmatprep.subr.bf16.mxu0 0
        %1892 = vmatpush2.bf16.msra.mxu0 0
        %1893 = vmatprep.mubr.bf16.mxu0 0
        %1894 = vmatmul.mubr.bf16.gmra.mxu0 %v1811
        %v1895 = vpop.f32.mrf.mxu0
        %v1896 = vadd.f32 0.0, %v1895
        %v1897 = vpop.f32.mrf.mxu0
        %v1898 = vpop.f32.mrf.mxu0
        %v1899 = vadd.f32 0.0, %v1898
        %v1900 = vpop.f32.mrf.mxu0
        %1901 = vmatprep.mubr.bf16.mxu0 0
        %1902 = vmatmul.mubr.bf16.gmra.mxu0 %v1814
        %v1903 = vpop.f32.mrf.mxu0
        %v1904 = vadd.f32 0.0, %v1903
        %v1905 = vpop.f32.mrf.mxu0
        %v1906 = vpop.f32.mrf.mxu0
        %v1907 = vadd.f32 0.0, %v1906
        %v1908 = vpop.f32.mrf.mxu0
        %1909 = vmatprep.mubr.bf16.mxu0 0
        %1910 = vmatmul.mubr.bf16.gmra.mxu0 %v1817
        %v1911 = vpop.f32.mrf.mxu0
        %v1912 = vadd.f32 0.0, %v1911
        %v1913 = vpop.f32.mrf.mxu0
        %v1914 = vpop.f32.mrf.mxu0
        %v1915 = vadd.f32 0.0, %v1914
        %v1916 = vpop.f32.mrf.mxu0
        %1917 = vmatprep.mubr.bf16.mxu0 0
        %1918 = vmatmul.mubr.bf16.gmra.mxu0 %v1820
        %v1919 = vpop.f32.mrf.mxu0
        %v1920 = vadd.f32 0.0, %v1919
        %v1921 = vpop.f32.mrf.mxu0
        %v1922 = vpop.f32.mrf.mxu0
        %v1923 = vadd.f32 0.0, %v1922
        %v1924 = vpop.f32.mrf.mxu0
        %1925 = vmatprep.mubr.bf16.mxu0 0
        %1926 = vmatmul.mubr.bf16.gmra.mxu0 %v1823
        %v1927 = vpop.f32.mrf.mxu0
        %v1928 = vadd.f32 0.0, %v1927
        %v1929 = vpop.f32.mrf.mxu0
        %v1930 = vpop.f32.mrf.mxu0
        %v1931 = vadd.f32 0.0, %v1930
        %v1932 = vpop.f32.mrf.mxu0
        %1933 = vmatprep.mubr.bf16.mxu0 0
        %1934 = vmatmul.mubr.bf16.gmra.mxu0 %v1826
        %v1935 = vpop.f32.mrf.mxu0
        %v1936 = vadd.f32 0.0, %v1935
        %v1937 = vpop.f32.mrf.mxu0
        %v1938 = vpop.f32.mrf.mxu0
        %v1939 = vadd.f32 0.0, %v1938
        %v1940 = vpop.f32.mrf.mxu0
        %1941 = vmatprep.mubr.bf16.mxu0 0
        %1942 = vmatmul.mubr.bf16.gmra.mxu0 %v1829
        %v1943 = vpop.f32.mrf.mxu0
        %v1944 = vadd.f32 0.0, %v1943
        %v1945 = vpop.f32.mrf.mxu0
        %v1946 = vpop.f32.mrf.mxu0
        %v1947 = vadd.f32 0.0, %v1946
        %v1948 = vpop.f32.mrf.mxu0
        %1949 = vmatprep.mubr.bf16.mxu0 0
        %1950 = vmatmul.mubr.bf16.gmra.mxu0 %v1832
        %v1951 = vpop.f32.mrf.mxu0
        %v1952 = vadd.f32 0.0, %v1951
        %v1953 = vpop.f32.mrf.mxu0
        %v1954 = vpop.f32.mrf.mxu0
        %v1955 = vadd.f32 0.0, %v1954
        %v1956 = vpop.f32.mrf.mxu0
        %1957 = vmatprep.mubr.bf16.mxu0 0
        %1958 = vmatmul.mubr.bf16.gmra.mxu0 %v1835
        %v1959 = vpop.f32.mrf.mxu0
        %v1960 = vadd.f32 0.0, %v1959
        %v1961 = vpop.f32.mrf.mxu0
        %v1962 = vpop.f32.mrf.mxu0
        %v1963 = vadd.f32 0.0, %v1962
        %v1964 = vpop.f32.mrf.mxu0
        %1965 = vmatprep.mubr.bf16.mxu0 0
        %1966 = vmatmul.mubr.bf16.gmra.mxu0 %v1838
        %v1967 = vpop.f32.mrf.mxu0
        %v1968 = vadd.f32 0.0, %v1967
        %v1969 = vpop.f32.mrf.mxu0
        %v1970 = vpop.f32.mrf.mxu0
        %v1971 = vadd.f32 0.0, %v1970
        %v1972 = vpop.f32.mrf.mxu0
        %1973 = vmatprep.mubr.bf16.mxu0 0
        %1974 = vmatmul.mubr.bf16.gmra.mxu0 %v1841
        %v1975 = vpop.f32.mrf.mxu0
        %v1976 = vadd.f32 0.0, %v1975
        %v1977 = vpop.f32.mrf.mxu0
        %v1978 = vpop.f32.mrf.mxu0
        %v1979 = vadd.f32 0.0, %v1978
        %v1980 = vpop.f32.mrf.mxu0
        %1981 = vmatprep.mubr.bf16.mxu0 0
        %1982 = vmatmul.mubr.bf16.gmra.mxu0 %v1844
        %v1983 = vpop.f32.mrf.mxu0
        %v1984 = vadd.f32 0.0, %v1983
        %v1985 = vpop.f32.mrf.mxu0
        %v1986 = vpop.f32.mrf.mxu0
        %v1987 = vadd.f32 0.0, %v1986
        %v1988 = vpop.f32.mrf.mxu0
        %1989 = vmatprep.mubr.bf16.mxu0 0
        %1990 = vmatmul.mubr.bf16.gmra.mxu0 %v1847
        %v1991 = vpop.f32.mrf.mxu0
        %v1992 = vadd.f32 0.0, %v1991
        %v1993 = vpop.f32.mrf.mxu0
        %v1994 = vpop.f32.mrf.mxu0
        %v1995 = vadd.f32 0.0, %v1994
        %v1996 = vpop.f32.mrf.mxu0
        %1997 = vmatprep.mubr.bf16.mxu0 0
        %1998 = vmatmul.mubr.bf16.gmra.mxu0 %v1850
        %v1999 = vpop.f32.mrf.mxu0
        %v2000 = vadd.f32 0.0, %v1999
        %v2001 = vpop.f32.mrf.mxu0
        %v2002 = vpop.f32.mrf.mxu0
        %v2003 = vadd.f32 0.0, %v2002
        %v2004 = vpop.f32.mrf.mxu0
        %2005 = vmatprep.mubr.bf16.mxu0 0
        %2006 = vmatmul.mubr.bf16.gmra.mxu0 %v1853
        %v2007 = vpop.f32.mrf.mxu0
        %v2008 = vadd.f32 0.0, %v2007
        %v2009 = vpop.f32.mrf.mxu0
        %v2010 = vpop.f32.mrf.mxu0
        %v2011 = vadd.f32 0.0, %v2010
        %v2012 = vpop.f32.mrf.mxu0
        %2013 = vmatprep.mubr.bf16.mxu0 0
        %2014 = vmatmul.mubr.bf16.gmra.mxu0 %v1856
        %v2015 = vpop.f32.mrf.mxu0
        %v2016 = vadd.f32 0.0, %v2015
        %v2017 = vpop.f32.mrf.mxu0
        %v2018 = vpop.f32.mrf.mxu0
        %v2019 = vadd.f32 0.0, %v2018
        %v2020 = vpop.f32.mrf.mxu0
        %2021 = vdwg.mxu0
        %v2022 = vadd.f32 %v1725, %v1896
        %v2023 = vadd.f32 %v1726, %v1899
        %v2024 = vadd.f32 %v1727, %v1904
        %v2025 = vadd.f32 %v1728, %v1907
        %v2026 = vadd.f32 %v1729, %v1912
        %v2027 = vadd.f32 %v1730, %v1915
        %v2028 = vadd.f32 %v1731, %v1920
        %v2029 = vadd.f32 %v1732, %v1923
        %v2030 = vadd.f32 %v1733, %v1928
        %v2031 = vadd.f32 %v1734, %v1931
        %v2032 = vadd.f32 %v1735, %v1936
        %v2033 = vadd.f32 %v1736, %v1939
        %v2034 = vadd.f32 %v1737, %v1944
        %v2035 = vadd.f32 %v1738, %v1947
        %v2036 = vadd.f32 %v1739, %v1952
        %v2037 = vadd.f32 %v1740, %v1955
        %v2038 = vadd.f32 %v1741, %v1960
        %v2039 = vadd.f32 %v1742, %v1963
        %v2040 = vadd.f32 %v1743, %v1968
        %v2041 = vadd.f32 %v1744, %v1971
        %v2042 = vadd.f32 %v1745, %v1976
        %v2043 = vadd.f32 %v1746, %v1979
        %v2044 = vadd.f32 %v1747, %v1984
        %v2045 = vadd.f32 %v1748, %v1987
        %v2046 = vadd.f32 %v1749, %v1992
        %v2047 = vadd.f32 %v1750, %v1995
        %v2048 = vadd.f32 %v1751, %v2000
        %v2049 = vadd.f32 %v1752, %v2003
        %v2050 = vadd.f32 %v1753, %v2008
        %v2051 = vadd.f32 %v1754, %v2011
        %v2052 = vadd.f32 %v1755, %v2016
        %v2053 = vadd.f32 %v1756, %v2019
        %s2054 = scalar_lea.vmem %s338, 48
        %v2055 = vld [vmem:[%s2054] sm:$0xff]
        %v2056 = vld [vmem:[%s2054 + $0x8] sm:$0xff]
        %v2057 = vld [vmem:[%s2054 + $0x18] sm:$0xff]
        %v2058 = vld [vmem:[%s2054 + $0x20] sm:$0xff]
        %v2059 = vld [vmem:[%s2054 + $0x30] sm:$0xff]
        %v2060 = vld [vmem:[%s2054 + $0x38] sm:$0xff]
        %v2061 = vld [vmem:[%s2054 + $0x48] sm:$0xff]
        %v2062 = vld [vmem:[%s2054 + $0x50] sm:$0xff]
        %v2063 = vld [vmem:[%s2054 + $0x60] sm:$0xff]
        %v2064 = vld [vmem:[%s2054 + $0x68] sm:$0xff]
        %v2065 = vld [vmem:[%s2054 + $0x78] sm:$0xff]
        %v2066 = vld [vmem:[%s2054 + $0x80] sm:$0xff]
        %v2067 = vld [vmem:[%s2054 + $0x90] sm:$0xff]
        %v2068 = vld [vmem:[%s2054 + $0x98] sm:$0xff]
        %v2069 = vld [vmem:[%s2054 + $0xa8] sm:$0xff]
        %v2070 = vld [vmem:[%s2054 + $0xb0] sm:$0xff]
        %v2071 = vld [vmem:[%s2054 + $0xc0] sm:$0xff]
        %v2072 = vld [vmem:[%s2054 + $0xc8] sm:$0xff]
        %v2073 = vld [vmem:[%s2054 + $0xd8] sm:$0xff]
        %v2074 = vld [vmem:[%s2054 + $0xe0] sm:$0xff]
        %v2075 = vld [vmem:[%s2054 + $0xf0] sm:$0xff]
        %v2076 = vld [vmem:[%s2054 + $0xf8] sm:$0xff]
        %v2077 = vld [vmem:[%s2054 + $0x108] sm:$0xff]
        %v2078 = vld [vmem:[%s2054 + $0x110] sm:$0xff]
        %v2079 = vld [vmem:[%s2054 + $0x120] sm:$0xff]
        %v2080 = vld [vmem:[%s2054 + $0x128] sm:$0xff]
        %v2081 = vld [vmem:[%s2054 + $0x138] sm:$0xff]
        %v2082 = vld [vmem:[%s2054 + $0x140] sm:$0xff]
        %v2083 = vld [vmem:[%s2054 + $0x150] sm:$0xff]
        %v2084 = vld [vmem:[%s2054 + $0x158] sm:$0xff]
        %v2085 = vld [vmem:[%s2054 + $0x168] sm:$0xff]
        %v2086 = vld [vmem:[%s2054 + $0x170] sm:$0xff]
        %v2087 = vpack.c.bf16 %v2056, %v2055
        %v2088 = vpack.c.bf16 %v2058, %v2057
        %v2089 = vpack.c.bf16 %v2060, %v2059
        %v2090 = vpack.c.bf16 %v2062, %v2061
        %v2091 = vpack.c.bf16 %v2064, %v2063
        %v2092 = vpack.c.bf16 %v2066, %v2065
        %v2093 = vpack.c.bf16 %v2068, %v2067
        %v2094 = vpack.c.bf16 %v2070, %v2069
        %v2095 = vpack.c.bf16 %v2072, %v2071
        %v2096 = vpack.c.bf16 %v2074, %v2073
        %v2097 = vpack.c.bf16 %v2076, %v2075
        %v2098 = vpack.c.bf16 %v2078, %v2077
        %v2099 = vpack.c.bf16 %v2080, %v2079
        %v2100 = vpack.c.bf16 %v2082, %v2081
        %v2101 = vpack.c.bf16 %v2084, %v2083
        %v2102 = vpack.c.bf16 %v2086, %v2085
        %v2103 = vld [vmem:[%s1 + $0xc] sm:$0x3]
        %v2105 = vsel %vm447, %v2087, 0
        %v2108 = vsel %vm447, %v2088, 0
        %v2111 = vsel %vm447, %v2089, 0
        %v2114 = vsel %vm447, %v2090, 0
        %v2117 = vsel %vm447, %v2091, 0
        %v2120 = vsel %vm447, %v2092, 0
        %v2123 = vsel %vm447, %v2093, 0
        %v2126 = vsel %vm447, %v2094, 0
        %v2129 = vsel %vm447, %v2095, 0
        %v2132 = vsel %vm447, %v2096, 0
        %v2135 = vsel %vm447, %v2097, 0
        %v2138 = vsel %vm447, %v2098, 0
        %v2141 = vsel %vm447, %v2099, 0
        %v2144 = vsel %vm447, %v2100, 0
        %v2147 = vsel %vm447, %v2101, 0
        %v2150 = vsel %vm447, %v2102, 0
        %v2153 = vsel %vm496, %v2103, 0
        %2155 = vmatprep.subr.bf16.mxu0 0
        %2156 = vmatpush1.bf16.msra.mxu0 0
        %2157 = vmatprep.subr.bf16.mxu0 0
        %2158 = vmatpush1.bf16.msra.mxu0 0
        %2159 = vmatprep.subr.bf16.mxu0 0
        %2160 = vmatpush1.bf16.msra.mxu0 0
        %2161 = vmatprep.subr.bf16.mxu0 0
        %2162 = vmatpush1.bf16.msra.mxu0 0
        %2163 = vmatprep.subr.bf16.mxu0 0
        %2164 = vmatpush1.bf16.msra.mxu0 0
        %2165 = vmatprep.subr.bf16.mxu0 0
        %2166 = vmatpush1.bf16.msra.mxu0 0
        %2167 = vmatprep.subr.bf16.mxu0 0
        %2168 = vmatpush1.bf16.msra.mxu0 0
        %2169 = vmatprep.subr.bf16.mxu0 0
        %2170 = vmatpush1.bf16.msra.mxu0 %v2153
        %2171 = vmatprep.subr.bf16.mxu0 0
        %2172 = vmatpush2.bf16.msra.mxu0 0
        %2173 = vmatprep.subr.bf16.mxu0 0
        %2174 = vmatpush2.bf16.msra.mxu0 0
        %2175 = vmatprep.subr.bf16.mxu0 0
        %2176 = vmatpush2.bf16.msra.mxu0 0
        %2177 = vmatprep.subr.bf16.mxu0 0
        %2178 = vmatpush2.bf16.msra.mxu0 0
        %2179 = vmatprep.subr.bf16.mxu0 0
        %2180 = vmatpush2.bf16.msra.mxu0 0
        %2181 = vmatprep.subr.bf16.mxu0 0
        %2182 = vmatpush2.bf16.msra.mxu0 0
        %2183 = vmatprep.subr.bf16.mxu0 0
        %2184 = vmatpush2.bf16.msra.mxu0 0
        %2185 = vmatprep.subr.bf16.mxu0 0
        %2186 = vmatpush2.bf16.msra.mxu0 0
        %2187 = vmatprep.mubr.bf16.mxu0 0
        %2188 = vmatmul.mubr.bf16.gmra.mxu0 %v2105
        %v2189 = vpop.f32.mrf.mxu0
        %v2190 = vadd.f32 0.0, %v2189
        %v2191 = vpop.f32.mrf.mxu0
        %v2192 = vpop.f32.mrf.mxu0
        %v2193 = vadd.f32 0.0, %v2192
        %v2194 = vpop.f32.mrf.mxu0
        %2195 = vmatprep.mubr.bf16.mxu0 0
        %2196 = vmatmul.mubr.bf16.gmra.mxu0 %v2108
        %v2197 = vpop.f32.mrf.mxu0
        %v2198 = vadd.f32 0.0, %v2197
        %v2199 = vpop.f32.mrf.mxu0
        %v2200 = vpop.f32.mrf.mxu0
        %v2201 = vadd.f32 0.0, %v2200
        %v2202 = vpop.f32.mrf.mxu0
        %2203 = vmatprep.mubr.bf16.mxu0 0
        %2204 = vmatmul.mubr.bf16.gmra.mxu0 %v2111
        %v2205 = vpop.f32.mrf.mxu0
        %v2206 = vadd.f32 0.0, %v2205
        %v2207 = vpop.f32.mrf.mxu0
        %v2208 = vpop.f32.mrf.mxu0
        %v2209 = vadd.f32 0.0, %v2208
        %v2210 = vpop.f32.mrf.mxu0
        %2211 = vmatprep.mubr.bf16.mxu0 0
        %2212 = vmatmul.mubr.bf16.gmra.mxu0 %v2114
        %v2213 = vpop.f32.mrf.mxu0
        %v2214 = vadd.f32 0.0, %v2213
        %v2215 = vpop.f32.mrf.mxu0
        %v2216 = vpop.f32.mrf.mxu0
        %v2217 = vadd.f32 0.0, %v2216
        %v2218 = vpop.f32.mrf.mxu0
        %2219 = vmatprep.mubr.bf16.mxu0 0
        %2220 = vmatmul.mubr.bf16.gmra.mxu0 %v2117
        %v2221 = vpop.f32.mrf.mxu0
        %v2222 = vadd.f32 0.0, %v2221
        %v2223 = vpop.f32.mrf.mxu0
        %v2224 = vpop.f32.mrf.mxu0
        %v2225 = vadd.f32 0.0, %v2224
        %v2226 = vpop.f32.mrf.mxu0
        %2227 = vmatprep.mubr.bf16.mxu0 0
        %2228 = vmatmul.mubr.bf16.gmra.mxu0 %v2120
        %v2229 = vpop.f32.mrf.mxu0
        %v2230 = vadd.f32 0.0, %v2229
        %v2231 = vpop.f32.mrf.mxu0
        %v2232 = vpop.f32.mrf.mxu0
        %v2233 = vadd.f32 0.0, %v2232
        %v2234 = vpop.f32.mrf.mxu0
        %2235 = vmatprep.mubr.bf16.mxu0 0
        %2236 = vmatmul.mubr.bf16.gmra.mxu0 %v2123
        %v2237 = vpop.f32.mrf.mxu0
        %v2238 = vadd.f32 0.0, %v2237
        %v2239 = vpop.f32.mrf.mxu0
        %v2240 = vpop.f32.mrf.mxu0
        %v2241 = vadd.f32 0.0, %v2240
        %v2242 = vpop.f32.mrf.mxu0
        %2243 = vmatprep.mubr.bf16.mxu0 0
        %2244 = vmatmul.mubr.bf16.gmra.mxu0 %v2126
        %v2245 = vpop.f32.mrf.mxu0
        %v2246 = vadd.f32 0.0, %v2245
        %v2247 = vpop.f32.mrf.mxu0
        %v2248 = vpop.f32.mrf.mxu0
        %v2249 = vadd.f32 0.0, %v2248
        %v2250 = vpop.f32.mrf.mxu0
        %2251 = vmatprep.mubr.bf16.mxu0 0
        %2252 = vmatmul.mubr.bf16.gmra.mxu0 %v2129
        %v2253 = vpop.f32.mrf.mxu0
        %v2254 = vadd.f32 0.0, %v2253
        %v2255 = vpop.f32.mrf.mxu0
        %v2256 = vpop.f32.mrf.mxu0
        %v2257 = vadd.f32 0.0, %v2256
        %v2258 = vpop.f32.mrf.mxu0
        %2259 = vmatprep.mubr.bf16.mxu0 0
        %2260 = vmatmul.mubr.bf16.gmra.mxu0 %v2132
        %v2261 = vpop.f32.mrf.mxu0
        %v2262 = vadd.f32 0.0, %v2261
        %v2263 = vpop.f32.mrf.mxu0
        %v2264 = vpop.f32.mrf.mxu0
        %v2265 = vadd.f32 0.0, %v2264
        %v2266 = vpop.f32.mrf.mxu0
        %2267 = vmatprep.mubr.bf16.mxu0 0
        %2268 = vmatmul.mubr.bf16.gmra.mxu0 %v2135
        %v2269 = vpop.f32.mrf.mxu0
        %v2270 = vadd.f32 0.0, %v2269
        %v2271 = vpop.f32.mrf.mxu0
        %v2272 = vpop.f32.mrf.mxu0
        %v2273 = vadd.f32 0.0, %v2272
        %v2274 = vpop.f32.mrf.mxu0
        %2275 = vmatprep.mubr.bf16.mxu0 0
        %2276 = vmatmul.mubr.bf16.gmra.mxu0 %v2138
        %v2277 = vpop.f32.mrf.mxu0
        %v2278 = vadd.f32 0.0, %v2277
        %v2279 = vpop.f32.mrf.mxu0
        %v2280 = vpop.f32.mrf.mxu0
        %v2281 = vadd.f32 0.0, %v2280
        %v2282 = vpop.f32.mrf.mxu0
        %2283 = vmatprep.mubr.bf16.mxu0 0
        %2284 = vmatmul.mubr.bf16.gmra.mxu0 %v2141
        %v2285 = vpop.f32.mrf.mxu0
        %v2286 = vadd.f32 0.0, %v2285
        %v2287 = vpop.f32.mrf.mxu0
        %v2288 = vpop.f32.mrf.mxu0
        %v2289 = vadd.f32 0.0, %v2288
        %v2290 = vpop.f32.mrf.mxu0
        %2291 = vmatprep.mubr.bf16.mxu0 0
        %2292 = vmatmul.mubr.bf16.gmra.mxu0 %v2144
        %v2293 = vpop.f32.mrf.mxu0
        %v2294 = vadd.f32 0.0, %v2293
        %v2295 = vpop.f32.mrf.mxu0
        %v2296 = vpop.f32.mrf.mxu0
        %v2297 = vadd.f32 0.0, %v2296
        %v2298 = vpop.f32.mrf.mxu0
        %2299 = vmatprep.mubr.bf16.mxu0 0
        %2300 = vmatmul.mubr.bf16.gmra.mxu0 %v2147
        %v2301 = vpop.f32.mrf.mxu0
        %v2302 = vadd.f32 0.0, %v2301
        %v2303 = vpop.f32.mrf.mxu0
        %v2304 = vpop.f32.mrf.mxu0
        %v2305 = vadd.f32 0.0, %v2304
        %v2306 = vpop.f32.mrf.mxu0
        %2307 = vmatprep.mubr.bf16.mxu0 0
        %2308 = vmatmul.mubr.bf16.gmra.mxu0 %v2150
        %v2309 = vpop.f32.mrf.mxu0
        %v2310 = vadd.f32 0.0, %v2309
        %v2311 = vpop.f32.mrf.mxu0
        %v2312 = vpop.f32.mrf.mxu0
        %v2313 = vadd.f32 0.0, %v2312
        %v2314 = vpop.f32.mrf.mxu0
        %2315 = vdwg.mxu0
        %v2316 = vadd.f32 %v2022, %v2190
        %v2317 = vadd.f32 %v2023, %v2193
        %v2318 = vadd.f32 %v2024, %v2198
        %v2319 = vadd.f32 %v2025, %v2201
        %v2320 = vadd.f32 %v2026, %v2206
        %v2321 = vadd.f32 %v2027, %v2209
        %v2322 = vadd.f32 %v2028, %v2214
        %v2323 = vadd.f32 %v2029, %v2217
        %v2324 = vadd.f32 %v2030, %v2222
        %v2325 = vadd.f32 %v2031, %v2225
        %v2326 = vadd.f32 %v2032, %v2230
        %v2327 = vadd.f32 %v2033, %v2233
        %v2328 = vadd.f32 %v2034, %v2238
        %v2329 = vadd.f32 %v2035, %v2241
        %v2330 = vadd.f32 %v2036, %v2246
        %v2331 = vadd.f32 %v2037, %v2249
        %v2332 = vadd.f32 %v2038, %v2254
        %v2333 = vadd.f32 %v2039, %v2257
        %v2334 = vadd.f32 %v2040, %v2262
        %v2335 = vadd.f32 %v2041, %v2265
        %v2336 = vadd.f32 %v2042, %v2270
        %v2337 = vadd.f32 %v2043, %v2273
        %v2338 = vadd.f32 %v2044, %v2278
        %v2339 = vadd.f32 %v2045, %v2281
        %v2340 = vadd.f32 %v2046, %v2286
        %v2341 = vadd.f32 %v2047, %v2289
        %v2342 = vadd.f32 %v2048, %v2294
        %v2343 = vadd.f32 %v2049, %v2297
        %v2344 = vadd.f32 %v2050, %v2302
        %v2345 = vadd.f32 %v2051, %v2305
        %v2346 = vadd.f32 %v2052, %v2310
        %v2347 = vadd.f32 %v2053, %v2313
        %v2348 = vld [vmem:[%s2054 + $0x1] sm:$0xff]
        %v2349 = vld [vmem:[%s2054 + $0x9] sm:$0xff]
        %v2350 = vld [vmem:[%s2054 + $0x19] sm:$0xff]
        %v2351 = vld [vmem:[%s2054 + $0x21] sm:$0xff]
        %v2352 = vld [vmem:[%s2054 + $0x31] sm:$0xff]
        %v2353 = vld [vmem:[%s2054 + $0x39] sm:$0xff]
        %v2354 = vld [vmem:[%s2054 + $0x49] sm:$0xff]
        %v2355 = vld [vmem:[%s2054 + $0x51] sm:$0xff]
        %v2356 = vld [vmem:[%s2054 + $0x61] sm:$0xff]
        %v2357 = vld [vmem:[%s2054 + $0x69] sm:$0xff]
        %v2358 = vld [vmem:[%s2054 + $0x79] sm:$0xff]
        %v2359 = vld [vmem:[%s2054 + $0x81] sm:$0xff]
        %v2360 = vld [vmem:[%s2054 + $0x91] sm:$0xff]
        %v2361 = vld [vmem:[%s2054 + $0x99] sm:$0xff]
        %v2362 = vld [vmem:[%s2054 + $0xa9] sm:$0xff]
        %v2363 = vld [vmem:[%s2054 + $0xb1] sm:$0xff]
        %v2364 = vld [vmem:[%s2054 + $0xc1] sm:$0xff]
        %v2365 = vld [vmem:[%s2054 + $0xc9] sm:$0xff]
        %v2366 = vld [vmem:[%s2054 + $0xd9] sm:$0xff]
        %v2367 = vld [vmem:[%s2054 + $0xe1] sm:$0xff]
        %v2368 = vld [vmem:[%s2054 + $0xf1] sm:$0xff]
        %v2369 = vld [vmem:[%s2054 + $0xf9] sm:$0xff]
        %v2370 = vld [vmem:[%s2054 + $0x109] sm:$0xff]
        %v2371 = vld [vmem:[%s2054 + $0x111] sm:$0xff]
        %v2372 = vld [vmem:[%s2054 + $0x121] sm:$0xff]
        %v2373 = vld [vmem:[%s2054 + $0x129] sm:$0xff]
        %v2374 = vld [vmem:[%s2054 + $0x139] sm:$0xff]
        %v2375 = vld [vmem:[%s2054 + $0x141] sm:$0xff]
        %v2376 = vld [vmem:[%s2054 + $0x151] sm:$0xff]
        %v2377 = vld [vmem:[%s2054 + $0x159] sm:$0xff]
        %v2378 = vld [vmem:[%s2054 + $0x169] sm:$0xff]
        %v2379 = vld [vmem:[%s2054 + $0x171] sm:$0xff]
        %v2380 = vpack.c.bf16 %v2349, %v2348
        %v2381 = vpack.c.bf16 %v2351, %v2350
        %v2382 = vpack.c.bf16 %v2353, %v2352
        %v2383 = vpack.c.bf16 %v2355, %v2354
        %v2384 = vpack.c.bf16 %v2357, %v2356
        %v2385 = vpack.c.bf16 %v2359, %v2358
        %v2386 = vpack.c.bf16 %v2361, %v2360
        %v2387 = vpack.c.bf16 %v2363, %v2362
        %v2388 = vpack.c.bf16 %v2365, %v2364
        %v2389 = vpack.c.bf16 %v2367, %v2366
        %v2390 = vpack.c.bf16 %v2369, %v2368
        %v2391 = vpack.c.bf16 %v2371, %v2370
        %v2392 = vpack.c.bf16 %v2373, %v2372
        %v2393 = vpack.c.bf16 %v2375, %v2374
        %v2394 = vpack.c.bf16 %v2377, %v2376
        %v2395 = vpack.c.bf16 %v2379, %v2378
        %v2396 = vld [vmem:[%s1 + $0xc] sm:$0xc]
        %v2398 = vunpack.c.l.b16 %v2396
        %v2399 = vpack.c.b16 %v2398, %v2398
        %v2400 = vrot.slane %v2399, 2
        %v2402 = vsel %vm447, %v2380, 0
        %v2405 = vsel %vm447, %v2381, 0
        %v2408 = vsel %vm447, %v2382, 0
        %v2411 = vsel %vm447, %v2383, 0
        %v2414 = vsel %vm447, %v2384, 0
        %v2417 = vsel %vm447, %v2385, 0
        %v2420 = vsel %vm447, %v2386, 0
        %v2423 = vsel %vm447, %v2387, 0
        %v2426 = vsel %vm447, %v2388, 0
        %v2429 = vsel %vm447, %v2389, 0
        %v2432 = vsel %vm447, %v2390, 0
        %v2435 = vsel %vm447, %v2391, 0
        %v2438 = vsel %vm447, %v2392, 0
        %v2441 = vsel %vm447, %v2393, 0
        %v2444 = vsel %vm447, %v2394, 0
        %v2447 = vsel %vm447, %v2395, 0
        %v2450 = vsel %vm496, %v2400, 0
        %2452 = vmatprep.subr.bf16.mxu0 0
        %2453 = vmatpush1.bf16.msra.mxu0 0
        %2454 = vmatprep.subr.bf16.mxu0 0
        %2455 = vmatpush1.bf16.msra.mxu0 0
        %2456 = vmatprep.subr.bf16.mxu0 0
        %2457 = vmatpush1.bf16.msra.mxu0 0
        %2458 = vmatprep.subr.bf16.mxu0 0
        %2459 = vmatpush1.bf16.msra.mxu0 0
        %2460 = vmatprep.subr.bf16.mxu0 0
        %2461 = vmatpush1.bf16.msra.mxu0 0
        %2462 = vmatprep.subr.bf16.mxu0 0
        %2463 = vmatpush1.bf16.msra.mxu0 0
        %2464 = vmatprep.subr.bf16.mxu0 0
        %2465 = vmatpush1.bf16.msra.mxu0 0
        %2466 = vmatprep.subr.bf16.mxu0 0
        %2467 = vmatpush1.bf16.msra.mxu0 %v2450
        %2468 = vmatprep.subr.bf16.mxu0 0
        %2469 = vmatpush2.bf16.msra.mxu0 0
        %2470 = vmatprep.subr.bf16.mxu0 0
        %2471 = vmatpush2.bf16.msra.mxu0 0
        %2472 = vmatprep.subr.bf16.mxu0 0
        %2473 = vmatpush2.bf16.msra.mxu0 0
        %2474 = vmatprep.subr.bf16.mxu0 0
        %2475 = vmatpush2.bf16.msra.mxu0 0
        %2476 = vmatprep.subr.bf16.mxu0 0
        %2477 = vmatpush2.bf16.msra.mxu0 0
        %2478 = vmatprep.subr.bf16.mxu0 0
        %2479 = vmatpush2.bf16.msra.mxu0 0
        %2480 = vmatprep.subr.bf16.mxu0 0
        %2481 = vmatpush2.bf16.msra.mxu0 0
        %2482 = vmatprep.subr.bf16.mxu0 0
        %2483 = vmatpush2.bf16.msra.mxu0 0
        %2484 = vmatprep.mubr.bf16.mxu0 0
        %2485 = vmatmul.mubr.bf16.gmra.mxu0 %v2402
        %v2486 = vpop.f32.mrf.mxu0
        %v2487 = vadd.f32 0.0, %v2486
        %v2488 = vpop.f32.mrf.mxu0
        %v2489 = vpop.f32.mrf.mxu0
        %v2490 = vadd.f32 0.0, %v2489
        %v2491 = vpop.f32.mrf.mxu0
        %2492 = vmatprep.mubr.bf16.mxu0 0
        %2493 = vmatmul.mubr.bf16.gmra.mxu0 %v2405
        %v2494 = vpop.f32.mrf.mxu0
        %v2495 = vadd.f32 0.0, %v2494
        %v2496 = vpop.f32.mrf.mxu0
        %v2497 = vpop.f32.mrf.mxu0
        %v2498 = vadd.f32 0.0, %v2497
        %v2499 = vpop.f32.mrf.mxu0
        %2500 = vmatprep.mubr.bf16.mxu0 0
        %2501 = vmatmul.mubr.bf16.gmra.mxu0 %v2408
        %v2502 = vpop.f32.mrf.mxu0
        %v2503 = vadd.f32 0.0, %v2502
        %v2504 = vpop.f32.mrf.mxu0
        %v2505 = vpop.f32.mrf.mxu0
        %v2506 = vadd.f32 0.0, %v2505
        %v2507 = vpop.f32.mrf.mxu0
        %2508 = vmatprep.mubr.bf16.mxu0 0
        %2509 = vmatmul.mubr.bf16.gmra.mxu0 %v2411
        %v2510 = vpop.f32.mrf.mxu0
        %v2511 = vadd.f32 0.0, %v2510
        %v2512 = vpop.f32.mrf.mxu0
        %v2513 = vpop.f32.mrf.mxu0
        %v2514 = vadd.f32 0.0, %v2513
        %v2515 = vpop.f32.mrf.mxu0
        %2516 = vmatprep.mubr.bf16.mxu0 0
        %2517 = vmatmul.mubr.bf16.gmra.mxu0 %v2414
        %v2518 = vpop.f32.mrf.mxu0
        %v2519 = vadd.f32 0.0, %v2518
        %v2520 = vpop.f32.mrf.mxu0
        %v2521 = vpop.f32.mrf.mxu0
        %v2522 = vadd.f32 0.0, %v2521
        %v2523 = vpop.f32.mrf.mxu0
        %2524 = vmatprep.mubr.bf16.mxu0 0
        %2525 = vmatmul.mubr.bf16.gmra.mxu0 %v2417
        %v2526 = vpop.f32.mrf.mxu0
        %v2527 = vadd.f32 0.0, %v2526
        %v2528 = vpop.f32.mrf.mxu0
        %v2529 = vpop.f32.mrf.mxu0
        %v2530 = vadd.f32 0.0, %v2529
        %v2531 = vpop.f32.mrf.mxu0
        %2532 = vmatprep.mubr.bf16.mxu0 0
        %2533 = vmatmul.mubr.bf16.gmra.mxu0 %v2420
        %v2534 = vpop.f32.mrf.mxu0
        %v2535 = vadd.f32 0.0, %v2534
        %v2536 = vpop.f32.mrf.mxu0
        %v2537 = vpop.f32.mrf.mxu0
        %v2538 = vadd.f32 0.0, %v2537
        %v2539 = vpop.f32.mrf.mxu0
        %2540 = vmatprep.mubr.bf16.mxu0 0
        %2541 = vmatmul.mubr.bf16.gmra.mxu0 %v2423
        %v2542 = vpop.f32.mrf.mxu0
        %v2543 = vadd.f32 0.0, %v2542
        %v2544 = vpop.f32.mrf.mxu0
        %v2545 = vpop.f32.mrf.mxu0
        %v2546 = vadd.f32 0.0, %v2545
        %v2547 = vpop.f32.mrf.mxu0
        %2548 = vmatprep.mubr.bf16.mxu0 0
        %2549 = vmatmul.mubr.bf16.gmra.mxu0 %v2426
        %v2550 = vpop.f32.mrf.mxu0
        %v2551 = vadd.f32 0.0, %v2550
        %v2552 = vpop.f32.mrf.mxu0
        %v2553 = vpop.f32.mrf.mxu0
        %v2554 = vadd.f32 0.0, %v2553
        %v2555 = vpop.f32.mrf.mxu0
        %2556 = vmatprep.mubr.bf16.mxu0 0
        %2557 = vmatmul.mubr.bf16.gmra.mxu0 %v2429
        %v2558 = vpop.f32.mrf.mxu0
        %v2559 = vadd.f32 0.0, %v2558
        %v2560 = vpop.f32.mrf.mxu0
        %v2561 = vpop.f32.mrf.mxu0
        %v2562 = vadd.f32 0.0, %v2561
        %v2563 = vpop.f32.mrf.mxu0
        %2564 = vmatprep.mubr.bf16.mxu0 0
        %2565 = vmatmul.mubr.bf16.gmra.mxu0 %v2432
        %v2566 = vpop.f32.mrf.mxu0
        %v2567 = vadd.f32 0.0, %v2566
        %v2568 = vpop.f32.mrf.mxu0
        %v2569 = vpop.f32.mrf.mxu0
        %v2570 = vadd.f32 0.0, %v2569
        %v2571 = vpop.f32.mrf.mxu0
        %2572 = vmatprep.mubr.bf16.mxu0 0
        %2573 = vmatmul.mubr.bf16.gmra.mxu0 %v2435
        %v2574 = vpop.f32.mrf.mxu0
        %v2575 = vadd.f32 0.0, %v2574
        %v2576 = vpop.f32.mrf.mxu0
        %v2577 = vpop.f32.mrf.mxu0
        %v2578 = vadd.f32 0.0, %v2577
        %v2579 = vpop.f32.mrf.mxu0
        %2580 = vmatprep.mubr.bf16.mxu0 0
        %2581 = vmatmul.mubr.bf16.gmra.mxu0 %v2438
        %v2582 = vpop.f32.mrf.mxu0
        %v2583 = vadd.f32 0.0, %v2582
        %v2584 = vpop.f32.mrf.mxu0
        %v2585 = vpop.f32.mrf.mxu0
        %v2586 = vadd.f32 0.0, %v2585
        %v2587 = vpop.f32.mrf.mxu0
        %2588 = vmatprep.mubr.bf16.mxu0 0
        %2589 = vmatmul.mubr.bf16.gmra.mxu0 %v2441
        %v2590 = vpop.f32.mrf.mxu0
        %v2591 = vadd.f32 0.0, %v2590
        %v2592 = vpop.f32.mrf.mxu0
        %v2593 = vpop.f32.mrf.mxu0
        %v2594 = vadd.f32 0.0, %v2593
        %v2595 = vpop.f32.mrf.mxu0
        %2596 = vmatprep.mubr.bf16.mxu0 0
        %2597 = vmatmul.mubr.bf16.gmra.mxu0 %v2444
        %v2598 = vpop.f32.mrf.mxu0
        %v2599 = vadd.f32 0.0, %v2598
        %v2600 = vpop.f32.mrf.mxu0
        %v2601 = vpop.f32.mrf.mxu0
        %v2602 = vadd.f32 0.0, %v2601
        %v2603 = vpop.f32.mrf.mxu0
        %2604 = vmatprep.mubr.bf16.mxu0 0
        %2605 = vmatmul.mubr.bf16.gmra.mxu0 %v2447
        %v2606 = vpop.f32.mrf.mxu0
        %v2607 = vadd.f32 0.0, %v2606
        %v2608 = vpop.f32.mrf.mxu0
        %v2609 = vpop.f32.mrf.mxu0
        %v2610 = vadd.f32 0.0, %v2609
        %v2611 = vpop.f32.mrf.mxu0
        %2612 = vdwg.mxu0
        %v2613 = vadd.f32 %v2316, %v2487
        %v2614 = vadd.f32 %v2317, %v2490
        %v2615 = vadd.f32 %v2318, %v2495
        %v2616 = vadd.f32 %v2319, %v2498
        %v2617 = vadd.f32 %v2320, %v2503
        %v2618 = vadd.f32 %v2321, %v2506
        %v2619 = vadd.f32 %v2322, %v2511
        %v2620 = vadd.f32 %v2323, %v2514
        %v2621 = vadd.f32 %v2324, %v2519
        %v2622 = vadd.f32 %v2325, %v2522
        %v2623 = vadd.f32 %v2326, %v2527
        %v2624 = vadd.f32 %v2327, %v2530
        %v2625 = vadd.f32 %v2328, %v2535
        %v2626 = vadd.f32 %v2329, %v2538
        %v2627 = vadd.f32 %v2330, %v2543
        %v2628 = vadd.f32 %v2331, %v2546
        %v2629 = vadd.f32 %v2332, %v2551
        %v2630 = vadd.f32 %v2333, %v2554
        %v2631 = vadd.f32 %v2334, %v2559
        %v2632 = vadd.f32 %v2335, %v2562
        %v2633 = vadd.f32 %v2336, %v2567
        %v2634 = vadd.f32 %v2337, %v2570
        %v2635 = vadd.f32 %v2338, %v2575
        %v2636 = vadd.f32 %v2339, %v2578
        %v2637 = vadd.f32 %v2340, %v2583
        %v2638 = vadd.f32 %v2341, %v2586
        %v2639 = vadd.f32 %v2342, %v2591
        %v2640 = vadd.f32 %v2343, %v2594
        %v2641 = vadd.f32 %v2344, %v2599
        %v2642 = vadd.f32 %v2345, %v2602
        %v2643 = vadd.f32 %v2346, %v2607
        %v2644 = vadd.f32 %v2347, %v2610
        %v2645 = vld [vmem:[%s2054 + $0x2] sm:$0xff]
        %v2646 = vld [vmem:[%s2054 + $0xa] sm:$0xff]
        %v2647 = vld [vmem:[%s2054 + $0x1a] sm:$0xff]
        %v2648 = vld [vmem:[%s2054 + $0x22] sm:$0xff]
        %v2649 = vld [vmem:[%s2054 + $0x32] sm:$0xff]
        %v2650 = vld [vmem:[%s2054 + $0x3a] sm:$0xff]
        %v2651 = vld [vmem:[%s2054 + $0x4a] sm:$0xff]
        %v2652 = vld [vmem:[%s2054 + $0x52] sm:$0xff]
        %v2653 = vld [vmem:[%s2054 + $0x62] sm:$0xff]
        %v2654 = vld [vmem:[%s2054 + $0x6a] sm:$0xff]
        %v2655 = vld [vmem:[%s2054 + $0x7a] sm:$0xff]
        %v2656 = vld [vmem:[%s2054 + $0x82] sm:$0xff]
        %v2657 = vld [vmem:[%s2054 + $0x92] sm:$0xff]
        %v2658 = vld [vmem:[%s2054 + $0x9a] sm:$0xff]
        %v2659 = vld [vmem:[%s2054 + $0xaa] sm:$0xff]
        %v2660 = vld [vmem:[%s2054 + $0xb2] sm:$0xff]
        %v2661 = vld [vmem:[%s2054 + $0xc2] sm:$0xff]
        %v2662 = vld [vmem:[%s2054 + $0xca] sm:$0xff]
        %v2663 = vld [vmem:[%s2054 + $0xda] sm:$0xff]
        %v2664 = vld [vmem:[%s2054 + $0xe2] sm:$0xff]
        %v2665 = vld [vmem:[%s2054 + $0xf2] sm:$0xff]
        %v2666 = vld [vmem:[%s2054 + $0xfa] sm:$0xff]
        %v2667 = vld [vmem:[%s2054 + $0x10a] sm:$0xff]
        %v2668 = vld [vmem:[%s2054 + $0x112] sm:$0xff]
        %v2669 = vld [vmem:[%s2054 + $0x122] sm:$0xff]
        %v2670 = vld [vmem:[%s2054 + $0x12a] sm:$0xff]
        %v2671 = vld [vmem:[%s2054 + $0x13a] sm:$0xff]
        %v2672 = vld [vmem:[%s2054 + $0x142] sm:$0xff]
        %v2673 = vld [vmem:[%s2054 + $0x152] sm:$0xff]
        %v2674 = vld [vmem:[%s2054 + $0x15a] sm:$0xff]
        %v2675 = vld [vmem:[%s2054 + $0x16a] sm:$0xff]
        %v2676 = vld [vmem:[%s2054 + $0x172] sm:$0xff]
        %v2677 = vpack.c.bf16 %v2646, %v2645
        %v2678 = vpack.c.bf16 %v2648, %v2647
        %v2679 = vpack.c.bf16 %v2650, %v2649
        %v2680 = vpack.c.bf16 %v2652, %v2651
        %v2681 = vpack.c.bf16 %v2654, %v2653
        %v2682 = vpack.c.bf16 %v2656, %v2655
        %v2683 = vpack.c.bf16 %v2658, %v2657
        %v2684 = vpack.c.bf16 %v2660, %v2659
        %v2685 = vpack.c.bf16 %v2662, %v2661
        %v2686 = vpack.c.bf16 %v2664, %v2663
        %v2687 = vpack.c.bf16 %v2666, %v2665
        %v2688 = vpack.c.bf16 %v2668, %v2667
        %v2689 = vpack.c.bf16 %v2670, %v2669
        %v2690 = vpack.c.bf16 %v2672, %v2671
        %v2691 = vpack.c.bf16 %v2674, %v2673
        %v2692 = vpack.c.bf16 %v2676, %v2675
        %v2693 = vld [vmem:[%s1 + $0x10] sm:$0x3]
        %v2695 = vsel %vm447, %v2677, 0
        %v2698 = vsel %vm447, %v2678, 0
        %v2701 = vsel %vm447, %v2679, 0
        %v2704 = vsel %vm447, %v2680, 0
        %v2707 = vsel %vm447, %v2681, 0
        %v2710 = vsel %vm447, %v2682, 0
        %v2713 = vsel %vm447, %v2683, 0
        %v2716 = vsel %vm447, %v2684, 0
        %v2719 = vsel %vm447, %v2685, 0
        %v2722 = vsel %vm447, %v2686, 0
        %v2725 = vsel %vm447, %v2687, 0
        %v2728 = vsel %vm447, %v2688, 0
        %v2731 = vsel %vm447, %v2689, 0
        %v2734 = vsel %vm447, %v2690, 0
        %v2737 = vsel %vm447, %v2691, 0
        %v2740 = vsel %vm447, %v2692, 0
        %v2743 = vsel %vm496, %v2693, 0
        %2745 = vmatprep.subr.bf16.mxu0 0
        %2746 = vmatpush1.bf16.msra.mxu0 0
        %2747 = vmatprep.subr.bf16.mxu0 0
        %2748 = vmatpush1.bf16.msra.mxu0 0
        %2749 = vmatprep.subr.bf16.mxu0 0
        %2750 = vmatpush1.bf16.msra.mxu0 0
        %2751 = vmatprep.subr.bf16.mxu0 0
        %2752 = vmatpush1.bf16.msra.mxu0 0
        %2753 = vmatprep.subr.bf16.mxu0 0
        %2754 = vmatpush1.bf16.msra.mxu0 0
        %2755 = vmatprep.subr.bf16.mxu0 0
        %2756 = vmatpush1.bf16.msra.mxu0 0
        %2757 = vmatprep.subr.bf16.mxu0 0
        %2758 = vmatpush1.bf16.msra.mxu0 0
        %2759 = vmatprep.subr.bf16.mxu0 0
        %2760 = vmatpush1.bf16.msra.mxu0 %v2743
        %2761 = vmatprep.subr.bf16.mxu0 0
        %2762 = vmatpush2.bf16.msra.mxu0 0
        %2763 = vmatprep.subr.bf16.mxu0 0
        %2764 = vmatpush2.bf16.msra.mxu0 0
        %2765 = vmatprep.subr.bf16.mxu0 0
        %2766 = vmatpush2.bf16.msra.mxu0 0
        %2767 = vmatprep.subr.bf16.mxu0 0
        %2768 = vmatpush2.bf16.msra.mxu0 0
        %2769 = vmatprep.subr.bf16.mxu0 0
        %2770 = vmatpush2.bf16.msra.mxu0 0
        %2771 = vmatprep.subr.bf16.mxu0 0
        %2772 = vmatpush2.bf16.msra.mxu0 0
        %2773 = vmatprep.subr.bf16.mxu0 0
        %2774 = vmatpush2.bf16.msra.mxu0 0
        %2775 = vmatprep.subr.bf16.mxu0 0
        %2776 = vmatpush2.bf16.msra.mxu0 0
        %2777 = vmatprep.mubr.bf16.mxu0 0
        %2778 = vmatmul.mubr.bf16.gmra.mxu0 %v2695
        %v2779 = vpop.f32.mrf.mxu0
        %v2780 = vadd.f32 0.0, %v2779
        %v2781 = vpop.f32.mrf.mxu0
        %v2782 = vpop.f32.mrf.mxu0
        %v2783 = vadd.f32 0.0, %v2782
        %v2784 = vpop.f32.mrf.mxu0
        %2785 = vmatprep.mubr.bf16.mxu0 0
        %2786 = vmatmul.mubr.bf16.gmra.mxu0 %v2698
        %v2787 = vpop.f32.mrf.mxu0
        %v2788 = vadd.f32 0.0, %v2787
        %v2789 = vpop.f32.mrf.mxu0
        %v2790 = vpop.f32.mrf.mxu0
        %v2791 = vadd.f32 0.0, %v2790
        %v2792 = vpop.f32.mrf.mxu0
        %2793 = vmatprep.mubr.bf16.mxu0 0
        %2794 = vmatmul.mubr.bf16.gmra.mxu0 %v2701
        %v2795 = vpop.f32.mrf.mxu0
        %v2796 = vadd.f32 0.0, %v2795
        %v2797 = vpop.f32.mrf.mxu0
        %v2798 = vpop.f32.mrf.mxu0
        %v2799 = vadd.f32 0.0, %v2798
        %v2800 = vpop.f32.mrf.mxu0
        %2801 = vmatprep.mubr.bf16.mxu0 0
        %2802 = vmatmul.mubr.bf16.gmra.mxu0 %v2704
        %v2803 = vpop.f32.mrf.mxu0
        %v2804 = vadd.f32 0.0, %v2803
        %v2805 = vpop.f32.mrf.mxu0
        %v2806 = vpop.f32.mrf.mxu0
        %v2807 = vadd.f32 0.0, %v2806
        %v2808 = vpop.f32.mrf.mxu0
        %2809 = vmatprep.mubr.bf16.mxu0 0
        %2810 = vmatmul.mubr.bf16.gmra.mxu0 %v2707
        %v2811 = vpop.f32.mrf.mxu0
        %v2812 = vadd.f32 0.0, %v2811
        %v2813 = vpop.f32.mrf.mxu0
        %v2814 = vpop.f32.mrf.mxu0
        %v2815 = vadd.f32 0.0, %v2814
        %v2816 = vpop.f32.mrf.mxu0
        %2817 = vmatprep.mubr.bf16.mxu0 0
        %2818 = vmatmul.mubr.bf16.gmra.mxu0 %v2710
        %v2819 = vpop.f32.mrf.mxu0
        %v2820 = vadd.f32 0.0, %v2819
        %v2821 = vpop.f32.mrf.mxu0
        %v2822 = vpop.f32.mrf.mxu0
        %v2823 = vadd.f32 0.0, %v2822
        %v2824 = vpop.f32.mrf.mxu0
        %2825 = vmatprep.mubr.bf16.mxu0 0
        %2826 = vmatmul.mubr.bf16.gmra.mxu0 %v2713
        %v2827 = vpop.f32.mrf.mxu0
        %v2828 = vadd.f32 0.0, %v2827
        %v2829 = vpop.f32.mrf.mxu0
        %v2830 = vpop.f32.mrf.mxu0
        %v2831 = vadd.f32 0.0, %v2830
        %v2832 = vpop.f32.mrf.mxu0
        %2833 = vmatprep.mubr.bf16.mxu0 0
        %2834 = vmatmul.mubr.bf16.gmra.mxu0 %v2716
        %v2835 = vpop.f32.mrf.mxu0
        %v2836 = vadd.f32 0.0, %v2835
        %v2837 = vpop.f32.mrf.mxu0
        %v2838 = vpop.f32.mrf.mxu0
        %v2839 = vadd.f32 0.0, %v2838
        %v2840 = vpop.f32.mrf.mxu0
        %2841 = vmatprep.mubr.bf16.mxu0 0
        %2842 = vmatmul.mubr.bf16.gmra.mxu0 %v2719
        %v2843 = vpop.f32.mrf.mxu0
        %v2844 = vadd.f32 0.0, %v2843
        %v2845 = vpop.f32.mrf.mxu0
        %v2846 = vpop.f32.mrf.mxu0
        %v2847 = vadd.f32 0.0, %v2846
        %v2848 = vpop.f32.mrf.mxu0
        %2849 = vmatprep.mubr.bf16.mxu0 0
        %2850 = vmatmul.mubr.bf16.gmra.mxu0 %v2722
        %v2851 = vpop.f32.mrf.mxu0
        %v2852 = vadd.f32 0.0, %v2851
        %v2853 = vpop.f32.mrf.mxu0
        %v2854 = vpop.f32.mrf.mxu0
        %v2855 = vadd.f32 0.0, %v2854
        %v2856 = vpop.f32.mrf.mxu0
        %2857 = vmatprep.mubr.bf16.mxu0 0
        %2858 = vmatmul.mubr.bf16.gmra.mxu0 %v2725
        %v2859 = vpop.f32.mrf.mxu0
        %v2860 = vadd.f32 0.0, %v2859
        %v2861 = vpop.f32.mrf.mxu0
        %v2862 = vpop.f32.mrf.mxu0
        %v2863 = vadd.f32 0.0, %v2862
        %v2864 = vpop.f32.mrf.mxu0
        %2865 = vmatprep.mubr.bf16.mxu0 0
        %2866 = vmatmul.mubr.bf16.gmra.mxu0 %v2728
        %v2867 = vpop.f32.mrf.mxu0
        %v2868 = vadd.f32 0.0, %v2867
        %v2869 = vpop.f32.mrf.mxu0
        %v2870 = vpop.f32.mrf.mxu0
        %v2871 = vadd.f32 0.0, %v2870
        %v2872 = vpop.f32.mrf.mxu0
        %2873 = vmatprep.mubr.bf16.mxu0 0
        %2874 = vmatmul.mubr.bf16.gmra.mxu0 %v2731
        %v2875 = vpop.f32.mrf.mxu0
        %v2876 = vadd.f32 0.0, %v2875
        %v2877 = vpop.f32.mrf.mxu0
        %v2878 = vpop.f32.mrf.mxu0
        %v2879 = vadd.f32 0.0, %v2878
        %v2880 = vpop.f32.mrf.mxu0
        %2881 = vmatprep.mubr.bf16.mxu0 0
        %2882 = vmatmul.mubr.bf16.gmra.mxu0 %v2734
        %v2883 = vpop.f32.mrf.mxu0
        %v2884 = vadd.f32 0.0, %v2883
        %v2885 = vpop.f32.mrf.mxu0
        %v2886 = vpop.f32.mrf.mxu0
        %v2887 = vadd.f32 0.0, %v2886
        %v2888 = vpop.f32.mrf.mxu0
        %2889 = vmatprep.mubr.bf16.mxu0 0
        %2890 = vmatmul.mubr.bf16.gmra.mxu0 %v2737
        %v2891 = vpop.f32.mrf.mxu0
        %v2892 = vadd.f32 0.0, %v2891
        %v2893 = vpop.f32.mrf.mxu0
        %v2894 = vpop.f32.mrf.mxu0
        %v2895 = vadd.f32 0.0, %v2894
        %v2896 = vpop.f32.mrf.mxu0
        %2897 = vmatprep.mubr.bf16.mxu0 0
        %2898 = vmatmul.mubr.bf16.gmra.mxu0 %v2740
        %v2899 = vpop.f32.mrf.mxu0
        %v2900 = vadd.f32 0.0, %v2899
        %v2901 = vpop.f32.mrf.mxu0
        %v2902 = vpop.f32.mrf.mxu0
        %v2903 = vadd.f32 0.0, %v2902
        %v2904 = vpop.f32.mrf.mxu0
        %2905 = vdwg.mxu0
        %v2906 = vadd.f32 %v2613, %v2780
        %v2907 = vadd.f32 %v2614, %v2783
        %v2908 = vadd.f32 %v2615, %v2788
        %v2909 = vadd.f32 %v2616, %v2791
        %v2910 = vadd.f32 %v2617, %v2796
        %v2911 = vadd.f32 %v2618, %v2799
        %v2912 = vadd.f32 %v2619, %v2804
        %v2913 = vadd.f32 %v2620, %v2807
        %v2914 = vadd.f32 %v2621, %v2812
        %v2915 = vadd.f32 %v2622, %v2815
        %v2916 = vadd.f32 %v2623, %v2820
        %v2917 = vadd.f32 %v2624, %v2823
        %v2918 = vadd.f32 %v2625, %v2828
        %v2919 = vadd.f32 %v2626, %v2831
        %v2920 = vadd.f32 %v2627, %v2836
        %v2921 = vadd.f32 %v2628, %v2839
        %v2922 = vadd.f32 %v2629, %v2844
        %v2923 = vadd.f32 %v2630, %v2847
        %v2924 = vadd.f32 %v2631, %v2852
        %v2925 = vadd.f32 %v2632, %v2855
        %v2926 = vadd.f32 %v2633, %v2860
        %v2927 = vadd.f32 %v2634, %v2863
        %v2928 = vadd.f32 %v2635, %v2868
        %v2929 = vadd.f32 %v2636, %v2871
        %v2930 = vadd.f32 %v2637, %v2876
        %v2931 = vadd.f32 %v2638, %v2879
        %v2932 = vadd.f32 %v2639, %v2884
        %v2933 = vadd.f32 %v2640, %v2887
        %v2934 = vadd.f32 %v2641, %v2892
        %v2935 = vadd.f32 %v2642, %v2895
        %v2936 = vadd.f32 %v2643, %v2900
        %v2937 = vadd.f32 %v2644, %v2903
        %v2938 = vld [vmem:[%s2] sm:$0x1]
        %v2940 = vlaneseq
        %v2941 = vshrl.u32 %v2940, 7
        %v2942 = vsub.s32 0, %v2941
        %v2943 = vrot.slane %v2938, %v2942
        %v2945 = vadd.f32 %v2906, %v2943
        %v2946 = vadd.f32 %v2907, %v2943
        %v2947 = vadd.f32 %v2908, %v2943
        %v2948 = vadd.f32 %v2909, %v2943
        %v2949 = vadd.f32 %v2910, %v2943
        %v2950 = vadd.f32 %v2911, %v2943
        %v2951 = vadd.f32 %v2912, %v2943
        %v2952 = vadd.f32 %v2913, %v2943
        %v2953 = vadd.f32 %v2914, %v2943
        %v2954 = vadd.f32 %v2915, %v2943
        %v2955 = vadd.f32 %v2916, %v2943
        %v2956 = vadd.f32 %v2917, %v2943
        %v2957 = vadd.f32 %v2918, %v2943
        %v2958 = vadd.f32 %v2919, %v2943
        %v2959 = vadd.f32 %v2920, %v2943
        %v2960 = vadd.f32 %v2921, %v2943
        %v2961 = vadd.f32 %v2922, %v2943
        %v2962 = vadd.f32 %v2923, %v2943
        %v2963 = vadd.f32 %v2924, %v2943
        %v2964 = vadd.f32 %v2925, %v2943
        %v2965 = vadd.f32 %v2926, %v2943
        %v2966 = vadd.f32 %v2927, %v2943
        %v2967 = vadd.f32 %v2928, %v2943
        %v2968 = vadd.f32 %v2929, %v2943
        %v2969 = vadd.f32 %v2930, %v2943
        %v2970 = vadd.f32 %v2931, %v2943
        %v2971 = vadd.f32 %v2932, %v2943
        %v2972 = vadd.f32 %v2933, %v2943
        %v2973 = vadd.f32 %v2934, %v2943
        %v2974 = vadd.f32 %v2935, %v2943
        %v2975 = vadd.f32 %v2936, %v2943
        %v2976 = vadd.f32 %v2937, %v2943
        %v2977 = vmax.f32 %v2945, 0.0
        %v2978 = vmax.f32 %v2946, 0.0
        %v2979 = vmax.f32 %v2947, 0.0
        %v2980 = vmax.f32 %v2948, 0.0
        %v2981 = vmax.f32 %v2949, 0.0
        %v2982 = vmax.f32 %v2950, 0.0
        %v2983 = vmax.f32 %v2951, 0.0
        %v2984 = vmax.f32 %v2952, 0.0
        %v2985 = vmax.f32 %v2953, 0.0
        %v2986 = vmax.f32 %v2954, 0.0
        %v2987 = vmax.f32 %v2955, 0.0
        %v2988 = vmax.f32 %v2956, 0.0
        %v2989 = vmax.f32 %v2957, 0.0
        %v2990 = vmax.f32 %v2958, 0.0
        %v2991 = vmax.f32 %v2959, 0.0
        %v2992 = vmax.f32 %v2960, 0.0
        %v2993 = vmax.f32 %v2961, 0.0
        %v2994 = vmax.f32 %v2962, 0.0
        %v2995 = vmax.f32 %v2963, 0.0
        %v2996 = vmax.f32 %v2964, 0.0
        %v2997 = vmax.f32 %v2965, 0.0
        %v2998 = vmax.f32 %v2966, 0.0
        %v2999 = vmax.f32 %v2967, 0.0
        %v3000 = vmax.f32 %v2968, 0.0
        %v3001 = vmax.f32 %v2969, 0.0
        %v3002 = vmax.f32 %v2970, 0.0
        %v3003 = vmax.f32 %v2971, 0.0
        %v3004 = vmax.f32 %v2972, 0.0
        %v3005 = vmax.f32 %v2973, 0.0
        %v3006 = vmax.f32 %v2974, 0.0
        %v3007 = vmax.f32 %v2975, 0.0
        %v3008 = vmax.f32 %v2976, 0.0
        %vm3009 = vcmask 130048
        %3010 = vst.msk [vmem:[%s343] sm:$0xff] %vm3009, %v2977
        %3011 = vst.msk [vmem:[%s343 + $0x8] sm:$0xff] %vm3009, %v2978
        %3012 = vst.msk [vmem:[%s343 + $0x10] sm:$0xff] %vm3009, %v2979
        %3013 = vst.msk [vmem:[%s343 + $0x18] sm:$0xff] %vm3009, %v2980
        %3014 = vst.msk [vmem:[%s343 + $0x20] sm:$0xff] %vm3009, %v2981
        %3015 = vst.msk [vmem:[%s343 + $0x28] sm:$0xff] %vm3009, %v2982
        %3016 = vst.msk [vmem:[%s343 + $0x30] sm:$0xff] %vm3009, %v2983
        %3017 = vst.msk [vmem:[%s343 + $0x38] sm:$0xff] %vm3009, %v2984
        %3018 = vst.msk [vmem:[%s343 + $0x40] sm:$0xff] %vm3009, %v2985
        %3019 = vst.msk [vmem:[%s343 + $0x48] sm:$0xff] %vm3009, %v2986
        %3020 = vst.msk [vmem:[%s343 + $0x50] sm:$0xff] %vm3009, %v2987
        %3021 = vst.msk [vmem:[%s343 + $0x58] sm:$0xff] %vm3009, %v2988
        %3022 = vst.msk [vmem:[%s343 + $0x60] sm:$0xff] %vm3009, %v2989
        %3023 = vst.msk [vmem:[%s343 + $0x68] sm:$0xff] %vm3009, %v2990
        %3024 = vst.msk [vmem:[%s343 + $0x70] sm:$0xff] %vm3009, %v2991
        %3025 = vst.msk [vmem:[%s343 + $0x78] sm:$0xff] %vm3009, %v2992
        %3026 = vst.msk [vmem:[%s343 + $0x80] sm:$0xff] %vm3009, %v2993
        %3027 = vst.msk [vmem:[%s343 + $0x88] sm:$0xff] %vm3009, %v2994
        %3028 = vst.msk [vmem:[%s343 + $0x90] sm:$0xff] %vm3009, %v2995
        %3029 = vst.msk [vmem:[%s343 + $0x98] sm:$0xff] %vm3009, %v2996
        %3030 = vst.msk [vmem:[%s343 + $0xa0] sm:$0xff] %vm3009, %v2997
        %3031 = vst.msk [vmem:[%s343 + $0xa8] sm:$0xff] %vm3009, %v2998
        %3032 = vst.msk [vmem:[%s343 + $0xb0] sm:$0xff] %vm3009, %v2999
        %3033 = vst.msk [vmem:[%s343 + $0xb8] sm:$0xff] %vm3009, %v3000
        %3034 = vst.msk [vmem:[%s343 + $0xc0] sm:$0xff] %vm3009, %v3001
        %3035 = vst.msk [vmem:[%s343 + $0xc8] sm:$0xff] %vm3009, %v3002
        %3036 = vst.msk [vmem:[%s343 + $0xd0] sm:$0xff] %vm3009, %v3003
        %3037 = vst.msk [vmem:[%s343 + $0xd8] sm:$0xff] %vm3009, %v3004
        %3038 = vst.msk [vmem:[%s343 + $0xe0] sm:$0xff] %vm3009, %v3005
        %3039 = vst.msk [vmem:[%s343 + $0xe8] sm:$0xff] %vm3009, %v3006
        %3040 = vst.msk [vmem:[%s343 + $0xf0] sm:$0xff] %vm3009, %v3007
        %3041 = vst.msk [vmem:[%s343 + $0xf8] sm:$0xff] %vm3009, %v3008
        %3042 = vst.msk [vmem:[#allocation2] sm:$0xff] %vm3009, 0.0
        %3043 = vst.msk [vmem:[#allocation2 + $0x8] sm:$0xff] %vm3009, 0.0
        %vm3044 = vcmask 123904
        %3045 = vst.msk [vmem:[#allocation2 + $0x10] sm:$0x3] %vm3044, 0.0
        %3046 = vst.msk [vmem:[#allocation2 + $0x18] sm:$0xff] %vm3009, 0.0
        %3047 = vst.msk [vmem:[#allocation2 + $0x20] sm:$0xff] %vm3009, 0.0
        %3048 = vst.msk [vmem:[#allocation2 + $0x28] sm:$0x3] %vm3044, 0.0
        %3049 = vst.msk [vmem:[#allocation2 + $0x30] sm:$0xff] %vm3009, 0.0
        %3050 = vst.msk [vmem:[#allocation2 + $0x38] sm:$0xff] %vm3009, 0.0
        %3051 = vst.msk [vmem:[#allocation2 + $0x40] sm:$0x3] %vm3044, 0.0
        %3052 = vst.msk [vmem:[#allocation2 + $0x48] sm:$0xff] %vm3009, 0.0
        %3053 = vst.msk [vmem:[#allocation2 + $0x50] sm:$0xff] %vm3009, 0.0
        %3054 = vst.msk [vmem:[#allocation2 + $0x58] sm:$0x3] %vm3044, 0.0
        %3055 = vst.msk [vmem:[#allocation2 + $0x60] sm:$0xff] %vm3009, 0.0
        %3056 = vst.msk [vmem:[#allocation2 + $0x68] sm:$0xff] %vm3009, 0.0
        %3057 = vst.msk [vmem:[#allocation2 + $0x70] sm:$0x3] %vm3044, 0.0
        %3058 = vst.msk [vmem:[#allocation2 + $0x78] sm:$0xff] %vm3009, 0.0
        %3059 = vst.msk [vmem:[#allocation2 + $0x80] sm:$0xff] %vm3009, 0.0
        %3060 = vst.msk [vmem:[#allocation2 + $0x88] sm:$0x3] %vm3044, 0.0
        %3061 = vst.msk [vmem:[#allocation2 + $0x90] sm:$0xff] %vm3009, 0.0
        %3062 = vst.msk [vmem:[#allocation2 + $0x98] sm:$0xff] %vm3009, 0.0
        %3063 = vst.msk [vmem:[#allocation2 + $0xa0] sm:$0x3] %vm3044, 0.0
        %3064 = vst.msk [vmem:[#allocation2 + $0xa8] sm:$0xff] %vm3009, 0.0
        %3065 = vst.msk [vmem:[#allocation2 + $0xb0] sm:$0xff] %vm3009, 0.0
        %3066 = vst.msk [vmem:[#allocation2 + $0xb8] sm:$0x3] %vm3044, 0.0
        %3067 = vst.msk [vmem:[#allocation2 + $0xc0] sm:$0xff] %vm3009, 0.0
        %3068 = vst.msk [vmem:[#allocation2 + $0xc8] sm:$0xff] %vm3009, 0.0
        %3069 = vst.msk [vmem:[#allocation2 + $0xd0] sm:$0x3] %vm3044, 0.0
        %3070 = vst.msk [vmem:[#allocation2 + $0xd8] sm:$0xff] %vm3009, 0.0
        %3071 = vst.msk [vmem:[#allocation2 + $0xe0] sm:$0xff] %vm3009, 0.0
        %3072 = vst.msk [vmem:[#allocation2 + $0xe8] sm:$0x3] %vm3044, 0.0
        %3073 = vst.msk [vmem:[#allocation2 + $0xf0] sm:$0xff] %vm3009, 0.0
        %3074 = vst.msk [vmem:[#allocation2 + $0xf8] sm:$0xff] %vm3009, 0.0
        %3075 = vst.msk [vmem:[#allocation2 + $0x100] sm:$0x3] %vm3044, 0.0
        %3076 = vst.msk [vmem:[#allocation2 + $0x108] sm:$0xff] %vm3009, 0.0
        %3077 = vst.msk [vmem:[#allocation2 + $0x110] sm:$0xff] %vm3009, 0.0
        %3078 = vst.msk [vmem:[#allocation2 + $0x118] sm:$0x3] %vm3044, 0.0
        %3079 = vst.msk [vmem:[#allocation2 + $0x120] sm:$0xff] %vm3009, 0.0
        %3080 = vst.msk [vmem:[#allocation2 + $0x128] sm:$0xff] %vm3009, 0.0
        %3081 = vst.msk [vmem:[#allocation2 + $0x130] sm:$0x3] %vm3044, 0.0
        %3082 = vst.msk [vmem:[#allocation2 + $0x138] sm:$0xff] %vm3009, 0.0
        %3083 = vst.msk [vmem:[#allocation2 + $0x140] sm:$0xff] %vm3009, 0.0
        %3084 = vst.msk [vmem:[#allocation2 + $0x148] sm:$0x3] %vm3044, 0.0
        %3085 = vst.msk [vmem:[#allocation2 + $0x150] sm:$0xff] %vm3009, 0.0
        %3086 = vst.msk [vmem:[#allocation2 + $0x158] sm:$0xff] %vm3009, 0.0
        %3087 = vst.msk [vmem:[#allocation2 + $0x160] sm:$0x3] %vm3044, 0.0
        %3088 = vst.msk [vmem:[#allocation2 + $0x168] sm:$0xff] %vm3009, 0.0
        %3089 = vst.msk [vmem:[#allocation2 + $0x170] sm:$0xff] %vm3009, 0.0
        %3090 = vst.msk [vmem:[#allocation2 + $0x178] sm:$0x3] %vm3044, 0.0
        %3091 = vst.msk [vmem:[#allocation2 + $0x180] sm:$0xff] %vm3009, 0.0
        %3092 = vst.msk [vmem:[#allocation2 + $0x188] sm:$0xff] %vm3009, 0.0
        %3093 = vst.msk [vmem:[#allocation2 + $0x190] sm:$0x3] %vm3044, 0.0
        %3094 = vst.msk [vmem:[#allocation2 + $0x198] sm:$0xff] %vm3009, 0.0
        %3095 = vst.msk [vmem:[#allocation2 + $0x1a0] sm:$0xff] %vm3009, 0.0
        %3096 = vst.msk [vmem:[#allocation2 + $0x1a8] sm:$0x3] %vm3044, 0.0
        %s3097 = scalar_lea.vmem [#allocation2], 24
        %3098 = vst.msk [vmem:[%s3097 + $0x1] sm:$0xff] %vm3009, %v2977
        %3099 = vst.msk [vmem:[%s3097 + $0x9] sm:$0xff] %vm3009, %v2978
        %3100 = vst.msk [vmem:[%s3097 + $0x19] sm:$0xff] %vm3009, %v2979
        %3101 = vst.msk [vmem:[%s3097 + $0x21] sm:$0xff] %vm3009, %v2980
        %3102 = vst.msk [vmem:[%s3097 + $0x31] sm:$0xff] %vm3009, %v2981
        %3103 = vst.msk [vmem:[%s3097 + $0x39] sm:$0xff] %vm3009, %v2982
        %3104 = vst.msk [vmem:[%s3097 + $0x49] sm:$0xff] %vm3009, %v2983
        %3105 = vst.msk [vmem:[%s3097 + $0x51] sm:$0xff] %vm3009, %v2984
        %3106 = vst.msk [vmem:[%s3097 + $0x61] sm:$0xff] %vm3009, %v2985
        %3107 = vst.msk [vmem:[%s3097 + $0x69] sm:$0xff] %vm3009, %v2986
        %3108 = vst.msk [vmem:[%s3097 + $0x79] sm:$0xff] %vm3009, %v2987
        %3109 = vst.msk [vmem:[%s3097 + $0x81] sm:$0xff] %vm3009, %v2988
        %3110 = vst.msk [vmem:[%s3097 + $0x91] sm:$0xff] %vm3009, %v2989
        %3111 = vst.msk [vmem:[%s3097 + $0x99] sm:$0xff] %vm3009, %v2990
        %3112 = vst.msk [vmem:[%s3097 + $0xa9] sm:$0xff] %vm3009, %v2991
        %3113 = vst.msk [vmem:[%s3097 + $0xb1] sm:$0xff] %vm3009, %v2992
        %3114 = vst.msk [vmem:[%s3097 + $0xc1] sm:$0xff] %vm3009, %v2993
        %3115 = vst.msk [vmem:[%s3097 + $0xc9] sm:$0xff] %vm3009, %v2994
        %3116 = vst.msk [vmem:[%s3097 + $0xd9] sm:$0xff] %vm3009, %v2995
        %3117 = vst.msk [vmem:[%s3097 + $0xe1] sm:$0xff] %vm3009, %v2996
        %3118 = vst.msk [vmem:[%s3097 + $0xf1] sm:$0xff] %vm3009, %v2997
        %3119 = vst.msk [vmem:[%s3097 + $0xf9] sm:$0xff] %vm3009, %v2998
        %3120 = vst.msk [vmem:[%s3097 + $0x109] sm:$0xff] %vm3009, %v2999
        %3121 = vst.msk [vmem:[%s3097 + $0x111] sm:$0xff] %vm3009, %v3000
        %3122 = vst.msk [vmem:[%s3097 + $0x121] sm:$0xff] %vm3009, %v3001
        %3123 = vst.msk [vmem:[%s3097 + $0x129] sm:$0xff] %vm3009, %v3002
        %3124 = vst.msk [vmem:[%s3097 + $0x139] sm:$0xff] %vm3009, %v3003
        %3125 = vst.msk [vmem:[%s3097 + $0x141] sm:$0xff] %vm3009, %v3004
        %3126 = vst.msk [vmem:[%s3097 + $0x151] sm:$0xff] %vm3009, %v3005
        %3127 = vst.msk [vmem:[%s3097 + $0x159] sm:$0xff] %vm3009, %v3006
        %3128 = vst.msk [vmem:[%s3097 + $0x169] sm:$0xff] %vm3009, %v3007
        %3129 = vst.msk [vmem:[%s3097 + $0x171] sm:$0xff] %vm3009, %v3008
        %v3130 = vld [vmem:[#allocation2] sm:$0xff]
        %v3131 = vld [vmem:[#allocation2 + $0x8] sm:$0xff]
        %v3132 = vld [vmem:[#allocation2 + $0x18] sm:$0xff]
        %v3133 = vld [vmem:[#allocation2 + $0x20] sm:$0xff]
        %v3134 = vld [vmem:[#allocation2 + $0x30] sm:$0xff]
        %v3135 = vld [vmem:[#allocation2 + $0x38] sm:$0xff]
        %v3136 = vld [vmem:[#allocation2 + $0x48] sm:$0xff]
        %v3137 = vld [vmem:[#allocation2 + $0x50] sm:$0xff]
        %v3138 = vld [vmem:[#allocation2 + $0x60] sm:$0xff]
        %v3139 = vld [vmem:[#allocation2 + $0x68] sm:$0xff]
        %v3140 = vld [vmem:[#allocation2 + $0x78] sm:$0xff]
        %v3141 = vld [vmem:[#allocation2 + $0x80] sm:$0xff]
        %v3142 = vld [vmem:[#allocation2 + $0x90] sm:$0xff]
        %v3143 = vld [vmem:[#allocation2 + $0x98] sm:$0xff]
        %v3144 = vld [vmem:[#allocation2 + $0xa8] sm:$0xff]
        %v3145 = vld [vmem:[#allocation2 + $0xb0] sm:$0xff]
        %v3146 = vld [vmem:[#allocation2 + $0xc0] sm:$0xff]
        %v3147 = vld [vmem:[#allocation2 + $0xc8] sm:$0xff]
        %v3148 = vld [vmem:[#allocation2 + $0xd8] sm:$0xff]
        %v3149 = vld [vmem:[#allocation2 + $0xe0] sm:$0xff]
        %v3150 = vld [vmem:[#allocation2 + $0xf0] sm:$0xff]
        %v3151 = vld [vmem:[#allocation2 + $0xf8] sm:$0xff]
        %v3152 = vld [vmem:[#allocation2 + $0x108] sm:$0xff]
        %v3153 = vld [vmem:[#allocation2 + $0x110] sm:$0xff]
        %v3154 = vld [vmem:[#allocation2 + $0x120] sm:$0xff]
        %v3155 = vld [vmem:[#allocation2 + $0x128] sm:$0xff]
        %v3156 = vld [vmem:[#allocation2 + $0x138] sm:$0xff]
        %v3157 = vld [vmem:[#allocation2 + $0x140] sm:$0xff]
        %v3158 = vld [vmem:[#allocation2 + $0x150] sm:$0xff]
        %v3159 = vld [vmem:[#allocation2 + $0x158] sm:$0xff]
        %v3160 = vld [vmem:[#allocation2 + $0x168] sm:$0xff]
        %v3161 = vld [vmem:[#allocation2 + $0x170] sm:$0xff]
        %v3162 = vpack.c.bf16 %v3131, %v3130
        %v3163 = vpack.c.bf16 %v3133, %v3132
        %v3164 = vpack.c.bf16 %v3135, %v3134
        %v3165 = vpack.c.bf16 %v3137, %v3136
        %v3166 = vpack.c.bf16 %v3139, %v3138
        %v3167 = vpack.c.bf16 %v3141, %v3140
        %v3168 = vpack.c.bf16 %v3143, %v3142
        %v3169 = vpack.c.bf16 %v3145, %v3144
        %v3170 = vpack.c.bf16 %v3147, %v3146
        %v3171 = vpack.c.bf16 %v3149, %v3148
        %v3172 = vpack.c.bf16 %v3151, %v3150
        %v3173 = vpack.c.bf16 %v3153, %v3152
        %v3174 = vpack.c.bf16 %v3155, %v3154
        %v3175 = vpack.c.bf16 %v3157, %v3156
        %v3176 = vpack.c.bf16 %v3159, %v3158
        %v3177 = vpack.c.bf16 %v3161, %v3160
        %v3178 = vld [vmem:[%s3] sm:$0xf]
        %v3179 = vld [vmem:[%s3 + $0x4] sm:$0xf]
        %v3180 = vld [vmem:[#allocation2 + $0x1] sm:$0xff]
        %v3181 = vld [vmem:[#allocation2 + $0x9] sm:$0xff]
        %v3182 = vld [vmem:[#allocation2 + $0x19] sm:$0xff]
        %v3183 = vld [vmem:[#allocation2 + $0x21] sm:$0xff]
        %v3184 = vld [vmem:[#allocation2 + $0x31] sm:$0xff]
        %v3185 = vld [vmem:[#allocation2 + $0x39] sm:$0xff]
        %v3186 = vld [vmem:[#allocation2 + $0x49] sm:$0xff]
        %v3187 = vld [vmem:[#allocation2 + $0x51] sm:$0xff]
        %v3188 = vld [vmem:[#allocation2 + $0x61] sm:$0xff]
        %v3189 = vld [vmem:[#allocation2 + $0x69] sm:$0xff]
        %v3190 = vld [vmem:[#allocation2 + $0x79] sm:$0xff]
        %v3191 = vld [vmem:[#allocation2 + $0x81] sm:$0xff]
        %v3192 = vld [vmem:[#allocation2 + $0x91] sm:$0xff]
        %v3193 = vld [vmem:[#allocation2 + $0x99] sm:$0xff]
        %v3194 = vld [vmem:[#allocation2 + $0xa9] sm:$0xff]
        %v3195 = vld [vmem:[#allocation2 + $0xb1] sm:$0xff]
        %v3196 = vld [vmem:[#allocation2 + $0xc1] sm:$0xff]
        %v3197 = vld [vmem:[#allocation2 + $0xc9] sm:$0xff]
        %v3198 = vld [vmem:[#allocation2 + $0xd9] sm:$0xff]
        %v3199 = vld [vmem:[#allocation2 + $0xe1] sm:$0xff]
        %v3200 = vld [vmem:[#allocation2 + $0xf1] sm:$0xff]
        %v3201 = vld [vmem:[#allocation2 + $0xf9] sm:$0xff]
        %v3202 = vld [vmem:[#allocation2 + $0x109] sm:$0xff]
        %v3203 = vld [vmem:[#allocation2 + $0x111] sm:$0xff]
        %v3204 = vld [vmem:[#allocation2 + $0x121] sm:$0xff]
        %v3205 = vld [vmem:[#allocation2 + $0x129] sm:$0xff]
        %v3206 = vld [vmem:[#allocation2 + $0x139] sm:$0xff]
        %v3207 = vld [vmem:[#allocation2 + $0x141] sm:$0xff]
        %v3208 = vld [vmem:[#allocation2 + $0x151] sm:$0xff]
        %v3209 = vld [vmem:[#allocation2 + $0x159] sm:$0xff]
        %v3210 = vld [vmem:[#allocation2 + $0x169] sm:$0xff]
        %v3211 = vld [vmem:[#allocation2 + $0x171] sm:$0xff]
        %v3212 = vpack.c.bf16 %v3181, %v3180
        %v3213 = vpack.c.bf16 %v3183, %v3182
        %v3214 = vpack.c.bf16 %v3185, %v3184
        %v3215 = vpack.c.bf16 %v3187, %v3186
        %v3216 = vpack.c.bf16 %v3189, %v3188
        %v3217 = vpack.c.bf16 %v3191, %v3190
        %v3218 = vpack.c.bf16 %v3193, %v3192
        %v3219 = vpack.c.bf16 %v3195, %v3194
        %v3220 = vpack.c.bf16 %v3197, %v3196
        %v3221 = vpack.c.bf16 %v3199, %v3198
        %v3222 = vpack.c.bf16 %v3201, %v3200
        %v3223 = vpack.c.bf16 %v3203, %v3202
        %v3224 = vpack.c.bf16 %v3205, %v3204
        %v3225 = vpack.c.bf16 %v3207, %v3206
        %v3226 = vpack.c.bf16 %v3209, %v3208
        %v3227 = vpack.c.bf16 %v3211, %v3210
        %v3228 = vld [vmem:[%s3 + $0x8] sm:$0xf]
        %v3229 = vld [vmem:[%s3 + $0xc] sm:$0xf]
        %v3232 = vunpack.c.l.b16 %v3228
        %v3233 = vunpack.c.l.b16 %v3229
        %v3234 = vpack.c.b16 %v3233, %v3232
        %v3237 = vsel %vm3009, %v3212, 0
        %v3240 = vsel %vm3009, %v3213, 0
        %v3243 = vsel %vm3009, %v3214, 0
        %v3246 = vsel %vm3009, %v3215, 0
        %v3249 = vsel %vm3009, %v3216, 0
        %v3252 = vsel %vm3009, %v3217, 0
        %v3255 = vsel %vm3009, %v3218, 0
        %v3258 = vsel %vm3009, %v3219, 0
        %v3261 = vsel %vm3009, %v3220, 0
        %v3264 = vsel %vm3009, %v3221, 0
        %v3267 = vsel %vm3009, %v3222, 0
        %v3270 = vsel %vm3009, %v3223, 0
        %v3273 = vsel %vm3009, %v3224, 0
        %v3276 = vsel %vm3009, %v3225, 0
        %v3279 = vsel %vm3009, %v3226, 0
        %v3282 = vsel %vm3009, %v3227, 0
        %3284 = vmatprep.subr.bf16.mxu0 0
        %3285 = vmatpush1.bf16.msra.mxu0 0
        %3286 = vmatprep.subr.bf16.mxu0 0
        %3287 = vmatpush1.bf16.msra.mxu0 0
        %3288 = vmatprep.subr.bf16.mxu0 0
        %3289 = vmatpush1.bf16.msra.mxu0 0
        %3290 = vmatprep.subr.bf16.mxu0 0
        %3291 = vmatpush1.bf16.msra.mxu0 0
        %3292 = vmatprep.subr.bf16.mxu0 0
        %3293 = vmatpush1.bf16.msra.mxu0 0
        %3294 = vmatprep.subr.bf16.mxu0 0
        %3295 = vmatpush1.bf16.msra.mxu0 0
        %3296 = vmatprep.subr.bf16.mxu0 0
        %3297 = vmatpush1.bf16.msra.mxu0 0
        %3298 = vmatprep.subr.bf16.mxu0 0
        %3299 = vmatpush1.bf16.msra.mxu0 %v3234
        %3300 = vmatprep.subr.bf16.mxu0 0
        %3301 = vmatpush2.bf16.msra.mxu0 0
        %3302 = vmatprep.subr.bf16.mxu0 0
        %3303 = vmatpush2.bf16.msra.mxu0 0
        %3304 = vmatprep.subr.bf16.mxu0 0
        %3305 = vmatpush2.bf16.msra.mxu0 0
        %3306 = vmatprep.subr.bf16.mxu0 0
        %3307 = vmatpush2.bf16.msra.mxu0 0
        %3308 = vmatprep.subr.bf16.mxu0 0
        %3309 = vmatpush2.bf16.msra.mxu0 0
        %3310 = vmatprep.subr.bf16.mxu0 0
        %3311 = vmatpush2.bf16.msra.mxu0 0
        %3312 = vmatprep.subr.bf16.mxu0 0
        %3313 = vmatpush2.bf16.msra.mxu0 0
        %3314 = vmatprep.subr.bf16.mxu0 0
        %3315 = vmatpush2.bf16.msra.mxu0 0
        %3316 = vmatprep.mubr.bf16.mxu0 0
        %3317 = vmatmul.mubr.bf16.gmra.mxu0 %v3237
        %v3318 = vpop.f32.mrf.mxu0
        %v3319 = vadd.f32 0.0, %v3318
        %v3320 = vpop.f32.mrf.mxu0
        %v3321 = vpop.f32.mrf.mxu0
        %v3322 = vadd.f32 0.0, %v3321
        %v3323 = vpop.f32.mrf.mxu0
        %3324 = vmatprep.mubr.bf16.mxu0 0
        %3325 = vmatmul.mubr.bf16.gmra.mxu0 %v3240
        %v3326 = vpop.f32.mrf.mxu0
        %v3327 = vadd.f32 0.0, %v3326
        %v3328 = vpop.f32.mrf.mxu0
        %v3329 = vpop.f32.mrf.mxu0
        %v3330 = vadd.f32 0.0, %v3329
        %v3331 = vpop.f32.mrf.mxu0
        %3332 = vmatprep.mubr.bf16.mxu0 0
        %3333 = vmatmul.mubr.bf16.gmra.mxu0 %v3243
        %v3334 = vpop.f32.mrf.mxu0
        %v3335 = vadd.f32 0.0, %v3334
        %v3336 = vpop.f32.mrf.mxu0
        %v3337 = vpop.f32.mrf.mxu0
        %v3338 = vadd.f32 0.0, %v3337
        %v3339 = vpop.f32.mrf.mxu0
        %3340 = vmatprep.mubr.bf16.mxu0 0
        %3341 = vmatmul.mubr.bf16.gmra.mxu0 %v3246
        %v3342 = vpop.f32.mrf.mxu0
        %v3343 = vadd.f32 0.0, %v3342
        %v3344 = vpop.f32.mrf.mxu0
        %v3345 = vpop.f32.mrf.mxu0
        %v3346 = vadd.f32 0.0, %v3345
        %v3347 = vpop.f32.mrf.mxu0
        %3348 = vmatprep.mubr.bf16.mxu0 0
        %3349 = vmatmul.mubr.bf16.gmra.mxu0 %v3249
        %v3350 = vpop.f32.mrf.mxu0
        %v3351 = vadd.f32 0.0, %v3350
        %v3352 = vpop.f32.mrf.mxu0
        %v3353 = vpop.f32.mrf.mxu0
        %v3354 = vadd.f32 0.0, %v3353
        %v3355 = vpop.f32.mrf.mxu0
        %3356 = vmatprep.mubr.bf16.mxu0 0
        %3357 = vmatmul.mubr.bf16.gmra.mxu0 %v3252
        %v3358 = vpop.f32.mrf.mxu0
        %v3359 = vadd.f32 0.0, %v3358
        %v3360 = vpop.f32.mrf.mxu0
        %v3361 = vpop.f32.mrf.mxu0
        %v3362 = vadd.f32 0.0, %v3361
        %v3363 = vpop.f32.mrf.mxu0
        %3364 = vmatprep.mubr.bf16.mxu0 0
        %3365 = vmatmul.mubr.bf16.gmra.mxu0 %v3255
        %v3366 = vpop.f32.mrf.mxu0
        %v3367 = vadd.f32 0.0, %v3366
        %v3368 = vpop.f32.mrf.mxu0
        %v3369 = vpop.f32.mrf.mxu0
        %v3370 = vadd.f32 0.0, %v3369
        %v3371 = vpop.f32.mrf.mxu0
        %3372 = vmatprep.mubr.bf16.mxu0 0
        %3373 = vmatmul.mubr.bf16.gmra.mxu0 %v3258
        %v3374 = vpop.f32.mrf.mxu0
        %v3375 = vadd.f32 0.0, %v3374
        %v3376 = vpop.f32.mrf.mxu0
        %v3377 = vpop.f32.mrf.mxu0
        %v3378 = vadd.f32 0.0, %v3377
        %v3379 = vpop.f32.mrf.mxu0
        %3380 = vmatprep.mubr.bf16.mxu0 0
        %3381 = vmatmul.mubr.bf16.gmra.mxu0 %v3261
        %v3382 = vpop.f32.mrf.mxu0
        %v3383 = vadd.f32 0.0, %v3382
        %v3384 = vpop.f32.mrf.mxu0
        %v3385 = vpop.f32.mrf.mxu0
        %v3386 = vadd.f32 0.0, %v3385
        %v3387 = vpop.f32.mrf.mxu0
        %3388 = vmatprep.mubr.bf16.mxu0 0
        %3389 = vmatmul.mubr.bf16.gmra.mxu0 %v3264
        %v3390 = vpop.f32.mrf.mxu0
        %v3391 = vadd.f32 0.0, %v3390
        %v3392 = vpop.f32.mrf.mxu0
        %v3393 = vpop.f32.mrf.mxu0
        %v3394 = vadd.f32 0.0, %v3393
        %v3395 = vpop.f32.mrf.mxu0
        %3396 = vmatprep.mubr.bf16.mxu0 0
        %3397 = vmatmul.mubr.bf16.gmra.mxu0 %v3267
        %v3398 = vpop.f32.mrf.mxu0
        %v3399 = vadd.f32 0.0, %v3398
        %v3400 = vpop.f32.mrf.mxu0
        %v3401 = vpop.f32.mrf.mxu0
        %v3402 = vadd.f32 0.0, %v3401
        %v3403 = vpop.f32.mrf.mxu0
        %3404 = vmatprep.mubr.bf16.mxu0 0
        %3405 = vmatmul.mubr.bf16.gmra.mxu0 %v3270
        %v3406 = vpop.f32.mrf.mxu0
        %v3407 = vadd.f32 0.0, %v3406
        %v3408 = vpop.f32.mrf.mxu0
        %v3409 = vpop.f32.mrf.mxu0
        %v3410 = vadd.f32 0.0, %v3409
        %v3411 = vpop.f32.mrf.mxu0
        %3412 = vmatprep.mubr.bf16.mxu0 0
        %3413 = vmatmul.mubr.bf16.gmra.mxu0 %v3273
        %v3414 = vpop.f32.mrf.mxu0
        %v3415 = vadd.f32 0.0, %v3414
        %v3416 = vpop.f32.mrf.mxu0
        %v3417 = vpop.f32.mrf.mxu0
        %v3418 = vadd.f32 0.0, %v3417
        %v3419 = vpop.f32.mrf.mxu0
        %3420 = vmatprep.mubr.bf16.mxu0 0
        %3421 = vmatmul.mubr.bf16.gmra.mxu0 %v3276
        %v3422 = vpop.f32.mrf.mxu0
        %v3423 = vadd.f32 0.0, %v3422
        %v3424 = vpop.f32.mrf.mxu0
        %v3425 = vpop.f32.mrf.mxu0
        %v3426 = vadd.f32 0.0, %v3425
        %v3427 = vpop.f32.mrf.mxu0
        %3428 = vmatprep.mubr.bf16.mxu0 0
        %3429 = vmatmul.mubr.bf16.gmra.mxu0 %v3279
        %v3430 = vpop.f32.mrf.mxu0
        %v3431 = vadd.f32 0.0, %v3430
        %v3432 = vpop.f32.mrf.mxu0
        %v3433 = vpop.f32.mrf.mxu0
        %v3434 = vadd.f32 0.0, %v3433
        %v3435 = vpop.f32.mrf.mxu0
        %3436 = vmatprep.mubr.bf16.mxu0 0
        %3437 = vmatmul.mubr.bf16.gmra.mxu0 %v3282
        %v3438 = vpop.f32.mrf.mxu0
        %v3439 = vadd.f32 0.0, %v3438
        %v3440 = vpop.f32.mrf.mxu0
        %v3441 = vpop.f32.mrf.mxu0
        %v3442 = vadd.f32 0.0, %v3441
        %v3443 = vpop.f32.mrf.mxu0
        %3444 = vdwg.mxu0
        %v3447 = vunpack.c.l.b16 %v3178
        %v3448 = vunpack.c.l.b16 %v3179
        %v3449 = vpack.c.b16 %v3448, %v3447
        %v3452 = vsel %vm3009, %v3162, 0
        %v3455 = vsel %vm3009, %v3163, 0
        %v3458 = vsel %vm3009, %v3164, 0
        %v3461 = vsel %vm3009, %v3165, 0
        %v3464 = vsel %vm3009, %v3166, 0
        %v3467 = vsel %vm3009, %v3167, 0
        %v3470 = vsel %vm3009, %v3168, 0
        %v3473 = vsel %vm3009, %v3169, 0
        %v3476 = vsel %vm3009, %v3170, 0
        %v3479 = vsel %vm3009, %v3171, 0
        %v3482 = vsel %vm3009, %v3172, 0
        %v3485 = vsel %vm3009, %v3173, 0
        %v3488 = vsel %vm3009, %v3174, 0
        %v3491 = vsel %vm3009, %v3175, 0
        %v3494 = vsel %vm3009, %v3176, 0
        %v3497 = vsel %vm3009, %v3177, 0
        %3499 = vmatprep.subr.bf16.mxu0 0
        %3500 = vmatpush1.bf16.msra.mxu0 0
        %3501 = vmatprep.subr.bf16.mxu0 0
        %3502 = vmatpush1.bf16.msra.mxu0 0
        %3503 = vmatprep.subr.bf16.mxu0 0
        %3504 = vmatpush1.bf16.msra.mxu0 0
        %3505 = vmatprep.subr.bf16.mxu0 0
        %3506 = vmatpush1.bf16.msra.mxu0 0
        %3507 = vmatprep.subr.bf16.mxu0 0
        %3508 = vmatpush1.bf16.msra.mxu0 0
        %3509 = vmatprep.subr.bf16.mxu0 0
        %3510 = vmatpush1.bf16.msra.mxu0 0
        %3511 = vmatprep.subr.bf16.mxu0 0
        %3512 = vmatpush1.bf16.msra.mxu0 0
        %3513 = vmatprep.subr.bf16.mxu0 0
        %3514 = vmatpush1.bf16.msra.mxu0 %v3449
        %3515 = vmatprep.subr.bf16.mxu0 0
        %3516 = vmatpush2.bf16.msra.mxu0 0
        %3517 = vmatprep.subr.bf16.mxu0 0
        %3518 = vmatpush2.bf16.msra.mxu0 0
        %3519 = vmatprep.subr.bf16.mxu0 0
        %3520 = vmatpush2.bf16.msra.mxu0 0
        %3521 = vmatprep.subr.bf16.mxu0 0
        %3522 = vmatpush2.bf16.msra.mxu0 0
        %3523 = vmatprep.subr.bf16.mxu0 0
        %3524 = vmatpush2.bf16.msra.mxu0 0
        %3525 = vmatprep.subr.bf16.mxu0 0
        %3526 = vmatpush2.bf16.msra.mxu0 0
        %3527 = vmatprep.subr.bf16.mxu0 0
        %3528 = vmatpush2.bf16.msra.mxu0 0
        %3529 = vmatprep.subr.bf16.mxu0 0
        %3530 = vmatpush2.bf16.msra.mxu0 0
        %3531 = vmatprep.mubr.bf16.mxu0 0
        %3532 = vmatmul.mubr.bf16.gmra.mxu0 %v3452
        %v3533 = vpop.f32.mrf.mxu0
        %v3534 = vadd.f32 %v3319, %v3533
        %v3535 = vpop.f32.mrf.mxu0
        %v3536 = vpop.f32.mrf.mxu0
        %v3537 = vadd.f32 %v3322, %v3536
        %v3538 = vpop.f32.mrf.mxu0
        %3539 = vmatprep.mubr.bf16.mxu0 0
        %3540 = vmatmul.mubr.bf16.gmra.mxu0 %v3455
        %v3541 = vpop.f32.mrf.mxu0
        %v3542 = vadd.f32 %v3327, %v3541
        %v3543 = vpop.f32.mrf.mxu0
        %v3544 = vpop.f32.mrf.mxu0
        %v3545 = vadd.f32 %v3330, %v3544
        %v3546 = vpop.f32.mrf.mxu0
        %3547 = vmatprep.mubr.bf16.mxu0 0
        %3548 = vmatmul.mubr.bf16.gmra.mxu0 %v3458
        %v3549 = vpop.f32.mrf.mxu0
        %v3550 = vadd.f32 %v3335, %v3549
        %v3551 = vpop.f32.mrf.mxu0
        %v3552 = vpop.f32.mrf.mxu0
        %v3553 = vadd.f32 %v3338, %v3552
        %v3554 = vpop.f32.mrf.mxu0
        %3555 = vmatprep.mubr.bf16.mxu0 0
        %3556 = vmatmul.mubr.bf16.gmra.mxu0 %v3461
        %v3557 = vpop.f32.mrf.mxu0
        %v3558 = vadd.f32 %v3343, %v3557
        %v3559 = vpop.f32.mrf.mxu0
        %v3560 = vpop.f32.mrf.mxu0
        %v3561 = vadd.f32 %v3346, %v3560
        %v3562 = vpop.f32.mrf.mxu0
        %3563 = vmatprep.mubr.bf16.mxu0 0
        %3564 = vmatmul.mubr.bf16.gmra.mxu0 %v3464
        %v3565 = vpop.f32.mrf.mxu0
        %v3566 = vadd.f32 %v3351, %v3565
        %v3567 = vpop.f32.mrf.mxu0
        %v3568 = vpop.f32.mrf.mxu0
        %v3569 = vadd.f32 %v3354, %v3568
        %v3570 = vpop.f32.mrf.mxu0
        %3571 = vmatprep.mubr.bf16.mxu0 0
        %3572 = vmatmul.mubr.bf16.gmra.mxu0 %v3467
        %v3573 = vpop.f32.mrf.mxu0
        %v3574 = vadd.f32 %v3359, %v3573
        %v3575 = vpop.f32.mrf.mxu0
        %v3576 = vpop.f32.mrf.mxu0
        %v3577 = vadd.f32 %v3362, %v3576
        %v3578 = vpop.f32.mrf.mxu0
        %3579 = vmatprep.mubr.bf16.mxu0 0
        %3580 = vmatmul.mubr.bf16.gmra.mxu0 %v3470
        %v3581 = vpop.f32.mrf.mxu0
        %v3582 = vadd.f32 %v3367, %v3581
        %v3583 = vpop.f32.mrf.mxu0
        %v3584 = vpop.f32.mrf.mxu0
        %v3585 = vadd.f32 %v3370, %v3584
        %v3586 = vpop.f32.mrf.mxu0
        %3587 = vmatprep.mubr.bf16.mxu0 0
        %3588 = vmatmul.mubr.bf16.gmra.mxu0 %v3473
        %v3589 = vpop.f32.mrf.mxu0
        %v3590 = vadd.f32 %v3375, %v3589
        %v3591 = vpop.f32.mrf.mxu0
        %v3592 = vpop.f32.mrf.mxu0
        %v3593 = vadd.f32 %v3378, %v3592
        %v3594 = vpop.f32.mrf.mxu0
        %3595 = vmatprep.mubr.bf16.mxu0 0
        %3596 = vmatmul.mubr.bf16.gmra.mxu0 %v3476
        %v3597 = vpop.f32.mrf.mxu0
        %v3598 = vadd.f32 %v3383, %v3597
        %v3599 = vpop.f32.mrf.mxu0
        %v3600 = vpop.f32.mrf.mxu0
        %v3601 = vadd.f32 %v3386, %v3600
        %v3602 = vpop.f32.mrf.mxu0
        %3603 = vmatprep.mubr.bf16.mxu0 0
        %3604 = vmatmul.mubr.bf16.gmra.mxu0 %v3479
        %v3605 = vpop.f32.mrf.mxu0
        %v3606 = vadd.f32 %v3391, %v3605
        %v3607 = vpop.f32.mrf.mxu0
        %v3608 = vpop.f32.mrf.mxu0
        %v3609 = vadd.f32 %v3394, %v3608
        %v3610 = vpop.f32.mrf.mxu0
        %3611 = vmatprep.mubr.bf16.mxu0 0
        %3612 = vmatmul.mubr.bf16.gmra.mxu0 %v3482
        %v3613 = vpop.f32.mrf.mxu0
        %v3614 = vadd.f32 %v3399, %v3613
        %v3615 = vpop.f32.mrf.mxu0
        %v3616 = vpop.f32.mrf.mxu0
        %v3617 = vadd.f32 %v3402, %v3616
        %v3618 = vpop.f32.mrf.mxu0
        %3619 = vmatprep.mubr.bf16.mxu0 0
        %3620 = vmatmul.mubr.bf16.gmra.mxu0 %v3485
        %v3621 = vpop.f32.mrf.mxu0
        %v3622 = vadd.f32 %v3407, %v3621
        %v3623 = vpop.f32.mrf.mxu0
        %v3624 = vpop.f32.mrf.mxu0
        %v3625 = vadd.f32 %v3410, %v3624
        %v3626 = vpop.f32.mrf.mxu0
        %3627 = vmatprep.mubr.bf16.mxu0 0
        %3628 = vmatmul.mubr.bf16.gmra.mxu0 %v3488
        %v3629 = vpop.f32.mrf.mxu0
        %v3630 = vadd.f32 %v3415, %v3629
        %v3631 = vpop.f32.mrf.mxu0
        %v3632 = vpop.f32.mrf.mxu0
        %v3633 = vadd.f32 %v3418, %v3632
        %v3634 = vpop.f32.mrf.mxu0
        %3635 = vmatprep.mubr.bf16.mxu0 0
        %3636 = vmatmul.mubr.bf16.gmra.mxu0 %v3491
        %v3637 = vpop.f32.mrf.mxu0
        %v3638 = vadd.f32 %v3423, %v3637
        %v3639 = vpop.f32.mrf.mxu0
        %v3640 = vpop.f32.mrf.mxu0
        %v3641 = vadd.f32 %v3426, %v3640
        %v3642 = vpop.f32.mrf.mxu0
        %3643 = vmatprep.mubr.bf16.mxu0 0
        %3644 = vmatmul.mubr.bf16.gmra.mxu0 %v3494
        %v3645 = vpop.f32.mrf.mxu0
        %v3646 = vadd.f32 %v3431, %v3645
        %v3647 = vpop.f32.mrf.mxu0
        %v3648 = vpop.f32.mrf.mxu0
        %v3649 = vadd.f32 %v3434, %v3648
        %v3650 = vpop.f32.mrf.mxu0
        %3651 = vmatprep.mubr.bf16.mxu0 0
        %3652 = vmatmul.mubr.bf16.gmra.mxu0 %v3497
        %v3653 = vpop.f32.mrf.mxu0
        %v3654 = vadd.f32 %v3439, %v3653
        %v3655 = vpop.f32.mrf.mxu0
        %v3656 = vpop.f32.mrf.mxu0
        %v3657 = vadd.f32 %v3442, %v3656
        %v3658 = vpop.f32.mrf.mxu0
        %3659 = vdwg.mxu0
        %v3660 = vld [vmem:[#allocation2 + $0x2] sm:$0xff]
        %v3661 = vld [vmem:[#allocation2 + $0xa] sm:$0xff]
        %v3662 = vld [vmem:[#allocation2 + $0x1a] sm:$0xff]
        %v3663 = vld [vmem:[#allocation2 + $0x22] sm:$0xff]
        %v3664 = vld [vmem:[#allocation2 + $0x32] sm:$0xff]
        %v3665 = vld [vmem:[#allocation2 + $0x3a] sm:$0xff]
        %v3666 = vld [vmem:[#allocation2 + $0x4a] sm:$0xff]
        %v3667 = vld [vmem:[#allocation2 + $0x52] sm:$0xff]
        %v3668 = vld [vmem:[#allocation2 + $0x62] sm:$0xff]
        %v3669 = vld [vmem:[#allocation2 + $0x6a] sm:$0xff]
        %v3670 = vld [vmem:[#allocation2 + $0x7a] sm:$0xff]
        %v3671 = vld [vmem:[#allocation2 + $0x82] sm:$0xff]
        %v3672 = vld [vmem:[#allocation2 + $0x92] sm:$0xff]
        %v3673 = vld [vmem:[#allocation2 + $0x9a] sm:$0xff]
        %v3674 = vld [vmem:[#allocation2 + $0xaa] sm:$0xff]
        %v3675 = vld [vmem:[#allocation2 + $0xb2] sm:$0xff]
        %v3676 = vld [vmem:[#allocation2 + $0xc2] sm:$0xff]
        %v3677 = vld [vmem:[#allocation2 + $0xca] sm:$0xff]
        %v3678 = vld [vmem:[#allocation2 + $0xda] sm:$0xff]
        %v3679 = vld [vmem:[#allocation2 + $0xe2] sm:$0xff]
        %v3680 = vld [vmem:[#allocation2 + $0xf2] sm:$0xff]
        %v3681 = vld [vmem:[#allocation2 + $0xfa] sm:$0xff]
        %v3682 = vld [vmem:[#allocation2 + $0x10a] sm:$0xff]
        %v3683 = vld [vmem:[#allocation2 + $0x112] sm:$0xff]
        %v3684 = vld [vmem:[#allocation2 + $0x122] sm:$0xff]
        %v3685 = vld [vmem:[#allocation2 + $0x12a] sm:$0xff]
        %v3686 = vld [vmem:[#allocation2 + $0x13a] sm:$0xff]
        %v3687 = vld [vmem:[#allocation2 + $0x142] sm:$0xff]
        %v3688 = vld [vmem:[#allocation2 + $0x152] sm:$0xff]
        %v3689 = vld [vmem:[#allocation2 + $0x15a] sm:$0xff]
        %v3690 = vld [vmem:[#allocation2 + $0x16a] sm:$0xff]
        %v3691 = vld [vmem:[#allocation2 + $0x172] sm:$0xff]
        %v3692 = vpack.c.bf16 %v3661, %v3660
        %v3693 = vpack.c.bf16 %v3663, %v3662
        %v3694 = vpack.c.bf16 %v3665, %v3664
        %v3695 = vpack.c.bf16 %v3667, %v3666
        %v3696 = vpack.c.bf16 %v3669, %v3668
        %v3697 = vpack.c.bf16 %v3671, %v3670
        %v3698 = vpack.c.bf16 %v3673, %v3672
        %v3699 = vpack.c.bf16 %v3675, %v3674
        %v3700 = vpack.c.bf16 %v3677, %v3676
        %v3701 = vpack.c.bf16 %v3679, %v3678
        %v3702 = vpack.c.bf16 %v3681, %v3680
        %v3703 = vpack.c.bf16 %v3683, %v3682
        %v3704 = vpack.c.bf16 %v3685, %v3684
        %v3705 = vpack.c.bf16 %v3687, %v3686
        %v3706 = vpack.c.bf16 %v3689, %v3688
        %v3707 = vpack.c.bf16 %v3691, %v3690
        %v3708 = vld [vmem:[%s3 + $0x10] sm:$0xf]
        %v3709 = vld [vmem:[%s3 + $0x14] sm:$0xf]
        %v3712 = vunpack.c.l.b16 %v3708
        %v3713 = vunpack.c.l.b16 %v3709
        %v3714 = vpack.c.b16 %v3713, %v3712
        %v3717 = vsel %vm3009, %v3692, 0
        %v3720 = vsel %vm3009, %v3693, 0
        %v3723 = vsel %vm3009, %v3694, 0
        %v3726 = vsel %vm3009, %v3695, 0
        %v3729 = vsel %vm3009, %v3696, 0
        %v3732 = vsel %vm3009, %v3697, 0
        %v3735 = vsel %vm3009, %v3698, 0
        %v3738 = vsel %vm3009, %v3699, 0
        %v3741 = vsel %vm3009, %v3700, 0
        %v3744 = vsel %vm3009, %v3701, 0
        %v3747 = vsel %vm3009, %v3702, 0
        %v3750 = vsel %vm3009, %v3703, 0
        %v3753 = vsel %vm3009, %v3704, 0
        %v3756 = vsel %vm3009, %v3705, 0
        %v3759 = vsel %vm3009, %v3706, 0
        %v3762 = vsel %vm3009, %v3707, 0
        %3764 = vmatprep.subr.bf16.mxu0 0
        %3765 = vmatpush1.bf16.msra.mxu0 0
        %3766 = vmatprep.subr.bf16.mxu0 0
        %3767 = vmatpush1.bf16.msra.mxu0 0
        %3768 = vmatprep.subr.bf16.mxu0 0
        %3769 = vmatpush1.bf16.msra.mxu0 0
        %3770 = vmatprep.subr.bf16.mxu0 0
        %3771 = vmatpush1.bf16.msra.mxu0 0
        %3772 = vmatprep.subr.bf16.mxu0 0
        %3773 = vmatpush1.bf16.msra.mxu0 0
        %3774 = vmatprep.subr.bf16.mxu0 0
        %3775 = vmatpush1.bf16.msra.mxu0 0
        %3776 = vmatprep.subr.bf16.mxu0 0
        %3777 = vmatpush1.bf16.msra.mxu0 0
        %3778 = vmatprep.subr.bf16.mxu0 0
        %3779 = vmatpush1.bf16.msra.mxu0 %v3714
        %3780 = vmatprep.subr.bf16.mxu0 0
        %3781 = vmatpush2.bf16.msra.mxu0 0
        %3782 = vmatprep.subr.bf16.mxu0 0
        %3783 = vmatpush2.bf16.msra.mxu0 0
        %3784 = vmatprep.subr.bf16.mxu0 0
        %3785 = vmatpush2.bf16.msra.mxu0 0
        %3786 = vmatprep.subr.bf16.mxu0 0
        %3787 = vmatpush2.bf16.msra.mxu0 0
        %3788 = vmatprep.subr.bf16.mxu0 0
        %3789 = vmatpush2.bf16.msra.mxu0 0
        %3790 = vmatprep.subr.bf16.mxu0 0
        %3791 = vmatpush2.bf16.msra.mxu0 0
        %3792 = vmatprep.subr.bf16.mxu0 0
        %3793 = vmatpush2.bf16.msra.mxu0 0
        %3794 = vmatprep.subr.bf16.mxu0 0
        %3795 = vmatpush2.bf16.msra.mxu0 0
        %3796 = vmatprep.mubr.bf16.mxu0 0
        %3797 = vmatmul.mubr.bf16.gmra.mxu0 %v3717
        %v3798 = vpop.f32.mrf.mxu0
        %v3799 = vadd.f32 0.0, %v3798
        %v3800 = vpop.f32.mrf.mxu0
        %v3801 = vpop.f32.mrf.mxu0
        %v3802 = vadd.f32 0.0, %v3801
        %v3803 = vpop.f32.mrf.mxu0
        %3804 = vmatprep.mubr.bf16.mxu0 0
        %3805 = vmatmul.mubr.bf16.gmra.mxu0 %v3720
        %v3806 = vpop.f32.mrf.mxu0
        %v3807 = vadd.f32 0.0, %v3806
        %v3808 = vpop.f32.mrf.mxu0
        %v3809 = vpop.f32.mrf.mxu0
        %v3810 = vadd.f32 0.0, %v3809
        %v3811 = vpop.f32.mrf.mxu0
        %3812 = vmatprep.mubr.bf16.mxu0 0
        %3813 = vmatmul.mubr.bf16.gmra.mxu0 %v3723
        %v3814 = vpop.f32.mrf.mxu0
        %v3815 = vadd.f32 0.0, %v3814
        %v3816 = vpop.f32.mrf.mxu0
        %v3817 = vpop.f32.mrf.mxu0
        %v3818 = vadd.f32 0.0, %v3817
        %v3819 = vpop.f32.mrf.mxu0
        %3820 = vmatprep.mubr.bf16.mxu0 0
        %3821 = vmatmul.mubr.bf16.gmra.mxu0 %v3726
        %v3822 = vpop.f32.mrf.mxu0
        %v3823 = vadd.f32 0.0, %v3822
        %v3824 = vpop.f32.mrf.mxu0
        %v3825 = vpop.f32.mrf.mxu0
        %v3826 = vadd.f32 0.0, %v3825
        %v3827 = vpop.f32.mrf.mxu0
        %3828 = vmatprep.mubr.bf16.mxu0 0
        %3829 = vmatmul.mubr.bf16.gmra.mxu0 %v3729
        %v3830 = vpop.f32.mrf.mxu0
        %v3831 = vadd.f32 0.0, %v3830
        %v3832 = vpop.f32.mrf.mxu0
        %v3833 = vpop.f32.mrf.mxu0
        %v3834 = vadd.f32 0.0, %v3833
        %v3835 = vpop.f32.mrf.mxu0
        %3836 = vmatprep.mubr.bf16.mxu0 0
        %3837 = vmatmul.mubr.bf16.gmra.mxu0 %v3732
        %v3838 = vpop.f32.mrf.mxu0
        %v3839 = vadd.f32 0.0, %v3838
        %v3840 = vpop.f32.mrf.mxu0
        %v3841 = vpop.f32.mrf.mxu0
        %v3842 = vadd.f32 0.0, %v3841
        %v3843 = vpop.f32.mrf.mxu0
        %3844 = vmatprep.mubr.bf16.mxu0 0
        %3845 = vmatmul.mubr.bf16.gmra.mxu0 %v3735
        %v3846 = vpop.f32.mrf.mxu0
        %v3847 = vadd.f32 0.0, %v3846
        %v3848 = vpop.f32.mrf.mxu0
        %v3849 = vpop.f32.mrf.mxu0
        %v3850 = vadd.f32 0.0, %v3849
        %v3851 = vpop.f32.mrf.mxu0
        %3852 = vmatprep.mubr.bf16.mxu0 0
        %3853 = vmatmul.mubr.bf16.gmra.mxu0 %v3738
        %v3854 = vpop.f32.mrf.mxu0
        %v3855 = vadd.f32 0.0, %v3854
        %v3856 = vpop.f32.mrf.mxu0
        %v3857 = vpop.f32.mrf.mxu0
        %v3858 = vadd.f32 0.0, %v3857
        %v3859 = vpop.f32.mrf.mxu0
        %3860 = vmatprep.mubr.bf16.mxu0 0
        %3861 = vmatmul.mubr.bf16.gmra.mxu0 %v3741
        %v3862 = vpop.f32.mrf.mxu0
        %v3863 = vadd.f32 0.0, %v3862
        %v3864 = vpop.f32.mrf.mxu0
        %v3865 = vpop.f32.mrf.mxu0
        %v3866 = vadd.f32 0.0, %v3865
        %v3867 = vpop.f32.mrf.mxu0
        %3868 = vmatprep.mubr.bf16.mxu0 0
        %3869 = vmatmul.mubr.bf16.gmra.mxu0 %v3744
        %v3870 = vpop.f32.mrf.mxu0
        %v3871 = vadd.f32 0.0, %v3870
        %v3872 = vpop.f32.mrf.mxu0
        %v3873 = vpop.f32.mrf.mxu0
        %v3874 = vadd.f32 0.0, %v3873
        %v3875 = vpop.f32.mrf.mxu0
        %3876 = vmatprep.mubr.bf16.mxu0 0
        %3877 = vmatmul.mubr.bf16.gmra.mxu0 %v3747
        %v3878 = vpop.f32.mrf.mxu0
        %v3879 = vadd.f32 0.0, %v3878
        %v3880 = vpop.f32.mrf.mxu0
        %v3881 = vpop.f32.mrf.mxu0
        %v3882 = vadd.f32 0.0, %v3881
        %v3883 = vpop.f32.mrf.mxu0
        %3884 = vmatprep.mubr.bf16.mxu0 0
        %3885 = vmatmul.mubr.bf16.gmra.mxu0 %v3750
        %v3886 = vpop.f32.mrf.mxu0
        %v3887 = vadd.f32 0.0, %v3886
        %v3888 = vpop.f32.mrf.mxu0
        %v3889 = vpop.f32.mrf.mxu0
        %v3890 = vadd.f32 0.0, %v3889
        %v3891 = vpop.f32.mrf.mxu0
        %3892 = vmatprep.mubr.bf16.mxu0 0
        %3893 = vmatmul.mubr.bf16.gmra.mxu0 %v3753
        %v3894 = vpop.f32.mrf.mxu0
        %v3895 = vadd.f32 0.0, %v3894
        %v3896 = vpop.f32.mrf.mxu0
        %v3897 = vpop.f32.mrf.mxu0
        %v3898 = vadd.f32 0.0, %v3897
        %v3899 = vpop.f32.mrf.mxu0
        %3900 = vmatprep.mubr.bf16.mxu0 0
        %3901 = vmatmul.mubr.bf16.gmra.mxu0 %v3756
        %v3902 = vpop.f32.mrf.mxu0
        %v3903 = vadd.f32 0.0, %v3902
        %v3904 = vpop.f32.mrf.mxu0
        %v3905 = vpop.f32.mrf.mxu0
        %v3906 = vadd.f32 0.0, %v3905
        %v3907 = vpop.f32.mrf.mxu0
        %3908 = vmatprep.mubr.bf16.mxu0 0
        %3909 = vmatmul.mubr.bf16.gmra.mxu0 %v3759
        %v3910 = vpop.f32.mrf.mxu0
        %v3911 = vadd.f32 0.0, %v3910
        %v3912 = vpop.f32.mrf.mxu0
        %v3913 = vpop.f32.mrf.mxu0
        %v3914 = vadd.f32 0.0, %v3913
        %v3915 = vpop.f32.mrf.mxu0
        %3916 = vmatprep.mubr.bf16.mxu0 0
        %3917 = vmatmul.mubr.bf16.gmra.mxu0 %v3762
        %v3918 = vpop.f32.mrf.mxu0
        %v3919 = vadd.f32 0.0, %v3918
        %v3920 = vpop.f32.mrf.mxu0
        %v3921 = vpop.f32.mrf.mxu0
        %v3922 = vadd.f32 0.0, %v3921
        %v3923 = vpop.f32.mrf.mxu0
        %3924 = vdwg.mxu0
        %v3925 = vadd.f32 %v3534, %v3799
        %v3926 = vadd.f32 %v3537, %v3802
        %v3927 = vadd.f32 %v3542, %v3807
        %v3928 = vadd.f32 %v3545, %v3810
        %v3929 = vadd.f32 %v3550, %v3815
        %v3930 = vadd.f32 %v3553, %v3818
        %v3931 = vadd.f32 %v3558, %v3823
        %v3932 = vadd.f32 %v3561, %v3826
        %v3933 = vadd.f32 %v3566, %v3831
        %v3934 = vadd.f32 %v3569, %v3834
        %v3935 = vadd.f32 %v3574, %v3839
        %v3936 = vadd.f32 %v3577, %v3842
        %v3937 = vadd.f32 %v3582, %v3847
        %v3938 = vadd.f32 %v3585, %v3850
        %v3939 = vadd.f32 %v3590, %v3855
        %v3940 = vadd.f32 %v3593, %v3858
        %v3941 = vadd.f32 %v3598, %v3863
        %v3942 = vadd.f32 %v3601, %v3866
        %v3943 = vadd.f32 %v3606, %v3871
        %v3944 = vadd.f32 %v3609, %v3874
        %v3945 = vadd.f32 %v3614, %v3879
        %v3946 = vadd.f32 %v3617, %v3882
        %v3947 = vadd.f32 %v3622, %v3887
        %v3948 = vadd.f32 %v3625, %v3890
        %v3949 = vadd.f32 %v3630, %v3895
        %v3950 = vadd.f32 %v3633, %v3898
        %v3951 = vadd.f32 %v3638, %v3903
        %v3952 = vadd.f32 %v3641, %v3906
        %v3953 = vadd.f32 %v3646, %v3911
        %v3954 = vadd.f32 %v3649, %v3914
        %v3955 = vadd.f32 %v3654, %v3919
        %v3956 = vadd.f32 %v3657, %v3922
        %v3957 = vld [vmem:[%s3097] sm:$0xff]
        %v3958 = vld [vmem:[%s3097 + $0x8] sm:$0xff]
        %v3959 = vld [vmem:[%s3097 + $0x18] sm:$0xff]
        %v3960 = vld [vmem:[%s3097 + $0x20] sm:$0xff]
        %v3961 = vld [vmem:[%s3097 + $0x30] sm:$0xff]
        %v3962 = vld [vmem:[%s3097 + $0x38] sm:$0xff]
        %v3963 = vld [vmem:[%s3097 + $0x48] sm:$0xff]
        %v3964 = vld [vmem:[%s3097 + $0x50] sm:$0xff]
        %v3965 = vld [vmem:[%s3097 + $0x60] sm:$0xff]
        %v3966 = vld [vmem:[%s3097 + $0x68] sm:$0xff]
        %v3967 = vld [vmem:[%s3097 + $0x78] sm:$0xff]
        %v3968 = vld [vmem:[%s3097 + $0x80] sm:$0xff]
        %v3969 = vld [vmem:[%s3097 + $0x90] sm:$0xff]
        %v3970 = vld [vmem:[%s3097 + $0x98] sm:$0xff]
        %v3971 = vld [vmem:[%s3097 + $0xa8] sm:$0xff]
        %v3972 = vld [vmem:[%s3097 + $0xb0] sm:$0xff]
        %v3973 = vld [vmem:[%s3097 + $0xc0] sm:$0xff]
        %v3974 = vld [vmem:[%s3097 + $0xc8] sm:$0xff]
        %v3975 = vld [vmem:[%s3097 + $0xd8] sm:$0xff]
        %v3976 = vld [vmem:[%s3097 + $0xe0] sm:$0xff]
        %v3977 = vld [vmem:[%s3097 + $0xf0] sm:$0xff]
        %v3978 = vld [vmem:[%s3097 + $0xf8] sm:$0xff]
        %v3979 = vld [vmem:[%s3097 + $0x108] sm:$0xff]
        %v3980 = vld [vmem:[%s3097 + $0x110] sm:$0xff]
        %v3981 = vld [vmem:[%s3097 + $0x120] sm:$0xff]
        %v3982 = vld [vmem:[%s3097 + $0x128] sm:$0xff]
        %v3983 = vld [vmem:[%s3097 + $0x138] sm:$0xff]
        %v3984 = vld [vmem:[%s3097 + $0x140] sm:$0xff]
        %v3985 = vld [vmem:[%s3097 + $0x150] sm:$0xff]
        %v3986 = vld [vmem:[%s3097 + $0x158] sm:$0xff]
        %v3987 = vld [vmem:[%s3097 + $0x168] sm:$0xff]
        %v3988 = vld [vmem:[%s3097 + $0x170] sm:$0xff]
        %v3989 = vpack.c.bf16 %v3958, %v3957
        %v3990 = vpack.c.bf16 %v3960, %v3959
        %v3991 = vpack.c.bf16 %v3962, %v3961
        %v3992 = vpack.c.bf16 %v3964, %v3963
        %v3993 = vpack.c.bf16 %v3966, %v3965
        %v3994 = vpack.c.bf16 %v3968, %v3967
        %v3995 = vpack.c.bf16 %v3970, %v3969
        %v3996 = vpack.c.bf16 %v3972, %v3971
        %v3997 = vpack.c.bf16 %v3974, %v3973
        %v3998 = vpack.c.bf16 %v3976, %v3975
        %v3999 = vpack.c.bf16 %v3978, %v3977
        %v4000 = vpack.c.bf16 %v3980, %v3979
        %v4001 = vpack.c.bf16 %v3982, %v3981
        %v4002 = vpack.c.bf16 %v3984, %v3983
        %v4003 = vpack.c.bf16 %v3986, %v3985
        %v4004 = vpack.c.bf16 %v3988, %v3987
        %v4005 = vld [vmem:[%s3 + $0x18] sm:$0xf]
        %v4006 = vld [vmem:[%s3 + $0x1c] sm:$0xf]
        %v4009 = vunpack.c.l.b16 %v4005
        %v4010 = vunpack.c.l.b16 %v4006
        %v4011 = vpack.c.b16 %v4010, %v4009
        %v4014 = vsel %vm3009, %v3989, 0
        %v4017 = vsel %vm3009, %v3990, 0
        %v4020 = vsel %vm3009, %v3991, 0
        %v4023 = vsel %vm3009, %v3992, 0
        %v4026 = vsel %vm3009, %v3993, 0
        %v4029 = vsel %vm3009, %v3994, 0
        %v4032 = vsel %vm3009, %v3995, 0
        %v4035 = vsel %vm3009, %v3996, 0
        %v4038 = vsel %vm3009, %v3997, 0
        %v4041 = vsel %vm3009, %v3998, 0
        %v4044 = vsel %vm3009, %v3999, 0
        %v4047 = vsel %vm3009, %v4000, 0
        %v4050 = vsel %vm3009, %v4001, 0
        %v4053 = vsel %vm3009, %v4002, 0
        %v4056 = vsel %vm3009, %v4003, 0
        %v4059 = vsel %vm3009, %v4004, 0
        %4061 = vmatprep.subr.bf16.mxu0 0
        %4062 = vmatpush1.bf16.msra.mxu0 0
        %4063 = vmatprep.subr.bf16.mxu0 0
        %4064 = vmatpush1.bf16.msra.mxu0 0
        %4065 = vmatprep.subr.bf16.mxu0 0
        %4066 = vmatpush1.bf16.msra.mxu0 0
        %4067 = vmatprep.subr.bf16.mxu0 0
        %4068 = vmatpush1.bf16.msra.mxu0 0
        %4069 = vmatprep.subr.bf16.mxu0 0
        %4070 = vmatpush1.bf16.msra.mxu0 0
        %4071 = vmatprep.subr.bf16.mxu0 0
        %4072 = vmatpush1.bf16.msra.mxu0 0
        %4073 = vmatprep.subr.bf16.mxu0 0
        %4074 = vmatpush1.bf16.msra.mxu0 0
        %4075 = vmatprep.subr.bf16.mxu0 0
        %4076 = vmatpush1.bf16.msra.mxu0 %v4011
        %4077 = vmatprep.subr.bf16.mxu0 0
        %4078 = vmatpush2.bf16.msra.mxu0 0
        %4079 = vmatprep.subr.bf16.mxu0 0
        %4080 = vmatpush2.bf16.msra.mxu0 0
        %4081 = vmatprep.subr.bf16.mxu0 0
        %4082 = vmatpush2.bf16.msra.mxu0 0
        %4083 = vmatprep.subr.bf16.mxu0 0
        %4084 = vmatpush2.bf16.msra.mxu0 0
        %4085 = vmatprep.subr.bf16.mxu0 0
        %4086 = vmatpush2.bf16.msra.mxu0 0
        %4087 = vmatprep.subr.bf16.mxu0 0
        %4088 = vmatpush2.bf16.msra.mxu0 0
        %4089 = vmatprep.subr.bf16.mxu0 0
        %4090 = vmatpush2.bf16.msra.mxu0 0
        %4091 = vmatprep.subr.bf16.mxu0 0
        %4092 = vmatpush2.bf16.msra.mxu0 0
        %4093 = vmatprep.mubr.bf16.mxu0 0
        %4094 = vmatmul.mubr.bf16.gmra.mxu0 %v4014
        %v4095 = vpop.f32.mrf.mxu0
        %v4096 = vadd.f32 0.0, %v4095
        %v4097 = vpop.f32.mrf.mxu0
        %v4098 = vpop.f32.mrf.mxu0
        %v4099 = vadd.f32 0.0, %v4098
        %v4100 = vpop.f32.mrf.mxu0
        %4101 = vmatprep.mubr.bf16.mxu0 0
        %4102 = vmatmul.mubr.bf16.gmra.mxu0 %v4017
        %v4103 = vpop.f32.mrf.mxu0
        %v4104 = vadd.f32 0.0, %v4103
        %v4105 = vpop.f32.mrf.mxu0
        %v4106 = vpop.f32.mrf.mxu0
        %v4107 = vadd.f32 0.0, %v4106
        %v4108 = vpop.f32.mrf.mxu0
        %4109 = vmatprep.mubr.bf16.mxu0 0
        %4110 = vmatmul.mubr.bf16.gmra.mxu0 %v4020
        %v4111 = vpop.f32.mrf.mxu0
        %v4112 = vadd.f32 0.0, %v4111
        %v4113 = vpop.f32.mrf.mxu0
        %v4114 = vpop.f32.mrf.mxu0
        %v4115 = vadd.f32 0.0, %v4114
        %v4116 = vpop.f32.mrf.mxu0
        %4117 = vmatprep.mubr.bf16.mxu0 0
        %4118 = vmatmul.mubr.bf16.gmra.mxu0 %v4023
        %v4119 = vpop.f32.mrf.mxu0
        %v4120 = vadd.f32 0.0, %v4119
        %v4121 = vpop.f32.mrf.mxu0
        %v4122 = vpop.f32.mrf.mxu0
        %v4123 = vadd.f32 0.0, %v4122
        %v4124 = vpop.f32.mrf.mxu0
        %4125 = vmatprep.mubr.bf16.mxu0 0
        %4126 = vmatmul.mubr.bf16.gmra.mxu0 %v4026
        %v4127 = vpop.f32.mrf.mxu0
        %v4128 = vadd.f32 0.0, %v4127
        %v4129 = vpop.f32.mrf.mxu0
        %v4130 = vpop.f32.mrf.mxu0
        %v4131 = vadd.f32 0.0, %v4130
        %v4132 = vpop.f32.mrf.mxu0
        %4133 = vmatprep.mubr.bf16.mxu0 0
        %4134 = vmatmul.mubr.bf16.gmra.mxu0 %v4029
        %v4135 = vpop.f32.mrf.mxu0
        %v4136 = vadd.f32 0.0, %v4135
        %v4137 = vpop.f32.mrf.mxu0
        %v4138 = vpop.f32.mrf.mxu0
        %v4139 = vadd.f32 0.0, %v4138
        %v4140 = vpop.f32.mrf.mxu0
        %4141 = vmatprep.mubr.bf16.mxu0 0
        %4142 = vmatmul.mubr.bf16.gmra.mxu0 %v4032
        %v4143 = vpop.f32.mrf.mxu0
        %v4144 = vadd.f32 0.0, %v4143
        %v4145 = vpop.f32.mrf.mxu0
        %v4146 = vpop.f32.mrf.mxu0
        %v4147 = vadd.f32 0.0, %v4146
        %v4148 = vpop.f32.mrf.mxu0
        %4149 = vmatprep.mubr.bf16.mxu0 0
        %4150 = vmatmul.mubr.bf16.gmra.mxu0 %v4035
        %v4151 = vpop.f32.mrf.mxu0
        %v4152 = vadd.f32 0.0, %v4151
        %v4153 = vpop.f32.mrf.mxu0
        %v4154 = vpop.f32.mrf.mxu0
        %v4155 = vadd.f32 0.0, %v4154
        %v4156 = vpop.f32.mrf.mxu0
        %4157 = vmatprep.mubr.bf16.mxu0 0
        %4158 = vmatmul.mubr.bf16.gmra.mxu0 %v4038
        %v4159 = vpop.f32.mrf.mxu0
        %v4160 = vadd.f32 0.0, %v4159
        %v4161 = vpop.f32.mrf.mxu0
        %v4162 = vpop.f32.mrf.mxu0
        %v4163 = vadd.f32 0.0, %v4162
        %v4164 = vpop.f32.mrf.mxu0
        %4165 = vmatprep.mubr.bf16.mxu0 0
        %4166 = vmatmul.mubr.bf16.gmra.mxu0 %v4041
        %v4167 = vpop.f32.mrf.mxu0
        %v4168 = vadd.f32 0.0, %v4167
        %v4169 = vpop.f32.mrf.mxu0
        %v4170 = vpop.f32.mrf.mxu0
        %v4171 = vadd.f32 0.0, %v4170
        %v4172 = vpop.f32.mrf.mxu0
        %4173 = vmatprep.mubr.bf16.mxu0 0
        %4174 = vmatmul.mubr.bf16.gmra.mxu0 %v4044
        %v4175 = vpop.f32.mrf.mxu0
        %v4176 = vadd.f32 0.0, %v4175
        %v4177 = vpop.f32.mrf.mxu0
        %v4178 = vpop.f32.mrf.mxu0
        %v4179 = vadd.f32 0.0, %v4178
        %v4180 = vpop.f32.mrf.mxu0
        %4181 = vmatprep.mubr.bf16.mxu0 0
        %4182 = vmatmul.mubr.bf16.gmra.mxu0 %v4047
        %v4183 = vpop.f32.mrf.mxu0
        %v4184 = vadd.f32 0.0, %v4183
        %v4185 = vpop.f32.mrf.mxu0
        %v4186 = vpop.f32.mrf.mxu0
        %v4187 = vadd.f32 0.0, %v4186
        %v4188 = vpop.f32.mrf.mxu0
        %4189 = vmatprep.mubr.bf16.mxu0 0
        %4190 = vmatmul.mubr.bf16.gmra.mxu0 %v4050
        %v4191 = vpop.f32.mrf.mxu0
        %v4192 = vadd.f32 0.0, %v4191
        %v4193 = vpop.f32.mrf.mxu0
        %v4194 = vpop.f32.mrf.mxu0
        %v4195 = vadd.f32 0.0, %v4194
        %v4196 = vpop.f32.mrf.mxu0
        %4197 = vmatprep.mubr.bf16.mxu0 0
        %4198 = vmatmul.mubr.bf16.gmra.mxu0 %v4053
        %v4199 = vpop.f32.mrf.mxu0
        %v4200 = vadd.f32 0.0, %v4199
        %v4201 = vpop.f32.mrf.mxu0
        %v4202 = vpop.f32.mrf.mxu0
        %v4203 = vadd.f32 0.0, %v4202
        %v4204 = vpop.f32.mrf.mxu0
        %4205 = vmatprep.mubr.bf16.mxu0 0
        %4206 = vmatmul.mubr.bf16.gmra.mxu0 %v4056
        %v4207 = vpop.f32.mrf.mxu0
        %v4208 = vadd.f32 0.0, %v4207
        %v4209 = vpop.f32.mrf.mxu0
        %v4210 = vpop.f32.mrf.mxu0
        %v4211 = vadd.f32 0.0, %v4210
        %v4212 = vpop.f32.mrf.mxu0
        %4213 = vmatprep.mubr.bf16.mxu0 0
        %4214 = vmatmul.mubr.bf16.gmra.mxu0 %v4059
        %v4215 = vpop.f32.mrf.mxu0
        %v4216 = vadd.f32 0.0, %v4215
        %v4217 = vpop.f32.mrf.mxu0
        %v4218 = vpop.f32.mrf.mxu0
        %v4219 = vadd.f32 0.0, %v4218
        %v4220 = vpop.f32.mrf.mxu0
        %4221 = vdwg.mxu0
        %v4222 = vadd.f32 %v3925, %v4096
        %v4223 = vadd.f32 %v3926, %v4099
        %v4224 = vadd.f32 %v3927, %v4104
        %v4225 = vadd.f32 %v3928, %v4107
        %v4226 = vadd.f32 %v3929, %v4112
        %v4227 = vadd.f32 %v3930, %v4115
        %v4228 = vadd.f32 %v3931, %v4120
        %v4229 = vadd.f32 %v3932, %v4123
        %v4230 = vadd.f32 %v3933, %v4128
        %v4231 = vadd.f32 %v3934, %v4131
        %v4232 = vadd.f32 %v3935, %v4136
        %v4233 = vadd.f32 %v3936, %v4139
        %v4234 = vadd.f32 %v3937, %v4144
        %v4235 = vadd.f32 %v3938, %v4147
        %v4236 = vadd.f32 %v3939, %v4152
        %v4237 = vadd.f32 %v3940, %v4155
        %v4238 = vadd.f32 %v3941, %v4160
        %v4239 = vadd.f32 %v3942, %v4163
        %v4240 = vadd.f32 %v3943, %v4168
        %v4241 = vadd.f32 %v3944, %v4171
        %v4242 = vadd.f32 %v3945, %v4176
        %v4243 = vadd.f32 %v3946, %v4179
        %v4244 = vadd.f32 %v3947, %v4184
        %v4245 = vadd.f32 %v3948, %v4187
        %v4246 = vadd.f32 %v3949, %v4192
        %v4247 = vadd.f32 %v3950, %v4195
        %v4248 = vadd.f32 %v3951, %v4200
        %v4249 = vadd.f32 %v3952, %v4203
        %v4250 = vadd.f32 %v3953, %v4208
        %v4251 = vadd.f32 %v3954, %v4211
        %v4252 = vadd.f32 %v3955, %v4216
        %v4253 = vadd.f32 %v3956, %v4219
        %v4254 = vld [vmem:[%s3097 + $0x1] sm:$0xff]
        %v4255 = vld [vmem:[%s3097 + $0x9] sm:$0xff]
        %v4256 = vld [vmem:[%s3097 + $0x19] sm:$0xff]
        %v4257 = vld [vmem:[%s3097 + $0x21] sm:$0xff]
        %v4258 = vld [vmem:[%s3097 + $0x31] sm:$0xff]
        %v4259 = vld [vmem:[%s3097 + $0x39] sm:$0xff]
        %v4260 = vld [vmem:[%s3097 + $0x49] sm:$0xff]
        %v4261 = vld [vmem:[%s3097 + $0x51] sm:$0xff]
        %v4262 = vld [vmem:[%s3097 + $0x61] sm:$0xff]
        %v4263 = vld [vmem:[%s3097 + $0x69] sm:$0xff]
        %v4264 = vld [vmem:[%s3097 + $0x79] sm:$0xff]
        %v4265 = vld [vmem:[%s3097 + $0x81] sm:$0xff]
        %v4266 = vld [vmem:[%s3097 + $0x91] sm:$0xff]
        %v4267 = vld [vmem:[%s3097 + $0x99] sm:$0xff]
        %v4268 = vld [vmem:[%s3097 + $0xa9] sm:$0xff]
        %v4269 = vld [vmem:[%s3097 + $0xb1] sm:$0xff]
        %v4270 = vld [vmem:[%s3097 + $0xc1] sm:$0xff]
        %v4271 = vld [vmem:[%s3097 + $0xc9] sm:$0xff]
        %v4272 = vld [vmem:[%s3097 + $0xd9] sm:$0xff]
        %v4273 = vld [vmem:[%s3097 + $0xe1] sm:$0xff]
        %v4274 = vld [vmem:[%s3097 + $0xf1] sm:$0xff]
        %v4275 = vld [vmem:[%s3097 + $0xf9] sm:$0xff]
        %v4276 = vld [vmem:[%s3097 + $0x109] sm:$0xff]
        %v4277 = vld [vmem:[%s3097 + $0x111] sm:$0xff]
        %v4278 = vld [vmem:[%s3097 + $0x121] sm:$0xff]
        %v4279 = vld [vmem:[%s3097 + $0x129] sm:$0xff]
        %v4280 = vld [vmem:[%s3097 + $0x139] sm:$0xff]
        %v4281 = vld [vmem:[%s3097 + $0x141] sm:$0xff]
        %v4282 = vld [vmem:[%s3097 + $0x151] sm:$0xff]
        %v4283 = vld [vmem:[%s3097 + $0x159] sm:$0xff]
        %v4284 = vld [vmem:[%s3097 + $0x169] sm:$0xff]
        %v4285 = vld [vmem:[%s3097 + $0x171] sm:$0xff]
        %v4286 = vpack.c.bf16 %v4255, %v4254
        %v4287 = vpack.c.bf16 %v4257, %v4256
        %v4288 = vpack.c.bf16 %v4259, %v4258
        %v4289 = vpack.c.bf16 %v4261, %v4260
        %v4290 = vpack.c.bf16 %v4263, %v4262
        %v4291 = vpack.c.bf16 %v4265, %v4264
        %v4292 = vpack.c.bf16 %v4267, %v4266
        %v4293 = vpack.c.bf16 %v4269, %v4268
        %v4294 = vpack.c.bf16 %v4271, %v4270
        %v4295 = vpack.c.bf16 %v4273, %v4272
        %v4296 = vpack.c.bf16 %v4275, %v4274
        %v4297 = vpack.c.bf16 %v4277, %v4276
        %v4298 = vpack.c.bf16 %v4279, %v4278
        %v4299 = vpack.c.bf16 %v4281, %v4280
        %v4300 = vpack.c.bf16 %v4283, %v4282
        %v4301 = vpack.c.bf16 %v4285, %v4284
        %v4302 = vld [vmem:[%s3 + $0x20] sm:$0xf]
        %v4303 = vld [vmem:[%s3 + $0x24] sm:$0xf]
        %v4306 = vunpack.c.l.b16 %v4302
        %v4307 = vunpack.c.l.b16 %v4303
        %v4308 = vpack.c.b16 %v4307, %v4306
        %v4311 = vsel %vm3009, %v4286, 0
        %v4314 = vsel %vm3009, %v4287, 0
        %v4317 = vsel %vm3009, %v4288, 0
        %v4320 = vsel %vm3009, %v4289, 0
        %v4323 = vsel %vm3009, %v4290, 0
        %v4326 = vsel %vm3009, %v4291, 0
        %v4329 = vsel %vm3009, %v4292, 0
        %v4332 = vsel %vm3009, %v4293, 0
        %v4335 = vsel %vm3009, %v4294, 0
        %v4338 = vsel %vm3009, %v4295, 0
        %v4341 = vsel %vm3009, %v4296, 0
        %v4344 = vsel %vm3009, %v4297, 0
        %v4347 = vsel %vm3009, %v4298, 0
        %v4350 = vsel %vm3009, %v4299, 0
        %v4353 = vsel %vm3009, %v4300, 0
        %v4356 = vsel %vm3009, %v4301, 0
        %4358 = vmatprep.subr.bf16.mxu0 0
        %4359 = vmatpush1.bf16.msra.mxu0 0
        %4360 = vmatprep.subr.bf16.mxu0 0
        %4361 = vmatpush1.bf16.msra.mxu0 0
        %4362 = vmatprep.subr.bf16.mxu0 0
        %4363 = vmatpush1.bf16.msra.mxu0 0
        %4364 = vmatprep.subr.bf16.mxu0 0
        %4365 = vmatpush1.bf16.msra.mxu0 0
        %4366 = vmatprep.subr.bf16.mxu0 0
        %4367 = vmatpush1.bf16.msra.mxu0 0
        %4368 = vmatprep.subr.bf16.mxu0 0
        %4369 = vmatpush1.bf16.msra.mxu0 0
        %4370 = vmatprep.subr.bf16.mxu0 0
        %4371 = vmatpush1.bf16.msra.mxu0 0
        %4372 = vmatprep.subr.bf16.mxu0 0
        %4373 = vmatpush1.bf16.msra.mxu0 %v4308
        %4374 = vmatprep.subr.bf16.mxu0 0
        %4375 = vmatpush2.bf16.msra.mxu0 0
        %4376 = vmatprep.subr.bf16.mxu0 0
        %4377 = vmatpush2.bf16.msra.mxu0 0
        %4378 = vmatprep.subr.bf16.mxu0 0
        %4379 = vmatpush2.bf16.msra.mxu0 0
        %4380 = vmatprep.subr.bf16.mxu0 0
        %4381 = vmatpush2.bf16.msra.mxu0 0
        %4382 = vmatprep.subr.bf16.mxu0 0
        %4383 = vmatpush2.bf16.msra.mxu0 0
        %4384 = vmatprep.subr.bf16.mxu0 0
        %4385 = vmatpush2.bf16.msra.mxu0 0
        %4386 = vmatprep.subr.bf16.mxu0 0
        %4387 = vmatpush2.bf16.msra.mxu0 0
        %4388 = vmatprep.subr.bf16.mxu0 0
        %4389 = vmatpush2.bf16.msra.mxu0 0
        %4390 = vmatprep.mubr.bf16.mxu0 0
        %4391 = vmatmul.mubr.bf16.gmra.mxu0 %v4311
        %v4392 = vpop.f32.mrf.mxu0
        %v4393 = vadd.f32 0.0, %v4392
        %v4394 = vpop.f32.mrf.mxu0
        %v4395 = vpop.f32.mrf.mxu0
        %v4396 = vadd.f32 0.0, %v4395
        %v4397 = vpop.f32.mrf.mxu0
        %4398 = vmatprep.mubr.bf16.mxu0 0
        %4399 = vmatmul.mubr.bf16.gmra.mxu0 %v4314
        %v4400 = vpop.f32.mrf.mxu0
        %v4401 = vadd.f32 0.0, %v4400
        %v4402 = vpop.f32.mrf.mxu0
        %v4403 = vpop.f32.mrf.mxu0
        %v4404 = vadd.f32 0.0, %v4403
        %v4405 = vpop.f32.mrf.mxu0
        %4406 = vmatprep.mubr.bf16.mxu0 0
        %4407 = vmatmul.mubr.bf16.gmra.mxu0 %v4317
        %v4408 = vpop.f32.mrf.mxu0
        %v4409 = vadd.f32 0.0, %v4408
        %v4410 = vpop.f32.mrf.mxu0
        %v4411 = vpop.f32.mrf.mxu0
        %v4412 = vadd.f32 0.0, %v4411
        %v4413 = vpop.f32.mrf.mxu0
        %4414 = vmatprep.mubr.bf16.mxu0 0
        %4415 = vmatmul.mubr.bf16.gmra.mxu0 %v4320
        %v4416 = vpop.f32.mrf.mxu0
        %v4417 = vadd.f32 0.0, %v4416
        %v4418 = vpop.f32.mrf.mxu0
        %v4419 = vpop.f32.mrf.mxu0
        %v4420 = vadd.f32 0.0, %v4419
        %v4421 = vpop.f32.mrf.mxu0
        %4422 = vmatprep.mubr.bf16.mxu0 0
        %4423 = vmatmul.mubr.bf16.gmra.mxu0 %v4323
        %v4424 = vpop.f32.mrf.mxu0
        %v4425 = vadd.f32 0.0, %v4424
        %v4426 = vpop.f32.mrf.mxu0
        %v4427 = vpop.f32.mrf.mxu0
        %v4428 = vadd.f32 0.0, %v4427
        %v4429 = vpop.f32.mrf.mxu0
        %4430 = vmatprep.mubr.bf16.mxu0 0
        %4431 = vmatmul.mubr.bf16.gmra.mxu0 %v4326
        %v4432 = vpop.f32.mrf.mxu0
        %v4433 = vadd.f32 0.0, %v4432
        %v4434 = vpop.f32.mrf.mxu0
        %v4435 = vpop.f32.mrf.mxu0
        %v4436 = vadd.f32 0.0, %v4435
        %v4437 = vpop.f32.mrf.mxu0
        %4438 = vmatprep.mubr.bf16.mxu0 0
        %4439 = vmatmul.mubr.bf16.gmra.mxu0 %v4329
        %v4440 = vpop.f32.mrf.mxu0
        %v4441 = vadd.f32 0.0, %v4440
        %v4442 = vpop.f32.mrf.mxu0
        %v4443 = vpop.f32.mrf.mxu0
        %v4444 = vadd.f32 0.0, %v4443
        %v4445 = vpop.f32.mrf.mxu0
        %4446 = vmatprep.mubr.bf16.mxu0 0
        %4447 = vmatmul.mubr.bf16.gmra.mxu0 %v4332
        %v4448 = vpop.f32.mrf.mxu0
        %v4449 = vadd.f32 0.0, %v4448
        %v4450 = vpop.f32.mrf.mxu0
        %v4451 = vpop.f32.mrf.mxu0
        %v4452 = vadd.f32 0.0, %v4451
        %v4453 = vpop.f32.mrf.mxu0
        %4454 = vmatprep.mubr.bf16.mxu0 0
        %4455 = vmatmul.mubr.bf16.gmra.mxu0 %v4335
        %v4456 = vpop.f32.mrf.mxu0
        %v4457 = vadd.f32 0.0, %v4456
        %v4458 = vpop.f32.mrf.mxu0
        %v4459 = vpop.f32.mrf.mxu0
        %v4460 = vadd.f32 0.0, %v4459
        %v4461 = vpop.f32.mrf.mxu0
        %4462 = vmatprep.mubr.bf16.mxu0 0
        %4463 = vmatmul.mubr.bf16.gmra.mxu0 %v4338
        %v4464 = vpop.f32.mrf.mxu0
        %v4465 = vadd.f32 0.0, %v4464
        %v4466 = vpop.f32.mrf.mxu0
        %v4467 = vpop.f32.mrf.mxu0
        %v4468 = vadd.f32 0.0, %v4467
        %v4469 = vpop.f32.mrf.mxu0
        %4470 = vmatprep.mubr.bf16.mxu0 0
        %4471 = vmatmul.mubr.bf16.gmra.mxu0 %v4341
        %v4472 = vpop.f32.mrf.mxu0
        %v4473 = vadd.f32 0.0, %v4472
        %v4474 = vpop.f32.mrf.mxu0
        %v4475 = vpop.f32.mrf.mxu0
        %v4476 = vadd.f32 0.0, %v4475
        %v4477 = vpop.f32.mrf.mxu0
        %4478 = vmatprep.mubr.bf16.mxu0 0
        %4479 = vmatmul.mubr.bf16.gmra.mxu0 %v4344
        %v4480 = vpop.f32.mrf.mxu0
        %v4481 = vadd.f32 0.0, %v4480
        %v4482 = vpop.f32.mrf.mxu0
        %v4483 = vpop.f32.mrf.mxu0
        %v4484 = vadd.f32 0.0, %v4483
        %v4485 = vpop.f32.mrf.mxu0
        %4486 = vmatprep.mubr.bf16.mxu0 0
        %4487 = vmatmul.mubr.bf16.gmra.mxu0 %v4347
        %v4488 = vpop.f32.mrf.mxu0
        %v4489 = vadd.f32 0.0, %v4488
        %v4490 = vpop.f32.mrf.mxu0
        %v4491 = vpop.f32.mrf.mxu0
        %v4492 = vadd.f32 0.0, %v4491
        %v4493 = vpop.f32.mrf.mxu0
        %4494 = vmatprep.mubr.bf16.mxu0 0
        %4495 = vmatmul.mubr.bf16.gmra.mxu0 %v4350
        %v4496 = vpop.f32.mrf.mxu0
        %v4497 = vadd.f32 0.0, %v4496
        %v4498 = vpop.f32.mrf.mxu0
        %v4499 = vpop.f32.mrf.mxu0
        %v4500 = vadd.f32 0.0, %v4499
        %v4501 = vpop.f32.mrf.mxu0
        %4502 = vmatprep.mubr.bf16.mxu0 0
        %4503 = vmatmul.mubr.bf16.gmra.mxu0 %v4353
        %v4504 = vpop.f32.mrf.mxu0
        %v4505 = vadd.f32 0.0, %v4504
        %v4506 = vpop.f32.mrf.mxu0
        %v4507 = vpop.f32.mrf.mxu0
        %v4508 = vadd.f32 0.0, %v4507
        %v4509 = vpop.f32.mrf.mxu0
        %4510 = vmatprep.mubr.bf16.mxu0 0
        %4511 = vmatmul.mubr.bf16.gmra.mxu0 %v4356
        %v4512 = vpop.f32.mrf.mxu0
        %v4513 = vadd.f32 0.0, %v4512
        %v4514 = vpop.f32.mrf.mxu0
        %v4515 = vpop.f32.mrf.mxu0
        %v4516 = vadd.f32 0.0, %v4515
        %v4517 = vpop.f32.mrf.mxu0
        %4518 = vdwg.mxu0
        %v4519 = vadd.f32 %v4222, %v4393
        %v4520 = vadd.f32 %v4223, %v4396
        %v4521 = vadd.f32 %v4224, %v4401
        %v4522 = vadd.f32 %v4225, %v4404
        %v4523 = vadd.f32 %v4226, %v4409
        %v4524 = vadd.f32 %v4227, %v4412
        %v4525 = vadd.f32 %v4228, %v4417
        %v4526 = vadd.f32 %v4229, %v4420
        %v4527 = vadd.f32 %v4230, %v4425
        %v4528 = vadd.f32 %v4231, %v4428
        %v4529 = vadd.f32 %v4232, %v4433
        %v4530 = vadd.f32 %v4233, %v4436
        %v4531 = vadd.f32 %v4234, %v4441
        %v4532 = vadd.f32 %v4235, %v4444
        %v4533 = vadd.f32 %v4236, %v4449
        %v4534 = vadd.f32 %v4237, %v4452
        %v4535 = vadd.f32 %v4238, %v4457
        %v4536 = vadd.f32 %v4239, %v4460
        %v4537 = vadd.f32 %v4240, %v4465
        %v4538 = vadd.f32 %v4241, %v4468
        %v4539 = vadd.f32 %v4242, %v4473
        %v4540 = vadd.f32 %v4243, %v4476
        %v4541 = vadd.f32 %v4244, %v4481
        %v4542 = vadd.f32 %v4245, %v4484
        %v4543 = vadd.f32 %v4246, %v4489
        %v4544 = vadd.f32 %v4247, %v4492
        %v4545 = vadd.f32 %v4248, %v4497
        %v4546 = vadd.f32 %v4249, %v4500
        %v4547 = vadd.f32 %v4250, %v4505
        %v4548 = vadd.f32 %v4251, %v4508
        %v4549 = vadd.f32 %v4252, %v4513
        %v4550 = vadd.f32 %v4253, %v4516
        %v4551 = vld [vmem:[%s3097 + $0x2] sm:$0xff]
        %v4552 = vld [vmem:[%s3097 + $0xa] sm:$0xff]
        %v4553 = vld [vmem:[%s3097 + $0x1a] sm:$0xff]
        %v4554 = vld [vmem:[%s3097 + $0x22] sm:$0xff]
        %v4555 = vld [vmem:[%s3097 + $0x32] sm:$0xff]
        %v4556 = vld [vmem:[%s3097 + $0x3a] sm:$0xff]
        %v4557 = vld [vmem:[%s3097 + $0x4a] sm:$0xff]
        %v4558 = vld [vmem:[%s3097 + $0x52] sm:$0xff]
        %v4559 = vld [vmem:[%s3097 + $0x62] sm:$0xff]
        %v4560 = vld [vmem:[%s3097 + $0x6a] sm:$0xff]
        %v4561 = vld [vmem:[%s3097 + $0x7a] sm:$0xff]
        %v4562 = vld [vmem:[%s3097 + $0x82] sm:$0xff]
        %v4563 = vld [vmem:[%s3097 + $0x92] sm:$0xff]
        %v4564 = vld [vmem:[%s3097 + $0x9a] sm:$0xff]
        %v4565 = vld [vmem:[%s3097 + $0xaa] sm:$0xff]
        %v4566 = vld [vmem:[%s3097 + $0xb2] sm:$0xff]
        %v4567 = vld [vmem:[%s3097 + $0xc2] sm:$0xff]
        %v4568 = vld [vmem:[%s3097 + $0xca] sm:$0xff]
        %v4569 = vld [vmem:[%s3097 + $0xda] sm:$0xff]
        %v4570 = vld [vmem:[%s3097 + $0xe2] sm:$0xff]
        %v4571 = vld [vmem:[%s3097 + $0xf2] sm:$0xff]
        %v4572 = vld [vmem:[%s3097 + $0xfa] sm:$0xff]
        %v4573 = vld [vmem:[%s3097 + $0x10a] sm:$0xff]
        %v4574 = vld [vmem:[%s3097 + $0x112] sm:$0xff]
        %v4575 = vld [vmem:[%s3097 + $0x122] sm:$0xff]
        %v4576 = vld [vmem:[%s3097 + $0x12a] sm:$0xff]
        %v4577 = vld [vmem:[%s3097 + $0x13a] sm:$0xff]
        %v4578 = vld [vmem:[%s3097 + $0x142] sm:$0xff]
        %v4579 = vld [vmem:[%s3097 + $0x152] sm:$0xff]
        %v4580 = vld [vmem:[%s3097 + $0x15a] sm:$0xff]
        %v4581 = vld [vmem:[%s3097 + $0x16a] sm:$0xff]
        %v4582 = vld [vmem:[%s3097 + $0x172] sm:$0xff]
        %v4583 = vpack.c.bf16 %v4552, %v4551
        %v4584 = vpack.c.bf16 %v4554, %v4553
        %v4585 = vpack.c.bf16 %v4556, %v4555
        %v4586 = vpack.c.bf16 %v4558, %v4557
        %v4587 = vpack.c.bf16 %v4560, %v4559
        %v4588 = vpack.c.bf16 %v4562, %v4561
        %v4589 = vpack.c.bf16 %v4564, %v4563
        %v4590 = vpack.c.bf16 %v4566, %v4565
        %v4591 = vpack.c.bf16 %v4568, %v4567
        %v4592 = vpack.c.bf16 %v4570, %v4569
        %v4593 = vpack.c.bf16 %v4572, %v4571
        %v4594 = vpack.c.bf16 %v4574, %v4573
        %v4595 = vpack.c.bf16 %v4576, %v4575
        %v4596 = vpack.c.bf16 %v4578, %v4577
        %v4597 = vpack.c.bf16 %v4580, %v4579
        %v4598 = vpack.c.bf16 %v4582, %v4581
        %v4599 = vld [vmem:[%s3 + $0x28] sm:$0xf]
        %v4600 = vld [vmem:[%s3 + $0x2c] sm:$0xf]
        %v4603 = vunpack.c.l.b16 %v4599
        %v4604 = vunpack.c.l.b16 %v4600
        %v4605 = vpack.c.b16 %v4604, %v4603
        %v4608 = vsel %vm3009, %v4583, 0
        %v4611 = vsel %vm3009, %v4584, 0
        %v4614 = vsel %vm3009, %v4585, 0
        %v4617 = vsel %vm3009, %v4586, 0
        %v4620 = vsel %vm3009, %v4587, 0
        %v4623 = vsel %vm3009, %v4588, 0
        %v4626 = vsel %vm3009, %v4589, 0
        %v4629 = vsel %vm3009, %v4590, 0
        %v4632 = vsel %vm3009, %v4591, 0
        %v4635 = vsel %vm3009, %v4592, 0
        %v4638 = vsel %vm3009, %v4593, 0
        %v4641 = vsel %vm3009, %v4594, 0
        %v4644 = vsel %vm3009, %v4595, 0
        %v4647 = vsel %vm3009, %v4596, 0
        %v4650 = vsel %vm3009, %v4597, 0
        %v4653 = vsel %vm3009, %v4598, 0
        %4655 = vmatprep.subr.bf16.mxu0 0
        %4656 = vmatpush1.bf16.msra.mxu0 0
        %4657 = vmatprep.subr.bf16.mxu0 0
        %4658 = vmatpush1.bf16.msra.mxu0 0
        %4659 = vmatprep.subr.bf16.mxu0 0
        %4660 = vmatpush1.bf16.msra.mxu0 0
        %4661 = vmatprep.subr.bf16.mxu0 0
        %4662 = vmatpush1.bf16.msra.mxu0 0
        %4663 = vmatprep.subr.bf16.mxu0 0
        %4664 = vmatpush1.bf16.msra.mxu0 0
        %4665 = vmatprep.subr.bf16.mxu0 0
        %4666 = vmatpush1.bf16.msra.mxu0 0
        %4667 = vmatprep.subr.bf16.mxu0 0
        %4668 = vmatpush1.bf16.msra.mxu0 0
        %4669 = vmatprep.subr.bf16.mxu0 0
        %4670 = vmatpush1.bf16.msra.mxu0 %v4605
        %4671 = vmatprep.subr.bf16.mxu0 0
        %4672 = vmatpush2.bf16.msra.mxu0 0
        %4673 = vmatprep.subr.bf16.mxu0 0
        %4674 = vmatpush2.bf16.msra.mxu0 0
        %4675 = vmatprep.subr.bf16.mxu0 0
        %4676 = vmatpush2.bf16.msra.mxu0 0
        %4677 = vmatprep.subr.bf16.mxu0 0
        %4678 = vmatpush2.bf16.msra.mxu0 0
        %4679 = vmatprep.subr.bf16.mxu0 0
        %4680 = vmatpush2.bf16.msra.mxu0 0
        %4681 = vmatprep.subr.bf16.mxu0 0
        %4682 = vmatpush2.bf16.msra.mxu0 0
        %4683 = vmatprep.subr.bf16.mxu0 0
        %4684 = vmatpush2.bf16.msra.mxu0 0
        %4685 = vmatprep.subr.bf16.mxu0 0
        %4686 = vmatpush2.bf16.msra.mxu0 0
        %4687 = vmatprep.mubr.bf16.mxu0 0
        %4688 = vmatmul.mubr.bf16.gmra.mxu0 %v4608
        %v4689 = vpop.f32.mrf.mxu0
        %v4690 = vadd.f32 0.0, %v4689
        %v4691 = vpop.f32.mrf.mxu0
        %v4692 = vpop.f32.mrf.mxu0
        %v4693 = vadd.f32 0.0, %v4692
        %v4694 = vpop.f32.mrf.mxu0
        %4695 = vmatprep.mubr.bf16.mxu0 0
        %4696 = vmatmul.mubr.bf16.gmra.mxu0 %v4611
        %v4697 = vpop.f32.mrf.mxu0
        %v4698 = vadd.f32 0.0, %v4697
        %v4699 = vpop.f32.mrf.mxu0
        %v4700 = vpop.f32.mrf.mxu0
        %v4701 = vadd.f32 0.0, %v4700
        %v4702 = vpop.f32.mrf.mxu0
        %4703 = vmatprep.mubr.bf16.mxu0 0
        %4704 = vmatmul.mubr.bf16.gmra.mxu0 %v4614
        %v4705 = vpop.f32.mrf.mxu0
        %v4706 = vadd.f32 0.0, %v4705
        %v4707 = vpop.f32.mrf.mxu0
        %v4708 = vpop.f32.mrf.mxu0
        %v4709 = vadd.f32 0.0, %v4708
        %v4710 = vpop.f32.mrf.mxu0
        %4711 = vmatprep.mubr.bf16.mxu0 0
        %4712 = vmatmul.mubr.bf16.gmra.mxu0 %v4617
        %v4713 = vpop.f32.mrf.mxu0
        %v4714 = vadd.f32 0.0, %v4713
        %v4715 = vpop.f32.mrf.mxu0
        %v4716 = vpop.f32.mrf.mxu0
        %v4717 = vadd.f32 0.0, %v4716
        %v4718 = vpop.f32.mrf.mxu0
        %4719 = vmatprep.mubr.bf16.mxu0 0
        %4720 = vmatmul.mubr.bf16.gmra.mxu0 %v4620
        %v4721 = vpop.f32.mrf.mxu0
        %v4722 = vadd.f32 0.0, %v4721
        %v4723 = vpop.f32.mrf.mxu0
        %v4724 = vpop.f32.mrf.mxu0
        %v4725 = vadd.f32 0.0, %v4724
        %v4726 = vpop.f32.mrf.mxu0
        %4727 = vmatprep.mubr.bf16.mxu0 0
        %4728 = vmatmul.mubr.bf16.gmra.mxu0 %v4623
        %v4729 = vpop.f32.mrf.mxu0
        %v4730 = vadd.f32 0.0, %v4729
        %v4731 = vpop.f32.mrf.mxu0
        %v4732 = vpop.f32.mrf.mxu0
        %v4733 = vadd.f32 0.0, %v4732
        %v4734 = vpop.f32.mrf.mxu0
        %4735 = vmatprep.mubr.bf16.mxu0 0
        %4736 = vmatmul.mubr.bf16.gmra.mxu0 %v4626
        %v4737 = vpop.f32.mrf.mxu0
        %v4738 = vadd.f32 0.0, %v4737
        %v4739 = vpop.f32.mrf.mxu0
        %v4740 = vpop.f32.mrf.mxu0
        %v4741 = vadd.f32 0.0, %v4740
        %v4742 = vpop.f32.mrf.mxu0
        %4743 = vmatprep.mubr.bf16.mxu0 0
        %4744 = vmatmul.mubr.bf16.gmra.mxu0 %v4629
        %v4745 = vpop.f32.mrf.mxu0
        %v4746 = vadd.f32 0.0, %v4745
        %v4747 = vpop.f32.mrf.mxu0
        %v4748 = vpop.f32.mrf.mxu0
        %v4749 = vadd.f32 0.0, %v4748
        %v4750 = vpop.f32.mrf.mxu0
        %4751 = vmatprep.mubr.bf16.mxu0 0
        %4752 = vmatmul.mubr.bf16.gmra.mxu0 %v4632
        %v4753 = vpop.f32.mrf.mxu0
        %v4754 = vadd.f32 0.0, %v4753
        %v4755 = vpop.f32.mrf.mxu0
        %v4756 = vpop.f32.mrf.mxu0
        %v4757 = vadd.f32 0.0, %v4756
        %v4758 = vpop.f32.mrf.mxu0
        %4759 = vmatprep.mubr.bf16.mxu0 0
        %4760 = vmatmul.mubr.bf16.gmra.mxu0 %v4635
        %v4761 = vpop.f32.mrf.mxu0
        %v4762 = vadd.f32 0.0, %v4761
        %v4763 = vpop.f32.mrf.mxu0
        %v4764 = vpop.f32.mrf.mxu0
        %v4765 = vadd.f32 0.0, %v4764
        %v4766 = vpop.f32.mrf.mxu0
        %4767 = vmatprep.mubr.bf16.mxu0 0
        %4768 = vmatmul.mubr.bf16.gmra.mxu0 %v4638
        %v4769 = vpop.f32.mrf.mxu0
        %v4770 = vadd.f32 0.0, %v4769
        %v4771 = vpop.f32.mrf.mxu0
        %v4772 = vpop.f32.mrf.mxu0
        %v4773 = vadd.f32 0.0, %v4772
        %v4774 = vpop.f32.mrf.mxu0
        %4775 = vmatprep.mubr.bf16.mxu0 0
        %4776 = vmatmul.mubr.bf16.gmra.mxu0 %v4641
        %v4777 = vpop.f32.mrf.mxu0
        %v4778 = vadd.f32 0.0, %v4777
        %v4779 = vpop.f32.mrf.mxu0
        %v4780 = vpop.f32.mrf.mxu0
        %v4781 = vadd.f32 0.0, %v4780
        %v4782 = vpop.f32.mrf.mxu0
        %4783 = vmatprep.mubr.bf16.mxu0 0
        %4784 = vmatmul.mubr.bf16.gmra.mxu0 %v4644
        %v4785 = vpop.f32.mrf.mxu0
        %v4786 = vadd.f32 0.0, %v4785
        %v4787 = vpop.f32.mrf.mxu0
        %v4788 = vpop.f32.mrf.mxu0
        %v4789 = vadd.f32 0.0, %v4788
        %v4790 = vpop.f32.mrf.mxu0
        %4791 = vmatprep.mubr.bf16.mxu0 0
        %4792 = vmatmul.mubr.bf16.gmra.mxu0 %v4647
        %v4793 = vpop.f32.mrf.mxu0
        %v4794 = vadd.f32 0.0, %v4793
        %v4795 = vpop.f32.mrf.mxu0
        %v4796 = vpop.f32.mrf.mxu0
        %v4797 = vadd.f32 0.0, %v4796
        %v4798 = vpop.f32.mrf.mxu0
        %4799 = vmatprep.mubr.bf16.mxu0 0
        %4800 = vmatmul.mubr.bf16.gmra.mxu0 %v4650
        %v4801 = vpop.f32.mrf.mxu0
        %v4802 = vadd.f32 0.0, %v4801
        %v4803 = vpop.f32.mrf.mxu0
        %v4804 = vpop.f32.mrf.mxu0
        %v4805 = vadd.f32 0.0, %v4804
        %v4806 = vpop.f32.mrf.mxu0
        %4807 = vmatprep.mubr.bf16.mxu0 0
        %4808 = vmatmul.mubr.bf16.gmra.mxu0 %v4653
        %v4809 = vpop.f32.mrf.mxu0
        %v4810 = vadd.f32 0.0, %v4809
        %v4811 = vpop.f32.mrf.mxu0
        %v4812 = vpop.f32.mrf.mxu0
        %v4813 = vadd.f32 0.0, %v4812
        %v4814 = vpop.f32.mrf.mxu0
        %4815 = vdwg.mxu0
        %v4816 = vadd.f32 %v4519, %v4690
        %v4817 = vadd.f32 %v4520, %v4693
        %v4818 = vadd.f32 %v4521, %v4698
        %v4819 = vadd.f32 %v4522, %v4701
        %v4820 = vadd.f32 %v4523, %v4706
        %v4821 = vadd.f32 %v4524, %v4709
        %v4822 = vadd.f32 %v4525, %v4714
        %v4823 = vadd.f32 %v4526, %v4717
        %v4824 = vadd.f32 %v4527, %v4722
        %v4825 = vadd.f32 %v4528, %v4725
        %v4826 = vadd.f32 %v4529, %v4730
        %v4827 = vadd.f32 %v4530, %v4733
        %v4828 = vadd.f32 %v4531, %v4738
        %v4829 = vadd.f32 %v4532, %v4741
        %v4830 = vadd.f32 %v4533, %v4746
        %v4831 = vadd.f32 %v4534, %v4749
        %v4832 = vadd.f32 %v4535, %v4754
        %v4833 = vadd.f32 %v4536, %v4757
        %v4834 = vadd.f32 %v4537, %v4762
        %v4835 = vadd.f32 %v4538, %v4765
        %v4836 = vadd.f32 %v4539, %v4770
        %v4837 = vadd.f32 %v4540, %v4773
        %v4838 = vadd.f32 %v4541, %v4778
        %v4839 = vadd.f32 %v4542, %v4781
        %v4840 = vadd.f32 %v4543, %v4786
        %v4841 = vadd.f32 %v4544, %v4789
        %v4842 = vadd.f32 %v4545, %v4794
        %v4843 = vadd.f32 %v4546, %v4797
        %v4844 = vadd.f32 %v4547, %v4802
        %v4845 = vadd.f32 %v4548, %v4805
        %v4846 = vadd.f32 %v4549, %v4810
        %v4847 = vadd.f32 %v4550, %v4813
        %s4848 = scalar_lea.vmem [#allocation2], 48
        %v4849 = vld [vmem:[%s4848] sm:$0xff]
        %v4850 = vld [vmem:[%s4848 + $0x8] sm:$0xff]
        %v4851 = vld [vmem:[%s4848 + $0x18] sm:$0xff]
        %v4852 = vld [vmem:[%s4848 + $0x20] sm:$0xff]
        %v4853 = vld [vmem:[%s4848 + $0x30] sm:$0xff]
        %v4854 = vld [vmem:[%s4848 + $0x38] sm:$0xff]
        %v4855 = vld [vmem:[%s4848 + $0x48] sm:$0xff]
        %v4856 = vld [vmem:[%s4848 + $0x50] sm:$0xff]
        %v4857 = vld [vmem:[%s4848 + $0x60] sm:$0xff]
        %v4858 = vld [vmem:[%s4848 + $0x68] sm:$0xff]
        %v4859 = vld [vmem:[%s4848 + $0x78] sm:$0xff]
        %v4860 = vld [vmem:[%s4848 + $0x80] sm:$0xff]
        %v4861 = vld [vmem:[%s4848 + $0x90] sm:$0xff]
        %v4862 = vld [vmem:[%s4848 + $0x98] sm:$0xff]
        %v4863 = vld [vmem:[%s4848 + $0xa8] sm:$0xff]
        %v4864 = vld [vmem:[%s4848 + $0xb0] sm:$0xff]
        %v4865 = vld [vmem:[%s4848 + $0xc0] sm:$0xff]
        %v4866 = vld [vmem:[%s4848 + $0xc8] sm:$0xff]
        %v4867 = vld [vmem:[%s4848 + $0xd8] sm:$0xff]
        %v4868 = vld [vmem:[%s4848 + $0xe0] sm:$0xff]
        %v4869 = vld [vmem:[%s4848 + $0xf0] sm:$0xff]
        %v4870 = vld [vmem:[%s4848 + $0xf8] sm:$0xff]
        %v4871 = vld [vmem:[%s4848 + $0x108] sm:$0xff]
        %v4872 = vld [vmem:[%s4848 + $0x110] sm:$0xff]
        %v4873 = vld [vmem:[%s4848 + $0x120] sm:$0xff]
        %v4874 = vld [vmem:[%s4848 + $0x128] sm:$0xff]
        %v4875 = vld [vmem:[%s4848 + $0x138] sm:$0xff]
        %v4876 = vld [vmem:[%s4848 + $0x140] sm:$0xff]
        %v4877 = vld [vmem:[%s4848 + $0x150] sm:$0xff]
        %v4878 = vld [vmem:[%s4848 + $0x158] sm:$0xff]
        %v4879 = vld [vmem:[%s4848 + $0x168] sm:$0xff]
        %v4880 = vld [vmem:[%s4848 + $0x170] sm:$0xff]
        %v4881 = vpack.c.bf16 %v4850, %v4849
        %v4882 = vpack.c.bf16 %v4852, %v4851
        %v4883 = vpack.c.bf16 %v4854, %v4853
        %v4884 = vpack.c.bf16 %v4856, %v4855
        %v4885 = vpack.c.bf16 %v4858, %v4857
        %v4886 = vpack.c.bf16 %v4860, %v4859
        %v4887 = vpack.c.bf16 %v4862, %v4861
        %v4888 = vpack.c.bf16 %v4864, %v4863
        %v4889 = vpack.c.bf16 %v4866, %v4865
        %v4890 = vpack.c.bf16 %v4868, %v4867
        %v4891 = vpack.c.bf16 %v4870, %v4869
        %v4892 = vpack.c.bf16 %v4872, %v4871
        %v4893 = vpack.c.bf16 %v4874, %v4873
        %v4894 = vpack.c.bf16 %v4876, %v4875
        %v4895 = vpack.c.bf16 %v4878, %v4877
        %v4896 = vpack.c.bf16 %v4880, %v4879
        %v4897 = vld [vmem:[%s3 + $0x30] sm:$0xf]
        %v4898 = vld [vmem:[%s3 + $0x34] sm:$0xf]
        %v4901 = vunpack.c.l.b16 %v4897
        %v4902 = vunpack.c.l.b16 %v4898
        %v4903 = vpack.c.b16 %v4902, %v4901
        %v4906 = vsel %vm3009, %v4881, 0
        %v4909 = vsel %vm3009, %v4882, 0
        %v4912 = vsel %vm3009, %v4883, 0
        %v4915 = vsel %vm3009, %v4884, 0
        %v4918 = vsel %vm3009, %v4885, 0
        %v4921 = vsel %vm3009, %v4886, 0
        %v4924 = vsel %vm3009, %v4887, 0
        %v4927 = vsel %vm3009, %v4888, 0
        %v4930 = vsel %vm3009, %v4889, 0
        %v4933 = vsel %vm3009, %v4890, 0
        %v4936 = vsel %vm3009, %v4891, 0
        %v4939 = vsel %vm3009, %v4892, 0
        %v4942 = vsel %vm3009, %v4893, 0
        %v4945 = vsel %vm3009, %v4894, 0
        %v4948 = vsel %vm3009, %v4895, 0
        %v4951 = vsel %vm3009, %v4896, 0
        %4953 = vmatprep.subr.bf16.mxu0 0
        %4954 = vmatpush1.bf16.msra.mxu0 0
        %4955 = vmatprep.subr.bf16.mxu0 0
        %4956 = vmatpush1.bf16.msra.mxu0 0
        %4957 = vmatprep.subr.bf16.mxu0 0
        %4958 = vmatpush1.bf16.msra.mxu0 0
        %4959 = vmatprep.subr.bf16.mxu0 0
        %4960 = vmatpush1.bf16.msra.mxu0 0
        %4961 = vmatprep.subr.bf16.mxu0 0
        %4962 = vmatpush1.bf16.msra.mxu0 0
        %4963 = vmatprep.subr.bf16.mxu0 0
        %4964 = vmatpush1.bf16.msra.mxu0 0
        %4965 = vmatprep.subr.bf16.mxu0 0
        %4966 = vmatpush1.bf16.msra.mxu0 0
        %4967 = vmatprep.subr.bf16.mxu0 0
        %4968 = vmatpush1.bf16.msra.mxu0 %v4903
        %4969 = vmatprep.subr.bf16.mxu0 0
        %4970 = vmatpush2.bf16.msra.mxu0 0
        %4971 = vmatprep.subr.bf16.mxu0 0
        %4972 = vmatpush2.bf16.msra.mxu0 0
        %4973 = vmatprep.subr.bf16.mxu0 0
        %4974 = vmatpush2.bf16.msra.mxu0 0
        %4975 = vmatprep.subr.bf16.mxu0 0
        %4976 = vmatpush2.bf16.msra.mxu0 0
        %4977 = vmatprep.subr.bf16.mxu0 0
        %4978 = vmatpush2.bf16.msra.mxu0 0
        %4979 = vmatprep.subr.bf16.mxu0 0
        %4980 = vmatpush2.bf16.msra.mxu0 0
        %4981 = vmatprep.subr.bf16.mxu0 0
        %4982 = vmatpush2.bf16.msra.mxu0 0
        %4983 = vmatprep.subr.bf16.mxu0 0
        %4984 = vmatpush2.bf16.msra.mxu0 0
        %4985 = vmatprep.mubr.bf16.mxu0 0
        %4986 = vmatmul.mubr.bf16.gmra.mxu0 %v4906
        %v4987 = vpop.f32.mrf.mxu0
        %v4988 = vadd.f32 0.0, %v4987
        %v4989 = vpop.f32.mrf.mxu0
        %v4990 = vpop.f32.mrf.mxu0
        %v4991 = vadd.f32 0.0, %v4990
        %v4992 = vpop.f32.mrf.mxu0
        %4993 = vmatprep.mubr.bf16.mxu0 0
        %4994 = vmatmul.mubr.bf16.gmra.mxu0 %v4909
        %v4995 = vpop.f32.mrf.mxu0
        %v4996 = vadd.f32 0.0, %v4995
        %v4997 = vpop.f32.mrf.mxu0
        %v4998 = vpop.f32.mrf.mxu0
        %v4999 = vadd.f32 0.0, %v4998
        %v5000 = vpop.f32.mrf.mxu0
        %5001 = vmatprep.mubr.bf16.mxu0 0
        %5002 = vmatmul.mubr.bf16.gmra.mxu0 %v4912
        %v5003 = vpop.f32.mrf.mxu0
        %v5004 = vadd.f32 0.0, %v5003
        %v5005 = vpop.f32.mrf.mxu0
        %v5006 = vpop.f32.mrf.mxu0
        %v5007 = vadd.f32 0.0, %v5006
        %v5008 = vpop.f32.mrf.mxu0
        %5009 = vmatprep.mubr.bf16.mxu0 0
        %5010 = vmatmul.mubr.bf16.gmra.mxu0 %v4915
        %v5011 = vpop.f32.mrf.mxu0
        %v5012 = vadd.f32 0.0, %v5011
        %v5013 = vpop.f32.mrf.mxu0
        %v5014 = vpop.f32.mrf.mxu0
        %v5015 = vadd.f32 0.0, %v5014
        %v5016 = vpop.f32.mrf.mxu0
        %5017 = vmatprep.mubr.bf16.mxu0 0
        %5018 = vmatmul.mubr.bf16.gmra.mxu0 %v4918
        %v5019 = vpop.f32.mrf.mxu0
        %v5020 = vadd.f32 0.0, %v5019
        %v5021 = vpop.f32.mrf.mxu0
        %v5022 = vpop.f32.mrf.mxu0
        %v5023 = vadd.f32 0.0, %v5022
        %v5024 = vpop.f32.mrf.mxu0
        %5025 = vmatprep.mubr.bf16.mxu0 0
        %5026 = vmatmul.mubr.bf16.gmra.mxu0 %v4921
        %v5027 = vpop.f32.mrf.mxu0
        %v5028 = vadd.f32 0.0, %v5027
        %v5029 = vpop.f32.mrf.mxu0
        %v5030 = vpop.f32.mrf.mxu0
        %v5031 = vadd.f32 0.0, %v5030
        %v5032 = vpop.f32.mrf.mxu0
        %5033 = vmatprep.mubr.bf16.mxu0 0
        %5034 = vmatmul.mubr.bf16.gmra.mxu0 %v4924
        %v5035 = vpop.f32.mrf.mxu0
        %v5036 = vadd.f32 0.0, %v5035
        %v5037 = vpop.f32.mrf.mxu0
        %v5038 = vpop.f32.mrf.mxu0
        %v5039 = vadd.f32 0.0, %v5038
        %v5040 = vpop.f32.mrf.mxu0
        %5041 = vmatprep.mubr.bf16.mxu0 0
        %5042 = vmatmul.mubr.bf16.gmra.mxu0 %v4927
        %v5043 = vpop.f32.mrf.mxu0
        %v5044 = vadd.f32 0.0, %v5043
        %v5045 = vpop.f32.mrf.mxu0
        %v5046 = vpop.f32.mrf.mxu0
        %v5047 = vadd.f32 0.0, %v5046
        %v5048 = vpop.f32.mrf.mxu0
        %5049 = vmatprep.mubr.bf16.mxu0 0
        %5050 = vmatmul.mubr.bf16.gmra.mxu0 %v4930
        %v5051 = vpop.f32.mrf.mxu0
        %v5052 = vadd.f32 0.0, %v5051
        %v5053 = vpop.f32.mrf.mxu0
        %v5054 = vpop.f32.mrf.mxu0
        %v5055 = vadd.f32 0.0, %v5054
        %v5056 = vpop.f32.mrf.mxu0
        %5057 = vmatprep.mubr.bf16.mxu0 0
        %5058 = vmatmul.mubr.bf16.gmra.mxu0 %v4933
        %v5059 = vpop.f32.mrf.mxu0
        %v5060 = vadd.f32 0.0, %v5059
        %v5061 = vpop.f32.mrf.mxu0
        %v5062 = vpop.f32.mrf.mxu0
        %v5063 = vadd.f32 0.0, %v5062
        %v5064 = vpop.f32.mrf.mxu0
        %5065 = vmatprep.mubr.bf16.mxu0 0
        %5066 = vmatmul.mubr.bf16.gmra.mxu0 %v4936
        %v5067 = vpop.f32.mrf.mxu0
        %v5068 = vadd.f32 0.0, %v5067
        %v5069 = vpop.f32.mrf.mxu0
        %v5070 = vpop.f32.mrf.mxu0
        %v5071 = vadd.f32 0.0, %v5070
        %v5072 = vpop.f32.mrf.mxu0
        %5073 = vmatprep.mubr.bf16.mxu0 0
        %5074 = vmatmul.mubr.bf16.gmra.mxu0 %v4939
        %v5075 = vpop.f32.mrf.mxu0
        %v5076 = vadd.f32 0.0, %v5075
        %v5077 = vpop.f32.mrf.mxu0
        %v5078 = vpop.f32.mrf.mxu0
        %v5079 = vadd.f32 0.0, %v5078
        %v5080 = vpop.f32.mrf.mxu0
        %5081 = vmatprep.mubr.bf16.mxu0 0
        %5082 = vmatmul.mubr.bf16.gmra.mxu0 %v4942
        %v5083 = vpop.f32.mrf.mxu0
        %v5084 = vadd.f32 0.0, %v5083
        %v5085 = vpop.f32.mrf.mxu0
        %v5086 = vpop.f32.mrf.mxu0
        %v5087 = vadd.f32 0.0, %v5086
        %v5088 = vpop.f32.mrf.mxu0
        %5089 = vmatprep.mubr.bf16.mxu0 0
        %5090 = vmatmul.mubr.bf16.gmra.mxu0 %v4945
        %v5091 = vpop.f32.mrf.mxu0
        %v5092 = vadd.f32 0.0, %v5091
        %v5093 = vpop.f32.mrf.mxu0
        %v5094 = vpop.f32.mrf.mxu0
        %v5095 = vadd.f32 0.0, %v5094
        %v5096 = vpop.f32.mrf.mxu0
        %5097 = vmatprep.mubr.bf16.mxu0 0
        %5098 = vmatmul.mubr.bf16.gmra.mxu0 %v4948
        %v5099 = vpop.f32.mrf.mxu0
        %v5100 = vadd.f32 0.0, %v5099
        %v5101 = vpop.f32.mrf.mxu0
        %v5102 = vpop.f32.mrf.mxu0
        %v5103 = vadd.f32 0.0, %v5102
        %v5104 = vpop.f32.mrf.mxu0
        %5105 = vmatprep.mubr.bf16.mxu0 0
        %5106 = vmatmul.mubr.bf16.gmra.mxu0 %v4951
        %v5107 = vpop.f32.mrf.mxu0
        %v5108 = vadd.f32 0.0, %v5107
        %v5109 = vpop.f32.mrf.mxu0
        %v5110 = vpop.f32.mrf.mxu0
        %v5111 = vadd.f32 0.0, %v5110
        %v5112 = vpop.f32.mrf.mxu0
        %5113 = vdwg.mxu0
        %v5114 = vadd.f32 %v4816, %v4988
        %v5115 = vadd.f32 %v4817, %v4991
        %v5116 = vadd.f32 %v4818, %v4996
        %v5117 = vadd.f32 %v4819, %v4999
        %v5118 = vadd.f32 %v4820, %v5004
        %v5119 = vadd.f32 %v4821, %v5007
        %v5120 = vadd.f32 %v4822, %v5012
        %v5121 = vadd.f32 %v4823, %v5015
        %v5122 = vadd.f32 %v4824, %v5020
        %v5123 = vadd.f32 %v4825, %v5023
        %v5124 = vadd.f32 %v4826, %v5028
        %v5125 = vadd.f32 %v4827, %v5031
        %v5126 = vadd.f32 %v4828, %v5036
        %v5127 = vadd.f32 %v4829, %v5039
        %v5128 = vadd.f32 %v4830, %v5044
        %v5129 = vadd.f32 %v4831, %v5047
        %v5130 = vadd.f32 %v4832, %v5052
        %v5131 = vadd.f32 %v4833, %v5055
        %v5132 = vadd.f32 %v4834, %v5060
        %v5133 = vadd.f32 %v4835, %v5063
        %v5134 = vadd.f32 %v4836, %v5068
        %v5135 = vadd.f32 %v4837, %v5071
        %v5136 = vadd.f32 %v4838, %v5076
        %v5137 = vadd.f32 %v4839, %v5079
        %v5138 = vadd.f32 %v4840, %v5084
        %v5139 = vadd.f32 %v4841, %v5087
        %v5140 = vadd.f32 %v4842, %v5092
        %v5141 = vadd.f32 %v4843, %v5095
        %v5142 = vadd.f32 %v4844, %v5100
        %v5143 = vadd.f32 %v4845, %v5103
        %v5144 = vadd.f32 %v4846, %v5108
        %v5145 = vadd.f32 %v4847, %v5111
        %v5146 = vld [vmem:[%s4848 + $0x1] sm:$0xff]
        %v5147 = vld [vmem:[%s4848 + $0x9] sm:$0xff]
        %v5148 = vld [vmem:[%s4848 + $0x19] sm:$0xff]
        %v5149 = vld [vmem:[%s4848 + $0x21] sm:$0xff]
        %v5150 = vld [vmem:[%s4848 + $0x31] sm:$0xff]
        %v5151 = vld [vmem:[%s4848 + $0x39] sm:$0xff]
        %v5152 = vld [vmem:[%s4848 + $0x49] sm:$0xff]
        %v5153 = vld [vmem:[%s4848 + $0x51] sm:$0xff]
        %v5154 = vld [vmem:[%s4848 + $0x61] sm:$0xff]
        %v5155 = vld [vmem:[%s4848 + $0x69] sm:$0xff]
        %v5156 = vld [vmem:[%s4848 + $0x79] sm:$0xff]
        %v5157 = vld [vmem:[%s4848 + $0x81] sm:$0xff]
        %v5158 = vld [vmem:[%s4848 + $0x91] sm:$0xff]
        %v5159 = vld [vmem:[%s4848 + $0x99] sm:$0xff]
        %v5160 = vld [vmem:[%s4848 + $0xa9] sm:$0xff]
        %v5161 = vld [vmem:[%s4848 + $0xb1] sm:$0xff]
        %v5162 = vld [vmem:[%s4848 + $0xc1] sm:$0xff]
        %v5163 = vld [vmem:[%s4848 + $0xc9] sm:$0xff]
        %v5164 = vld [vmem:[%s4848 + $0xd9] sm:$0xff]
        %v5165 = vld [vmem:[%s4848 + $0xe1] sm:$0xff]
        %v5166 = vld [vmem:[%s4848 + $0xf1] sm:$0xff]
        %v5167 = vld [vmem:[%s4848 + $0xf9] sm:$0xff]
        %v5168 = vld [vmem:[%s4848 + $0x109] sm:$0xff]
        %v5169 = vld [vmem:[%s4848 + $0x111] sm:$0xff]
        %v5170 = vld [vmem:[%s4848 + $0x121] sm:$0xff]
        %v5171 = vld [vmem:[%s4848 + $0x129] sm:$0xff]
        %v5172 = vld [vmem:[%s4848 + $0x139] sm:$0xff]
        %v5173 = vld [vmem:[%s4848 + $0x141] sm:$0xff]
        %v5174 = vld [vmem:[%s4848 + $0x151] sm:$0xff]
        %v5175 = vld [vmem:[%s4848 + $0x159] sm:$0xff]
        %v5176 = vld [vmem:[%s4848 + $0x169] sm:$0xff]
        %v5177 = vld [vmem:[%s4848 + $0x171] sm:$0xff]
        %v5178 = vpack.c.bf16 %v5147, %v5146
        %v5179 = vpack.c.bf16 %v5149, %v5148
        %v5180 = vpack.c.bf16 %v5151, %v5150
        %v5181 = vpack.c.bf16 %v5153, %v5152
        %v5182 = vpack.c.bf16 %v5155, %v5154
        %v5183 = vpack.c.bf16 %v5157, %v5156
        %v5184 = vpack.c.bf16 %v5159, %v5158
        %v5185 = vpack.c.bf16 %v5161, %v5160
        %v5186 = vpack.c.bf16 %v5163, %v5162
        %v5187 = vpack.c.bf16 %v5165, %v5164
        %v5188 = vpack.c.bf16 %v5167, %v5166
        %v5189 = vpack.c.bf16 %v5169, %v5168
        %v5190 = vpack.c.bf16 %v5171, %v5170
        %v5191 = vpack.c.bf16 %v5173, %v5172
        %v5192 = vpack.c.bf16 %v5175, %v5174
        %v5193 = vpack.c.bf16 %v5177, %v5176
        %v5194 = vld [vmem:[%s3 + $0x38] sm:$0xf]
        %v5195 = vld [vmem:[%s3 + $0x3c] sm:$0xf]
        %v5198 = vunpack.c.l.b16 %v5194
        %v5199 = vunpack.c.l.b16 %v5195
        %v5200 = vpack.c.b16 %v5199, %v5198
        %v5203 = vsel %vm3009, %v5178, 0
        %v5206 = vsel %vm3009, %v5179, 0
        %v5209 = vsel %vm3009, %v5180, 0
        %v5212 = vsel %vm3009, %v5181, 0
        %v5215 = vsel %vm3009, %v5182, 0
        %v5218 = vsel %vm3009, %v5183, 0
        %v5221 = vsel %vm3009, %v5184, 0
        %v5224 = vsel %vm3009, %v5185, 0
        %v5227 = vsel %vm3009, %v5186, 0
        %v5230 = vsel %vm3009, %v5187, 0
        %v5233 = vsel %vm3009, %v5188, 0
        %v5236 = vsel %vm3009, %v5189, 0
        %v5239 = vsel %vm3009, %v5190, 0
        %v5242 = vsel %vm3009, %v5191, 0
        %v5245 = vsel %vm3009, %v5192, 0
        %v5248 = vsel %vm3009, %v5193, 0
        %5250 = vmatprep.subr.bf16.mxu0 0
        %5251 = vmatpush1.bf16.msra.mxu0 0
        %5252 = vmatprep.subr.bf16.mxu0 0
        %5253 = vmatpush1.bf16.msra.mxu0 0
        %5254 = vmatprep.subr.bf16.mxu0 0
        %5255 = vmatpush1.bf16.msra.mxu0 0
        %5256 = vmatprep.subr.bf16.mxu0 0
        %5257 = vmatpush1.bf16.msra.mxu0 0
        %5258 = vmatprep.subr.bf16.mxu0 0
        %5259 = vmatpush1.bf16.msra.mxu0 0
        %5260 = vmatprep.subr.bf16.mxu0 0
        %5261 = vmatpush1.bf16.msra.mxu0 0
        %5262 = vmatprep.subr.bf16.mxu0 0
        %5263 = vmatpush1.bf16.msra.mxu0 0
        %5264 = vmatprep.subr.bf16.mxu0 0
        %5265 = vmatpush1.bf16.msra.mxu0 %v5200
        %5266 = vmatprep.subr.bf16.mxu0 0
        %5267 = vmatpush2.bf16.msra.mxu0 0
        %5268 = vmatprep.subr.bf16.mxu0 0
        %5269 = vmatpush2.bf16.msra.mxu0 0
        %5270 = vmatprep.subr.bf16.mxu0 0
        %5271 = vmatpush2.bf16.msra.mxu0 0
        %5272 = vmatprep.subr.bf16.mxu0 0
        %5273 = vmatpush2.bf16.msra.mxu0 0
        %5274 = vmatprep.subr.bf16.mxu0 0
        %5275 = vmatpush2.bf16.msra.mxu0 0
        %5276 = vmatprep.subr.bf16.mxu0 0
        %5277 = vmatpush2.bf16.msra.mxu0 0
        %5278 = vmatprep.subr.bf16.mxu0 0
        %5279 = vmatpush2.bf16.msra.mxu0 0
        %5280 = vmatprep.subr.bf16.mxu0 0
        %5281 = vmatpush2.bf16.msra.mxu0 0
        %5282 = vmatprep.mubr.bf16.mxu0 0
        %5283 = vmatmul.mubr.bf16.gmra.mxu0 %v5203
        %v5284 = vpop.f32.mrf.mxu0
        %v5285 = vadd.f32 0.0, %v5284
        %v5286 = vpop.f32.mrf.mxu0
        %v5287 = vpop.f32.mrf.mxu0
        %v5288 = vadd.f32 0.0, %v5287
        %v5289 = vpop.f32.mrf.mxu0
        %5290 = vmatprep.mubr.bf16.mxu0 0
        %5291 = vmatmul.mubr.bf16.gmra.mxu0 %v5206
        %v5292 = vpop.f32.mrf.mxu0
        %v5293 = vadd.f32 0.0, %v5292
        %v5294 = vpop.f32.mrf.mxu0
        %v5295 = vpop.f32.mrf.mxu0
        %v5296 = vadd.f32 0.0, %v5295
        %v5297 = vpop.f32.mrf.mxu0
        %5298 = vmatprep.mubr.bf16.mxu0 0
        %5299 = vmatmul.mubr.bf16.gmra.mxu0 %v5209
        %v5300 = vpop.f32.mrf.mxu0
        %v5301 = vadd.f32 0.0, %v5300
        %v5302 = vpop.f32.mrf.mxu0
        %v5303 = vpop.f32.mrf.mxu0
        %v5304 = vadd.f32 0.0, %v5303
        %v5305 = vpop.f32.mrf.mxu0
        %5306 = vmatprep.mubr.bf16.mxu0 0
        %5307 = vmatmul.mubr.bf16.gmra.mxu0 %v5212
        %v5308 = vpop.f32.mrf.mxu0
        %v5309 = vadd.f32 0.0, %v5308
        %v5310 = vpop.f32.mrf.mxu0
        %v5311 = vpop.f32.mrf.mxu0
        %v5312 = vadd.f32 0.0, %v5311
        %v5313 = vpop.f32.mrf.mxu0
        %5314 = vmatprep.mubr.bf16.mxu0 0
        %5315 = vmatmul.mubr.bf16.gmra.mxu0 %v5215
        %v5316 = vpop.f32.mrf.mxu0
        %v5317 = vadd.f32 0.0, %v5316
        %v5318 = vpop.f32.mrf.mxu0
        %v5319 = vpop.f32.mrf.mxu0
        %v5320 = vadd.f32 0.0, %v5319
        %v5321 = vpop.f32.mrf.mxu0
        %5322 = vmatprep.mubr.bf16.mxu0 0
        %5323 = vmatmul.mubr.bf16.gmra.mxu0 %v5218
        %v5324 = vpop.f32.mrf.mxu0
        %v5325 = vadd.f32 0.0, %v5324
        %v5326 = vpop.f32.mrf.mxu0
        %v5327 = vpop.f32.mrf.mxu0
        %v5328 = vadd.f32 0.0, %v5327
        %v5329 = vpop.f32.mrf.mxu0
        %5330 = vmatprep.mubr.bf16.mxu0 0
        %5331 = vmatmul.mubr.bf16.gmra.mxu0 %v5221
        %v5332 = vpop.f32.mrf.mxu0
        %v5333 = vadd.f32 0.0, %v5332
        %v5334 = vpop.f32.mrf.mxu0
        %v5335 = vpop.f32.mrf.mxu0
        %v5336 = vadd.f32 0.0, %v5335
        %v5337 = vpop.f32.mrf.mxu0
        %5338 = vmatprep.mubr.bf16.mxu0 0
        %5339 = vmatmul.mubr.bf16.gmra.mxu0 %v5224
        %v5340 = vpop.f32.mrf.mxu0
        %v5341 = vadd.f32 0.0, %v5340
        %v5342 = vpop.f32.mrf.mxu0
        %v5343 = vpop.f32.mrf.mxu0
        %v5344 = vadd.f32 0.0, %v5343
        %v5345 = vpop.f32.mrf.mxu0
        %5346 = vmatprep.mubr.bf16.mxu0 0
        %5347 = vmatmul.mubr.bf16.gmra.mxu0 %v5227
        %v5348 = vpop.f32.mrf.mxu0
        %v5349 = vadd.f32 0.0, %v5348
        %v5350 = vpop.f32.mrf.mxu0
        %v5351 = vpop.f32.mrf.mxu0
        %v5352 = vadd.f32 0.0, %v5351
        %v5353 = vpop.f32.mrf.mxu0
        %5354 = vmatprep.mubr.bf16.mxu0 0
        %5355 = vmatmul.mubr.bf16.gmra.mxu0 %v5230
        %v5356 = vpop.f32.mrf.mxu0
        %v5357 = vadd.f32 0.0, %v5356
        %v5358 = vpop.f32.mrf.mxu0
        %v5359 = vpop.f32.mrf.mxu0
        %v5360 = vadd.f32 0.0, %v5359
        %v5361 = vpop.f32.mrf.mxu0
        %5362 = vmatprep.mubr.bf16.mxu0 0
        %5363 = vmatmul.mubr.bf16.gmra.mxu0 %v5233
        %v5364 = vpop.f32.mrf.mxu0
        %v5365 = vadd.f32 0.0, %v5364
        %v5366 = vpop.f32.mrf.mxu0
        %v5367 = vpop.f32.mrf.mxu0
        %v5368 = vadd.f32 0.0, %v5367
        %v5369 = vpop.f32.mrf.mxu0
        %5370 = vmatprep.mubr.bf16.mxu0 0
        %5371 = vmatmul.mubr.bf16.gmra.mxu0 %v5236
        %v5372 = vpop.f32.mrf.mxu0
        %v5373 = vadd.f32 0.0, %v5372
        %v5374 = vpop.f32.mrf.mxu0
        %v5375 = vpop.f32.mrf.mxu0
        %v5376 = vadd.f32 0.0, %v5375
        %v5377 = vpop.f32.mrf.mxu0
        %5378 = vmatprep.mubr.bf16.mxu0 0
        %5379 = vmatmul.mubr.bf16.gmra.mxu0 %v5239
        %v5380 = vpop.f32.mrf.mxu0
        %v5381 = vadd.f32 0.0, %v5380
        %v5382 = vpop.f32.mrf.mxu0
        %v5383 = vpop.f32.mrf.mxu0
        %v5384 = vadd.f32 0.0, %v5383
        %v5385 = vpop.f32.mrf.mxu0
        %5386 = vmatprep.mubr.bf16.mxu0 0
        %5387 = vmatmul.mubr.bf16.gmra.mxu0 %v5242
        %v5388 = vpop.f32.mrf.mxu0
        %v5389 = vadd.f32 0.0, %v5388
        %v5390 = vpop.f32.mrf.mxu0
        %v5391 = vpop.f32.mrf.mxu0
        %v5392 = vadd.f32 0.0, %v5391
        %v5393 = vpop.f32.mrf.mxu0
        %5394 = vmatprep.mubr.bf16.mxu0 0
        %5395 = vmatmul.mubr.bf16.gmra.mxu0 %v5245
        %v5396 = vpop.f32.mrf.mxu0
        %v5397 = vadd.f32 0.0, %v5396
        %v5398 = vpop.f32.mrf.mxu0
        %v5399 = vpop.f32.mrf.mxu0
        %v5400 = vadd.f32 0.0, %v5399
        %v5401 = vpop.f32.mrf.mxu0
        %5402 = vmatprep.mubr.bf16.mxu0 0
        %5403 = vmatmul.mubr.bf16.gmra.mxu0 %v5248
        %v5404 = vpop.f32.mrf.mxu0
        %v5405 = vadd.f32 0.0, %v5404
        %v5406 = vpop.f32.mrf.mxu0
        %v5407 = vpop.f32.mrf.mxu0
        %v5408 = vadd.f32 0.0, %v5407
        %v5409 = vpop.f32.mrf.mxu0
        %5410 = vdwg.mxu0
        %v5411 = vadd.f32 %v5114, %v5285
        %v5412 = vadd.f32 %v5115, %v5288
        %v5413 = vadd.f32 %v5116, %v5293
        %v5414 = vadd.f32 %v5117, %v5296
        %v5415 = vadd.f32 %v5118, %v5301
        %v5416 = vadd.f32 %v5119, %v5304
        %v5417 = vadd.f32 %v5120, %v5309
        %v5418 = vadd.f32 %v5121, %v5312
        %v5419 = vadd.f32 %v5122, %v5317
        %v5420 = vadd.f32 %v5123, %v5320
        %v5421 = vadd.f32 %v5124, %v5325
        %v5422 = vadd.f32 %v5125, %v5328
        %v5423 = vadd.f32 %v5126, %v5333
        %v5424 = vadd.f32 %v5127, %v5336
        %v5425 = vadd.f32 %v5128, %v5341
        %v5426 = vadd.f32 %v5129, %v5344
        %v5427 = vadd.f32 %v5130, %v5349
        %v5428 = vadd.f32 %v5131, %v5352
        %v5429 = vadd.f32 %v5132, %v5357
        %v5430 = vadd.f32 %v5133, %v5360
        %v5431 = vadd.f32 %v5134, %v5365
        %v5432 = vadd.f32 %v5135, %v5368
        %v5433 = vadd.f32 %v5136, %v5373
        %v5434 = vadd.f32 %v5137, %v5376
        %v5435 = vadd.f32 %v5138, %v5381
        %v5436 = vadd.f32 %v5139, %v5384
        %v5437 = vadd.f32 %v5140, %v5389
        %v5438 = vadd.f32 %v5141, %v5392
        %v5439 = vadd.f32 %v5142, %v5397
        %v5440 = vadd.f32 %v5143, %v5400
        %v5441 = vadd.f32 %v5144, %v5405
        %v5442 = vadd.f32 %v5145, %v5408
        %v5443 = vld [vmem:[%s4848 + $0x2] sm:$0xff]
        %v5444 = vld [vmem:[%s4848 + $0xa] sm:$0xff]
        %v5445 = vld [vmem:[%s4848 + $0x1a] sm:$0xff]
        %v5446 = vld [vmem:[%s4848 + $0x22] sm:$0xff]
        %v5447 = vld [vmem:[%s4848 + $0x32] sm:$0xff]
        %v5448 = vld [vmem:[%s4848 + $0x3a] sm:$0xff]
        %v5449 = vld [vmem:[%s4848 + $0x4a] sm:$0xff]
        %v5450 = vld [vmem:[%s4848 + $0x52] sm:$0xff]
        %v5451 = vld [vmem:[%s4848 + $0x62] sm:$0xff]
        %v5452 = vld [vmem:[%s4848 + $0x6a] sm:$0xff]
        %v5453 = vld [vmem:[%s4848 + $0x7a] sm:$0xff]
        %v5454 = vld [vmem:[%s4848 + $0x82] sm:$0xff]
        %v5455 = vld [vmem:[%s4848 + $0x92] sm:$0xff]
        %v5456 = vld [vmem:[%s4848 + $0x9a] sm:$0xff]
        %v5457 = vld [vmem:[%s4848 + $0xaa] sm:$0xff]
        %v5458 = vld [vmem:[%s4848 + $0xb2] sm:$0xff]
        %v5459 = vld [vmem:[%s4848 + $0xc2] sm:$0xff]
        %v5460 = vld [vmem:[%s4848 + $0xca] sm:$0xff]
        %v5461 = vld [vmem:[%s4848 + $0xda] sm:$0xff]
        %v5462 = vld [vmem:[%s4848 + $0xe2] sm:$0xff]
        %v5463 = vld [vmem:[%s4848 + $0xf2] sm:$0xff]
        %v5464 = vld [vmem:[%s4848 + $0xfa] sm:$0xff]
        %v5465 = vld [vmem:[%s4848 + $0x10a] sm:$0xff]
        %v5466 = vld [vmem:[%s4848 + $0x112] sm:$0xff]
        %v5467 = vld [vmem:[%s4848 + $0x122] sm:$0xff]
        %v5468 = vld [vmem:[%s4848 + $0x12a] sm:$0xff]
        %v5469 = vld [vmem:[%s4848 + $0x13a] sm:$0xff]
        %v5470 = vld [vmem:[%s4848 + $0x142] sm:$0xff]
        %v5471 = vld [vmem:[%s4848 + $0x152] sm:$0xff]
        %v5472 = vld [vmem:[%s4848 + $0x15a] sm:$0xff]
        %v5473 = vld [vmem:[%s4848 + $0x16a] sm:$0xff]
        %v5474 = vld [vmem:[%s4848 + $0x172] sm:$0xff]
        %v5475 = vpack.c.bf16 %v5444, %v5443
        %v5476 = vpack.c.bf16 %v5446, %v5445
        %v5477 = vpack.c.bf16 %v5448, %v5447
        %v5478 = vpack.c.bf16 %v5450, %v5449
        %v5479 = vpack.c.bf16 %v5452, %v5451
        %v5480 = vpack.c.bf16 %v5454, %v5453
        %v5481 = vpack.c.bf16 %v5456, %v5455
        %v5482 = vpack.c.bf16 %v5458, %v5457
        %v5483 = vpack.c.bf16 %v5460, %v5459
        %v5484 = vpack.c.bf16 %v5462, %v5461
        %v5485 = vpack.c.bf16 %v5464, %v5463
        %v5486 = vpack.c.bf16 %v5466, %v5465
        %v5487 = vpack.c.bf16 %v5468, %v5467
        %v5488 = vpack.c.bf16 %v5470, %v5469
        %v5489 = vpack.c.bf16 %v5472, %v5471
        %v5490 = vpack.c.bf16 %v5474, %v5473
        %v5491 = vld [vmem:[%s3 + $0x40] sm:$0xf]
        %v5492 = vld [vmem:[%s3 + $0x44] sm:$0xf]
        %v5495 = vunpack.c.l.b16 %v5491
        %v5496 = vunpack.c.l.b16 %v5492
        %v5497 = vpack.c.b16 %v5496, %v5495
        %v5500 = vsel %vm3009, %v5475, 0
        %v5503 = vsel %vm3009, %v5476, 0
        %v5506 = vsel %vm3009, %v5477, 0
        %v5509 = vsel %vm3009, %v5478, 0
        %v5512 = vsel %vm3009, %v5479, 0
        %v5515 = vsel %vm3009, %v5480, 0
        %v5518 = vsel %vm3009, %v5481, 0
        %v5521 = vsel %vm3009, %v5482, 0
        %v5524 = vsel %vm3009, %v5483, 0
        %v5527 = vsel %vm3009, %v5484, 0
        %v5530 = vsel %vm3009, %v5485, 0
        %v5533 = vsel %vm3009, %v5486, 0
        %v5536 = vsel %vm3009, %v5487, 0
        %v5539 = vsel %vm3009, %v5488, 0
        %v5542 = vsel %vm3009, %v5489, 0
        %v5545 = vsel %vm3009, %v5490, 0
        %5547 = vmatprep.subr.bf16.mxu0 0
        %5548 = vmatpush1.bf16.msra.mxu0 0
        %5549 = vmatprep.subr.bf16.mxu0 0
        %5550 = vmatpush1.bf16.msra.mxu0 0
        %5551 = vmatprep.subr.bf16.mxu0 0
        %5552 = vmatpush1.bf16.msra.mxu0 0
        %5553 = vmatprep.subr.bf16.mxu0 0
        %5554 = vmatpush1.bf16.msra.mxu0 0
        %5555 = vmatprep.subr.bf16.mxu0 0
        %5556 = vmatpush1.bf16.msra.mxu0 0
        %5557 = vmatprep.subr.bf16.mxu0 0
        %5558 = vmatpush1.bf16.msra.mxu0 0
        %5559 = vmatprep.subr.bf16.mxu0 0
        %5560 = vmatpush1.bf16.msra.mxu0 0
        %5561 = vmatprep.subr.bf16.mxu0 0
        %5562 = vmatpush1.bf16.msra.mxu0 %v5497
        %5563 = vmatprep.subr.bf16.mxu0 0
        %5564 = vmatpush2.bf16.msra.mxu0 0
        %5565 = vmatprep.subr.bf16.mxu0 0
        %5566 = vmatpush2.bf16.msra.mxu0 0
        %5567 = vmatprep.subr.bf16.mxu0 0
        %5568 = vmatpush2.bf16.msra.mxu0 0
        %5569 = vmatprep.subr.bf16.mxu0 0
        %5570 = vmatpush2.bf16.msra.mxu0 0
        %5571 = vmatprep.subr.bf16.mxu0 0
        %5572 = vmatpush2.bf16.msra.mxu0 0
        %5573 = vmatprep.subr.bf16.mxu0 0
        %5574 = vmatpush2.bf16.msra.mxu0 0
        %5575 = vmatprep.subr.bf16.mxu0 0
        %5576 = vmatpush2.bf16.msra.mxu0 0
        %5577 = vmatprep.subr.bf16.mxu0 0
        %5578 = vmatpush2.bf16.msra.mxu0 0
        %5579 = vmatprep.mubr.bf16.mxu0 0
        %5580 = vmatmul.mubr.bf16.gmra.mxu0 %v5500
        %v5581 = vpop.f32.mrf.mxu0
        %v5582 = vadd.f32 0.0, %v5581
        %v5583 = vpop.f32.mrf.mxu0
        %v5584 = vpop.f32.mrf.mxu0
        %v5585 = vadd.f32 0.0, %v5584
        %v5586 = vpop.f32.mrf.mxu0
        %5587 = vmatprep.mubr.bf16.mxu0 0
        %5588 = vmatmul.mubr.bf16.gmra.mxu0 %v5503
        %v5589 = vpop.f32.mrf.mxu0
        %v5590 = vadd.f32 0.0, %v5589
        %v5591 = vpop.f32.mrf.mxu0
        %v5592 = vpop.f32.mrf.mxu0
        %v5593 = vadd.f32 0.0, %v5592
        %v5594 = vpop.f32.mrf.mxu0
        %5595 = vmatprep.mubr.bf16.mxu0 0
        %5596 = vmatmul.mubr.bf16.gmra.mxu0 %v5506
        %v5597 = vpop.f32.mrf.mxu0
        %v5598 = vadd.f32 0.0, %v5597
        %v5599 = vpop.f32.mrf.mxu0
        %v5600 = vpop.f32.mrf.mxu0
        %v5601 = vadd.f32 0.0, %v5600
        %v5602 = vpop.f32.mrf.mxu0
        %5603 = vmatprep.mubr.bf16.mxu0 0
        %5604 = vmatmul.mubr.bf16.gmra.mxu0 %v5509
        %v5605 = vpop.f32.mrf.mxu0
        %v5606 = vadd.f32 0.0, %v5605
        %v5607 = vpop.f32.mrf.mxu0
        %v5608 = vpop.f32.mrf.mxu0
        %v5609 = vadd.f32 0.0, %v5608
        %v5610 = vpop.f32.mrf.mxu0
        %5611 = vmatprep.mubr.bf16.mxu0 0
        %5612 = vmatmul.mubr.bf16.gmra.mxu0 %v5512
        %v5613 = vpop.f32.mrf.mxu0
        %v5614 = vadd.f32 0.0, %v5613
        %v5615 = vpop.f32.mrf.mxu0
        %v5616 = vpop.f32.mrf.mxu0
        %v5617 = vadd.f32 0.0, %v5616
        %v5618 = vpop.f32.mrf.mxu0
        %5619 = vmatprep.mubr.bf16.mxu0 0
        %5620 = vmatmul.mubr.bf16.gmra.mxu0 %v5515
        %v5621 = vpop.f32.mrf.mxu0
        %v5622 = vadd.f32 0.0, %v5621
        %v5623 = vpop.f32.mrf.mxu0
        %v5624 = vpop.f32.mrf.mxu0
        %v5625 = vadd.f32 0.0, %v5624
        %v5626 = vpop.f32.mrf.mxu0
        %5627 = vmatprep.mubr.bf16.mxu0 0
        %5628 = vmatmul.mubr.bf16.gmra.mxu0 %v5518
        %v5629 = vpop.f32.mrf.mxu0
        %v5630 = vadd.f32 0.0, %v5629
        %v5631 = vpop.f32.mrf.mxu0
        %v5632 = vpop.f32.mrf.mxu0
        %v5633 = vadd.f32 0.0, %v5632
        %v5634 = vpop.f32.mrf.mxu0
        %5635 = vmatprep.mubr.bf16.mxu0 0
        %5636 = vmatmul.mubr.bf16.gmra.mxu0 %v5521
        %v5637 = vpop.f32.mrf.mxu0
        %v5638 = vadd.f32 0.0, %v5637
        %v5639 = vpop.f32.mrf.mxu0
        %v5640 = vpop.f32.mrf.mxu0
        %v5641 = vadd.f32 0.0, %v5640
        %v5642 = vpop.f32.mrf.mxu0
        %5643 = vmatprep.mubr.bf16.mxu0 0
        %5644 = vmatmul.mubr.bf16.gmra.mxu0 %v5524
        %v5645 = vpop.f32.mrf.mxu0
        %v5646 = vadd.f32 0.0, %v5645
        %v5647 = vpop.f32.mrf.mxu0
        %v5648 = vpop.f32.mrf.mxu0
        %v5649 = vadd.f32 0.0, %v5648
        %v5650 = vpop.f32.mrf.mxu0
        %5651 = vmatprep.mubr.bf16.mxu0 0
        %5652 = vmatmul.mubr.bf16.gmra.mxu0 %v5527
        %v5653 = vpop.f32.mrf.mxu0
        %v5654 = vadd.f32 0.0, %v5653
        %v5655 = vpop.f32.mrf.mxu0
        %v5656 = vpop.f32.mrf.mxu0
        %v5657 = vadd.f32 0.0, %v5656
        %v5658 = vpop.f32.mrf.mxu0
        %5659 = vmatprep.mubr.bf16.mxu0 0
        %5660 = vmatmul.mubr.bf16.gmra.mxu0 %v5530
        %v5661 = vpop.f32.mrf.mxu0
        %v5662 = vadd.f32 0.0, %v5661
        %v5663 = vpop.f32.mrf.mxu0
        %v5664 = vpop.f32.mrf.mxu0
        %v5665 = vadd.f32 0.0, %v5664
        %v5666 = vpop.f32.mrf.mxu0
        %5667 = vmatprep.mubr.bf16.mxu0 0
        %5668 = vmatmul.mubr.bf16.gmra.mxu0 %v5533
        %v5669 = vpop.f32.mrf.mxu0
        %v5670 = vadd.f32 0.0, %v5669
        %v5671 = vpop.f32.mrf.mxu0
        %v5672 = vpop.f32.mrf.mxu0
        %v5673 = vadd.f32 0.0, %v5672
        %v5674 = vpop.f32.mrf.mxu0
        %5675 = vmatprep.mubr.bf16.mxu0 0
        %5676 = vmatmul.mubr.bf16.gmra.mxu0 %v5536
        %v5677 = vpop.f32.mrf.mxu0
        %v5678 = vadd.f32 0.0, %v5677
        %v5679 = vpop.f32.mrf.mxu0
        %v5680 = vpop.f32.mrf.mxu0
        %v5681 = vadd.f32 0.0, %v5680
        %v5682 = vpop.f32.mrf.mxu0
        %5683 = vmatprep.mubr.bf16.mxu0 0
        %5684 = vmatmul.mubr.bf16.gmra.mxu0 %v5539
        %v5685 = vpop.f32.mrf.mxu0
        %v5686 = vadd.f32 0.0, %v5685
        %v5687 = vpop.f32.mrf.mxu0
        %v5688 = vpop.f32.mrf.mxu0
        %v5689 = vadd.f32 0.0, %v5688
        %v5690 = vpop.f32.mrf.mxu0
        %5691 = vmatprep.mubr.bf16.mxu0 0
        %5692 = vmatmul.mubr.bf16.gmra.mxu0 %v5542
        %v5693 = vpop.f32.mrf.mxu0
        %v5694 = vadd.f32 0.0, %v5693
        %v5695 = vpop.f32.mrf.mxu0
        %v5696 = vpop.f32.mrf.mxu0
        %v5697 = vadd.f32 0.0, %v5696
        %v5698 = vpop.f32.mrf.mxu0
        %5699 = vmatprep.mubr.bf16.mxu0 0
        %5700 = vmatmul.mubr.bf16.gmra.mxu0 %v5545
        %v5701 = vpop.f32.mrf.mxu0
        %v5702 = vadd.f32 0.0, %v5701
        %v5703 = vpop.f32.mrf.mxu0
        %v5704 = vpop.f32.mrf.mxu0
        %v5705 = vadd.f32 0.0, %v5704
        %v5706 = vpop.f32.mrf.mxu0
        %5707 = vdwg.mxu0
        %v5708 = vadd.f32 %v5411, %v5582
        %v5709 = vadd.f32 %v5412, %v5585
        %v5710 = vadd.f32 %v5413, %v5590
        %v5711 = vadd.f32 %v5414, %v5593
        %v5712 = vadd.f32 %v5415, %v5598
        %v5713 = vadd.f32 %v5416, %v5601
        %v5714 = vadd.f32 %v5417, %v5606
        %v5715 = vadd.f32 %v5418, %v5609
        %v5716 = vadd.f32 %v5419, %v5614
        %v5717 = vadd.f32 %v5420, %v5617
        %v5718 = vadd.f32 %v5421, %v5622
        %v5719 = vadd.f32 %v5422, %v5625
        %v5720 = vadd.f32 %v5423, %v5630
        %v5721 = vadd.f32 %v5424, %v5633
        %v5722 = vadd.f32 %v5425, %v5638
        %v5723 = vadd.f32 %v5426, %v5641
        %v5724 = vadd.f32 %v5427, %v5646
        %v5725 = vadd.f32 %v5428, %v5649
        %v5726 = vadd.f32 %v5429, %v5654
        %v5727 = vadd.f32 %v5430, %v5657
        %v5728 = vadd.f32 %v5431, %v5662
        %v5729 = vadd.f32 %v5432, %v5665
        %v5730 = vadd.f32 %v5433, %v5670
        %v5731 = vadd.f32 %v5434, %v5673
        %v5732 = vadd.f32 %v5435, %v5678
        %v5733 = vadd.f32 %v5436, %v5681
        %v5734 = vadd.f32 %v5437, %v5686
        %v5735 = vadd.f32 %v5438, %v5689
        %v5736 = vadd.f32 %v5439, %v5694
        %v5737 = vadd.f32 %v5440, %v5697
        %v5738 = vadd.f32 %v5441, %v5702
        %v5739 = vadd.f32 %v5442, %v5705
        %v5740 = vld [vmem:[%s5] sm:$0xff]
        %v5741 = vld [vmem:[%s5 + $0x8] sm:$0xff]
        %v5742 = vld [vmem:[%s5 + $0x10] sm:$0xff]
        %v5743 = vld [vmem:[%s5 + $0x18] sm:$0xff]
        %v5744 = vld [vmem:[%s5 + $0x20] sm:$0xff]
        %v5745 = vld [vmem:[%s5 + $0x28] sm:$0xff]
        %v5746 = vld [vmem:[%s5 + $0x30] sm:$0xff]
        %v5747 = vld [vmem:[%s5 + $0x38] sm:$0xff]
        %v5748 = vld [vmem:[%s5 + $0x40] sm:$0xff]
        %v5749 = vld [vmem:[%s5 + $0x48] sm:$0xff]
        %v5750 = vld [vmem:[%s5 + $0x50] sm:$0xff]
        %v5751 = vld [vmem:[%s5 + $0x58] sm:$0xff]
        %v5752 = vld [vmem:[%s5 + $0x60] sm:$0xff]
        %v5753 = vld [vmem:[%s5 + $0x68] sm:$0xff]
        %v5754 = vld [vmem:[%s5 + $0x70] sm:$0xff]
        %v5755 = vld [vmem:[%s5 + $0x78] sm:$0xff]
        %v5756 = vld [vmem:[%s4] sm:$0x1]
        %v5758 = vlaneseq
        %v5759 = vshrl.u32 %v5758, 7
        %v5760 = vsub.s32 0, %v5759
        %v5761 = vrot.slane %v5756, %v5760
        %5763 = vmatprep.subr.mxu0 0.0
        %5764 = vmatpush1.msra.mxu0 %v5723
        %5765 = vmatprep.subr.mxu0 0.0
        %5766 = vmatpush1.msra.mxu0 %v5722
        %5767 = vmatprep.subr.mxu0 0.0
        %5768 = vmatpush1.msra.mxu0 %v5721
        %5769 = vmatprep.subr.mxu0 0.0
        %5770 = vmatpush1.msra.mxu0 %v5720
        %5771 = vmatprep.subr.mxu0 0.0
        %5772 = vmatpush1.msra.mxu0 %v5719
        %5773 = vmatprep.subr.mxu0 0.0
        %5774 = vmatpush1.msra.mxu0 %v5718
        %5775 = vmatprep.subr.mxu0 0.0
        %5776 = vmatpush1.msra.mxu0 %v5717
        %5777 = vmatprep.subr.mxu0 0.0
        %5778 = vmatpush1.msra.mxu0 %v5716
        %5779 = vmatprep.subr.mxu0 0.0
        %5780 = vmatpush1.msra.mxu0 %v5715
        %5781 = vmatprep.subr.mxu0 0.0
        %5782 = vmatpush1.msra.mxu0 %v5714
        %5783 = vmatprep.subr.mxu0 0.0
        %5784 = vmatpush1.msra.mxu0 %v5713
        %5785 = vmatprep.subr.mxu0 0.0
        %5786 = vmatpush1.msra.mxu0 %v5712
        %5787 = vmatprep.subr.mxu0 0.0
        %5788 = vmatpush1.msra.mxu0 %v5711
        %5789 = vmatprep.subr.mxu0 0.0
        %5790 = vmatpush1.msra.mxu0 %v5710
        %5791 = vmatprep.subr.mxu0 0.0
        %5792 = vmatpush1.msra.mxu0 %v5709
        %5793 = vmatprep.subr.mxu0 0.0
        %5794 = vmatpush1.msra.mxu0 %v5708
        %5795 = vmatprep.subr.mxu0 0.0
        %5796 = vmatpush2.msra.mxu0 %v5739
        %5797 = vmatprep.subr.mxu0 0.0
        %5798 = vmatpush2.msra.mxu0 %v5738
        %5799 = vmatprep.subr.mxu0 0.0
        %5800 = vmatpush2.msra.mxu0 %v5737
        %5801 = vmatprep.subr.mxu0 0.0
        %5802 = vmatpush2.msra.mxu0 %v5736
        %5803 = vmatprep.subr.mxu0 0.0
        %5804 = vmatpush2.msra.mxu0 %v5735
        %5805 = vmatprep.subr.mxu0 0.0
        %5806 = vmatpush2.msra.mxu0 %v5734
        %5807 = vmatprep.subr.mxu0 0.0
        %5808 = vmatpush2.msra.mxu0 %v5733
        %5809 = vmatprep.subr.mxu0 0.0
        %5810 = vmatpush2.msra.mxu0 %v5732
        %5811 = vmatprep.subr.mxu0 0.0
        %5812 = vmatpush2.msra.mxu0 %v5731
        %5813 = vmatprep.subr.mxu0 0.0
        %5814 = vmatpush2.msra.mxu0 %v5730
        %5815 = vmatprep.subr.mxu0 0.0
        %5816 = vmatpush2.msra.mxu0 %v5729
        %5817 = vmatprep.subr.mxu0 0.0
        %5818 = vmatpush2.msra.mxu0 %v5728
        %5819 = vmatprep.subr.mxu0 0.0
        %5820 = vmatpush2.msra.mxu0 %v5727
        %5821 = vmatprep.subr.mxu0 0.0
        %5822 = vmatpush2.msra.mxu0 %v5726
        %5823 = vmatprep.subr.mxu0 0.0
        %5824 = vmatpush2.msra.mxu0 %v5725
        %5825 = vmatprep.subr.mxu0 0.0
        %5826 = vmatpush2.msra.mxu0 %v5724
        %5827 = vmatprep.mubr.f32.mxu0 %v5741
        %5828 = vmatmul.mubr.f32.gmra.mxu0 %v5740
        %v5829 = vpop.f32.mrf.mxu0
        %v5830 = vadd.f32 %v5761, %v5829
        %v5831 = vpop.f32.mrf.mxu0
        %5832 = vmatprep.mubr.f32.mxu0 %v5743
        %5833 = vmatmul.mubr.f32.gmra.mxu0 %v5742
        %v5834 = vpop.f32.mrf.mxu0
        %v5835 = vadd.f32 %v5761, %v5834
        %v5836 = vpop.f32.mrf.mxu0
        %5837 = vmatprep.mubr.f32.mxu0 %v5745
        %5838 = vmatmul.mubr.f32.gmra.mxu0 %v5744
        %v5839 = vpop.f32.mrf.mxu0
        %v5840 = vadd.f32 %v5761, %v5839
        %v5841 = vpop.f32.mrf.mxu0
        %5842 = vmatprep.mubr.f32.mxu0 %v5747
        %5843 = vmatmul.mubr.f32.gmra.mxu0 %v5746
        %v5844 = vpop.f32.mrf.mxu0
        %v5845 = vadd.f32 %v5761, %v5844
        %v5846 = vpop.f32.mrf.mxu0
        %5847 = vmatprep.mubr.f32.mxu0 %v5749
        %5848 = vmatmul.mubr.f32.gmra.mxu0 %v5748
        %v5849 = vpop.f32.mrf.mxu0
        %v5850 = vadd.f32 %v5761, %v5849
        %v5851 = vpop.f32.mrf.mxu0
        %5852 = vmatprep.mubr.f32.mxu0 %v5751
        %5853 = vmatmul.mubr.f32.gmra.mxu0 %v5750
        %v5854 = vpop.f32.mrf.mxu0
        %v5855 = vadd.f32 %v5761, %v5854
        %v5856 = vpop.f32.mrf.mxu0
        %5857 = vmatprep.mubr.f32.mxu0 %v5753
        %5858 = vmatmul.mubr.f32.gmra.mxu0 %v5752
        %v5859 = vpop.f32.mrf.mxu0
        %v5860 = vadd.f32 %v5761, %v5859
        %v5861 = vpop.f32.mrf.mxu0
        %5862 = vmatprep.mubr.f32.mxu0 %v5755
        %5863 = vmatmul.mubr.f32.gmra.mxu0 %v5754
        %v5864 = vpop.f32.mrf.mxu0
        %v5865 = vadd.f32 %v5761, %v5864
        %v5866 = vpop.f32.mrf.mxu0
        %5867 = vdwg.mxu0
        %v5868 = vmax.f32 %v5830, 0.0
        %v5869 = vmax.f32 %v5835, 0.0
        %v5870 = vmax.f32 %v5840, 0.0
        %v5871 = vmax.f32 %v5845, 0.0
        %v5872 = vmax.f32 %v5850, 0.0
        %v5873 = vmax.f32 %v5855, 0.0
        %v5874 = vmax.f32 %v5860, 0.0
        %v5875 = vmax.f32 %v5865, 0.0
        %vm5876 = vcmask 261120
        %5877 = vst.msk [vmem:[#allocation3] sm:$0xff] %vm5876, 0.0
        %vm5878 = vcmask 254976
        %5879 = vst.msk [vmem:[#allocation3 + $0x8] sm:$0x3] %vm5878, 0.0
        %5880 = vst.msk [vmem:[#allocation3 + $0x10] sm:$0xff] %vm5876, 0.0
        %5881 = vst.msk [vmem:[#allocation3 + $0x18] sm:$0x3] %vm5878, 0.0
        %5882 = vst.msk [vmem:[#allocation3 + $0x20] sm:$0xff] %vm5876, 0.0
        %5883 = vst.msk [vmem:[#allocation3 + $0x28] sm:$0x3] %vm5878, 0.0
        %5884 = vst.msk [vmem:[#allocation3 + $0x30] sm:$0xff] %vm5876, 0.0
        %5885 = vst.msk [vmem:[#allocation3 + $0x38] sm:$0x3] %vm5878, 0.0
        %5886 = vst.msk [vmem:[#allocation3 + $0x40] sm:$0xff] %vm5876, 0.0
        %5887 = vst.msk [vmem:[#allocation3 + $0x48] sm:$0x3] %vm5878, 0.0
        %5888 = vst.msk [vmem:[#allocation3 + $0x50] sm:$0xff] %vm5876, 0.0
        %5889 = vst.msk [vmem:[#allocation3 + $0x58] sm:$0x3] %vm5878, 0.0
        %5890 = vst.msk [vmem:[#allocation3 + $0x60] sm:$0xff] %vm5876, 0.0
        %5891 = vst.msk [vmem:[#allocation3 + $0x68] sm:$0x3] %vm5878, 0.0
        %5892 = vst.msk [vmem:[#allocation3 + $0x70] sm:$0xff] %vm5876, 0.0
        %5893 = vst.msk [vmem:[#allocation3 + $0x78] sm:$0x3] %vm5878, 0.0
        %5894 = vst.msk [vmem:[#allocation3 + $0x80] sm:$0xff] %vm5876, 0.0
        %5895 = vst.msk [vmem:[#allocation3 + $0x88] sm:$0x3] %vm5878, 0.0
        %5896 = vst.msk [vmem:[#allocation3 + $0x90] sm:$0xff] %vm5876, 0.0
        %5897 = vst.msk [vmem:[#allocation3 + $0x98] sm:$0x3] %vm5878, 0.0
        %s5898 = scalar_lea.vmem [#allocation3], 16
        %5899 = vst.msk [vmem:[%s5898 + $0x1] sm:$0xff] %vm5876, %v5868
        %5900 = vst.msk [vmem:[%s5898 + $0x11] sm:$0xff] %vm5876, %v5869
        %5901 = vst.msk [vmem:[%s5898 + $0x21] sm:$0xff] %vm5876, %v5870
        %5902 = vst.msk [vmem:[%s5898 + $0x31] sm:$0xff] %vm5876, %v5871
        %5903 = vst.msk [vmem:[%s5898 + $0x41] sm:$0xff] %vm5876, %v5872
        %5904 = vst.msk [vmem:[%s5898 + $0x51] sm:$0xff] %vm5876, %v5873
        %5905 = vst.msk [vmem:[%s5898 + $0x61] sm:$0xff] %vm5876, %v5874
        %5906 = vst.msk [vmem:[%s5898 + $0x71] sm:$0xff] %vm5876, %v5875
        %v5907 = vld [vmem:[#allocation3] sm:$0xff]
        %v5908 = vld [vmem:[#allocation3 + $0x10] sm:$0xff]
        %v5909 = vld [vmem:[#allocation3 + $0x20] sm:$0xff]
        %v5910 = vld [vmem:[#allocation3 + $0x30] sm:$0xff]
        %v5911 = vld [vmem:[#allocation3 + $0x40] sm:$0xff]
        %v5912 = vld [vmem:[#allocation3 + $0x50] sm:$0xff]
        %v5913 = vld [vmem:[#allocation3 + $0x60] sm:$0xff]
        %v5914 = vld [vmem:[#allocation3 + $0x70] sm:$0xff]
        %v5915 = vpack.c.bf16 %v5908, %v5907
        %v5916 = vpack.c.bf16 %v5910, %v5909
        %v5917 = vpack.c.bf16 %v5912, %v5911
        %v5918 = vpack.c.bf16 %v5914, %v5913
        %v5919 = vld [vmem:[%s6] sm:$0xf]
        %v5920 = vld [vmem:[%s6 + $0x4] sm:$0xf]
        %v5921 = vld [vmem:[%s6 + $0x8] sm:$0xf]
        %v5922 = vld [vmem:[%s6 + $0xc] sm:$0xf]
        %v5923 = vld [vmem:[#allocation3 + $0x1] sm:$0xff]
        %v5924 = vld [vmem:[#allocation3 + $0x11] sm:$0xff]
        %v5925 = vld [vmem:[#allocation3 + $0x21] sm:$0xff]
        %v5926 = vld [vmem:[#allocation3 + $0x31] sm:$0xff]
        %v5927 = vld [vmem:[#allocation3 + $0x41] sm:$0xff]
        %v5928 = vld [vmem:[#allocation3 + $0x51] sm:$0xff]
        %v5929 = vld [vmem:[#allocation3 + $0x61] sm:$0xff]
        %v5930 = vld [vmem:[#allocation3 + $0x71] sm:$0xff]
        %v5931 = vpack.c.bf16 %v5924, %v5923
        %v5932 = vpack.c.bf16 %v5926, %v5925
        %v5933 = vpack.c.bf16 %v5928, %v5927
        %v5934 = vpack.c.bf16 %v5930, %v5929
        %v5935 = vld [vmem:[%s6 + $0x10] sm:$0xf]
        %v5936 = vld [vmem:[%s6 + $0x14] sm:$0xf]
        %v5937 = vld [vmem:[%s6 + $0x18] sm:$0xf]
        %v5938 = vld [vmem:[%s6 + $0x1c] sm:$0xf]
        %v5943 = vunpack.c.l.b16 %v5935
        %v5944 = vunpack.c.l.b16 %v5936
        %v5945 = vunpack.c.l.b16 %v5937
        %v5946 = vunpack.c.l.b16 %v5938
        %v5947 = vpack.c.b16 %v5944, %v5943
        %v5948 = vpack.c.b16 %v5946, %v5945
        %v5952 = vsel %vm5876, %v5931, 0
        %v5955 = vsel %vm5876, %v5932, 0
        %v5958 = vsel %vm5876, %v5933, 0
        %v5961 = vsel %vm5876, %v5934, 0
        %5963 = vmatprep.subr.bf16.mxu0 0
        %5964 = vmatpush1.bf16.msra.mxu0 0
        %5965 = vmatprep.subr.bf16.mxu0 0
        %5966 = vmatpush1.bf16.msra.mxu0 0
        %5967 = vmatprep.subr.bf16.mxu0 0
        %5968 = vmatpush1.bf16.msra.mxu0 0
        %5969 = vmatprep.subr.bf16.mxu0 0
        %5970 = vmatpush1.bf16.msra.mxu0 0
        %5971 = vmatprep.subr.bf16.mxu0 0
        %5972 = vmatpush1.bf16.msra.mxu0 0
        %5973 = vmatprep.subr.bf16.mxu0 0
        %5974 = vmatpush1.bf16.msra.mxu0 0
        %5975 = vmatprep.subr.bf16.mxu0 0
        %5976 = vmatpush1.bf16.msra.mxu0 %v5948
        %5977 = vmatprep.subr.bf16.mxu0 0
        %5978 = vmatpush1.bf16.msra.mxu0 %v5947
        %5979 = vmatprep.subr.bf16.mxu0 0
        %5980 = vmatpush2.bf16.msra.mxu0 0
        %5981 = vmatprep.subr.bf16.mxu0 0
        %5982 = vmatpush2.bf16.msra.mxu0 0
        %5983 = vmatprep.subr.bf16.mxu0 0
        %5984 = vmatpush2.bf16.msra.mxu0 0
        %5985 = vmatprep.subr.bf16.mxu0 0
        %5986 = vmatpush2.bf16.msra.mxu0 0
        %5987 = vmatprep.subr.bf16.mxu0 0
        %5988 = vmatpush2.bf16.msra.mxu0 0
        %5989 = vmatprep.subr.bf16.mxu0 0
        %5990 = vmatpush2.bf16.msra.mxu0 0
        %5991 = vmatprep.subr.bf16.mxu0 0
        %5992 = vmatpush2.bf16.msra.mxu0 0
        %5993 = vmatprep.subr.bf16.mxu0 0
        %5994 = vmatpush2.bf16.msra.mxu0 0
        %5995 = vmatprep.mubr.bf16.mxu0 0
        %5996 = vmatmul.mubr.bf16.gmra.mxu0 %v5952
        %v5997 = vpop.f32.mrf.mxu0
        %v5998 = vadd.f32 0.0, %v5997
        %v5999 = vpop.f32.mrf.mxu0
        %v6000 = vpop.f32.mrf.mxu0
        %v6001 = vadd.f32 0.0, %v6000
        %v6002 = vpop.f32.mrf.mxu0
        %6003 = vmatprep.mubr.bf16.mxu0 0
        %6004 = vmatmul.mubr.bf16.gmra.mxu0 %v5955
        %v6005 = vpop.f32.mrf.mxu0
        %v6006 = vadd.f32 0.0, %v6005
        %v6007 = vpop.f32.mrf.mxu0
        %v6008 = vpop.f32.mrf.mxu0
        %v6009 = vadd.f32 0.0, %v6008
        %v6010 = vpop.f32.mrf.mxu0
        %6011 = vmatprep.mubr.bf16.mxu0 0
        %6012 = vmatmul.mubr.bf16.gmra.mxu0 %v5958
        %v6013 = vpop.f32.mrf.mxu0
        %v6014 = vadd.f32 0.0, %v6013
        %v6015 = vpop.f32.mrf.mxu0
        %v6016 = vpop.f32.mrf.mxu0
        %v6017 = vadd.f32 0.0, %v6016
        %v6018 = vpop.f32.mrf.mxu0
        %6019 = vmatprep.mubr.bf16.mxu0 0
        %6020 = vmatmul.mubr.bf16.gmra.mxu0 %v5961
        %v6021 = vpop.f32.mrf.mxu0
        %v6022 = vadd.f32 0.0, %v6021
        %v6023 = vpop.f32.mrf.mxu0
        %v6024 = vpop.f32.mrf.mxu0
        %v6025 = vadd.f32 0.0, %v6024
        %v6026 = vpop.f32.mrf.mxu0
        %6027 = vdwg.mxu0
        %v6032 = vunpack.c.l.b16 %v5919
        %v6033 = vunpack.c.l.b16 %v5920
        %v6034 = vunpack.c.l.b16 %v5921
        %v6035 = vunpack.c.l.b16 %v5922
        %v6036 = vpack.c.b16 %v6033, %v6032
        %v6037 = vpack.c.b16 %v6035, %v6034
        %v6041 = vsel %vm5876, %v5915, 0
        %v6044 = vsel %vm5876, %v5916, 0
        %v6047 = vsel %vm5876, %v5917, 0
        %v6050 = vsel %vm5876, %v5918, 0
        %6052 = vmatprep.subr.bf16.mxu0 0
        %6053 = vmatpush1.bf16.msra.mxu0 0
        %6054 = vmatprep.subr.bf16.mxu0 0
        %6055 = vmatpush1.bf16.msra.mxu0 0
        %6056 = vmatprep.subr.bf16.mxu0 0
        %6057 = vmatpush1.bf16.msra.mxu0 0
        %6058 = vmatprep.subr.bf16.mxu0 0
        %6059 = vmatpush1.bf16.msra.mxu0 0
        %6060 = vmatprep.subr.bf16.mxu0 0
        %6061 = vmatpush1.bf16.msra.mxu0 0
        %6062 = vmatprep.subr.bf16.mxu0 0
        %6063 = vmatpush1.bf16.msra.mxu0 0
        %6064 = vmatprep.subr.bf16.mxu0 0
        %6065 = vmatpush1.bf16.msra.mxu0 %v6037
        %6066 = vmatprep.subr.bf16.mxu0 0
        %6067 = vmatpush1.bf16.msra.mxu0 %v6036
        %6068 = vmatprep.subr.bf16.mxu0 0
        %6069 = vmatpush2.bf16.msra.mxu0 0
        %6070 = vmatprep.subr.bf16.mxu0 0
        %6071 = vmatpush2.bf16.msra.mxu0 0
        %6072 = vmatprep.subr.bf16.mxu0 0
        %6073 = vmatpush2.bf16.msra.mxu0 0
        %6074 = vmatprep.subr.bf16.mxu0 0
        %6075 = vmatpush2.bf16.msra.mxu0 0
        %6076 = vmatprep.subr.bf16.mxu0 0
        %6077 = vmatpush2.bf16.msra.mxu0 0
        %6078 = vmatprep.subr.bf16.mxu0 0
        %6079 = vmatpush2.bf16.msra.mxu0 0
        %6080 = vmatprep.subr.bf16.mxu0 0
        %6081 = vmatpush2.bf16.msra.mxu0 0
        %6082 = vmatprep.subr.bf16.mxu0 0
        %6083 = vmatpush2.bf16.msra.mxu0 0
        %6084 = vmatprep.mubr.bf16.mxu0 0
        %6085 = vmatmul.mubr.bf16.gmra.mxu0 %v6041
        %v6086 = vpop.f32.mrf.mxu0
        %v6087 = vadd.f32 %v5998, %v6086
        %v6088 = vpop.f32.mrf.mxu0
        %v6089 = vpop.f32.mrf.mxu0
        %v6090 = vadd.f32 %v6001, %v6089
        %v6091 = vpop.f32.mrf.mxu0
        %6092 = vmatprep.mubr.bf16.mxu0 0
        %6093 = vmatmul.mubr.bf16.gmra.mxu0 %v6044
        %v6094 = vpop.f32.mrf.mxu0
        %v6095 = vadd.f32 %v6006, %v6094
        %v6096 = vpop.f32.mrf.mxu0
        %v6097 = vpop.f32.mrf.mxu0
        %v6098 = vadd.f32 %v6009, %v6097
        %v6099 = vpop.f32.mrf.mxu0
        %6100 = vmatprep.mubr.bf16.mxu0 0
        %6101 = vmatmul.mubr.bf16.gmra.mxu0 %v6047
        %v6102 = vpop.f32.mrf.mxu0
        %v6103 = vadd.f32 %v6014, %v6102
        %v6104 = vpop.f32.mrf.mxu0
        %v6105 = vpop.f32.mrf.mxu0
        %v6106 = vadd.f32 %v6017, %v6105
        %v6107 = vpop.f32.mrf.mxu0
        %6108 = vmatprep.mubr.bf16.mxu0 0
        %6109 = vmatmul.mubr.bf16.gmra.mxu0 %v6050
        %v6110 = vpop.f32.mrf.mxu0
        %v6111 = vadd.f32 %v6022, %v6110
        %v6112 = vpop.f32.mrf.mxu0
        %v6113 = vpop.f32.mrf.mxu0
        %v6114 = vadd.f32 %v6025, %v6113
        %v6115 = vpop.f32.mrf.mxu0
        %6116 = vdwg.mxu0
        %v6117 = vld [vmem:[#allocation3 + $0x2] sm:$0xff]
        %v6118 = vld [vmem:[#allocation3 + $0x12] sm:$0xff]
        %v6119 = vld [vmem:[#allocation3 + $0x22] sm:$0xff]
        %v6120 = vld [vmem:[#allocation3 + $0x32] sm:$0xff]
        %v6121 = vld [vmem:[#allocation3 + $0x42] sm:$0xff]
        %v6122 = vld [vmem:[#allocation3 + $0x52] sm:$0xff]
        %v6123 = vld [vmem:[#allocation3 + $0x62] sm:$0xff]
        %v6124 = vld [vmem:[#allocation3 + $0x72] sm:$0xff]
        %v6125 = vpack.c.bf16 %v6118, %v6117
        %v6126 = vpack.c.bf16 %v6120, %v6119
        %v6127 = vpack.c.bf16 %v6122, %v6121
        %v6128 = vpack.c.bf16 %v6124, %v6123
        %v6129 = vld [vmem:[%s6 + $0x20] sm:$0xf]
        %v6130 = vld [vmem:[%s6 + $0x24] sm:$0xf]
        %v6131 = vld [vmem:[%s6 + $0x28] sm:$0xf]
        %v6132 = vld [vmem:[%s6 + $0x2c] sm:$0xf]
        %v6137 = vunpack.c.l.b16 %v6129
        %v6138 = vunpack.c.l.b16 %v6130
        %v6139 = vunpack.c.l.b16 %v6131
        %v6140 = vunpack.c.l.b16 %v6132
        %v6141 = vpack.c.b16 %v6138, %v6137
        %v6142 = vpack.c.b16 %v6140, %v6139
        %v6146 = vsel %vm5876, %v6125, 0
        %v6149 = vsel %vm5876, %v6126, 0
        %v6152 = vsel %vm5876, %v6127, 0
        %v6155 = vsel %vm5876, %v6128, 0
        %6157 = vmatprep.subr.bf16.mxu0 0
        %6158 = vmatpush1.bf16.msra.mxu0 0
        %6159 = vmatprep.subr.bf16.mxu0 0
        %6160 = vmatpush1.bf16.msra.mxu0 0
        %6161 = vmatprep.subr.bf16.mxu0 0
        %6162 = vmatpush1.bf16.msra.mxu0 0
        %6163 = vmatprep.subr.bf16.mxu0 0
        %6164 = vmatpush1.bf16.msra.mxu0 0
        %6165 = vmatprep.subr.bf16.mxu0 0
        %6166 = vmatpush1.bf16.msra.mxu0 0
        %6167 = vmatprep.subr.bf16.mxu0 0
        %6168 = vmatpush1.bf16.msra.mxu0 0
        %6169 = vmatprep.subr.bf16.mxu0 0
        %6170 = vmatpush1.bf16.msra.mxu0 %v6142
        %6171 = vmatprep.subr.bf16.mxu0 0
        %6172 = vmatpush1.bf16.msra.mxu0 %v6141
        %6173 = vmatprep.subr.bf16.mxu0 0
        %6174 = vmatpush2.bf16.msra.mxu0 0
        %6175 = vmatprep.subr.bf16.mxu0 0
        %6176 = vmatpush2.bf16.msra.mxu0 0
        %6177 = vmatprep.subr.bf16.mxu0 0
        %6178 = vmatpush2.bf16.msra.mxu0 0
        %6179 = vmatprep.subr.bf16.mxu0 0
        %6180 = vmatpush2.bf16.msra.mxu0 0
        %6181 = vmatprep.subr.bf16.mxu0 0
        %6182 = vmatpush2.bf16.msra.mxu0 0
        %6183 = vmatprep.subr.bf16.mxu0 0
        %6184 = vmatpush2.bf16.msra.mxu0 0
        %6185 = vmatprep.subr.bf16.mxu0 0
        %6186 = vmatpush2.bf16.msra.mxu0 0
        %6187 = vmatprep.subr.bf16.mxu0 0
        %6188 = vmatpush2.bf16.msra.mxu0 0
        %6189 = vmatprep.mubr.bf16.mxu0 0
        %6190 = vmatmul.mubr.bf16.gmra.mxu0 %v6146
        %v6191 = vpop.f32.mrf.mxu0
        %v6192 = vadd.f32 0.0, %v6191
        %v6193 = vpop.f32.mrf.mxu0
        %v6194 = vpop.f32.mrf.mxu0
        %v6195 = vadd.f32 0.0, %v6194
        %v6196 = vpop.f32.mrf.mxu0
        %6197 = vmatprep.mubr.bf16.mxu0 0
        %6198 = vmatmul.mubr.bf16.gmra.mxu0 %v6149
        %v6199 = vpop.f32.mrf.mxu0
        %v6200 = vadd.f32 0.0, %v6199
        %v6201 = vpop.f32.mrf.mxu0
        %v6202 = vpop.f32.mrf.mxu0
        %v6203 = vadd.f32 0.0, %v6202
        %v6204 = vpop.f32.mrf.mxu0
        %6205 = vmatprep.mubr.bf16.mxu0 0
        %6206 = vmatmul.mubr.bf16.gmra.mxu0 %v6152
        %v6207 = vpop.f32.mrf.mxu0
        %v6208 = vadd.f32 0.0, %v6207
        %v6209 = vpop.f32.mrf.mxu0
        %v6210 = vpop.f32.mrf.mxu0
        %v6211 = vadd.f32 0.0, %v6210
        %v6212 = vpop.f32.mrf.mxu0
        %6213 = vmatprep.mubr.bf16.mxu0 0
        %6214 = vmatmul.mubr.bf16.gmra.mxu0 %v6155
        %v6215 = vpop.f32.mrf.mxu0
        %v6216 = vadd.f32 0.0, %v6215
        %v6217 = vpop.f32.mrf.mxu0
        %v6218 = vpop.f32.mrf.mxu0
        %v6219 = vadd.f32 0.0, %v6218
        %v6220 = vpop.f32.mrf.mxu0
        %6221 = vdwg.mxu0
        %v6222 = vadd.f32 %v6087, %v6192
        %v6223 = vadd.f32 %v6090, %v6195
        %v6224 = vadd.f32 %v6095, %v6200
        %v6225 = vadd.f32 %v6098, %v6203
        %v6226 = vadd.f32 %v6103, %v6208
        %v6227 = vadd.f32 %v6106, %v6211
        %v6228 = vadd.f32 %v6111, %v6216
        %v6229 = vadd.f32 %v6114, %v6219
        %v6230 = vld [vmem:[%s5898] sm:$0xff]
        %v6231 = vld [vmem:[%s5898 + $0x10] sm:$0xff]
        %v6232 = vld [vmem:[%s5898 + $0x20] sm:$0xff]
        %v6233 = vld [vmem:[%s5898 + $0x30] sm:$0xff]
        %v6234 = vld [vmem:[%s5898 + $0x40] sm:$0xff]
        %v6235 = vld [vmem:[%s5898 + $0x50] sm:$0xff]
        %v6236 = vld [vmem:[%s5898 + $0x60] sm:$0xff]
        %v6237 = vld [vmem:[%s5898 + $0x70] sm:$0xff]
        %v6238 = vpack.c.bf16 %v6231, %v6230
        %v6239 = vpack.c.bf16 %v6233, %v6232
        %v6240 = vpack.c.bf16 %v6235, %v6234
        %v6241 = vpack.c.bf16 %v6237, %v6236
        %v6242 = vld [vmem:[%s6 + $0x30] sm:$0xf]
        %v6243 = vld [vmem:[%s6 + $0x34] sm:$0xf]
        %v6244 = vld [vmem:[%s6 + $0x38] sm:$0xf]
        %v6245 = vld [vmem:[%s6 + $0x3c] sm:$0xf]
        %v6250 = vunpack.c.l.b16 %v6242
        %v6251 = vunpack.c.l.b16 %v6243
        %v6252 = vunpack.c.l.b16 %v6244
        %v6253 = vunpack.c.l.b16 %v6245
        %v6254 = vpack.c.b16 %v6251, %v6250
        %v6255 = vpack.c.b16 %v6253, %v6252
        %v6259 = vsel %vm5876, %v6238, 0
        %v6262 = vsel %vm5876, %v6239, 0
        %v6265 = vsel %vm5876, %v6240, 0
        %v6268 = vsel %vm5876, %v6241, 0
        %6270 = vmatprep.subr.bf16.mxu0 0
        %6271 = vmatpush1.bf16.msra.mxu0 0
        %6272 = vmatprep.subr.bf16.mxu0 0
        %6273 = vmatpush1.bf16.msra.mxu0 0
        %6274 = vmatprep.subr.bf16.mxu0 0
        %6275 = vmatpush1.bf16.msra.mxu0 0
        %6276 = vmatprep.subr.bf16.mxu0 0
        %6277 = vmatpush1.bf16.msra.mxu0 0
        %6278 = vmatprep.subr.bf16.mxu0 0
        %6279 = vmatpush1.bf16.msra.mxu0 0
        %6280 = vmatprep.subr.bf16.mxu0 0
        %6281 = vmatpush1.bf16.msra.mxu0 0
        %6282 = vmatprep.subr.bf16.mxu0 0
        %6283 = vmatpush1.bf16.msra.mxu0 %v6255
        %6284 = vmatprep.subr.bf16.mxu0 0
        %6285 = vmatpush1.bf16.msra.mxu0 %v6254
        %6286 = vmatprep.subr.bf16.mxu0 0
        %6287 = vmatpush2.bf16.msra.mxu0 0
        %6288 = vmatprep.subr.bf16.mxu0 0
        %6289 = vmatpush2.bf16.msra.mxu0 0
        %6290 = vmatprep.subr.bf16.mxu0 0
        %6291 = vmatpush2.bf16.msra.mxu0 0
        %6292 = vmatprep.subr.bf16.mxu0 0
        %6293 = vmatpush2.bf16.msra.mxu0 0
        %6294 = vmatprep.subr.bf16.mxu0 0
        %6295 = vmatpush2.bf16.msra.mxu0 0
        %6296 = vmatprep.subr.bf16.mxu0 0
        %6297 = vmatpush2.bf16.msra.mxu0 0
        %6298 = vmatprep.subr.bf16.mxu0 0
        %6299 = vmatpush2.bf16.msra.mxu0 0
        %6300 = vmatprep.subr.bf16.mxu0 0
        %6301 = vmatpush2.bf16.msra.mxu0 0
        %6302 = vmatprep.mubr.bf16.mxu0 0
        %6303 = vmatmul.mubr.bf16.gmra.mxu0 %v6259
        %v6304 = vpop.f32.mrf.mxu0
        %v6305 = vadd.f32 0.0, %v6304
        %v6306 = vpop.f32.mrf.mxu0
        %v6307 = vpop.f32.mrf.mxu0
        %v6308 = vadd.f32 0.0, %v6307
        %v6309 = vpop.f32.mrf.mxu0
        %6310 = vmatprep.mubr.bf16.mxu0 0
        %6311 = vmatmul.mubr.bf16.gmra.mxu0 %v6262
        %v6312 = vpop.f32.mrf.mxu0
        %v6313 = vadd.f32 0.0, %v6312
        %v6314 = vpop.f32.mrf.mxu0
        %v6315 = vpop.f32.mrf.mxu0
        %v6316 = vadd.f32 0.0, %v6315
        %v6317 = vpop.f32.mrf.mxu0
        %6318 = vmatprep.mubr.bf16.mxu0 0
        %6319 = vmatmul.mubr.bf16.gmra.mxu0 %v6265
        %v6320 = vpop.f32.mrf.mxu0
        %v6321 = vadd.f32 0.0, %v6320
        %v6322 = vpop.f32.mrf.mxu0
        %v6323 = vpop.f32.mrf.mxu0
        %v6324 = vadd.f32 0.0, %v6323
        %v6325 = vpop.f32.mrf.mxu0
        %6326 = vmatprep.mubr.bf16.mxu0 0
        %6327 = vmatmul.mubr.bf16.gmra.mxu0 %v6268
        %v6328 = vpop.f32.mrf.mxu0
        %v6329 = vadd.f32 0.0, %v6328
        %v6330 = vpop.f32.mrf.mxu0
        %v6331 = vpop.f32.mrf.mxu0
        %v6332 = vadd.f32 0.0, %v6331
        %v6333 = vpop.f32.mrf.mxu0
        %6334 = vdwg.mxu0
        %v6335 = vadd.f32 %v6222, %v6305
        %v6336 = vadd.f32 %v6223, %v6308
        %v6337 = vadd.f32 %v6224, %v6313
        %v6338 = vadd.f32 %v6225, %v6316
        %v6339 = vadd.f32 %v6226, %v6321
        %v6340 = vadd.f32 %v6227, %v6324
        %v6341 = vadd.f32 %v6228, %v6329
        %v6342 = vadd.f32 %v6229, %v6332
        %v6343 = vld [vmem:[%s5898 + $0x1] sm:$0xff]
        %v6344 = vld [vmem:[%s5898 + $0x11] sm:$0xff]
        %v6345 = vld [vmem:[%s5898 + $0x21] sm:$0xff]
        %v6346 = vld [vmem:[%s5898 + $0x31] sm:$0xff]
        %v6347 = vld [vmem:[%s5898 + $0x41] sm:$0xff]
        %v6348 = vld [vmem:[%s5898 + $0x51] sm:$0xff]
        %v6349 = vld [vmem:[%s5898 + $0x61] sm:$0xff]
        %v6350 = vld [vmem:[%s5898 + $0x71] sm:$0xff]
        %v6351 = vpack.c.bf16 %v6344, %v6343
        %v6352 = vpack.c.bf16 %v6346, %v6345
        %v6353 = vpack.c.bf16 %v6348, %v6347
        %v6354 = vpack.c.bf16 %v6350, %v6349
        %v6355 = vld [vmem:[%s6 + $0x40] sm:$0xf]
        %v6356 = vld [vmem:[%s6 + $0x44] sm:$0xf]
        %v6357 = vld [vmem:[%s6 + $0x48] sm:$0xf]
        %v6358 = vld [vmem:[%s6 + $0x4c] sm:$0xf]
        %v6363 = vunpack.c.l.b16 %v6355
        %v6364 = vunpack.c.l.b16 %v6356
        %v6365 = vunpack.c.l.b16 %v6357
        %v6366 = vunpack.c.l.b16 %v6358
        %v6367 = vpack.c.b16 %v6364, %v6363
        %v6368 = vpack.c.b16 %v6366, %v6365
        %v6372 = vsel %vm5876, %v6351, 0
        %v6375 = vsel %vm5876, %v6352, 0
        %v6378 = vsel %vm5876, %v6353, 0
        %v6381 = vsel %vm5876, %v6354, 0
        %6383 = vmatprep.subr.bf16.mxu0 0
        %6384 = vmatpush1.bf16.msra.mxu0 0
        %6385 = vmatprep.subr.bf16.mxu0 0
        %6386 = vmatpush1.bf16.msra.mxu0 0
        %6387 = vmatprep.subr.bf16.mxu0 0
        %6388 = vmatpush1.bf16.msra.mxu0 0
        %6389 = vmatprep.subr.bf16.mxu0 0
        %6390 = vmatpush1.bf16.msra.mxu0 0
        %6391 = vmatprep.subr.bf16.mxu0 0
        %6392 = vmatpush1.bf16.msra.mxu0 0
        %6393 = vmatprep.subr.bf16.mxu0 0
        %6394 = vmatpush1.bf16.msra.mxu0 0
        %6395 = vmatprep.subr.bf16.mxu0 0
        %6396 = vmatpush1.bf16.msra.mxu0 %v6368
        %6397 = vmatprep.subr.bf16.mxu0 0
        %6398 = vmatpush1.bf16.msra.mxu0 %v6367
        %6399 = vmatprep.subr.bf16.mxu0 0
        %6400 = vmatpush2.bf16.msra.mxu0 0
        %6401 = vmatprep.subr.bf16.mxu0 0
        %6402 = vmatpush2.bf16.msra.mxu0 0
        %6403 = vmatprep.subr.bf16.mxu0 0
        %6404 = vmatpush2.bf16.msra.mxu0 0
        %6405 = vmatprep.subr.bf16.mxu0 0
        %6406 = vmatpush2.bf16.msra.mxu0 0
        %6407 = vmatprep.subr.bf16.mxu0 0
        %6408 = vmatpush2.bf16.msra.mxu0 0
        %6409 = vmatprep.subr.bf16.mxu0 0
        %6410 = vmatpush2.bf16.msra.mxu0 0
        %6411 = vmatprep.subr.bf16.mxu0 0
        %6412 = vmatpush2.bf16.msra.mxu0 0
        %6413 = vmatprep.subr.bf16.mxu0 0
        %6414 = vmatpush2.bf16.msra.mxu0 0
        %6415 = vmatprep.mubr.bf16.mxu0 0
        %6416 = vmatmul.mubr.bf16.gmra.mxu0 %v6372
        %v6417 = vpop.f32.mrf.mxu0
        %v6418 = vadd.f32 0.0, %v6417
        %v6419 = vpop.f32.mrf.mxu0
        %v6420 = vpop.f32.mrf.mxu0
        %v6421 = vadd.f32 0.0, %v6420
        %v6422 = vpop.f32.mrf.mxu0
        %6423 = vmatprep.mubr.bf16.mxu0 0
        %6424 = vmatmul.mubr.bf16.gmra.mxu0 %v6375
        %v6425 = vpop.f32.mrf.mxu0
        %v6426 = vadd.f32 0.0, %v6425
        %v6427 = vpop.f32.mrf.mxu0
        %v6428 = vpop.f32.mrf.mxu0
        %v6429 = vadd.f32 0.0, %v6428
        %v6430 = vpop.f32.mrf.mxu0
        %6431 = vmatprep.mubr.bf16.mxu0 0
        %6432 = vmatmul.mubr.bf16.gmra.mxu0 %v6378
        %v6433 = vpop.f32.mrf.mxu0
        %v6434 = vadd.f32 0.0, %v6433
        %v6435 = vpop.f32.mrf.mxu0
        %v6436 = vpop.f32.mrf.mxu0
        %v6437 = vadd.f32 0.0, %v6436
        %v6438 = vpop.f32.mrf.mxu0
        %6439 = vmatprep.mubr.bf16.mxu0 0
        %6440 = vmatmul.mubr.bf16.gmra.mxu0 %v6381
        %v6441 = vpop.f32.mrf.mxu0
        %v6442 = vadd.f32 0.0, %v6441
        %v6443 = vpop.f32.mrf.mxu0
        %v6444 = vpop.f32.mrf.mxu0
        %v6445 = vadd.f32 0.0, %v6444
        %v6446 = vpop.f32.mrf.mxu0
        %6447 = vdwg.mxu0
        %v6448 = vadd.f32 %v6335, %v6418
        %v6449 = vadd.f32 %v6336, %v6421
        %v6450 = vadd.f32 %v6337, %v6426
        %v6451 = vadd.f32 %v6338, %v6429
        %v6452 = vadd.f32 %v6339, %v6434
        %v6453 = vadd.f32 %v6340, %v6437
        %v6454 = vadd.f32 %v6341, %v6442
        %v6455 = vadd.f32 %v6342, %v6445
        %v6456 = vld [vmem:[%s5898 + $0x2] sm:$0xff]
        %v6457 = vld [vmem:[%s5898 + $0x12] sm:$0xff]
        %v6458 = vld [vmem:[%s5898 + $0x22] sm:$0xff]
        %v6459 = vld [vmem:[%s5898 + $0x32] sm:$0xff]
        %v6460 = vld [vmem:[%s5898 + $0x42] sm:$0xff]
        %v6461 = vld [vmem:[%s5898 + $0x52] sm:$0xff]
        %v6462 = vld [vmem:[%s5898 + $0x62] sm:$0xff]
        %v6463 = vld [vmem:[%s5898 + $0x72] sm:$0xff]
        %v6464 = vpack.c.bf16 %v6457, %v6456
        %v6465 = vpack.c.bf16 %v6459, %v6458
        %v6466 = vpack.c.bf16 %v6461, %v6460
        %v6467 = vpack.c.bf16 %v6463, %v6462
        %v6468 = vld [vmem:[%s6 + $0x50] sm:$0xf]
        %v6469 = vld [vmem:[%s6 + $0x54] sm:$0xf]
        %v6470 = vld [vmem:[%s6 + $0x58] sm:$0xf]
        %v6471 = vld [vmem:[%s6 + $0x5c] sm:$0xf]
        %v6476 = vunpack.c.l.b16 %v6468
        %v6477 = vunpack.c.l.b16 %v6469
        %v6478 = vunpack.c.l.b16 %v6470
        %v6479 = vunpack.c.l.b16 %v6471
        %v6480 = vpack.c.b16 %v6477, %v6476
        %v6481 = vpack.c.b16 %v6479, %v6478
        %v6485 = vsel %vm5876, %v6464, 0
        %v6488 = vsel %vm5876, %v6465, 0
        %v6491 = vsel %vm5876, %v6466, 0
        %v6494 = vsel %vm5876, %v6467, 0
        %6496 = vmatprep.subr.bf16.mxu0 0
        %6497 = vmatpush1.bf16.msra.mxu0 0
        %6498 = vmatprep.subr.bf16.mxu0 0
        %6499 = vmatpush1.bf16.msra.mxu0 0
        %6500 = vmatprep.subr.bf16.mxu0 0
        %6501 = vmatpush1.bf16.msra.mxu0 0
        %6502 = vmatprep.subr.bf16.mxu0 0
        %6503 = vmatpush1.bf16.msra.mxu0 0
        %6504 = vmatprep.subr.bf16.mxu0 0
        %6505 = vmatpush1.bf16.msra.mxu0 0
        %6506 = vmatprep.subr.bf16.mxu0 0
        %6507 = vmatpush1.bf16.msra.mxu0 0
        %6508 = vmatprep.subr.bf16.mxu0 0
        %6509 = vmatpush1.bf16.msra.mxu0 %v6481
        %6510 = vmatprep.subr.bf16.mxu0 0
        %6511 = vmatpush1.bf16.msra.mxu0 %v6480
        %6512 = vmatprep.subr.bf16.mxu0 0
        %6513 = vmatpush2.bf16.msra.mxu0 0
        %6514 = vmatprep.subr.bf16.mxu0 0
        %6515 = vmatpush2.bf16.msra.mxu0 0
        %6516 = vmatprep.subr.bf16.mxu0 0
        %6517 = vmatpush2.bf16.msra.mxu0 0
        %6518 = vmatprep.subr.bf16.mxu0 0
        %6519 = vmatpush2.bf16.msra.mxu0 0
        %6520 = vmatprep.subr.bf16.mxu0 0
        %6521 = vmatpush2.bf16.msra.mxu0 0
        %6522 = vmatprep.subr.bf16.mxu0 0
        %6523 = vmatpush2.bf16.msra.mxu0 0
        %6524 = vmatprep.subr.bf16.mxu0 0
        %6525 = vmatpush2.bf16.msra.mxu0 0
        %6526 = vmatprep.subr.bf16.mxu0 0
        %6527 = vmatpush2.bf16.msra.mxu0 0
        %6528 = vmatprep.mubr.bf16.mxu0 0
        %6529 = vmatmul.mubr.bf16.gmra.mxu0 %v6485
        %v6530 = vpop.f32.mrf.mxu0
        %v6531 = vadd.f32 0.0, %v6530
        %v6532 = vpop.f32.mrf.mxu0
        %v6533 = vpop.f32.mrf.mxu0
        %v6534 = vadd.f32 0.0, %v6533
        %v6535 = vpop.f32.mrf.mxu0
        %6536 = vmatprep.mubr.bf16.mxu0 0
        %6537 = vmatmul.mubr.bf16.gmra.mxu0 %v6488
        %v6538 = vpop.f32.mrf.mxu0
        %v6539 = vadd.f32 0.0, %v6538
        %v6540 = vpop.f32.mrf.mxu0
        %v6541 = vpop.f32.mrf.mxu0
        %v6542 = vadd.f32 0.0, %v6541
        %v6543 = vpop.f32.mrf.mxu0
        %6544 = vmatprep.mubr.bf16.mxu0 0
        %6545 = vmatmul.mubr.bf16.gmra.mxu0 %v6491
        %v6546 = vpop.f32.mrf.mxu0
        %v6547 = vadd.f32 0.0, %v6546
        %v6548 = vpop.f32.mrf.mxu0
        %v6549 = vpop.f32.mrf.mxu0
        %v6550 = vadd.f32 0.0, %v6549
        %v6551 = vpop.f32.mrf.mxu0
        %6552 = vmatprep.mubr.bf16.mxu0 0
        %6553 = vmatmul.mubr.bf16.gmra.mxu0 %v6494
        %v6554 = vpop.f32.mrf.mxu0
        %v6555 = vadd.f32 0.0, %v6554
        %v6556 = vpop.f32.mrf.mxu0
        %v6557 = vpop.f32.mrf.mxu0
        %v6558 = vadd.f32 0.0, %v6557
        %v6559 = vpop.f32.mrf.mxu0
        %6560 = vdwg.mxu0
        %v6561 = vadd.f32 %v6448, %v6531
        %v6562 = vadd.f32 %v6449, %v6534
        %v6563 = vadd.f32 %v6450, %v6539
        %v6564 = vadd.f32 %v6451, %v6542
        %v6565 = vadd.f32 %v6452, %v6547
        %v6566 = vadd.f32 %v6453, %v6550
        %v6567 = vadd.f32 %v6454, %v6555
        %v6568 = vadd.f32 %v6455, %v6558
        %s6569 = scalar_lea.vmem [#allocation3], 32
        %v6570 = vld [vmem:[%s6569] sm:$0xff]
        %v6571 = vld [vmem:[%s6569 + $0x10] sm:$0xff]
        %v6572 = vld [vmem:[%s6569 + $0x20] sm:$0xff]
        %v6573 = vld [vmem:[%s6569 + $0x30] sm:$0xff]
        %v6574 = vld [vmem:[%s6569 + $0x40] sm:$0xff]
        %v6575 = vld [vmem:[%s6569 + $0x50] sm:$0xff]
        %v6576 = vld [vmem:[%s6569 + $0x60] sm:$0xff]
        %v6577 = vld [vmem:[%s6569 + $0x70] sm:$0xff]
        %v6578 = vpack.c.bf16 %v6571, %v6570
        %v6579 = vpack.c.bf16 %v6573, %v6572
        %v6580 = vpack.c.bf16 %v6575, %v6574
        %v6581 = vpack.c.bf16 %v6577, %v6576
        %v6582 = vld [vmem:[%s6 + $0x60] sm:$0xf]
        %v6583 = vld [vmem:[%s6 + $0x64] sm:$0xf]
        %v6584 = vld [vmem:[%s6 + $0x68] sm:$0xf]
        %v6585 = vld [vmem:[%s6 + $0x6c] sm:$0xf]
        %v6590 = vunpack.c.l.b16 %v6582
        %v6591 = vunpack.c.l.b16 %v6583
        %v6592 = vunpack.c.l.b16 %v6584
        %v6593 = vunpack.c.l.b16 %v6585
        %v6594 = vpack.c.b16 %v6591, %v6590
        %v6595 = vpack.c.b16 %v6593, %v6592
        %v6599 = vsel %vm5876, %v6578, 0
        %v6602 = vsel %vm5876, %v6579, 0
        %v6605 = vsel %vm5876, %v6580, 0
        %v6608 = vsel %vm5876, %v6581, 0
        %6610 = vmatprep.subr.bf16.mxu0 0
        %6611 = vmatpush1.bf16.msra.mxu0 0
        %6612 = vmatprep.subr.bf16.mxu0 0
        %6613 = vmatpush1.bf16.msra.mxu0 0
        %6614 = vmatprep.subr.bf16.mxu0 0
        %6615 = vmatpush1.bf16.msra.mxu0 0
        %6616 = vmatprep.subr.bf16.mxu0 0
        %6617 = vmatpush1.bf16.msra.mxu0 0
        %6618 = vmatprep.subr.bf16.mxu0 0
        %6619 = vmatpush1.bf16.msra.mxu0 0
        %6620 = vmatprep.subr.bf16.mxu0 0
        %6621 = vmatpush1.bf16.msra.mxu0 0
        %6622 = vmatprep.subr.bf16.mxu0 0
        %6623 = vmatpush1.bf16.msra.mxu0 %v6595
        %6624 = vmatprep.subr.bf16.mxu0 0
        %6625 = vmatpush1.bf16.msra.mxu0 %v6594
        %6626 = vmatprep.subr.bf16.mxu0 0
        %6627 = vmatpush2.bf16.msra.mxu0 0
        %6628 = vmatprep.subr.bf16.mxu0 0
        %6629 = vmatpush2.bf16.msra.mxu0 0
        %6630 = vmatprep.subr.bf16.mxu0 0
        %6631 = vmatpush2.bf16.msra.mxu0 0
        %6632 = vmatprep.subr.bf16.mxu0 0
        %6633 = vmatpush2.bf16.msra.mxu0 0
        %6634 = vmatprep.subr.bf16.mxu0 0
        %6635 = vmatpush2.bf16.msra.mxu0 0
        %6636 = vmatprep.subr.bf16.mxu0 0
        %6637 = vmatpush2.bf16.msra.mxu0 0
        %6638 = vmatprep.subr.bf16.mxu0 0
        %6639 = vmatpush2.bf16.msra.mxu0 0
        %6640 = vmatprep.subr.bf16.mxu0 0
        %6641 = vmatpush2.bf16.msra.mxu0 0
        %6642 = vmatprep.mubr.bf16.mxu0 0
        %6643 = vmatmul.mubr.bf16.gmra.mxu0 %v6599
        %v6644 = vpop.f32.mrf.mxu0
        %v6645 = vadd.f32 0.0, %v6644
        %v6646 = vpop.f32.mrf.mxu0
        %v6647 = vpop.f32.mrf.mxu0
        %v6648 = vadd.f32 0.0, %v6647
        %v6649 = vpop.f32.mrf.mxu0
        %6650 = vmatprep.mubr.bf16.mxu0 0
        %6651 = vmatmul.mubr.bf16.gmra.mxu0 %v6602
        %v6652 = vpop.f32.mrf.mxu0
        %v6653 = vadd.f32 0.0, %v6652
        %v6654 = vpop.f32.mrf.mxu0
        %v6655 = vpop.f32.mrf.mxu0
        %v6656 = vadd.f32 0.0, %v6655
        %v6657 = vpop.f32.mrf.mxu0
        %6658 = vmatprep.mubr.bf16.mxu0 0
        %6659 = vmatmul.mubr.bf16.gmra.mxu0 %v6605
        %v6660 = vpop.f32.mrf.mxu0
        %v6661 = vadd.f32 0.0, %v6660
        %v6662 = vpop.f32.mrf.mxu0
        %v6663 = vpop.f32.mrf.mxu0
        %v6664 = vadd.f32 0.0, %v6663
        %v6665 = vpop.f32.mrf.mxu0
        %6666 = vmatprep.mubr.bf16.mxu0 0
        %6667 = vmatmul.mubr.bf16.gmra.mxu0 %v6608
        %v6668 = vpop.f32.mrf.mxu0
        %v6669 = vadd.f32 0.0, %v6668
        %v6670 = vpop.f32.mrf.mxu0
        %v6671 = vpop.f32.mrf.mxu0
        %v6672 = vadd.f32 0.0, %v6671
        %v6673 = vpop.f32.mrf.mxu0
        %6674 = vdwg.mxu0
        %v6675 = vadd.f32 %v6561, %v6645
        %v6676 = vadd.f32 %v6562, %v6648
        %v6677 = vadd.f32 %v6563, %v6653
        %v6678 = vadd.f32 %v6564, %v6656
        %v6679 = vadd.f32 %v6565, %v6661
        %v6680 = vadd.f32 %v6566, %v6664
        %v6681 = vadd.f32 %v6567, %v6669
        %v6682 = vadd.f32 %v6568, %v6672
        %v6683 = vld [vmem:[%s6569 + $0x1] sm:$0xff]
        %v6684 = vld [vmem:[%s6569 + $0x11] sm:$0xff]
        %v6685 = vld [vmem:[%s6569 + $0x21] sm:$0xff]
        %v6686 = vld [vmem:[%s6569 + $0x31] sm:$0xff]
        %v6687 = vld [vmem:[%s6569 + $0x41] sm:$0xff]
        %v6688 = vld [vmem:[%s6569 + $0x51] sm:$0xff]
        %v6689 = vld [vmem:[%s6569 + $0x61] sm:$0xff]
        %v6690 = vld [vmem:[%s6569 + $0x71] sm:$0xff]
        %v6691 = vpack.c.bf16 %v6684, %v6683
        %v6692 = vpack.c.bf16 %v6686, %v6685
        %v6693 = vpack.c.bf16 %v6688, %v6687
        %v6694 = vpack.c.bf16 %v6690, %v6689
        %v6695 = vld [vmem:[%s6 + $0x70] sm:$0xf]
        %v6696 = vld [vmem:[%s6 + $0x74] sm:$0xf]
        %v6697 = vld [vmem:[%s6 + $0x78] sm:$0xf]
        %v6698 = vld [vmem:[%s6 + $0x7c] sm:$0xf]
        %v6703 = vunpack.c.l.b16 %v6695
        %v6704 = vunpack.c.l.b16 %v6696
        %v6705 = vunpack.c.l.b16 %v6697
        %v6706 = vunpack.c.l.b16 %v6698
        %v6707 = vpack.c.b16 %v6704, %v6703
        %v6708 = vpack.c.b16 %v6706, %v6705
        %v6712 = vsel %vm5876, %v6691, 0
        %v6715 = vsel %vm5876, %v6692, 0
        %v6718 = vsel %vm5876, %v6693, 0
        %v6721 = vsel %vm5876, %v6694, 0
        %6723 = vmatprep.subr.bf16.mxu0 0
        %6724 = vmatpush1.bf16.msra.mxu0 0
        %6725 = vmatprep.subr.bf16.mxu0 0
        %6726 = vmatpush1.bf16.msra.mxu0 0
        %6727 = vmatprep.subr.bf16.mxu0 0
        %6728 = vmatpush1.bf16.msra.mxu0 0
        %6729 = vmatprep.subr.bf16.mxu0 0
        %6730 = vmatpush1.bf16.msra.mxu0 0
        %6731 = vmatprep.subr.bf16.mxu0 0
        %6732 = vmatpush1.bf16.msra.mxu0 0
        %6733 = vmatprep.subr.bf16.mxu0 0
        %6734 = vmatpush1.bf16.msra.mxu0 0
        %6735 = vmatprep.subr.bf16.mxu0 0
        %6736 = vmatpush1.bf16.msra.mxu0 %v6708
        %6737 = vmatprep.subr.bf16.mxu0 0
        %6738 = vmatpush1.bf16.msra.mxu0 %v6707
        %6739 = vmatprep.subr.bf16.mxu0 0
        %6740 = vmatpush2.bf16.msra.mxu0 0
        %6741 = vmatprep.subr.bf16.mxu0 0
        %6742 = vmatpush2.bf16.msra.mxu0 0
        %6743 = vmatprep.subr.bf16.mxu0 0
        %6744 = vmatpush2.bf16.msra.mxu0 0
        %6745 = vmatprep.subr.bf16.mxu0 0
        %6746 = vmatpush2.bf16.msra.mxu0 0
        %6747 = vmatprep.subr.bf16.mxu0 0
        %6748 = vmatpush2.bf16.msra.mxu0 0
        %6749 = vmatprep.subr.bf16.mxu0 0
        %6750 = vmatpush2.bf16.msra.mxu0 0
        %6751 = vmatprep.subr.bf16.mxu0 0
        %6752 = vmatpush2.bf16.msra.mxu0 0
        %6753 = vmatprep.subr.bf16.mxu0 0
        %6754 = vmatpush2.bf16.msra.mxu0 0
        %6755 = vmatprep.mubr.bf16.mxu0 0
        %6756 = vmatmul.mubr.bf16.gmra.mxu0 %v6712
        %v6757 = vpop.f32.mrf.mxu0
        %v6758 = vadd.f32 0.0, %v6757
        %v6759 = vpop.f32.mrf.mxu0
        %v6760 = vpop.f32.mrf.mxu0
        %v6761 = vadd.f32 0.0, %v6760
        %v6762 = vpop.f32.mrf.mxu0
        %6763 = vmatprep.mubr.bf16.mxu0 0
        %6764 = vmatmul.mubr.bf16.gmra.mxu0 %v6715
        %v6765 = vpop.f32.mrf.mxu0
        %v6766 = vadd.f32 0.0, %v6765
        %v6767 = vpop.f32.mrf.mxu0
        %v6768 = vpop.f32.mrf.mxu0
        %v6769 = vadd.f32 0.0, %v6768
        %v6770 = vpop.f32.mrf.mxu0
        %6771 = vmatprep.mubr.bf16.mxu0 0
        %6772 = vmatmul.mubr.bf16.gmra.mxu0 %v6718
        %v6773 = vpop.f32.mrf.mxu0
        %v6774 = vadd.f32 0.0, %v6773
        %v6775 = vpop.f32.mrf.mxu0
        %v6776 = vpop.f32.mrf.mxu0
        %v6777 = vadd.f32 0.0, %v6776
        %v6778 = vpop.f32.mrf.mxu0
        %6779 = vmatprep.mubr.bf16.mxu0 0
        %6780 = vmatmul.mubr.bf16.gmra.mxu0 %v6721
        %v6781 = vpop.f32.mrf.mxu0
        %v6782 = vadd.f32 0.0, %v6781
        %v6783 = vpop.f32.mrf.mxu0
        %v6784 = vpop.f32.mrf.mxu0
        %v6785 = vadd.f32 0.0, %v6784
        %v6786 = vpop.f32.mrf.mxu0
        %6787 = vdwg.mxu0
        %v6788 = vadd.f32 %v6675, %v6758
        %v6789 = vadd.f32 %v6676, %v6761
        %v6790 = vadd.f32 %v6677, %v6766
        %v6791 = vadd.f32 %v6678, %v6769
        %v6792 = vadd.f32 %v6679, %v6774
        %v6793 = vadd.f32 %v6680, %v6777
        %v6794 = vadd.f32 %v6681, %v6782
        %v6795 = vadd.f32 %v6682, %v6785
        %v6796 = vld [vmem:[%s6569 + $0x2] sm:$0xff]
        %v6797 = vld [vmem:[%s6569 + $0x12] sm:$0xff]
        %v6798 = vld [vmem:[%s6569 + $0x22] sm:$0xff]
        %v6799 = vld [vmem:[%s6569 + $0x32] sm:$0xff]
        %v6800 = vld [vmem:[%s6569 + $0x42] sm:$0xff]
        %v6801 = vld [vmem:[%s6569 + $0x52] sm:$0xff]
        %v6802 = vld [vmem:[%s6569 + $0x62] sm:$0xff]
        %v6803 = vld [vmem:[%s6569 + $0x72] sm:$0xff]
        %v6804 = vpack.c.bf16 %v6797, %v6796
        %v6805 = vpack.c.bf16 %v6799, %v6798
        %v6806 = vpack.c.bf16 %v6801, %v6800
        %v6807 = vpack.c.bf16 %v6803, %v6802
        %v6808 = vld [vmem:[%s6 + $0x80] sm:$0xf]
        %v6809 = vld [vmem:[%s6 + $0x84] sm:$0xf]
        %v6810 = vld [vmem:[%s6 + $0x88] sm:$0xf]
        %v6811 = vld [vmem:[%s6 + $0x8c] sm:$0xf]
        %v6816 = vunpack.c.l.b16 %v6808
        %v6817 = vunpack.c.l.b16 %v6809
        %v6818 = vunpack.c.l.b16 %v6810
        %v6819 = vunpack.c.l.b16 %v6811
        %v6820 = vpack.c.b16 %v6817, %v6816
        %v6821 = vpack.c.b16 %v6819, %v6818
        %v6825 = vsel %vm5876, %v6804, 0
        %v6828 = vsel %vm5876, %v6805, 0
        %v6831 = vsel %vm5876, %v6806, 0
        %v6834 = vsel %vm5876, %v6807, 0
        %6836 = vmatprep.subr.bf16.mxu0 0
        %6837 = vmatpush1.bf16.msra.mxu0 0
        %6838 = vmatprep.subr.bf16.mxu0 0
        %6839 = vmatpush1.bf16.msra.mxu0 0
        %6840 = vmatprep.subr.bf16.mxu0 0
        %6841 = vmatpush1.bf16.msra.mxu0 0
        %6842 = vmatprep.subr.bf16.mxu0 0
        %6843 = vmatpush1.bf16.msra.mxu0 0
        %6844 = vmatprep.subr.bf16.mxu0 0
        %6845 = vmatpush1.bf16.msra.mxu0 0
        %6846 = vmatprep.subr.bf16.mxu0 0
        %6847 = vmatpush1.bf16.msra.mxu0 0
        %6848 = vmatprep.subr.bf16.mxu0 0
        %6849 = vmatpush1.bf16.msra.mxu0 %v6821
        %6850 = vmatprep.subr.bf16.mxu0 0
        %6851 = vmatpush1.bf16.msra.mxu0 %v6820
        %6852 = vmatprep.subr.bf16.mxu0 0
        %6853 = vmatpush2.bf16.msra.mxu0 0
        %6854 = vmatprep.subr.bf16.mxu0 0
        %6855 = vmatpush2.bf16.msra.mxu0 0
        %6856 = vmatprep.subr.bf16.mxu0 0
        %6857 = vmatpush2.bf16.msra.mxu0 0
        %6858 = vmatprep.subr.bf16.mxu0 0
        %6859 = vmatpush2.bf16.msra.mxu0 0
        %6860 = vmatprep.subr.bf16.mxu0 0
        %6861 = vmatpush2.bf16.msra.mxu0 0
        %6862 = vmatprep.subr.bf16.mxu0 0
        %6863 = vmatpush2.bf16.msra.mxu0 0
        %6864 = vmatprep.subr.bf16.mxu0 0
        %6865 = vmatpush2.bf16.msra.mxu0 0
        %6866 = vmatprep.subr.bf16.mxu0 0
        %6867 = vmatpush2.bf16.msra.mxu0 0
        %6868 = vmatprep.mubr.bf16.mxu0 0
        %6869 = vmatmul.mubr.bf16.gmra.mxu0 %v6825
        %v6870 = vpop.f32.mrf.mxu0
        %v6871 = vadd.f32 0.0, %v6870
        %v6872 = vpop.f32.mrf.mxu0
        %v6873 = vpop.f32.mrf.mxu0
        %v6874 = vadd.f32 0.0, %v6873
        %v6875 = vpop.f32.mrf.mxu0
        %6876 = vmatprep.mubr.bf16.mxu0 0
        %6877 = vmatmul.mubr.bf16.gmra.mxu0 %v6828
        %v6878 = vpop.f32.mrf.mxu0
        %v6879 = vadd.f32 0.0, %v6878
        %v6880 = vpop.f32.mrf.mxu0
        %v6881 = vpop.f32.mrf.mxu0
        %v6882 = vadd.f32 0.0, %v6881
        %v6883 = vpop.f32.mrf.mxu0
        %6884 = vmatprep.mubr.bf16.mxu0 0
        %6885 = vmatmul.mubr.bf16.gmra.mxu0 %v6831
        %v6886 = vpop.f32.mrf.mxu0
        %v6887 = vadd.f32 0.0, %v6886
        %v6888 = vpop.f32.mrf.mxu0
        %v6889 = vpop.f32.mrf.mxu0
        %v6890 = vadd.f32 0.0, %v6889
        %v6891 = vpop.f32.mrf.mxu0
        %6892 = vmatprep.mubr.bf16.mxu0 0
        %6893 = vmatmul.mubr.bf16.gmra.mxu0 %v6834
        %v6894 = vpop.f32.mrf.mxu0
        %v6895 = vadd.f32 0.0, %v6894
        %v6896 = vpop.f32.mrf.mxu0
        %v6897 = vpop.f32.mrf.mxu0
        %v6898 = vadd.f32 0.0, %v6897
        %v6899 = vpop.f32.mrf.mxu0
        %6900 = vdwg.mxu0
        %v6901 = vadd.f32 %v6788, %v6871
        %v6902 = vadd.f32 %v6789, %v6874
        %v6903 = vadd.f32 %v6790, %v6879
        %v6904 = vadd.f32 %v6791, %v6882
        %v6905 = vadd.f32 %v6792, %v6887
        %v6906 = vadd.f32 %v6793, %v6890
        %v6907 = vadd.f32 %v6794, %v6895
        %v6908 = vadd.f32 %v6795, %v6898
        %v6909 = vld [vmem:[%s7] sm:$0x1]
        %v6911 = vlaneseq
        %v6912 = vshrl.u32 %v6911, 7
        %v6913 = vsub.s32 0, %v6912
        %v6914 = vrot.slane %v6909, %v6913
        %v6916 = vadd.f32 %v6901, %v6914
        %v6917 = vadd.f32 %v6902, %v6914
        %v6918 = vadd.f32 %v6903, %v6914
        %v6919 = vadd.f32 %v6904, %v6914
        %v6920 = vadd.f32 %v6905, %v6914
        %v6921 = vadd.f32 %v6906, %v6914
        %v6922 = vadd.f32 %v6907, %v6914
        %v6923 = vadd.f32 %v6908, %v6914
        %v6924 = vmax.f32 %v6916, 0.0
        %v6925 = vmax.f32 %v6917, 0.0
        %v6926 = vmax.f32 %v6918, 0.0
        %v6927 = vmax.f32 %v6919, 0.0
        %v6928 = vmax.f32 %v6920, 0.0
        %v6929 = vmax.f32 %v6921, 0.0
        %v6930 = vmax.f32 %v6922, 0.0
        %v6931 = vmax.f32 %v6923, 0.0
        %6932 = vst.msk [vmem:[%s333] sm:$0xff] %vm5876, %v6924
        %6933 = vst.msk [vmem:[%s333 + $0x8] sm:$0xff] %vm5876, %v6925
        %6934 = vst.msk [vmem:[%s333 + $0x10] sm:$0xff] %vm5876, %v6926
        %6935 = vst.msk [vmem:[%s333 + $0x18] sm:$0xff] %vm5876, %v6927
        %6936 = vst.msk [vmem:[%s333 + $0x20] sm:$0xff] %vm5876, %v6928
        %6937 = vst.msk [vmem:[%s333 + $0x28] sm:$0xff] %vm5876, %v6929
        %6938 = vst.msk [vmem:[%s333 + $0x30] sm:$0xff] %vm5876, %v6930
        %6939 = vst.msk [vmem:[%s333 + $0x38] sm:$0xff] %vm5876, %v6931
        %p6940 = scmp.lt.s32.totalorder %s24, 1
        %s6941 = scalar_select %p6940, %s24, 1
        %s6942 = smul.addr %s6941, 32
        %s6943 = smul.addr %s6942, 8
        %s6944 = scalar_lea.vmem %s8, %s6943
        %s6945 = sand.u32 %s231, 1
        %s6946 = scalar_lea.sflag [#allocation5], %s6945
        %s6947 = sand.u32 %s231, 1
        %s6948 = smul.addr %s6947, 64
        %s6949 = scalar_lea.vmem [#allocation4], %s6948
        // Predicated region
        $region53: #{forward.1} parent=51 // pred_check
          %p6950 = pneg %p215
        $region54: #{forward.1} parent=51 // pred_check_branch
          %6952 = sbr.rel (%p6950) target = $region56
        $region55: #{forward.1} parent=51 // pred_region
          _
        $region56: #{forward.1} parent=51 // pred_fallthru
          _
        // Predicated region
        $region57: #{forward.1} parent=51 // pred_check
          %p6953 = pneg %p241
        $region58: #{forward.1} parent=51 // pred_check_branch
          %6955 = sbr.rel (%p6953) target = $region60
        $region59: #{forward.1} parent=51 // pred_region
          %s6957 = ssub.s32 1024, 1024
          %6958 = vsyncadd %s6946, %s6957
          %s6959 = smul.addr %s24, 8
          %s6960 = smul.addr %s6959, 128
          %s6961 = scalar_lea.hbm %s9, %s6960
          %s6962 = sshll.u32 %s6949, 4
          %s6963 = int_to_ptr.vmem [resolvable:$true] %s6962
          %6968 = dma.vmem_to_hbm [thread:$0]  %s6963, 1024, %s6961, %s6946, 128, 128, 8
        $region60: #{forward.1} parent=51 // pred_fallthru
          _
      $region52: #{forward.1} parent=5 // pred_fallthru
        _
      %p6969 = scmp.le.s32.totalorder 2, %s19
      // Predicated region
      $region61: #{forward.1} parent=5 // pred_check
        %p6970 = pneg %p6969
      $region62: #{forward.1} parent=5 // pred_check_branch
        %6972 = sbr.rel (%p6970) target = $region64
      $region63: #{forward.1} parent=5 // pred_region
        %s6973 = ssub.s32 %s19, 2
        // Predicated region
        $region65: #{forward.1} parent=63 // pred_check
          %p6974 = pneg %p221
        $region66: #{forward.1} parent=63 // pred_check_branch
          %6976 = sbr.rel (%p6974) target = $region68
        $region67: #{forward.1} parent=63 // pred_region
          %p6977 = scmp.lt.s32.totalorder %s25, 1
          %s6978 = scalar_select %p6977, %s25, 1
          %s6979 = smul.addr %s6978, 32
          %s6980 = smul.addr %s6979, 8
          %s6981 = scalar_lea.vmem %s8, %s6980
        $region68: #{forward.1} parent=63 // pred_fallthru
          _
        // Predicated region
        $region69: #{forward.1} parent=63 // pred_check
          %p6982 = pneg %p247
        $region70: #{forward.1} parent=63 // pred_check_branch
          %6984 = sbr.rel (%p6982) target = $region72
        $region71: #{forward.1} parent=63 // pred_region
          %s6985 = sand.u32 %s232, 1
          %s6986 = scalar_lea.sflag [#allocation5], %s6985
          %s6987 = sand.u32 %s232, 1
          %s6988 = smul.addr %s6987, 64
          %s6989 = scalar_lea.vmem [#allocation4], %s6988
          %6990 = dma.done %s6986, 1024
        $region72: #{forward.1} parent=63 // pred_fallthru
          _
      $region64: #{forward.1} parent=5 // pred_fallthru
        _
    $region6: #{forward.1} parent=1 // loop_footer
      %s23 = sadd.s32 1, %s19
    $region7: #{forward.1} parent=1 // loop_footer_branch
      %18 = sbr.rel target = $region3
    $region8: #{forward.1} parent=1 // loop_exit
      _
    %6991 = vsyncpa [#allocation5], 1
    %s6992 = scalar_lea.sflag [#allocation5], 1
    %6993 = vsyncpa %s6992, 1

</llo_original>
